<compile_context>
chip_gen: v7x
topology: tpu7x:2x2x1
jax: 0.10.0
libtpu: 0.0.40
codegen_flags: <defaults>
</compile_context>

<pallas_src>
import jax
import jax.numpy as jnp
from jax.experimental import pallas as pl
from jax.experimental.pallas import tpu as pltpu

NHEAD = 8
LN_EPS = 1e-5


def _layernorm(x, gamma, beta):
    mu = jnp.mean(x, axis=-1, keepdims=True)
    var = jnp.mean((x - mu) ** 2, axis=-1, keepdims=True)
    return (x - mu) * jax.lax.rsqrt(var + LN_EPS) * gamma + beta


# ----------------------------------------------------------------------------
# Fused kernel: encoder layer (whole batch block, both pair members) + pooling
# + L2 normalize + cosine similarity.
# ----------------------------------------------------------------------------
def fused_batch_kernel(x_ref, m_ref,
                       wqkv_ref, bqkv_ref, wo_ref, bo_ref,
                       w1_ref, b1_ref, w2_ref, b2_ref,
                       g1_ref, be1_ref, g2_ref, be2_ref,
                       sim_ref):
    two, bb, S, D = x_ref.shape      # block = both pair members of a batch block
    n_seq = two * bb                 # sequences processed this step
    M = n_seq * S                    # flattened matmul M dimension
    hd = D // NHEAD
    nh = n_seq * NHEAD
    scale = 1.0 / (hd ** 0.5)

    # Pair stacked host-side -> one flat (M, D) activation slab feeds every
    # matmul; no in-kernel concatenates.
    x = x_ref[...].reshape(M, D)                           # f32
    mask = m_ref[...].reshape(n_seq, S)                    # f32 (1=valid, 0=pad)

    # Packed QKV projection: one (M, D) x (D, 3D) MXU matmul, bf16 in / f32 acc.
    qkv = jnp.dot(x.astype(jnp.bfloat16), wqkv_ref[...],
                  preferred_element_type=jnp.float32) + bqkv_ref[0]   # (M, 3D)

    q = qkv[:, 0 * D:1 * D] * scale      # fold 1/sqrt(hd) into q once
    k = qkv[:, 1 * D:2 * D]
    v = qkv[:, 2 * D:3 * D]

    # All sequences x all heads in ONE batched contraction (batch dim nh = 2*bb*H).
    # K is laid out (nh, hd, S) so the score matmul output has S on lanes.
    qh = (q.reshape(n_seq, S, NHEAD, hd).transpose(0, 2, 1, 3)
           .reshape(nh, S, hd).astype(jnp.bfloat16))       # (nh, S, hd)
    kh = (k.reshape(n_seq, S, NHEAD, hd).transpose(0, 2, 3, 1)
           .reshape(nh, hd, S).astype(jnp.bfloat16))       # (nh, hd, S)
    vh = (v.reshape(n_seq, S, NHEAD, hd).transpose(0, 2, 1, 3)
           .reshape(nh, S, hd).astype(jnp.bfloat16))       # (nh, S, hd)

    s = jnp.einsum('nqd,nds->nqs', qh, kh,
                   preferred_element_type=jnp.float32)     # (nh, S, S)

    # src_key_padding_mask: padded keys get a large negative bias (f32 scores).
    key_bias = jnp.where(mask == 0.0, -1e30, 0.0)          # (n_seq, S)
    s = s.reshape(n_seq, NHEAD, S, S) + key_bias[:, None, None, :]
    s = s - jnp.max(s, axis=-1, keepdims=True)
    p = jnp.exp(s)
    p = p * pl.reciprocal(jnp.sum(p, axis=-1, keepdims=True), approx=True)

    o = jnp.einsum('nqk,nkd->nqd',
                   p.reshape(nh, S, S).astype(jnp.bfloat16), vh,
                   preferred_element_type=jnp.float32)     # (nh, S, hd)
    attn = o.reshape(n_seq, NHEAD, S, hd).transpose(0, 2, 1, 3).reshape(M, D)

    attn = jnp.dot(attn.astype(jnp.bfloat16), wo_ref[...],
                   preferred_element_type=jnp.float32) + bo_ref[0]    # (M, D)

    # post-norm (norm_first=False), dropout disabled (eval mode); LN/relu in f32.
    y = _layernorm(x + attn, g1_ref[0], be1_ref[0])
    ff = jnp.maximum(
        jnp.dot(y.astype(jnp.bfloat16), w1_ref[...],
                preferred_element_type=jnp.float32) + b1_ref[0], 0.0)
    ff = jnp.dot(ff.astype(jnp.bfloat16), w2_ref[...],
                 preferred_element_type=jnp.float32) + b2_ref[0]
    z = _layernorm(y + ff, g2_ref[0], be2_ref[0])                     # (M, D)

    # Masked mean pool + L2 normalize (F.normalize eps=1e-12), all sequences at once.
    z = z.reshape(n_seq, S, D)
    lengths = jnp.maximum(jnp.sum(mask, axis=1, keepdims=True), 1e-8)  # clamp(min=1e-8)
    pooled = jnp.sum(z * mask[:, :, None], axis=1) / lengths           # (n_seq, D)
    nsq = jnp.sum(pooled * pooled, axis=-1, keepdims=True)
    e = pooled * jax.lax.rsqrt(jnp.maximum(nsq, 1e-24))                # (n_seq, D)

    # F.cosine_similarity with per-norm clamping (eps = 1e-8), vectorized over bb.
    e1, e2 = e[:bb], e[bb:]
    dot12 = jnp.sum(e1 * e2, axis=-1, keepdims=True)                   # (bb, 1)
    n1 = jnp.sqrt(jnp.sum(e1 * e1, axis=-1, keepdims=True))
    n2 = jnp.sqrt(jnp.sum(e2 * e2, axis=-1, keepdims=True))
    sim = dot12 / (jnp.maximum(n1, 1e-8) * jnp.maximum(n2, 1e-8))      # (bb, 1)

    # One lane-contiguous output row per grid step (zero-padded to 128 lanes)
    # instead of bb separate scalar blocks.
    bpad = sim_ref.shape[1]
    sim_row = sim.T                                                    # (1, bb)
    if bpad > bb:
        sim_row = jnp.concatenate(
            [sim_row, jnp.zeros((1, bpad - bb), jnp.float32)], axis=1)
    sim_ref[...] = sim_row


def _weight_spec(shape):
    # Constant index_map: double-buffering a replicated weight block only doubles
    # its VMEM footprint with zero overlap benefit -> single-buffer it.
    try:
        return pl.BlockSpec(shape, lambda i: (0, 0), pipeline_mode=pl.Buffered(1))
    except TypeError:  # older jax without BlockSpec.pipeline_mode
        return pl.BlockSpec(shape, lambda i: (0, 0))


def fused_forward(params, hidden_pair, mask_pair, *, batch_block=None):
    """hidden_pair: (2, B, S, D) f32, mask_pair: (2, B, S) f32 -> (B,) cosine sims."""
    _, B, S, D = hidden_pair.shape
    bb = B if batch_block is None else batch_block
    assert B % bb == 0 and D % NHEAD == 0
    num_blocks = B // bb
    bpad = ((bb + 127) // 128) * 128       # lane-padded similarity row per step

    weights = (params["wqkv"], params["bqkv"], params["wo"], params["bo"],
               params["w1"], params["b1"], params["w2"], params["b2"],
               params["g1"], params["be1"], params["g2"], params["be2"])

    in_specs = [
        pl.BlockSpec((2, bb, S, D), lambda i: (0, i, 0, 0)),   # stacked pair hidden states
        pl.BlockSpec((2, bb, S), lambda i: (0, i, 0)),         # stacked pair masks
    ] + [_weight_spec(w.shape) for w in weights]               # replicated weights

    sim = pl.pallas_call(
        fused_batch_kernel,
        out_shape=jax.ShapeDtypeStruct((num_blocks, bpad), jnp.float32),
        grid=(num_blocks,),
        in_specs=in_specs,
        out_specs=pl.BlockSpec((1, bpad), lambda i: (i, 0)),
        compiler_params=pltpu.CompilerParams(
            dimension_semantics=("parallel",)),
    )(hidden_pair, mask_pair, *weights)
    return sim[:, :bb].reshape(B)


# ----------------------------------------------------------------------------
# Parameter init + full forward
# ----------------------------------------------------------------------------
def init_params(key, d_model, d_ff, vocab):
    ks = jax.random.split(key, 8)

    def mat(k, shape):
        return jax.random.normal(k, shape, jnp.float32) * 0.02

    wq = mat(ks[0], (d_model, d_model))
    wk = mat(ks[1], (d_model, d_model))
    wv = mat(ks[2], (d_model, d_model))
    p = {
        # Q/K/V packed ONCE at init (one (D, 3D) matmul in-kernel, no per-call concat).
        # Matmul weights stored bf16 (MXU operands); biases / LN params stay f32.
        "wqkv": jnp.concatenate([wq, wk, wv], axis=1).astype(jnp.bfloat16),
        "bqkv": jnp.zeros((1, 3 * d_model), jnp.float32),
        "wo": mat(ks[3], (d_model, d_model)).astype(jnp.bfloat16),
        "bo": jnp.zeros((1, d_model), jnp.float32),
        "w1": mat(ks[4], (d_model, d_ff)).astype(jnp.bfloat16),
        "b1": jnp.zeros((1, d_ff), jnp.float32),
        "w2": mat(ks[5], (d_ff, d_model)).astype(jnp.bfloat16),
        "b2": jnp.zeros((1, d_model), jnp.float32),
        "g1": jnp.ones((1, d_model), jnp.float32),
        "be1": jnp.zeros((1, d_model), jnp.float32),
        "g2": jnp.ones((1, d_model), jnp.float32),
        "be2": jnp.zeros((1, d_model), jnp.float32),
    }
    emb = jax.random.normal(ks[6], (vocab, d_model), jnp.float32) * 0.5
    return p, emb


def custom_model_avgpool_forward(params, emb_table,
                                 input_ids_1, input_ids_2,
                                 attention_mask_1, attention_mask_2,
                                 score_labels):
    # TODO(synk): stand-in for peft_model(...).hidden_states[-1]
    last_hidden_1 = emb_table[input_ids_1]            # (B, S, D)
    last_hidden_2 = emb_table[input_ids_2]

    # Stack the pair host-side so the kernel never concatenates in VMEM.
    hidden_pair = jnp.stack([last_hidden_1, last_hidden_2], axis=0)       # (2, B, S, D)
    mask_pair = jnp.stack([attention_mask_1, attention_mask_2],
                          axis=0).astype(jnp.float32)                     # (2, B, S)

    similarity = fused_forward(params, hidden_pair, mask_pair)

    # Scalar MSE over B similarities: trivially fused by XLA outside the kernel.
    loss = jnp.mean((similarity - score_labels) ** 2)
    return similarity, loss


if __name__ == "__main__":
    B, S, D, DFF, VOCAB = 2, 8, 64, 128, 64

    key = jax.random.PRNGKey(0)
    k_param, k_ids1, k_ids2, k_lbl = jax.random.split(key, 4)
    params, emb_table = init_params(k_param, D, DFF, VOCAB)

    input_ids_1 = jax.random.randint(k_ids1, (B, S), 0, VOCAB, dtype=jnp.int32)
    input_ids_2 = jax.random.randint(k_ids2, (B, S), 0, VOCAB, dtype=jnp.int32)

    # padding masks: sequence 0 has 8/6 valid tokens, sequence 1 has 5/8.
    lens_1 = jnp.array([[8], [5]], dtype=jnp.int32)
    lens_2 = jnp.array([[6], [8]], dtype=jnp.int32)
    pos = jnp.arange(S, dtype=jnp.int32)[None, :]
    attention_mask_1 = (pos < lens_1).astype(jnp.float32)
    attention_mask_2 = (pos < lens_2).astype(jnp.float32)

    score_labels = jax.random.uniform(k_lbl, (B,), jnp.float32)

    fwd = jax.jit(custom_model_avgpool_forward)
    similarity, loss = fwd(params, emb_table, input_ids_1, input_ids_2,
                           attention_mask_1, attention_mask_2, score_labels)

    jax.block_until_ready((similarity, loss))
    assert similarity.shape == (B,)
    assert loss.shape == ()
    print("KERNEL_OK")
</pallas_src>

<mosaic_0001>
module attributes {stable_mosaic.version = 11 : i64} {
  func.func @fused_batch_kernel(%arg0: i32, %arg1: memref<2x2x8x64xf32, #tpu.memory_space<vmem>>, %arg2: memref<2x2x8xf32, #tpu.memory_space<vmem>>, %arg3: memref<64x192xbf16, #tpu.memory_space<vmem>>, %arg4: memref<1x192xf32, #tpu.memory_space<vmem>>, %arg5: memref<64x64xbf16, #tpu.memory_space<vmem>>, %arg6: memref<1x64xf32, #tpu.memory_space<vmem>>, %arg7: memref<64x128xbf16, #tpu.memory_space<vmem>>, %arg8: memref<1x128xf32, #tpu.memory_space<vmem>>, %arg9: memref<128x64xbf16, #tpu.memory_space<vmem>>, %arg10: memref<1x64xf32, #tpu.memory_space<vmem>>, %arg11: memref<1x64xf32, #tpu.memory_space<vmem>>, %arg12: memref<1x64xf32, #tpu.memory_space<vmem>>, %arg13: memref<1x64xf32, #tpu.memory_space<vmem>>, %arg14: memref<1x64xf32, #tpu.memory_space<vmem>>, %arg15: memref<1x128xf32, #tpu.memory_space<vmem>>) attributes {dimension_semantics = [#tpu.dimension_semantics<parallel>], iteration_bounds = array<i64: 1>, scalar_prefetch = 0 : i64, scratch_operands = 0 : i64, tpu.core_type = #tpu.core_type<tc>, window_params = [{transform_indices = @transform_0, window_bounds = array<i64: 2, 2, 8, 64>}, {transform_indices = @transform_1, window_bounds = array<i64: 2, 2, 8>}, {pipeline_mode = #tpu.pipeline_mode<synchronous>, transform_indices = @transform_2, window_bounds = array<i64: 64, 192>}, {pipeline_mode = #tpu.pipeline_mode<synchronous>, transform_indices = @transform_3, window_bounds = array<i64: 1, 192>}, {pipeline_mode = #tpu.pipeline_mode<synchronous>, transform_indices = @transform_4, window_bounds = array<i64: 64, 64>}, {pipeline_mode = #tpu.pipeline_mode<synchronous>, transform_indices = @transform_5, window_bounds = array<i64: 1, 64>}, {pipeline_mode = #tpu.pipeline_mode<synchronous>, transform_indices = @transform_6, window_bounds = array<i64: 64, 128>}, {pipeline_mode = #tpu.pipeline_mode<synchronous>, transform_indices = @transform_7, window_bounds = array<i64: 1, 128>}, {pipeline_mode = #tpu.pipeline_mode<synchronous>, transform_indices = @transform_8, window_bounds = array<i64: 128, 64>}, {pipeline_mode = #tpu.pipeline_mode<synchronous>, transform_indices = @transform_9, window_bounds = array<i64: 1, 64>}, {pipeline_mode = #tpu.pipeline_mode<synchronous>, transform_indices = @transform_10, window_bounds = array<i64: 1, 64>}, {pipeline_mode = #tpu.pipeline_mode<synchronous>, transform_indices = @transform_11, window_bounds = array<i64: 1, 64>}, {pipeline_mode = #tpu.pipeline_mode<synchronous>, transform_indices = @transform_12, window_bounds = array<i64: 1, 64>}, {pipeline_mode = #tpu.pipeline_mode<synchronous>, transform_indices = @transform_13, window_bounds = array<i64: 1, 64>}, {transform_indices = @transform_14, window_bounds = array<i64: 1, 128>}]} {
    %c0 = arith.constant 0 : index
    %c0_0 = arith.constant 0 : index
    %c0_1 = arith.constant 0 : index
    %c0_2 = arith.constant 0 : index
    %0 = vector.load %arg1[%c0, %c0_0, %c0_1, %c0_2] : memref<2x2x8x64xf32, #tpu.memory_space<vmem>>, vector<2x2x8x64xf32>
    %1 = vector.shape_cast %0 : vector<2x2x8x64xf32> to vector<32x64xf32>
    %c0_3 = arith.constant 0 : index
    %c0_4 = arith.constant 0 : index
    %c0_5 = arith.constant 0 : index
    %2 = vector.load %arg2[%c0_3, %c0_4, %c0_5] : memref<2x2x8xf32, #tpu.memory_space<vmem>>, vector<2x2x8xf32>
    %3 = vector.shape_cast %2 : vector<2x2x8xf32> to vector<4x8xf32>
    %4 = arith.truncf %1 : vector<32x64xf32> to vector<32x64xbf16>
    %c0_6 = arith.constant 0 : index
    %c0_7 = arith.constant 0 : index
    %5 = vector.load %arg3[%c0_6, %c0_7] : memref<64x192xbf16, #tpu.memory_space<vmem>>, vector<64x192xbf16>
    %cst = arith.constant dense<0.000000e+00> : vector<32x192xf32>
    %6 = tpu.matmul %4, %5, %cst {dimension_numbers = #tpu.dot_dimension_numbers<[1], [0], [0], [1], [0, 0, 1, 1], [], []>} : vector<32x64xbf16>, vector<64x192xbf16>, vector<32x192xf32> -> vector<32x192xf32>
    %c0_8 = arith.constant 0 : index
    %c0_9 = arith.constant 0 : index
    %7 = vector.load %arg4[%c0_8, %c0_9] : memref<1x192xf32, #tpu.memory_space<vmem>>, vector<1x192xf32>
    %8 = vector.shape_cast %7 : vector<1x192xf32> to vector<192xf32>
    %9 = vector.shape_cast %8 : vector<192xf32> to vector<1x192xf32>
    %10 = vector.broadcast %9 : vector<1x192xf32> to vector<32x192xf32>
    %11 = arith.addf %6, %10 : vector<32x192xf32>
    %12 = vector.extract_strided_slice %11 {offsets = [0, 0], sizes = [32, 64], strides = [1, 1]} : vector<32x192xf32> to vector<32x64xf32>
    %cst_10 = arith.constant 0.353553385 : f32
    %13 = vector.broadcast %cst_10 : f32 to vector<32x64xf32>
    %14 = arith.mulf %12, %13 : vector<32x64xf32>
    %15 = vector.extract_strided_slice %11 {offsets = [0, 64], sizes = [32, 64], strides = [1, 1]} : vector<32x192xf32> to vector<32x64xf32>
    %16 = vector.extract_strided_slice %11 {offsets = [0, 128], sizes = [32, 64], strides = [1, 1]} : vector<32x192xf32> to vector<32x64xf32>
    %17 = vector.shape_cast %14 : vector<32x64xf32> to vector<4x8x8x8xf32>
    %18 = tpu.transpose %17, [0, 2, 1, 3] : vector<4x8x8x8xf32> -> vector<4x8x8x8xf32>
    %19 = vector.shape_cast %18 : vector<4x8x8x8xf32> to vector<32x8x8xf32>
    %20 = arith.truncf %19 : vector<32x8x8xf32> to vector<32x8x8xbf16>
    %21 = vector.shape_cast %15 : vector<32x64xf32> to vector<4x8x8x8xf32>
    %22 = tpu.transpose %21, [0, 2, 3, 1] : vector<4x8x8x8xf32> -> vector<4x8x8x8xf32>
    %23 = vector.shape_cast %22 : vector<4x8x8x8xf32> to vector<32x8x8xf32>
    %24 = arith.truncf %23 : vector<32x8x8xf32> to vector<32x8x8xbf16>
    %25 = vector.shape_cast %16 : vector<32x64xf32> to vector<4x8x8x8xf32>
    %26 = tpu.transpose %25, [0, 2, 1, 3] : vector<4x8x8x8xf32> -> vector<4x8x8x8xf32>
    %27 = vector.shape_cast %26 : vector<4x8x8x8xf32> to vector<32x8x8xf32>
    %28 = arith.truncf %27 : vector<32x8x8xf32> to vector<32x8x8xbf16>
    "tpu.trace_start"() <{level = 10 : i32, message = "nqd,nds->nqs"}> : () -> ()
    %cst_11 = arith.constant dense<0.000000e+00> : vector<32x8x8xf32>
    %29 = tpu.matmul %20, %24, %cst_11 {dimension_numbers = #tpu.dot_dimension_numbers<[2], [1], [1], [2], [0, 0, 0, 1, 1, 2], [0], [0]>} : vector<32x8x8xbf16>, vector<32x8x8xbf16>, vector<32x8x8xf32> -> vector<32x8x8xf32>
    %cst_12 = arith.constant 0.000000e+00 : f32
    "tpu.trace_stop"() : () -> ()
    %30 = vector.broadcast %cst_12 : f32 to vector<4x8xf32>
    %31 = arith.cmpf oeq, %3, %30 : vector<4x8xf32>
    %cst_13 = arith.constant -1.000000e+30 : f32
    %cst_14 = arith.constant 0.000000e+00 : f32
    %32 = vector.broadcast %cst_13 : f32 to vector<4x8xf32>
    %33 = vector.broadcast %cst_14 : f32 to vector<4x8xf32>
    %34 = arith.select %31, %32, %33 : vector<4x8xi1>, vector<4x8xf32>
    %35 = vector.shape_cast %29 : vector<32x8x8xf32> to vector<4x8x8x8xf32>
    %36 = vector.shape_cast %34 : vector<4x8xf32> to vector<4x1x1x8xf32>
    %37 = vector.broadcast %36 : vector<4x1x1x8xf32> to vector<4x8x8x8xf32>
    %38 = arith.addf %35, %37 : vector<4x8x8x8xf32>
    %cst_15 = arith.constant dense<0xFF800000> : vector<4x8x8xf32>
    %39 = vector.multi_reduction <maximumf>, %38, %cst_15 [3] : vector<4x8x8x8xf32> to vector<4x8x8xf32>
    %40 = vector.shape_cast %39 : vector<4x8x8xf32> to vector<4x8x8x1xf32>
    %41 = vector.broadcast %40 : vector<4x8x8x1xf32> to vector<4x8x8x8xf32>
    %42 = arith.subf %38, %41 : vector<4x8x8x8xf32>
    %43 = math.exp %42 : vector<4x8x8x8xf32>
    %cst_16 = arith.constant dense<0.000000e+00> : vector<4x8x8xf32>
    %44 = vector.multi_reduction <add>, %43, %cst_16 [3] : vector<4x8x8x8xf32> to vector<4x8x8xf32>
    %45 = vector.shape_cast %44 : vector<4x8x8xf32> to vector<4x8x8x1xf32>
    %46 = tpu.reciprocal %45 {approx = true} : vector<4x8x8x1xf32> -> vector<4x8x8x1xf32>
    %47 = vector.broadcast %46 : vector<4x8x8x1xf32> to vector<4x8x8x8xf32>
    %48 = arith.mulf %43, %47 : vector<4x8x8x8xf32>
    %49 = vector.shape_cast %48 : vector<4x8x8x8xf32> to vector<32x8x8xf32>
    %50 = arith.truncf %49 : vector<32x8x8xf32> to vector<32x8x8xbf16>
    "tpu.trace_start"() <{level = 10 : i32, message = "nqk,nkd->nqd"}> : () -> ()
    %cst_17 = arith.constant dense<0.000000e+00> : vector<32x8x8xf32>
    %51 = tpu.matmul %50, %28, %cst_17 {dimension_numbers = #tpu.dot_dimension_numbers<[2], [1], [1], [2], [0, 0, 0, 1, 1, 2], [0], [0]>} : vector<32x8x8xbf16>, vector<32x8x8xbf16>, vector<32x8x8xf32> -> vector<32x8x8xf32>
    "tpu.trace_stop"() : () -> ()
    %52 = vector.shape_cast %51 : vector<32x8x8xf32> to vector<4x8x8x8xf32>
    %53 = tpu.transpose %52, [0, 2, 1, 3] : vector<4x8x8x8xf32> -> vector<4x8x8x8xf32>
    %54 = vector.shape_cast %53 : vector<4x8x8x8xf32> to vector<32x64xf32>
    %55 = arith.truncf %54 : vector<32x64xf32> to vector<32x64xbf16>
    %c0_18 = arith.constant 0 : index
    %c0_19 = arith.constant 0 : index
    %56 = vector.load %arg5[%c0_18, %c0_19] : memref<64x64xbf16, #tpu.memory_space<vmem>>, vector<64x64xbf16>
    %cst_20 = arith.constant dense<0.000000e+00> : vector<32x64xf32>
    %57 = tpu.matmul %55, %56, %cst_20 {dimension_numbers = #tpu.dot_dimension_numbers<[1], [0], [0], [1], [0, 0, 1, 1], [], []>} : vector<32x64xbf16>, vector<64x64xbf16>, vector<32x64xf32> -> vector<32x64xf32>
    %c0_21 = arith.constant 0 : index
    %c0_22 = arith.constant 0 : index
    %58 = vector.load %arg6[%c0_21, %c0_22] : memref<1x64xf32, #tpu.memory_space<vmem>>, vector<1x64xf32>
    %59 = vector.shape_cast %58 : vector<1x64xf32> to vector<64xf32>
    %60 = vector.shape_cast %59 : vector<64xf32> to vector<1x64xf32>
    %61 = vector.broadcast %60 : vector<1x64xf32> to vector<32x64xf32>
    %62 = arith.addf %57, %61 : vector<32x64xf32>
    %63 = arith.addf %1, %62 : vector<32x64xf32>
    %c0_23 = arith.constant 0 : index
    %c0_24 = arith.constant 0 : index
    %64 = vector.load %arg11[%c0_23, %c0_24] : memref<1x64xf32, #tpu.memory_space<vmem>>, vector<1x64xf32>
    %65 = vector.shape_cast %64 : vector<1x64xf32> to vector<64xf32>
    %c0_25 = arith.constant 0 : index
    %c0_26 = arith.constant 0 : index
    %66 = vector.load %arg12[%c0_25, %c0_26] : memref<1x64xf32, #tpu.memory_space<vmem>>, vector<1x64xf32>
    %67 = vector.shape_cast %66 : vector<1x64xf32> to vector<64xf32>
    %cst_27 = arith.constant dense<0.000000e+00> : vector<32xf32>
    %68 = vector.multi_reduction <add>, %63, %cst_27 [1] : vector<32x64xf32> to vector<32xf32>
    %69 = vector.shape_cast %68 : vector<32xf32> to vector<32x1xf32>
    %cst_28 = arith.constant 6.400000e+01 : f32
    %70 = vector.broadcast %cst_28 : f32 to vector<32x1xf32>
    %71 = arith.divf %69, %70 : vector<32x1xf32>
    %72 = vector.broadcast %71 : vector<32x1xf32> to vector<32x64xf32>
    %73 = arith.subf %63, %72 : vector<32x64xf32>
    %74 = arith.mulf %73, %73 : vector<32x64xf32>
    %cst_29 = arith.constant dense<0.000000e+00> : vector<32xf32>
    %75 = vector.multi_reduction <add>, %74, %cst_29 [1] : vector<32x64xf32> to vector<32xf32>
    %76 = vector.shape_cast %75 : vector<32xf32> to vector<32x1xf32>
    %cst_30 = arith.constant 6.400000e+01 : f32
    %77 = vector.broadcast %cst_30 : f32 to vector<32x1xf32>
    %78 = arith.divf %76, %77 : vector<32x1xf32>
    %79 = vector.broadcast %71 : vector<32x1xf32> to vector<32x64xf32>
    %80 = arith.subf %63, %79 : vector<32x64xf32>
    %cst_31 = arith.constant 9.99999974E-6 : f32
    %81 = vector.broadcast %cst_31 : f32 to vector<32x1xf32>
    %82 = arith.addf %78, %81 : vector<32x1xf32>
    %83 = math.rsqrt %82 : vector<32x1xf32>
    %84 = vector.broadcast %83 : vector<32x1xf32> to vector<32x64xf32>
    %85 = arith.mulf %80, %84 : vector<32x64xf32>
    %86 = vector.shape_cast %65 : vector<64xf32> to vector<1x64xf32>
    %87 = vector.broadcast %86 : vector<1x64xf32> to vector<32x64xf32>
    %88 = arith.mulf %85, %87 : vector<32x64xf32>
    %89 = vector.shape_cast %67 : vector<64xf32> to vector<1x64xf32>
    %90 = vector.broadcast %89 : vector<1x64xf32> to vector<32x64xf32>
    %91 = arith.addf %88, %90 : vector<32x64xf32>
    %92 = arith.truncf %91 : vector<32x64xf32> to vector<32x64xbf16>
    %c0_32 = arith.constant 0 : index
    %c0_33 = arith.constant 0 : index
    %93 = vector.load %arg7[%c0_32, %c0_33] : memref<64x128xbf16, #tpu.memory_space<vmem>>, vector<64x128xbf16>
    %cst_34 = arith.constant dense<0.000000e+00> : vector<32x128xf32>
    %94 = tpu.matmul %92, %93, %cst_34 {dimension_numbers = #tpu.dot_dimension_numbers<[1], [0], [0], [1], [0, 0, 1, 1], [], []>} : vector<32x64xbf16>, vector<64x128xbf16>, vector<32x128xf32> -> vector<32x128xf32>
    %c0_35 = arith.constant 0 : index
    %c0_36 = arith.constant 0 : index
    %95 = vector.load %arg8[%c0_35, %c0_36] : memref<1x128xf32, #tpu.memory_space<vmem>>, vector<1x128xf32>
    %96 = vector.shape_cast %95 : vector<1x128xf32> to vector<128xf32>
    %97 = vector.shape_cast %96 : vector<128xf32> to vector<1x128xf32>
    %98 = vector.broadcast %97 : vector<1x128xf32> to vector<32x128xf32>
    %99 = arith.addf %94, %98 : vector<32x128xf32>
    %cst_37 = arith.constant 0.000000e+00 : f32
    %100 = vector.broadcast %cst_37 : f32 to vector<32x128xf32>
    %101 = arith.maximumf %99, %100 : vector<32x128xf32>
    %102 = arith.truncf %101 : vector<32x128xf32> to vector<32x128xbf16>
    %c0_38 = arith.constant 0 : index
    %c0_39 = arith.constant 0 : index
    %103 = vector.load %arg9[%c0_38, %c0_39] : memref<128x64xbf16, #tpu.memory_space<vmem>>, vector<128x64xbf16>
    %cst_40 = arith.constant dense<0.000000e+00> : vector<32x64xf32>
    %104 = tpu.matmul %102, %103, %cst_40 {dimension_numbers = #tpu.dot_dimension_numbers<[1], [0], [0], [1], [0, 0, 1, 1], [], []>} : vector<32x128xbf16>, vector<128x64xbf16>, vector<32x64xf32> -> vector<32x64xf32>
    %c0_41 = arith.constant 0 : index
    %c0_42 = arith.constant 0 : index
    %105 = vector.load %arg10[%c0_41, %c0_42] : memref<1x64xf32, #tpu.memory_space<vmem>>, vector<1x64xf32>
    %106 = vector.shape_cast %105 : vector<1x64xf32> to vector<64xf32>
    %107 = vector.shape_cast %106 : vector<64xf32> to vector<1x64xf32>
    %108 = vector.broadcast %107 : vector<1x64xf32> to vector<32x64xf32>
    %109 = arith.addf %104, %108 : vector<32x64xf32>
    %110 = arith.addf %91, %109 : vector<32x64xf32>
    %c0_43 = arith.constant 0 : index
    %c0_44 = arith.constant 0 : index
    %111 = vector.load %arg13[%c0_43, %c0_44] : memref<1x64xf32, #tpu.memory_space<vmem>>, vector<1x64xf32>
    %112 = vector.shape_cast %111 : vector<1x64xf32> to vector<64xf32>
    %c0_45 = arith.constant 0 : index
    %c0_46 = arith.constant 0 : index
    %113 = vector.load %arg14[%c0_45, %c0_46] : memref<1x64xf32, #tpu.memory_space<vmem>>, vector<1x64xf32>
    %114 = vector.shape_cast %113 : vector<1x64xf32> to vector<64xf32>
    %cst_47 = arith.constant dense<0.000000e+00> : vector<32xf32>
    %115 = vector.multi_reduction <add>, %110, %cst_47 [1] : vector<32x64xf32> to vector<32xf32>
    %116 = vector.shape_cast %115 : vector<32xf32> to vector<32x1xf32>
    %cst_48 = arith.constant 6.400000e+01 : f32
    %117 = vector.broadcast %cst_48 : f32 to vector<32x1xf32>
    %118 = arith.divf %116, %117 : vector<32x1xf32>
    %119 = vector.broadcast %118 : vector<32x1xf32> to vector<32x64xf32>
    %120 = arith.subf %110, %119 : vector<32x64xf32>
    %121 = arith.mulf %120, %120 : vector<32x64xf32>
    %cst_49 = arith.constant dense<0.000000e+00> : vector<32xf32>
    %122 = vector.multi_reduction <add>, %121, %cst_49 [1] : vector<32x64xf32> to vector<32xf32>
    %123 = vector.shape_cast %122 : vector<32xf32> to vector<32x1xf32>
    %cst_50 = arith.constant 6.400000e+01 : f32
    %124 = vector.broadcast %cst_50 : f32 to vector<32x1xf32>
    %125 = arith.divf %123, %124 : vector<32x1xf32>
    %126 = vector.broadcast %118 : vector<32x1xf32> to vector<32x64xf32>
    %127 = arith.subf %110, %126 : vector<32x64xf32>
    %cst_51 = arith.constant 9.99999974E-6 : f32
    %128 = vector.broadcast %cst_51 : f32 to vector<32x1xf32>
    %129 = arith.addf %125, %128 : vector<32x1xf32>
    %130 = math.rsqrt %129 : vector<32x1xf32>
    %131 = vector.broadcast %130 : vector<32x1xf32> to vector<32x64xf32>
    %132 = arith.mulf %127, %131 : vector<32x64xf32>
    %133 = vector.shape_cast %112 : vector<64xf32> to vector<1x64xf32>
    %134 = vector.broadcast %133 : vector<1x64xf32> to vector<32x64xf32>
    %135 = arith.mulf %132, %134 : vector<32x64xf32>
    %136 = vector.shape_cast %114 : vector<64xf32> to vector<1x64xf32>
    %137 = vector.broadcast %136 : vector<1x64xf32> to vector<32x64xf32>
    %138 = arith.addf %135, %137 : vector<32x64xf32>
    %139 = vector.shape_cast %138 : vector<32x64xf32> to vector<4x8x64xf32>
    %cst_52 = arith.constant dense<0.000000e+00> : vector<4xf32>
    %140 = vector.multi_reduction <add>, %3, %cst_52 [1] : vector<4x8xf32> to vector<4xf32>
    %141 = vector.shape_cast %140 : vector<4xf32> to vector<4x1xf32>
    %cst_53 = arith.constant 9.99999993E-9 : f32
    %142 = vector.broadcast %cst_53 : f32 to vector<4x1xf32>
    %143 = arith.maximumf %141, %142 : vector<4x1xf32>
    %144 = vector.shape_cast %3 : vector<4x8xf32> to vector<4x8x1xf32>
    %145 = vector.broadcast %144 : vector<4x8x1xf32> to vector<4x8x64xf32>
    %146 = arith.mulf %139, %145 : vector<4x8x64xf32>
    %cst_54 = arith.constant dense<0.000000e+00> : vector<4x64xf32>
    %147 = vector.multi_reduction <add>, %146, %cst_54 [1] : vector<4x8x64xf32> to vector<4x64xf32>
    %148 = vector.broadcast %143 : vector<4x1xf32> to vector<4x64xf32>
    %149 = arith.divf %147, %148 : vector<4x64xf32>
    %150 = arith.mulf %149, %149 : vector<4x64xf32>
    %cst_55 = arith.constant dense<0.000000e+00> : vector<4xf32>
    %151 = vector.multi_reduction <add>, %150, %cst_55 [1] : vector<4x64xf32> to vector<4xf32>
    %152 = vector.shape_cast %151 : vector<4xf32> to vector<4x1xf32>
    %cst_56 = arith.constant 1.000000e-24 : f32
    %153 = vector.broadcast %cst_56 : f32 to vector<4x1xf32>
    %154 = arith.maximumf %152, %153 : vector<4x1xf32>
    %155 = math.rsqrt %154 : vector<4x1xf32>
    %156 = vector.broadcast %155 : vector<4x1xf32> to vector<4x64xf32>
    %157 = arith.mulf %149, %156 : vector<4x64xf32>
    %158 = vector.extract_strided_slice %157 {offsets = [0, 0], sizes = [2, 64], strides = [1, 1]} : vector<4x64xf32> to vector<2x64xf32>
    %159 = vector.extract_strided_slice %157 {offsets = [2, 0], sizes = [2, 64], strides = [1, 1]} : vector<4x64xf32> to vector<2x64xf32>
    %160 = arith.mulf %158, %159 : vector<2x64xf32>
    %cst_57 = arith.constant dense<0.000000e+00> : vector<2xf32>
    %161 = vector.multi_reduction <add>, %160, %cst_57 [1] : vector<2x64xf32> to vector<2xf32>
    %162 = vector.shape_cast %161 : vector<2xf32> to vector<2x1xf32>
    %163 = arith.mulf %158, %158 : vector<2x64xf32>
    %cst_58 = arith.constant dense<0.000000e+00> : vector<2xf32>
    %164 = vector.multi_reduction <add>, %163, %cst_58 [1] : vector<2x64xf32> to vector<2xf32>
    %165 = vector.shape_cast %164 : vector<2xf32> to vector<2x1xf32>
    %166 = math.sqrt %165 : vector<2x1xf32>
    %167 = arith.mulf %159, %159 : vector<2x64xf32>
    %cst_59 = arith.constant dense<0.000000e+00> : vector<2xf32>
    %168 = vector.multi_reduction <add>, %167, %cst_59 [1] : vector<2x64xf32> to vector<2xf32>
    %169 = vector.shape_cast %168 : vector<2xf32> to vector<2x1xf32>
    %170 = math.sqrt %169 : vector<2x1xf32>
    %cst_60 = arith.constant 9.99999993E-9 : f32
    %171 = vector.broadcast %cst_60 : f32 to vector<2x1xf32>
    %172 = arith.maximumf %166, %171 : vector<2x1xf32>
    %cst_61 = arith.constant 9.99999993E-9 : f32
    %173 = vector.broadcast %cst_61 : f32 to vector<2x1xf32>
    %174 = arith.maximumf %170, %173 : vector<2x1xf32>
    %175 = arith.mulf %172, %174 : vector<2x1xf32>
    %176 = arith.divf %162, %175 : vector<2x1xf32>
    %177 = tpu.transpose %176, [1, 0] : vector<2x1xf32> -> vector<1x2xf32>
    %cst_62 = arith.constant 0.000000e+00 : f32
    %178 = vector.broadcast %cst_62 : f32 to vector<1x126xf32>
    %179 = tpu.concatenate %177, %178 in 1 : vector<1x2xf32>, vector<1x126xf32> -> vector<1x128xf32>
    %c0_63 = arith.constant 0 : index
    %c0_64 = arith.constant 0 : index
    %180 = vector.load %arg15[%c0_63, %c0_64] : memref<1x128xf32, #tpu.memory_space<vmem>>, vector<1x128xf32>
    tpu.vector_store %arg15[%c0_63, %c0_64], %179 {strides = array<i32>} : memref<1x128xf32, #tpu.memory_space<vmem>>, vector<1x128xf32>,
    return
  }
  func.func @transform_0(%arg0: i32) -> (i32, i32, i32, i32) {
    %c0_i32 = arith.constant 0 : i32
    %c0_i32_0 = arith.constant 0 : i32
    %c0_i32_1 = arith.constant 0 : i32
    %c0_i32_2 = arith.constant 0 : i32
    return %c0_i32, %arg0, %c0_i32_0, %c0_i32_1 : i32, i32, i32, i32
  }
  func.func @transform_1(%arg0: i32) -> (i32, i32, i32) {
    %c0_i32 = arith.constant 0 : i32
    %c0_i32_0 = arith.constant 0 : i32
    %c0_i32_1 = arith.constant 0 : i32
    return %c0_i32, %arg0, %c0_i32_0 : i32, i32, i32
  }
  func.func @transform_2(%arg0: i32) -> (i32, i32) {
    %c0_i32 = arith.constant 0 : i32
    %c0_i32_0 = arith.constant 0 : i32
    %c0_i32_1 = arith.constant 0 : i32
    return %c0_i32, %c0_i32_0 : i32, i32
  }
  func.func @transform_3(%arg0: i32) -> (i32, i32) {
    %c0_i32 = arith.constant 0 : i32
    %c0_i32_0 = arith.constant 0 : i32
    %c0_i32_1 = arith.constant 0 : i32
    return %c0_i32, %c0_i32_0 : i32, i32
  }
  func.func @transform_4(%arg0: i32) -> (i32, i32) {
    %c0_i32 = arith.constant 0 : i32
    %c0_i32_0 = arith.constant 0 : i32
    %c0_i32_1 = arith.constant 0 : i32
    return %c0_i32, %c0_i32_0 : i32, i32
  }
  func.func @transform_5(%arg0: i32) -> (i32, i32) {
    %c0_i32 = arith.constant 0 : i32
    %c0_i32_0 = arith.constant 0 : i32
    %c0_i32_1 = arith.constant 0 : i32
    return %c0_i32, %c0_i32_0 : i32, i32
  }
  func.func @transform_6(%arg0: i32) -> (i32, i32) {
    %c0_i32 = arith.constant 0 : i32
    %c0_i32_0 = arith.constant 0 : i32
    %c0_i32_1 = arith.constant 0 : i32
    return %c0_i32, %c0_i32_0 : i32, i32
  }
  func.func @transform_7(%arg0: i32) -> (i32, i32) {
    %c0_i32 = arith.constant 0 : i32
    %c0_i32_0 = arith.constant 0 : i32
    %c0_i32_1 = arith.constant 0 : i32
    return %c0_i32, %c0_i32_0 : i32, i32
  }
  func.func @transform_8(%arg0: i32) -> (i32, i32) {
    %c0_i32 = arith.constant 0 : i32
    %c0_i32_0 = arith.constant 0 : i32
    %c0_i32_1 = arith.constant 0 : i32
    return %c0_i32, %c0_i32_0 : i32, i32
  }
  func.func @transform_9(%arg0: i32) -> (i32, i32) {
    %c0_i32 = arith.constant 0 : i32
    %c0_i32_0 = arith.constant 0 : i32
    %c0_i32_1 = arith.constant 0 : i32
    return %c0_i32, %c0_i32_0 : i32, i32
  }
  func.func @transform_10(%arg0: i32) -> (i32, i32) {
    %c0_i32 = arith.constant 0 : i32
    %c0_i32_0 = arith.constant 0 : i32
    %c0_i32_1 = arith.constant 0 : i32
    return %c0_i32, %c0_i32_0 : i32, i32
  }
  func.func @transform_11(%arg0: i32) -> (i32, i32) {
    %c0_i32 = arith.constant 0 : i32
    %c0_i32_0 = arith.constant 0 : i32
    %c0_i32_1 = arith.constant 0 : i32
    return %c0_i32, %c0_i32_0 : i32, i32
  }
  func.func @transform_12(%arg0: i32) -> (i32, i32) {
    %c0_i32 = arith.constant 0 : i32
    %c0_i32_0 = arith.constant 0 : i32
    %c0_i32_1 = arith.constant 0 : i32
    return %c0_i32, %c0_i32_0 : i32, i32
  }
  func.func @transform_13(%arg0: i32) -> (i32, i32) {
    %c0_i32 = arith.constant 0 : i32
    %c0_i32_0 = arith.constant 0 : i32
    %c0_i32_1 = arith.constant 0 : i32
    return %c0_i32, %c0_i32_0 : i32, i32
  }
  func.func @transform_14(%arg0: i32) -> (i32, i32) {
    %c0_i32 = arith.constant 0 : i32
    %c0_i32_0 = arith.constant 0 : i32
    return %arg0, %c0_i32 : i32, i32
  }
}

</mosaic_0001>

<llo_original>
// kernel: custom_model_avgpool_forward.1
$region0: #{custom_model_avgpool_forward.1}
  #allocation0 [shape = 'u32[]', space=smem, size = 0x4, offset = 0x4, fixed_abs, tag = 'smem constant byte address 0x4 - core index']
  #allocation1 [shape = 'u32[144,128]{1,0:T(1,128)}', space=vmem, size = 0x12000, scoped, tag = 'internal scratch']
  %s0 = inlined_call_operand.vmem [shape: f32[2,2,8,64], index: 0, kind: input, shape index: {}]
  %s1 = inlined_call_operand.vmem [shape: f32[2,2,8], index: 1, kind: input, shape index: {}]
  %s2 = inlined_call_operand.vmem [shape: bf16[64,192], index: 2, kind: input, shape index: {}]
  %s3 = inlined_call_operand.vmem [shape: f32[1,192], index: 3, kind: input, shape index: {}]
  %s4 = inlined_call_operand.vmem [shape: bf16[64,64], index: 4, kind: input, shape index: {}]
  %s5 = inlined_call_operand.vmem [shape: f32[1,64], index: 5, kind: input, shape index: {}]
  %s6 = inlined_call_operand.vmem [shape: bf16[64,128], index: 6, kind: input, shape index: {}]
  %s7 = inlined_call_operand.vmem [shape: f32[1,128], index: 7, kind: input, shape index: {}]
  %s8 = inlined_call_operand.vmem [shape: bf16[128,64], index: 8, kind: input, shape index: {}]
  %s9 = inlined_call_operand.vmem [shape: f32[1,64], index: 9, kind: input, shape index: {}]
  %s10 = inlined_call_operand.vmem [shape: f32[1,64], index: 10, kind: input, shape index: {}]
  %s11 = inlined_call_operand.vmem [shape: f32[1,64], index: 11, kind: input, shape index: {}]
  %s12 = inlined_call_operand.vmem [shape: f32[1,64], index: 12, kind: input, shape index: {}]
  %s13 = inlined_call_operand.vmem [shape: f32[1,64], index: 13, kind: input, shape index: {}]
  %s14 = inlined_call_operand.vmem [shape: f32[1,128], index: 14, kind: output, shape index: {}]
  %s15 = sld [smem:[#allocation0]]
  $region66: #{custom_model_avgpool_forward.1} parent=0
    _
  %s17 = ssub.s32 1, %s15
  %s18 = scalar_select 0, %s17, %s15
  // Predicated region
  $region2: #{custom_model_avgpool_forward.1} parent=0 // pred_check
    _
  $region3: #{custom_model_avgpool_forward.1} parent=0 // pred_check_branch
    %20 = sbr.rel (0) target = $region5
  $region4: #{custom_model_avgpool_forward.1} parent=0 // pred_region
    _
  $region5: #{custom_model_avgpool_forward.1} parent=0 // pred_fallthru
    _
  // Predicated region
  $region6: #{custom_model_avgpool_forward.1} parent=0 // pred_check
    _
  $region7: #{custom_model_avgpool_forward.1} parent=0 // pred_check_branch
    %22 = sbr.rel (0) target = $region9
  $region8: #{custom_model_avgpool_forward.1} parent=0 // pred_region
    _
  $region9: #{custom_model_avgpool_forward.1} parent=0 // pred_fallthru
    _
  // Predicated region
  $region10: #{custom_model_avgpool_forward.1} parent=0 // pred_check
    _
  $region11: #{custom_model_avgpool_forward.1} parent=0 // pred_check_branch
    %24 = sbr.rel (0) target = $region13
  $region12: #{custom_model_avgpool_forward.1} parent=0 // pred_region
    _
  $region13: #{custom_model_avgpool_forward.1} parent=0 // pred_fallthru
    _
  // Predicated region
  $region14: #{custom_model_avgpool_forward.1} parent=0 // pred_check
    _
  $region15: #{custom_model_avgpool_forward.1} parent=0 // pred_check_branch
    %26 = sbr.rel (0) target = $region17
  $region16: #{custom_model_avgpool_forward.1} parent=0 // pred_region
    _
  $region17: #{custom_model_avgpool_forward.1} parent=0 // pred_fallthru
    _
  // Predicated region
  $region18: #{custom_model_avgpool_forward.1} parent=0 // pred_check
    _
  $region19: #{custom_model_avgpool_forward.1} parent=0 // pred_check_branch
    %28 = sbr.rel (0) target = $region21
  $region20: #{custom_model_avgpool_forward.1} parent=0 // pred_region
    _
  $region21: #{custom_model_avgpool_forward.1} parent=0 // pred_fallthru
    _
  // Predicated region
  $region22: #{custom_model_avgpool_forward.1} parent=0 // pred_check
    _
  $region23: #{custom_model_avgpool_forward.1} parent=0 // pred_check_branch
    %30 = sbr.rel (0) target = $region25
  $region24: #{custom_model_avgpool_forward.1} parent=0 // pred_region
    _
  $region25: #{custom_model_avgpool_forward.1} parent=0 // pred_fallthru
    _
  // Predicated region
  $region26: #{custom_model_avgpool_forward.1} parent=0 // pred_check
    _
  $region27: #{custom_model_avgpool_forward.1} parent=0 // pred_check_branch
    %32 = sbr.rel (0) target = $region29
  $region28: #{custom_model_avgpool_forward.1} parent=0 // pred_region
    _
  $region29: #{custom_model_avgpool_forward.1} parent=0 // pred_fallthru
    _
  // Predicated region
  $region30: #{custom_model_avgpool_forward.1} parent=0 // pred_check
    _
  $region31: #{custom_model_avgpool_forward.1} parent=0 // pred_check_branch
    %34 = sbr.rel (0) target = $region33
  $region32: #{custom_model_avgpool_forward.1} parent=0 // pred_region
    _
  $region33: #{custom_model_avgpool_forward.1} parent=0 // pred_fallthru
    _
  // Predicated region
  $region34: #{custom_model_avgpool_forward.1} parent=0 // pred_check
    _
  $region35: #{custom_model_avgpool_forward.1} parent=0 // pred_check_branch
    %36 = sbr.rel (0) target = $region37
  $region36: #{custom_model_avgpool_forward.1} parent=0 // pred_region
    _
  $region37: #{custom_model_avgpool_forward.1} parent=0 // pred_fallthru
    _
  // Predicated region
  $region38: #{custom_model_avgpool_forward.1} parent=0 // pred_check
    _
  $region39: #{custom_model_avgpool_forward.1} parent=0 // pred_check_branch
    %38 = sbr.rel (0) target = $region41
  $region40: #{custom_model_avgpool_forward.1} parent=0 // pred_region
    _
  $region41: #{custom_model_avgpool_forward.1} parent=0 // pred_fallthru
    _
  // Predicated region
  $region42: #{custom_model_avgpool_forward.1} parent=0 // pred_check
    _
  $region43: #{custom_model_avgpool_forward.1} parent=0 // pred_check_branch
    %40 = sbr.rel (0) target = $region45
  $region44: #{custom_model_avgpool_forward.1} parent=0 // pred_region
    _
  $region45: #{custom_model_avgpool_forward.1} parent=0 // pred_fallthru
    _
  // Predicated region
  $region46: #{custom_model_avgpool_forward.1} parent=0 // pred_check
    _
  $region47: #{custom_model_avgpool_forward.1} parent=0 // pred_check_branch
    %42 = sbr.rel (0) target = $region49
  $region48: #{custom_model_avgpool_forward.1} parent=0 // pred_region
    _
  $region49: #{custom_model_avgpool_forward.1} parent=0 // pred_fallthru
    _
  // Predicated region
  $region50: #{custom_model_avgpool_forward.1} parent=0 // pred_check
    _
  $region51: #{custom_model_avgpool_forward.1} parent=0 // pred_check_branch
    %44 = sbr.rel (0) target = $region53
  $region52: #{custom_model_avgpool_forward.1} parent=0 // pred_region
    _
  $region53: #{custom_model_avgpool_forward.1} parent=0 // pred_fallthru
    _
  // Predicated region
  $region54: #{custom_model_avgpool_forward.1} parent=0 // pred_check
    _
  $region55: #{custom_model_avgpool_forward.1} parent=0 // pred_check_branch
    %46 = sbr.rel (0) target = $region57
  $region56: #{custom_model_avgpool_forward.1} parent=0 // pred_region
    _
  $region57: #{custom_model_avgpool_forward.1} parent=0 // pred_fallthru
    _
  %v48 = vld [vmem:[%s0] sm:$0xff]
  %v49 = vld [vmem:[%s0 + $0x8] sm:$0xff]
  %v50 = vld [vmem:[%s0 + $0x10] sm:$0xff]
  %v51 = vld [vmem:[%s0 + $0x18] sm:$0xff]
  %v52 = vld [vmem:[%s1] sm:$0x3]
  %v53 = vld [vmem:[%s1 + $0x2] sm:$0x3]
  %v54 = vpack.c.bf16 %v49, %v48
  %v55 = vpack.c.bf16 %v51, %v50
  %v56 = vld [vmem:[%s2] sm:$0xff]
  %v57 = vld [vmem:[%s2 + $0x8] sm:$0xff]
  %v58 = vld [vmem:[%s2 + $0x10] sm:$0xff]
  %v59 = vld [vmem:[%s2 + $0x18] sm:$0xff]
  %v60 = vld [vmem:[%s2 + $0x20] sm:$0xff]
  %v61 = vld [vmem:[%s2 + $0x28] sm:$0xff]
  %v62 = vld [vmem:[%s2 + $0x30] sm:$0xff]
  %v63 = vld [vmem:[%s2 + $0x38] sm:$0xff]
  %v64 = vld [vmem:[%s3] sm:$0x3]
  %v66 = vlaneseq
  %v67 = vshrl.u32 %v66, 7
  %v68 = vsub.s32 0, %v67
  %v69 = vrot.slane %v64, %v68
  %v70 = vlaneseq
  %v71 = vshrl.u32 %v70, 7
  %v72 = vsub.s32 1, %v71
  %v73 = vrot.slane %v64, %v72
  %v84 = vunpack.c.l.b16 %v56
  %v85 = vunpack.c.h.b16 %v56
  %v86 = vunpack.c.l.b16 %v57
  %v87 = vunpack.c.h.b16 %v57
  %v88 = vunpack.c.l.b16 %v58
  %v89 = vunpack.c.h.b16 %v58
  %v90 = vunpack.c.l.b16 %v59
  %v91 = vunpack.c.h.b16 %v59
  %v92 = vunpack.c.l.b16 %v60
  %v93 = vunpack.c.h.b16 %v60
  %v94 = vunpack.c.l.b16 %v61
  %v95 = vunpack.c.h.b16 %v61
  %v96 = vunpack.c.l.b16 %v62
  %v97 = vunpack.c.h.b16 %v62
  %v98 = vunpack.c.l.b16 %v63
  %v99 = vunpack.c.h.b16 %v63
  %v100 = vpack.c.b16 %v86, %v84
  %v101 = vpack.c.b16 %v87, %v85
  %v102 = vpack.c.b16 %v90, %v88
  %v103 = vpack.c.b16 %v91, %v89
  %v104 = vpack.c.b16 %v94, %v92
  %v105 = vpack.c.b16 %v95, %v93
  %v106 = vpack.c.b16 %v98, %v96
  %v107 = vpack.c.b16 %v99, %v97
  %vm116 = vcmask 523264
  %v118 = vsel %vm116, %v54, 0
  %v121 = vsel %vm116, %v55, 0
  %123 = vmatprep.subr.bf16.mxu0 %v101
  %124 = vmatpush1.bf16.msra.mxu0 %v100
  %125 = vmatprep.subr.bf16.mxu0 %v103
  %126 = vmatpush1.bf16.msra.mxu0 %v102
  %127 = vmatprep.subr.bf16.mxu0 %v105
  %128 = vmatpush1.bf16.msra.mxu0 %v104
  %129 = vmatprep.subr.bf16.mxu0 %v107
  %130 = vmatpush1.bf16.msra.mxu0 %v106
  %131 = vmatprep.subr.bf16.mxu0 0
  %132 = vmatpush1.bf16.msra.mxu0 0
  %133 = vmatprep.subr.bf16.mxu0 0
  %134 = vmatpush1.bf16.msra.mxu0 0
  %135 = vmatprep.subr.bf16.mxu0 0
  %136 = vmatpush1.bf16.msra.mxu0 0
  %137 = vmatprep.subr.bf16.mxu0 0
  %138 = vmatpush1.bf16.msra.mxu0 0
  %139 = vmatprep.subr.bf16.mxu0 0
  %140 = vmatpush1.bf16.msra.mxu0 0
  %141 = vmatprep.subr.bf16.mxu0 0
  %142 = vmatpush1.bf16.msra.mxu0 0
  %143 = vmatprep.subr.bf16.mxu0 0
  %144 = vmatpush1.bf16.msra.mxu0 0
  %145 = vmatprep.subr.bf16.mxu0 0
  %146 = vmatpush1.bf16.msra.mxu0 0
  %147 = vmatprep.subr.bf16.mxu0 0
  %148 = vmatpush1.bf16.msra.mxu0 0
  %149 = vmatprep.subr.bf16.mxu0 0
  %150 = vmatpush1.bf16.msra.mxu0 0
  %151 = vmatprep.subr.bf16.mxu0 0
  %152 = vmatpush1.bf16.msra.mxu0 0
  %153 = vmatprep.subr.bf16.mxu0 0
  %154 = vmatpush1.bf16.msra.mxu0 0
  %155 = vmatprep.mubr.bf16.mxu0 0
  %156 = vmatmul.mubr.bf16.gmra.mrb[0].mxu0 %v118
  %v157 = vpop.f32.mrb[0].mxu0
  %v158 = vadd.f32 %v69, %v157
  %v159 = vpop.f32.mrb[0].mxu0
  %v160 = vadd.f32 %v73, %v159
  %v161 = vpop.f32.mrb[0].mxu0
  %v162 = vadd.f32 %v69, %v161
  %v163 = vpop.f32.mrb[0].mxu0
  %v164 = vadd.f32 %v73, %v163
  %165 = vmatprep.mubr.bf16.mxu0 0
  %166 = vmatmul.mubr.bf16.gmra.mrb[0].mxu0 %v121
  %v167 = vpop.f32.mrb[0].mxu0
  %v168 = vadd.f32 %v69, %v167
  %v169 = vpop.f32.mrb[0].mxu0
  %v170 = vadd.f32 %v73, %v169
  %v171 = vpop.f32.mrb[0].mxu0
  %v172 = vadd.f32 %v69, %v171
  %v173 = vpop.f32.mrb[0].mxu0
  %v174 = vadd.f32 %v73, %v173
  %175 = vdwg.mxu0
  %v176 = vmul.f32 %v158, 0.35355338
  %v177 = vmul.f32 %v162, 0.35355338
  %v178 = vmul.f32 %v168, 0.35355338
  %v179 = vmul.f32 %v172, 0.35355338
  %184 = vrot.lane.b32.xlu0 %v176, 120
  %v185 = vpop.permute.xlu0 %184
  %186 = vrot.lane.b32.xlu0 %v177, 120
  %v187 = vpop.permute.xlu0 %186
  %188 = vrot.lane.b32.xlu0 %v178, 120
  %v189 = vpop.permute.xlu0 %188
  %190 = vrot.lane.b32.xlu0 %v179, 120
  %v191 = vpop.permute.xlu0 %190
  %196 = vrot.lane.b32.xlu0 %v176, 112
  %v197 = vpop.permute.xlu0 %196
  %198 = vrot.lane.b32.xlu0 %v177, 112
  %v199 = vpop.permute.xlu0 %198
  %200 = vrot.lane.b32.xlu0 %v178, 112
  %v201 = vpop.permute.xlu0 %200
  %202 = vrot.lane.b32.xlu0 %v179, 112
  %v203 = vpop.permute.xlu0 %202
  %208 = vrot.lane.b32.xlu0 %v176, 104
  %v209 = vpop.permute.xlu0 %208
  %210 = vrot.lane.b32.xlu0 %v177, 104
  %v211 = vpop.permute.xlu0 %210
  %212 = vrot.lane.b32.xlu0 %v178, 104
  %v213 = vpop.permute.xlu0 %212
  %214 = vrot.lane.b32.xlu0 %v179, 104
  %v215 = vpop.permute.xlu0 %214
  %220 = vrot.lane.b32.xlu0 %v176, 96
  %v221 = vpop.permute.xlu0 %220
  %222 = vrot.lane.b32.xlu0 %v177, 96
  %v223 = vpop.permute.xlu0 %222
  %224 = vrot.lane.b32.xlu0 %v178, 96
  %v225 = vpop.permute.xlu0 %224
  %226 = vrot.lane.b32.xlu0 %v179, 96
  %v227 = vpop.permute.xlu0 %226
  %232 = vrot.lane.b32.xlu0 %v176, 88
  %v233 = vpop.permute.xlu0 %232
  %234 = vrot.lane.b32.xlu0 %v177, 88
  %v235 = vpop.permute.xlu0 %234
  %236 = vrot.lane.b32.xlu0 %v178, 88
  %v237 = vpop.permute.xlu0 %236
  %238 = vrot.lane.b32.xlu0 %v179, 88
  %v239 = vpop.permute.xlu0 %238
  %244 = vrot.lane.b32.xlu0 %v176, 80
  %v245 = vpop.permute.xlu0 %244
  %246 = vrot.lane.b32.xlu0 %v177, 80
  %v247 = vpop.permute.xlu0 %246
  %248 = vrot.lane.b32.xlu0 %v178, 80
  %v249 = vpop.permute.xlu0 %248
  %250 = vrot.lane.b32.xlu0 %v179, 80
  %v251 = vpop.permute.xlu0 %250
  %256 = vrot.lane.b32.xlu0 %v176, 72
  %v257 = vpop.permute.xlu0 %256
  %258 = vrot.lane.b32.xlu0 %v177, 72
  %v259 = vpop.permute.xlu0 %258
  %260 = vrot.lane.b32.xlu0 %v178, 72
  %v261 = vpop.permute.xlu0 %260
  %262 = vrot.lane.b32.xlu0 %v179, 72
  %v263 = vpop.permute.xlu0 %262
  %v268 = vcombine.low %v176, %v197
  %v269 = vcombine.high %v176, %v197
  %v271 = vunpack.c.l.s4 1983009808
  %v272 = vunpack.c.0.s8 %v271
  %v273 = vlaneseq
  %v274 = vshrl.u32 %v273, 7
  %v275 = vsub.s32 %v272, %v274
  %v276 = vrot.slane %v268, %v275
  %v278 = vunpack.c.l.s4 1983009808
  %v279 = vunpack.c.0.s8 %v278
  %v280 = vlaneseq
  %v281 = vshrl.u32 %v280, 7
  %v282 = vsub.s32 %v279, %v281
  %v283 = vrot.slane %v269, %v282
  %v284 = vcombine.low %v185, %v209
  %v285 = vcombine.high %v185, %v209
  %v287 = vunpack.c.l.s4 1983009808
  %v288 = vunpack.c.0.s8 %v287
  %v289 = vlaneseq
  %v290 = vshrl.u32 %v289, 7
  %v291 = vsub.s32 %v288, %v290
  %v292 = vrot.slane %v284, %v291
  %v294 = vunpack.c.l.s4 1983009808
  %v295 = vunpack.c.0.s8 %v294
  %v296 = vlaneseq
  %v297 = vshrl.u32 %v296, 7
  %v298 = vsub.s32 %v295, %v297
  %v299 = vrot.slane %v285, %v298
  %v300 = vcombine.low %v221, %v245
  %v301 = vcombine.high %v221, %v245
  %v303 = vunpack.c.l.s4 1983009808
  %v304 = vunpack.c.0.s8 %v303
  %v305 = vlaneseq
  %v306 = vshrl.u32 %v305, 7
  %v307 = vsub.s32 %v304, %v306
  %v308 = vrot.slane %v300, %v307
  %v310 = vunpack.c.l.s4 1983009808
  %v311 = vunpack.c.0.s8 %v310
  %v312 = vlaneseq
  %v313 = vshrl.u32 %v312, 7
  %v314 = vsub.s32 %v311, %v313
  %v315 = vrot.slane %v301, %v314
  %v316 = vcombine.low %v233, %v257
  %v317 = vcombine.high %v233, %v257
  %v319 = vunpack.c.l.s4 1983009808
  %v320 = vunpack.c.0.s8 %v319
  %v321 = vlaneseq
  %v322 = vshrl.u32 %v321, 7
  %v323 = vsub.s32 %v320, %v322
  %v324 = vrot.slane %v316, %v323
  %v326 = vunpack.c.l.s4 1983009808
  %v327 = vunpack.c.0.s8 %v326
  %v328 = vlaneseq
  %v329 = vshrl.u32 %v328, 7
  %v330 = vsub.s32 %v327, %v329
  %v331 = vrot.slane %v317, %v330
  %v332 = vcombine.low %v276, %v292
  %v333 = vcombine.high %v276, %v292
  %v335 = vunpack.c.l.s4 1934713408
  %v336 = vunpack.c.0.s8 %v335
  %v337 = vlaneseq
  %v338 = vshrl.u32 %v337, 7
  %v339 = vsub.s32 %v336, %v338
  %v340 = vrot.slane %v332, %v339
  %v342 = vunpack.c.l.s4 1934713408
  %v343 = vunpack.c.0.s8 %v342
  %v344 = vlaneseq
  %v345 = vshrl.u32 %v344, 7
  %v346 = vsub.s32 %v343, %v345
  %v347 = vrot.slane %v333, %v346
  %v348 = vcombine.low %v283, %v299
  %v349 = vcombine.high %v283, %v299
  %v351 = vunpack.c.l.s4 1934713408
  %v352 = vunpack.c.0.s8 %v351
  %v353 = vlaneseq
  %v354 = vshrl.u32 %v353, 7
  %v355 = vsub.s32 %v352, %v354
  %v356 = vrot.slane %v348, %v355
  %v358 = vunpack.c.l.s4 1934713408
  %v359 = vunpack.c.0.s8 %v358
  %v360 = vlaneseq
  %v361 = vshrl.u32 %v360, 7
  %v362 = vsub.s32 %v359, %v361
  %v363 = vrot.slane %v349, %v362
  %v364 = vcombine.low %v308, %v324
  %v365 = vcombine.high %v308, %v324
  %v367 = vunpack.c.l.s4 1934713408
  %v368 = vunpack.c.0.s8 %v367
  %v369 = vlaneseq
  %v370 = vshrl.u32 %v369, 7
  %v371 = vsub.s32 %v368, %v370
  %v372 = vrot.slane %v364, %v371
  %v374 = vunpack.c.l.s4 1934713408
  %v375 = vunpack.c.0.s8 %v374
  %v376 = vlaneseq
  %v377 = vshrl.u32 %v376, 7
  %v378 = vsub.s32 %v375, %v377
  %v379 = vrot.slane %v365, %v378
  %v380 = vcombine.low %v315, %v331
  %v381 = vcombine.high %v315, %v331
  %v383 = vunpack.c.l.s4 1934713408
  %v384 = vunpack.c.0.s8 %v383
  %v385 = vlaneseq
  %v386 = vshrl.u32 %v385, 7
  %v387 = vsub.s32 %v384, %v386
  %v388 = vrot.slane %v380, %v387
  %v390 = vunpack.c.l.s4 1934713408
  %v391 = vunpack.c.0.s8 %v390
  %v392 = vlaneseq
  %v393 = vshrl.u32 %v392, 7
  %v394 = vsub.s32 %v391, %v393
  %v395 = vrot.slane %v381, %v394
  %v396 = vcombine.low %v340, %v372
  %v397 = vcombine.high %v340, %v372
  %v398 = vcombine.low %v347, %v379
  %v399 = vcombine.high %v347, %v379
  %v400 = vcombine.low %v356, %v388
  %v401 = vcombine.high %v356, %v388
  %v402 = vcombine.low %v363, %v395
  %v403 = vcombine.high %v363, %v395
  %v404 = vcombine.low %v177, %v199
  %v405 = vcombine.high %v177, %v199
  %v407 = vunpack.c.l.s4 1983009808
  %v408 = vunpack.c.0.s8 %v407
  %v409 = vlaneseq
  %v410 = vshrl.u32 %v409, 7
  %v411 = vsub.s32 %v408, %v410
  %v412 = vrot.slane %v404, %v411
  %v414 = vunpack.c.l.s4 1983009808
  %v415 = vunpack.c.0.s8 %v414
  %v416 = vlaneseq
  %v417 = vshrl.u32 %v416, 7
  %v418 = vsub.s32 %v415, %v417
  %v419 = vrot.slane %v405, %v418
  %v420 = vcombine.low %v187, %v211
  %v421 = vcombine.high %v187, %v211
  %v423 = vunpack.c.l.s4 1983009808
  %v424 = vunpack.c.0.s8 %v423
  %v425 = vlaneseq
  %v426 = vshrl.u32 %v425, 7
  %v427 = vsub.s32 %v424, %v426
  %v428 = vrot.slane %v420, %v427
  %v430 = vunpack.c.l.s4 1983009808
  %v431 = vunpack.c.0.s8 %v430
  %v432 = vlaneseq
  %v433 = vshrl.u32 %v432, 7
  %v434 = vsub.s32 %v431, %v433
  %v435 = vrot.slane %v421, %v434
  %v436 = vcombine.low %v223, %v247
  %v437 = vcombine.high %v223, %v247
  %v439 = vunpack.c.l.s4 1983009808
  %v440 = vunpack.c.0.s8 %v439
  %v441 = vlaneseq
  %v442 = vshrl.u32 %v441, 7
  %v443 = vsub.s32 %v440, %v442
  %v444 = vrot.slane %v436, %v443
  %v446 = vunpack.c.l.s4 1983009808
  %v447 = vunpack.c.0.s8 %v446
  %v448 = vlaneseq
  %v449 = vshrl.u32 %v448, 7
  %v450 = vsub.s32 %v447, %v449
  %v451 = vrot.slane %v437, %v450
  %v452 = vcombine.low %v235, %v259
  %v453 = vcombine.high %v235, %v259
  %v455 = vunpack.c.l.s4 1983009808
  %v456 = vunpack.c.0.s8 %v455
  %v457 = vlaneseq
  %v458 = vshrl.u32 %v457, 7
  %v459 = vsub.s32 %v456, %v458
  %v460 = vrot.slane %v452, %v459
  %v462 = vunpack.c.l.s4 1983009808
  %v463 = vunpack.c.0.s8 %v462
  %v464 = vlaneseq
  %v465 = vshrl.u32 %v464, 7
  %v466 = vsub.s32 %v463, %v465
  %v467 = vrot.slane %v453, %v466
  %v468 = vcombine.low %v412, %v428
  %v469 = vcombine.high %v412, %v428
  %v471 = vunpack.c.l.s4 1934713408
  %v472 = vunpack.c.0.s8 %v471
  %v473 = vlaneseq
  %v474 = vshrl.u32 %v473, 7
  %v475 = vsub.s32 %v472, %v474
  %v476 = vrot.slane %v468, %v475
  %v478 = vunpack.c.l.s4 1934713408
  %v479 = vunpack.c.0.s8 %v478
  %v480 = vlaneseq
  %v481 = vshrl.u32 %v480, 7
  %v482 = vsub.s32 %v479, %v481
  %v483 = vrot.slane %v469, %v482
  %v484 = vcombine.low %v419, %v435
  %v485 = vcombine.high %v419, %v435
  %v487 = vunpack.c.l.s4 1934713408
  %v488 = vunpack.c.0.s8 %v487
  %v489 = vlaneseq
  %v490 = vshrl.u32 %v489, 7
  %v491 = vsub.s32 %v488, %v490
  %v492 = vrot.slane %v484, %v491
  %v494 = vunpack.c.l.s4 1934713408
  %v495 = vunpack.c.0.s8 %v494
  %v496 = vlaneseq
  %v497 = vshrl.u32 %v496, 7
  %v498 = vsub.s32 %v495, %v497
  %v499 = vrot.slane %v485, %v498
  %v500 = vcombine.low %v444, %v460
  %v501 = vcombine.high %v444, %v460
  %v503 = vunpack.c.l.s4 1934713408
  %v504 = vunpack.c.0.s8 %v503
  %v505 = vlaneseq
  %v506 = vshrl.u32 %v505, 7
  %v507 = vsub.s32 %v504, %v506
  %v508 = vrot.slane %v500, %v507
  %v510 = vunpack.c.l.s4 1934713408
  %v511 = vunpack.c.0.s8 %v510
  %v512 = vlaneseq
  %v513 = vshrl.u32 %v512, 7
  %v514 = vsub.s32 %v511, %v513
  %v515 = vrot.slane %v501, %v514
  %v516 = vcombine.low %v451, %v467
  %v517 = vcombine.high %v451, %v467
  %v519 = vunpack.c.l.s4 1934713408
  %v520 = vunpack.c.0.s8 %v519
  %v521 = vlaneseq
  %v522 = vshrl.u32 %v521, 7
  %v523 = vsub.s32 %v520, %v522
  %v524 = vrot.slane %v516, %v523
  %v526 = vunpack.c.l.s4 1934713408
  %v527 = vunpack.c.0.s8 %v526
  %v528 = vlaneseq
  %v529 = vshrl.u32 %v528, 7
  %v530 = vsub.s32 %v527, %v529
  %v531 = vrot.slane %v517, %v530
  %v532 = vcombine.low %v476, %v508
  %v533 = vcombine.high %v476, %v508
  %v534 = vcombine.low %v483, %v515
  %v535 = vcombine.high %v483, %v515
  %v536 = vcombine.low %v492, %v524
  %v537 = vcombine.high %v492, %v524
  %v538 = vcombine.low %v499, %v531
  %v539 = vcombine.high %v499, %v531
  %v540 = vcombine.low %v178, %v201
  %v541 = vcombine.high %v178, %v201
  %v543 = vunpack.c.l.s4 1983009808
  %v544 = vunpack.c.0.s8 %v543
  %v545 = vlaneseq
  %v546 = vshrl.u32 %v545, 7
  %v547 = vsub.s32 %v544, %v546
  %v548 = vrot.slane %v540, %v547
  %v550 = vunpack.c.l.s4 1983009808
  %v551 = vunpack.c.0.s8 %v550
  %v552 = vlaneseq
  %v553 = vshrl.u32 %v552, 7
  %v554 = vsub.s32 %v551, %v553
  %v555 = vrot.slane %v541, %v554
  %v556 = vcombine.low %v189, %v213
  %v557 = vcombine.high %v189, %v213
  %v559 = vunpack.c.l.s4 1983009808
  %v560 = vunpack.c.0.s8 %v559
  %v561 = vlaneseq
  %v562 = vshrl.u32 %v561, 7
  %v563 = vsub.s32 %v560, %v562
  %v564 = vrot.slane %v556, %v563
  %v566 = vunpack.c.l.s4 1983009808
  %v567 = vunpack.c.0.s8 %v566
  %v568 = vlaneseq
  %v569 = vshrl.u32 %v568, 7
  %v570 = vsub.s32 %v567, %v569
  %v571 = vrot.slane %v557, %v570
  %v572 = vcombine.low %v225, %v249
  %v573 = vcombine.high %v225, %v249
  %v575 = vunpack.c.l.s4 1983009808
  %v576 = vunpack.c.0.s8 %v575
  %v577 = vlaneseq
  %v578 = vshrl.u32 %v577, 7
  %v579 = vsub.s32 %v576, %v578
  %v580 = vrot.slane %v572, %v579
  %v582 = vunpack.c.l.s4 1983009808
  %v583 = vunpack.c.0.s8 %v582
  %v584 = vlaneseq
  %v585 = vshrl.u32 %v584, 7
  %v586 = vsub.s32 %v583, %v585
  %v587 = vrot.slane %v573, %v586
  %v588 = vcombine.low %v237, %v261
  %v589 = vcombine.high %v237, %v261
  %v591 = vunpack.c.l.s4 1983009808
  %v592 = vunpack.c.0.s8 %v591
  %v593 = vlaneseq
  %v594 = vshrl.u32 %v593, 7
  %v595 = vsub.s32 %v592, %v594
  %v596 = vrot.slane %v588, %v595
  %v598 = vunpack.c.l.s4 1983009808
  %v599 = vunpack.c.0.s8 %v598
  %v600 = vlaneseq
  %v601 = vshrl.u32 %v600, 7
  %v602 = vsub.s32 %v599, %v601
  %v603 = vrot.slane %v589, %v602
  %v604 = vcombine.low %v548, %v564
  %v605 = vcombine.high %v548, %v564
  %v607 = vunpack.c.l.s4 1934713408
  %v608 = vunpack.c.0.s8 %v607
  %v609 = vlaneseq
  %v610 = vshrl.u32 %v609, 7
  %v611 = vsub.s32 %v608, %v610
  %v612 = vrot.slane %v604, %v611
  %v614 = vunpack.c.l.s4 1934713408
  %v615 = vunpack.c.0.s8 %v614
  %v616 = vlaneseq
  %v617 = vshrl.u32 %v616, 7
  %v618 = vsub.s32 %v615, %v617
  %v619 = vrot.slane %v605, %v618
  %v620 = vcombine.low %v555, %v571
  %v621 = vcombine.high %v555, %v571
  %v623 = vunpack.c.l.s4 1934713408
  %v624 = vunpack.c.0.s8 %v623
  %v625 = vlaneseq
  %v626 = vshrl.u32 %v625, 7
  %v627 = vsub.s32 %v624, %v626
  %v628 = vrot.slane %v620, %v627
  %v630 = vunpack.c.l.s4 1934713408
  %v631 = vunpack.c.0.s8 %v630
  %v632 = vlaneseq
  %v633 = vshrl.u32 %v632, 7
  %v634 = vsub.s32 %v631, %v633
  %v635 = vrot.slane %v621, %v634
  %v636 = vcombine.low %v580, %v596
  %v637 = vcombine.high %v580, %v596
  %v639 = vunpack.c.l.s4 1934713408
  %v640 = vunpack.c.0.s8 %v639
  %v641 = vlaneseq
  %v642 = vshrl.u32 %v641, 7
  %v643 = vsub.s32 %v640, %v642
  %v644 = vrot.slane %v636, %v643
  %v646 = vunpack.c.l.s4 1934713408
  %v647 = vunpack.c.0.s8 %v646
  %v648 = vlaneseq
  %v649 = vshrl.u32 %v648, 7
  %v650 = vsub.s32 %v647, %v649
  %v651 = vrot.slane %v637, %v650
  %v652 = vcombine.low %v587, %v603
  %v653 = vcombine.high %v587, %v603
  %v655 = vunpack.c.l.s4 1934713408
  %v656 = vunpack.c.0.s8 %v655
  %v657 = vlaneseq
  %v658 = vshrl.u32 %v657, 7
  %v659 = vsub.s32 %v656, %v658
  %v660 = vrot.slane %v652, %v659
  %v662 = vunpack.c.l.s4 1934713408
  %v663 = vunpack.c.0.s8 %v662
  %v664 = vlaneseq
  %v665 = vshrl.u32 %v664, 7
  %v666 = vsub.s32 %v663, %v665
  %v667 = vrot.slane %v653, %v666
  %v668 = vcombine.low %v612, %v644
  %v669 = vcombine.high %v612, %v644
  %v670 = vcombine.low %v619, %v651
  %v671 = vcombine.high %v619, %v651
  %v672 = vcombine.low %v628, %v660
  %v673 = vcombine.high %v628, %v660
  %v674 = vcombine.low %v635, %v667
  %v675 = vcombine.high %v635, %v667
  %v676 = vcombine.low %v179, %v203
  %v677 = vcombine.high %v179, %v203
  %v679 = vunpack.c.l.s4 1983009808
  %v680 = vunpack.c.0.s8 %v679
  %v681 = vlaneseq
  %v682 = vshrl.u32 %v681, 7
  %v683 = vsub.s32 %v680, %v682
  %v684 = vrot.slane %v676, %v683
  %v686 = vunpack.c.l.s4 1983009808
  %v687 = vunpack.c.0.s8 %v686
  %v688 = vlaneseq
  %v689 = vshrl.u32 %v688, 7
  %v690 = vsub.s32 %v687, %v689
  %v691 = vrot.slane %v677, %v690
  %v692 = vcombine.low %v191, %v215
  %v693 = vcombine.high %v191, %v215
  %v695 = vunpack.c.l.s4 1983009808
  %v696 = vunpack.c.0.s8 %v695
  %v697 = vlaneseq
  %v698 = vshrl.u32 %v697, 7
  %v699 = vsub.s32 %v696, %v698
  %v700 = vrot.slane %v692, %v699
  %v702 = vunpack.c.l.s4 1983009808
  %v703 = vunpack.c.0.s8 %v702
  %v704 = vlaneseq
  %v705 = vshrl.u32 %v704, 7
  %v706 = vsub.s32 %v703, %v705
  %v707 = vrot.slane %v693, %v706
  %v708 = vcombine.low %v227, %v251
  %v709 = vcombine.high %v227, %v251
  %v711 = vunpack.c.l.s4 1983009808
  %v712 = vunpack.c.0.s8 %v711
  %v713 = vlaneseq
  %v714 = vshrl.u32 %v713, 7
  %v715 = vsub.s32 %v712, %v714
  %v716 = vrot.slane %v708, %v715
  %v718 = vunpack.c.l.s4 1983009808
  %v719 = vunpack.c.0.s8 %v718
  %v720 = vlaneseq
  %v721 = vshrl.u32 %v720, 7
  %v722 = vsub.s32 %v719, %v721
  %v723 = vrot.slane %v709, %v722
  %v724 = vcombine.low %v239, %v263
  %v725 = vcombine.high %v239, %v263
  %v727 = vunpack.c.l.s4 1983009808
  %v728 = vunpack.c.0.s8 %v727
  %v729 = vlaneseq
  %v730 = vshrl.u32 %v729, 7
  %v731 = vsub.s32 %v728, %v730
  %v732 = vrot.slane %v724, %v731
  %v734 = vunpack.c.l.s4 1983009808
  %v735 = vunpack.c.0.s8 %v734
  %v736 = vlaneseq
  %v737 = vshrl.u32 %v736, 7
  %v738 = vsub.s32 %v735, %v737
  %v739 = vrot.slane %v725, %v738
  %v740 = vcombine.low %v684, %v700
  %v741 = vcombine.high %v684, %v700
  %v743 = vunpack.c.l.s4 1934713408
  %v744 = vunpack.c.0.s8 %v743
  %v745 = vlaneseq
  %v746 = vshrl.u32 %v745, 7
  %v747 = vsub.s32 %v744, %v746
  %v748 = vrot.slane %v740, %v747
  %v750 = vunpack.c.l.s4 1934713408
  %v751 = vunpack.c.0.s8 %v750
  %v752 = vlaneseq
  %v753 = vshrl.u32 %v752, 7
  %v754 = vsub.s32 %v751, %v753
  %v755 = vrot.slane %v741, %v754
  %v756 = vcombine.low %v691, %v707
  %v757 = vcombine.high %v691, %v707
  %v759 = vunpack.c.l.s4 1934713408
  %v760 = vunpack.c.0.s8 %v759
  %v761 = vlaneseq
  %v762 = vshrl.u32 %v761, 7
  %v763 = vsub.s32 %v760, %v762
  %v764 = vrot.slane %v756, %v763
  %v766 = vunpack.c.l.s4 1934713408
  %v767 = vunpack.c.0.s8 %v766
  %v768 = vlaneseq
  %v769 = vshrl.u32 %v768, 7
  %v770 = vsub.s32 %v767, %v769
  %v771 = vrot.slane %v757, %v770
  %v772 = vcombine.low %v716, %v732
  %v773 = vcombine.high %v716, %v732
  %v775 = vunpack.c.l.s4 1934713408
  %v776 = vunpack.c.0.s8 %v775
  %v777 = vlaneseq
  %v778 = vshrl.u32 %v777, 7
  %v779 = vsub.s32 %v776, %v778
  %v780 = vrot.slane %v772, %v779
  %v782 = vunpack.c.l.s4 1934713408
  %v783 = vunpack.c.0.s8 %v782
  %v784 = vlaneseq
  %v785 = vshrl.u32 %v784, 7
  %v786 = vsub.s32 %v783, %v785
  %v787 = vrot.slane %v773, %v786
  %v788 = vcombine.low %v723, %v739
  %v789 = vcombine.high %v723, %v739
  %v791 = vunpack.c.l.s4 1934713408
  %v792 = vunpack.c.0.s8 %v791
  %v793 = vlaneseq
  %v794 = vshrl.u32 %v793, 7
  %v795 = vsub.s32 %v792, %v794
  %v796 = vrot.slane %v788, %v795
  %v798 = vunpack.c.l.s4 1934713408
  %v799 = vunpack.c.0.s8 %v798
  %v800 = vlaneseq
  %v801 = vshrl.u32 %v800, 7
  %v802 = vsub.s32 %v799, %v801
  %v803 = vrot.slane %v789, %v802
  %v804 = vcombine.low %v748, %v780
  %v805 = vcombine.high %v748, %v780
  %v806 = vcombine.low %v755, %v787
  %v807 = vcombine.high %v755, %v787
  %v808 = vcombine.low %v764, %v796
  %v809 = vcombine.high %v764, %v796
  %v810 = vcombine.low %v771, %v803
  %v811 = vcombine.high %v771, %v803
  %v812 = vcombine.low %v396, %v398
  %v813 = vcombine.high %v396, %v398
  %v815 = vunpack.c.l.s4 1983009808
  %v816 = vunpack.c.0.s8 %v815
  %v817 = vlaneseq
  %v818 = vshrl.u32 %v817, 7
  %v819 = vsub.s32 %v816, %v818
  %v820 = vrot.slane %v812, %v819
  %v822 = vunpack.c.l.s4 1983009808
  %v823 = vunpack.c.0.s8 %v822
  %v824 = vlaneseq
  %v825 = vshrl.u32 %v824, 7
  %v826 = vsub.s32 %v823, %v825
  %v827 = vrot.slane %v813, %v826
  %v828 = vcombine.low %v397, %v399
  %v829 = vcombine.high %v397, %v399
  %v831 = vunpack.c.l.s4 1983009808
  %v832 = vunpack.c.0.s8 %v831
  %v833 = vlaneseq
  %v834 = vshrl.u32 %v833, 7
  %v835 = vsub.s32 %v832, %v834
  %v836 = vrot.slane %v828, %v835
  %v838 = vunpack.c.l.s4 1983009808
  %v839 = vunpack.c.0.s8 %v838
  %v840 = vlaneseq
  %v841 = vshrl.u32 %v840, 7
  %v842 = vsub.s32 %v839, %v841
  %v843 = vrot.slane %v829, %v842
  %v844 = vcombine.low %v400, %v402
  %v845 = vcombine.high %v400, %v402
  %v847 = vunpack.c.l.s4 1983009808
  %v848 = vunpack.c.0.s8 %v847
  %v849 = vlaneseq
  %v850 = vshrl.u32 %v849, 7
  %v851 = vsub.s32 %v848, %v850
  %v852 = vrot.slane %v844, %v851
  %v854 = vunpack.c.l.s4 1983009808
  %v855 = vunpack.c.0.s8 %v854
  %v856 = vlaneseq
  %v857 = vshrl.u32 %v856, 7
  %v858 = vsub.s32 %v855, %v857
  %v859 = vrot.slane %v845, %v858
  %v860 = vcombine.low %v401, %v403
  %v861 = vcombine.high %v401, %v403
  %v863 = vunpack.c.l.s4 1983009808
  %v864 = vunpack.c.0.s8 %v863
  %v865 = vlaneseq
  %v866 = vshrl.u32 %v865, 7
  %v867 = vsub.s32 %v864, %v866
  %v868 = vrot.slane %v860, %v867
  %v870 = vunpack.c.l.s4 1983009808
  %v871 = vunpack.c.0.s8 %v870
  %v872 = vlaneseq
  %v873 = vshrl.u32 %v872, 7
  %v874 = vsub.s32 %v871, %v873
  %v875 = vrot.slane %v861, %v874
  %v876 = vcombine.low %v820, %v836
  %v877 = vcombine.high %v820, %v836
  %v879 = vunpack.c.l.s4 1934713408
  %v880 = vunpack.c.0.s8 %v879
  %v881 = vlaneseq
  %v882 = vshrl.u32 %v881, 7
  %v883 = vsub.s32 %v880, %v882
  %v884 = vrot.slane %v876, %v883
  %v886 = vunpack.c.l.s4 1934713408
  %v887 = vunpack.c.0.s8 %v886
  %v888 = vlaneseq
  %v889 = vshrl.u32 %v888, 7
  %v890 = vsub.s32 %v887, %v889
  %v891 = vrot.slane %v877, %v890
  %v892 = vcombine.low %v827, %v843
  %v893 = vcombine.high %v827, %v843
  %v895 = vunpack.c.l.s4 1934713408
  %v896 = vunpack.c.0.s8 %v895
  %v897 = vlaneseq
  %v898 = vshrl.u32 %v897, 7
  %v899 = vsub.s32 %v896, %v898
  %v900 = vrot.slane %v892, %v899
  %v902 = vunpack.c.l.s4 1934713408
  %v903 = vunpack.c.0.s8 %v902
  %v904 = vlaneseq
  %v905 = vshrl.u32 %v904, 7
  %v906 = vsub.s32 %v903, %v905
  %v907 = vrot.slane %v893, %v906
  %v908 = vcombine.low %v852, %v868
  %v909 = vcombine.high %v852, %v868
  %v911 = vunpack.c.l.s4 1934713408
  %v912 = vunpack.c.0.s8 %v911
  %v913 = vlaneseq
  %v914 = vshrl.u32 %v913, 7
  %v915 = vsub.s32 %v912, %v914
  %v916 = vrot.slane %v908, %v915
  %v918 = vunpack.c.l.s4 1934713408
  %v919 = vunpack.c.0.s8 %v918
  %v920 = vlaneseq
  %v921 = vshrl.u32 %v920, 7
  %v922 = vsub.s32 %v919, %v921
  %v923 = vrot.slane %v909, %v922
  %v924 = vcombine.low %v859, %v875
  %v925 = vcombine.high %v859, %v875
  %v927 = vunpack.c.l.s4 1934713408
  %v928 = vunpack.c.0.s8 %v927
  %v929 = vlaneseq
  %v930 = vshrl.u32 %v929, 7
  %v931 = vsub.s32 %v928, %v930
  %v932 = vrot.slane %v924, %v931
  %v934 = vunpack.c.l.s4 1934713408
  %v935 = vunpack.c.0.s8 %v934
  %v936 = vlaneseq
  %v937 = vshrl.u32 %v936, 7
  %v938 = vsub.s32 %v935, %v937
  %v939 = vrot.slane %v925, %v938
  %v940 = vcombine.low %v884, %v916
  %v941 = vcombine.high %v884, %v916
  %v942 = vcombine.low %v891, %v923
  %v943 = vcombine.high %v891, %v923
  %v944 = vcombine.low %v900, %v932
  %v945 = vcombine.high %v900, %v932
  %v946 = vcombine.low %v907, %v939
  %v947 = vcombine.high %v907, %v939
  %v948 = vcombine.low %v532, %v534
  %v949 = vcombine.high %v532, %v534
  %v951 = vunpack.c.l.s4 1983009808
  %v952 = vunpack.c.0.s8 %v951
  %v953 = vlaneseq
  %v954 = vshrl.u32 %v953, 7
  %v955 = vsub.s32 %v952, %v954
  %v956 = vrot.slane %v948, %v955
  %v958 = vunpack.c.l.s4 1983009808
  %v959 = vunpack.c.0.s8 %v958
  %v960 = vlaneseq
  %v961 = vshrl.u32 %v960, 7
  %v962 = vsub.s32 %v959, %v961
  %v963 = vrot.slane %v949, %v962
  %v964 = vcombine.low %v533, %v535
  %v965 = vcombine.high %v533, %v535
  %v967 = vunpack.c.l.s4 1983009808
  %v968 = vunpack.c.0.s8 %v967
  %v969 = vlaneseq
  %v970 = vshrl.u32 %v969, 7
  %v971 = vsub.s32 %v968, %v970
  %v972 = vrot.slane %v964, %v971
  %v974 = vunpack.c.l.s4 1983009808
  %v975 = vunpack.c.0.s8 %v974
  %v976 = vlaneseq
  %v977 = vshrl.u32 %v976, 7
  %v978 = vsub.s32 %v975, %v977
  %v979 = vrot.slane %v965, %v978
  %v980 = vcombine.low %v536, %v538
  %v981 = vcombine.high %v536, %v538
  %v983 = vunpack.c.l.s4 1983009808
  %v984 = vunpack.c.0.s8 %v983
  %v985 = vlaneseq
  %v986 = vshrl.u32 %v985, 7
  %v987 = vsub.s32 %v984, %v986
  %v988 = vrot.slane %v980, %v987
  %v990 = vunpack.c.l.s4 1983009808
  %v991 = vunpack.c.0.s8 %v990
  %v992 = vlaneseq
  %v993 = vshrl.u32 %v992, 7
  %v994 = vsub.s32 %v991, %v993
  %v995 = vrot.slane %v981, %v994
  %v996 = vcombine.low %v537, %v539
  %v997 = vcombine.high %v537, %v539
  %v999 = vunpack.c.l.s4 1983009808
  %v1000 = vunpack.c.0.s8 %v999
  %v1001 = vlaneseq
  %v1002 = vshrl.u32 %v1001, 7
  %v1003 = vsub.s32 %v1000, %v1002
  %v1004 = vrot.slane %v996, %v1003
  %v1006 = vunpack.c.l.s4 1983009808
  %v1007 = vunpack.c.0.s8 %v1006
  %v1008 = vlaneseq
  %v1009 = vshrl.u32 %v1008, 7
  %v1010 = vsub.s32 %v1007, %v1009
  %v1011 = vrot.slane %v997, %v1010
  %v1012 = vcombine.low %v956, %v972
  %v1013 = vcombine.high %v956, %v972
  %v1015 = vunpack.c.l.s4 1934713408
  %v1016 = vunpack.c.0.s8 %v1015
  %v1017 = vlaneseq
  %v1018 = vshrl.u32 %v1017, 7
  %v1019 = vsub.s32 %v1016, %v1018
  %v1020 = vrot.slane %v1012, %v1019
  %v1022 = vunpack.c.l.s4 1934713408
  %v1023 = vunpack.c.0.s8 %v1022
  %v1024 = vlaneseq
  %v1025 = vshrl.u32 %v1024, 7
  %v1026 = vsub.s32 %v1023, %v1025
  %v1027 = vrot.slane %v1013, %v1026
  %v1028 = vcombine.low %v963, %v979
  %v1029 = vcombine.high %v963, %v979
  %v1031 = vunpack.c.l.s4 1934713408
  %v1032 = vunpack.c.0.s8 %v1031
  %v1033 = vlaneseq
  %v1034 = vshrl.u32 %v1033, 7
  %v1035 = vsub.s32 %v1032, %v1034
  %v1036 = vrot.slane %v1028, %v1035
  %v1038 = vunpack.c.l.s4 1934713408
  %v1039 = vunpack.c.0.s8 %v1038
  %v1040 = vlaneseq
  %v1041 = vshrl.u32 %v1040, 7
  %v1042 = vsub.s32 %v1039, %v1041
  %v1043 = vrot.slane %v1029, %v1042
  %v1044 = vcombine.low %v988, %v1004
  %v1045 = vcombine.high %v988, %v1004
  %v1047 = vunpack.c.l.s4 1934713408
  %v1048 = vunpack.c.0.s8 %v1047
  %v1049 = vlaneseq
  %v1050 = vshrl.u32 %v1049, 7
  %v1051 = vsub.s32 %v1048, %v1050
  %v1052 = vrot.slane %v1044, %v1051
  %v1054 = vunpack.c.l.s4 1934713408
  %v1055 = vunpack.c.0.s8 %v1054
  %v1056 = vlaneseq
  %v1057 = vshrl.u32 %v1056, 7
  %v1058 = vsub.s32 %v1055, %v1057
  %v1059 = vrot.slane %v1045, %v1058
  %v1060 = vcombine.low %v995, %v1011
  %v1061 = vcombine.high %v995, %v1011
  %v1063 = vunpack.c.l.s4 1934713408
  %v1064 = vunpack.c.0.s8 %v1063
  %v1065 = vlaneseq
  %v1066 = vshrl.u32 %v1065, 7
  %v1067 = vsub.s32 %v1064, %v1066
  %v1068 = vrot.slane %v1060, %v1067
  %v1070 = vunpack.c.l.s4 1934713408
  %v1071 = vunpack.c.0.s8 %v1070
  %v1072 = vlaneseq
  %v1073 = vshrl.u32 %v1072, 7
  %v1074 = vsub.s32 %v1071, %v1073
  %v1075 = vrot.slane %v1061, %v1074
  %v1076 = vcombine.low %v1020, %v1052
  %v1077 = vcombine.high %v1020, %v1052
  %v1078 = vcombine.low %v1027, %v1059
  %v1079 = vcombine.high %v1027, %v1059
  %v1080 = vcombine.low %v1036, %v1068
  %v1081 = vcombine.high %v1036, %v1068
  %v1082 = vcombine.low %v1043, %v1075
  %v1083 = vcombine.high %v1043, %v1075
  %v1084 = vcombine.low %v668, %v670
  %v1085 = vcombine.high %v668, %v670
  %v1087 = vunpack.c.l.s4 1983009808
  %v1088 = vunpack.c.0.s8 %v1087
  %v1089 = vlaneseq
  %v1090 = vshrl.u32 %v1089, 7
  %v1091 = vsub.s32 %v1088, %v1090
  %v1092 = vrot.slane %v1084, %v1091
  %v1094 = vunpack.c.l.s4 1983009808
  %v1095 = vunpack.c.0.s8 %v1094
  %v1096 = vlaneseq
  %v1097 = vshrl.u32 %v1096, 7
  %v1098 = vsub.s32 %v1095, %v1097
  %v1099 = vrot.slane %v1085, %v1098
  %v1100 = vcombine.low %v669, %v671
  %v1101 = vcombine.high %v669, %v671
  %v1103 = vunpack.c.l.s4 1983009808
  %v1104 = vunpack.c.0.s8 %v1103
  %v1105 = vlaneseq
  %v1106 = vshrl.u32 %v1105, 7
  %v1107 = vsub.s32 %v1104, %v1106
  %v1108 = vrot.slane %v1100, %v1107
  %v1110 = vunpack.c.l.s4 1983009808
  %v1111 = vunpack.c.0.s8 %v1110
  %v1112 = vlaneseq
  %v1113 = vshrl.u32 %v1112, 7
  %v1114 = vsub.s32 %v1111, %v1113
  %v1115 = vrot.slane %v1101, %v1114
  %v1116 = vcombine.low %v672, %v674
  %v1117 = vcombine.high %v672, %v674
  %v1119 = vunpack.c.l.s4 1983009808
  %v1120 = vunpack.c.0.s8 %v1119
  %v1121 = vlaneseq
  %v1122 = vshrl.u32 %v1121, 7
  %v1123 = vsub.s32 %v1120, %v1122
  %v1124 = vrot.slane %v1116, %v1123
  %v1126 = vunpack.c.l.s4 1983009808
  %v1127 = vunpack.c.0.s8 %v1126
  %v1128 = vlaneseq
  %v1129 = vshrl.u32 %v1128, 7
  %v1130 = vsub.s32 %v1127, %v1129
  %v1131 = vrot.slane %v1117, %v1130
  %v1132 = vcombine.low %v673, %v675
  %v1133 = vcombine.high %v673, %v675
  %v1135 = vunpack.c.l.s4 1983009808
  %v1136 = vunpack.c.0.s8 %v1135
  %v1137 = vlaneseq
  %v1138 = vshrl.u32 %v1137, 7
  %v1139 = vsub.s32 %v1136, %v1138
  %v1140 = vrot.slane %v1132, %v1139
  %v1142 = vunpack.c.l.s4 1983009808
  %v1143 = vunpack.c.0.s8 %v1142
  %v1144 = vlaneseq
  %v1145 = vshrl.u32 %v1144, 7
  %v1146 = vsub.s32 %v1143, %v1145
  %v1147 = vrot.slane %v1133, %v1146
  %v1148 = vcombine.low %v1092, %v1108
  %v1149 = vcombine.high %v1092, %v1108
  %v1151 = vunpack.c.l.s4 1934713408
  %v1152 = vunpack.c.0.s8 %v1151
  %v1153 = vlaneseq
  %v1154 = vshrl.u32 %v1153, 7
  %v1155 = vsub.s32 %v1152, %v1154
  %v1156 = vrot.slane %v1148, %v1155
  %v1158 = vunpack.c.l.s4 1934713408
  %v1159 = vunpack.c.0.s8 %v1158
  %v1160 = vlaneseq
  %v1161 = vshrl.u32 %v1160, 7
  %v1162 = vsub.s32 %v1159, %v1161
  %v1163 = vrot.slane %v1149, %v1162
  %v1164 = vcombine.low %v1099, %v1115
  %v1165 = vcombine.high %v1099, %v1115
  %v1167 = vunpack.c.l.s4 1934713408
  %v1168 = vunpack.c.0.s8 %v1167
  %v1169 = vlaneseq
  %v1170 = vshrl.u32 %v1169, 7
  %v1171 = vsub.s32 %v1168, %v1170
  %v1172 = vrot.slane %v1164, %v1171
  %v1174 = vunpack.c.l.s4 1934713408
  %v1175 = vunpack.c.0.s8 %v1174
  %v1176 = vlaneseq
  %v1177 = vshrl.u32 %v1176, 7
  %v1178 = vsub.s32 %v1175, %v1177
  %v1179 = vrot.slane %v1165, %v1178
  %v1180 = vcombine.low %v1124, %v1140
  %v1181 = vcombine.high %v1124, %v1140
  %v1183 = vunpack.c.l.s4 1934713408
  %v1184 = vunpack.c.0.s8 %v1183
  %v1185 = vlaneseq
  %v1186 = vshrl.u32 %v1185, 7
  %v1187 = vsub.s32 %v1184, %v1186
  %v1188 = vrot.slane %v1180, %v1187
  %v1190 = vunpack.c.l.s4 1934713408
  %v1191 = vunpack.c.0.s8 %v1190
  %v1192 = vlaneseq
  %v1193 = vshrl.u32 %v1192, 7
  %v1194 = vsub.s32 %v1191, %v1193
  %v1195 = vrot.slane %v1181, %v1194
  %v1196 = vcombine.low %v1131, %v1147
  %v1197 = vcombine.high %v1131, %v1147
  %v1199 = vunpack.c.l.s4 1934713408
  %v1200 = vunpack.c.0.s8 %v1199
  %v1201 = vlaneseq
  %v1202 = vshrl.u32 %v1201, 7
  %v1203 = vsub.s32 %v1200, %v1202
  %v1204 = vrot.slane %v1196, %v1203
  %v1206 = vunpack.c.l.s4 1934713408
  %v1207 = vunpack.c.0.s8 %v1206
  %v1208 = vlaneseq
  %v1209 = vshrl.u32 %v1208, 7
  %v1210 = vsub.s32 %v1207, %v1209
  %v1211 = vrot.slane %v1197, %v1210
  %v1212 = vcombine.low %v1156, %v1188
  %v1213 = vcombine.high %v1156, %v1188
  %v1214 = vcombine.low %v1163, %v1195
  %v1215 = vcombine.high %v1163, %v1195
  %v1216 = vcombine.low %v1172, %v1204
  %v1217 = vcombine.high %v1172, %v1204
  %v1218 = vcombine.low %v1179, %v1211
  %v1219 = vcombine.high %v1179, %v1211
  %v1220 = vcombine.low %v804, %v806
  %v1221 = vcombine.high %v804, %v806
  %v1223 = vunpack.c.l.s4 1983009808
  %v1224 = vunpack.c.0.s8 %v1223
  %v1225 = vlaneseq
  %v1226 = vshrl.u32 %v1225, 7
  %v1227 = vsub.s32 %v1224, %v1226
  %v1228 = vrot.slane %v1220, %v1227
  %v1230 = vunpack.c.l.s4 1983009808
  %v1231 = vunpack.c.0.s8 %v1230
  %v1232 = vlaneseq
  %v1233 = vshrl.u32 %v1232, 7
  %v1234 = vsub.s32 %v1231, %v1233
  %v1235 = vrot.slane %v1221, %v1234
  %v1236 = vcombine.low %v805, %v807
  %v1237 = vcombine.high %v805, %v807
  %v1239 = vunpack.c.l.s4 1983009808
  %v1240 = vunpack.c.0.s8 %v1239
  %v1241 = vlaneseq
  %v1242 = vshrl.u32 %v1241, 7
  %v1243 = vsub.s32 %v1240, %v1242
  %v1244 = vrot.slane %v1236, %v1243
  %v1246 = vunpack.c.l.s4 1983009808
  %v1247 = vunpack.c.0.s8 %v1246
  %v1248 = vlaneseq
  %v1249 = vshrl.u32 %v1248, 7
  %v1250 = vsub.s32 %v1247, %v1249
  %v1251 = vrot.slane %v1237, %v1250
  %v1252 = vcombine.low %v808, %v810
  %v1253 = vcombine.high %v808, %v810
  %v1255 = vunpack.c.l.s4 1983009808
  %v1256 = vunpack.c.0.s8 %v1255
  %v1257 = vlaneseq
  %v1258 = vshrl.u32 %v1257, 7
  %v1259 = vsub.s32 %v1256, %v1258
  %v1260 = vrot.slane %v1252, %v1259
  %v1262 = vunpack.c.l.s4 1983009808
  %v1263 = vunpack.c.0.s8 %v1262
  %v1264 = vlaneseq
  %v1265 = vshrl.u32 %v1264, 7
  %v1266 = vsub.s32 %v1263, %v1265
  %v1267 = vrot.slane %v1253, %v1266
  %v1268 = vcombine.low %v809, %v811
  %v1269 = vcombine.high %v809, %v811
  %v1271 = vunpack.c.l.s4 1983009808
  %v1272 = vunpack.c.0.s8 %v1271
  %v1273 = vlaneseq
  %v1274 = vshrl.u32 %v1273, 7
  %v1275 = vsub.s32 %v1272, %v1274
  %v1276 = vrot.slane %v1268, %v1275
  %v1278 = vunpack.c.l.s4 1983009808
  %v1279 = vunpack.c.0.s8 %v1278
  %v1280 = vlaneseq
  %v1281 = vshrl.u32 %v1280, 7
  %v1282 = vsub.s32 %v1279, %v1281
  %v1283 = vrot.slane %v1269, %v1282
  %v1284 = vcombine.low %v1228, %v1244
  %v1285 = vcombine.high %v1228, %v1244
  %v1287 = vunpack.c.l.s4 1934713408
  %v1288 = vunpack.c.0.s8 %v1287
  %v1289 = vlaneseq
  %v1290 = vshrl.u32 %v1289, 7
  %v1291 = vsub.s32 %v1288, %v1290
  %v1292 = vrot.slane %v1284, %v1291
  %v1294 = vunpack.c.l.s4 1934713408
  %v1295 = vunpack.c.0.s8 %v1294
  %v1296 = vlaneseq
  %v1297 = vshrl.u32 %v1296, 7
  %v1298 = vsub.s32 %v1295, %v1297
  %v1299 = vrot.slane %v1285, %v1298
  %v1300 = vcombine.low %v1235, %v1251
  %v1301 = vcombine.high %v1235, %v1251
  %v1303 = vunpack.c.l.s4 1934713408
  %v1304 = vunpack.c.0.s8 %v1303
  %v1305 = vlaneseq
  %v1306 = vshrl.u32 %v1305, 7
  %v1307 = vsub.s32 %v1304, %v1306
  %v1308 = vrot.slane %v1300, %v1307
  %v1310 = vunpack.c.l.s4 1934713408
  %v1311 = vunpack.c.0.s8 %v1310
  %v1312 = vlaneseq
  %v1313 = vshrl.u32 %v1312, 7
  %v1314 = vsub.s32 %v1311, %v1313
  %v1315 = vrot.slane %v1301, %v1314
  %v1316 = vcombine.low %v1260, %v1276
  %v1317 = vcombine.high %v1260, %v1276
  %v1319 = vunpack.c.l.s4 1934713408
  %v1320 = vunpack.c.0.s8 %v1319
  %v1321 = vlaneseq
  %v1322 = vshrl.u32 %v1321, 7
  %v1323 = vsub.s32 %v1320, %v1322
  %v1324 = vrot.slane %v1316, %v1323
  %v1326 = vunpack.c.l.s4 1934713408
  %v1327 = vunpack.c.0.s8 %v1326
  %v1328 = vlaneseq
  %v1329 = vshrl.u32 %v1328, 7
  %v1330 = vsub.s32 %v1327, %v1329
  %v1331 = vrot.slane %v1317, %v1330
  %v1332 = vcombine.low %v1267, %v1283
  %v1333 = vcombine.high %v1267, %v1283
  %v1335 = vunpack.c.l.s4 1934713408
  %v1336 = vunpack.c.0.s8 %v1335
  %v1337 = vlaneseq
  %v1338 = vshrl.u32 %v1337, 7
  %v1339 = vsub.s32 %v1336, %v1338
  %v1340 = vrot.slane %v1332, %v1339
  %v1342 = vunpack.c.l.s4 1934713408
  %v1343 = vunpack.c.0.s8 %v1342
  %v1344 = vlaneseq
  %v1345 = vshrl.u32 %v1344, 7
  %v1346 = vsub.s32 %v1343, %v1345
  %v1347 = vrot.slane %v1333, %v1346
  %v1348 = vcombine.low %v1292, %v1324
  %v1349 = vcombine.high %v1292, %v1324
  %v1350 = vcombine.low %v1299, %v1331
  %v1351 = vcombine.high %v1299, %v1331
  %v1352 = vcombine.low %v1308, %v1340
  %v1353 = vcombine.high %v1308, %v1340
  %v1354 = vcombine.low %v1315, %v1347
  %v1355 = vcombine.high %v1315, %v1347
  %v1356 = vpack.c.bf16 %v940, %v940
  %v1357 = vpack.c.bf16 %v941, %v941
  %v1358 = vpack.c.bf16 %v942, %v942
  %v1359 = vpack.c.bf16 %v943, %v943
  %v1360 = vpack.c.bf16 %v944, %v944
  %v1361 = vpack.c.bf16 %v945, %v945
  %v1362 = vpack.c.bf16 %v946, %v946
  %v1363 = vpack.c.bf16 %v947, %v947
  %v1364 = vpack.c.bf16 %v1076, %v1076
  %v1365 = vpack.c.bf16 %v1077, %v1077
  %v1366 = vpack.c.bf16 %v1078, %v1078
  %v1367 = vpack.c.bf16 %v1079, %v1079
  %v1368 = vpack.c.bf16 %v1080, %v1080
  %v1369 = vpack.c.bf16 %v1081, %v1081
  %v1370 = vpack.c.bf16 %v1082, %v1082
  %v1371 = vpack.c.bf16 %v1083, %v1083
  %v1372 = vpack.c.bf16 %v1212, %v1212
  %v1373 = vpack.c.bf16 %v1213, %v1213
  %v1374 = vpack.c.bf16 %v1214, %v1214
  %v1375 = vpack.c.bf16 %v1215, %v1215
  %v1376 = vpack.c.bf16 %v1216, %v1216
  %v1377 = vpack.c.bf16 %v1217, %v1217
  %v1378 = vpack.c.bf16 %v1218, %v1218
  %v1379 = vpack.c.bf16 %v1219, %v1219
  %v1380 = vpack.c.bf16 %v1348, %v1348
  %v1381 = vpack.c.bf16 %v1349, %v1349
  %v1382 = vpack.c.bf16 %v1350, %v1350
  %v1383 = vpack.c.bf16 %v1351, %v1351
  %v1384 = vpack.c.bf16 %v1352, %v1352
  %v1385 = vpack.c.bf16 %v1353, %v1353
  %v1386 = vpack.c.bf16 %v1354, %v1354
  %v1387 = vpack.c.bf16 %v1355, %v1355
  %1392 = vrot.lane.b32.xlu0 %v158, 120
  %v1393 = vpop.permute.xlu0 %1392
  %1394 = vrot.lane.b32.xlu0 %v162, 120
  %v1395 = vpop.permute.xlu0 %1394
  %1396 = vrot.lane.b32.xlu0 %v168, 120
  %v1397 = vpop.permute.xlu0 %1396
  %1398 = vrot.lane.b32.xlu0 %v172, 120
  %v1399 = vpop.permute.xlu0 %1398
  %1400 = vrot.lane.b32.xlu0 %v158, 112
  %v1401 = vpop.permute.xlu0 %1400
  %1402 = vrot.lane.b32.xlu0 %v162, 112
  %v1403 = vpop.permute.xlu0 %1402
  %1404 = vrot.lane.b32.xlu0 %v168, 112
  %v1405 = vpop.permute.xlu0 %1404
  %1406 = vrot.lane.b32.xlu0 %v172, 112
  %v1407 = vpop.permute.xlu0 %1406
  %1408 = vrot.lane.b32.xlu0 %v158, 104
  %v1409 = vpop.permute.xlu0 %1408
  %1410 = vrot.lane.b32.xlu0 %v162, 104
  %v1411 = vpop.permute.xlu0 %1410
  %1412 = vrot.lane.b32.xlu0 %v168, 104
  %v1413 = vpop.permute.xlu0 %1412
  %1414 = vrot.lane.b32.xlu0 %v172, 104
  %v1415 = vpop.permute.xlu0 %1414
  %1416 = vrot.lane.b32.xlu0 %v158, 96
  %v1417 = vpop.permute.xlu0 %1416
  %1418 = vrot.lane.b32.xlu0 %v162, 96
  %v1419 = vpop.permute.xlu0 %1418
  %1420 = vrot.lane.b32.xlu0 %v168, 96
  %v1421 = vpop.permute.xlu0 %1420
  %1422 = vrot.lane.b32.xlu0 %v172, 96
  %v1423 = vpop.permute.xlu0 %1422
  %1424 = vrot.lane.b32.xlu0 %v158, 88
  %v1425 = vpop.permute.xlu0 %1424
  %1426 = vrot.lane.b32.xlu0 %v162, 88
  %v1427 = vpop.permute.xlu0 %1426
  %1428 = vrot.lane.b32.xlu0 %v168, 88
  %v1429 = vpop.permute.xlu0 %1428
  %1430 = vrot.lane.b32.xlu0 %v172, 88
  %v1431 = vpop.permute.xlu0 %1430
  %1432 = vrot.lane.b32.xlu0 %v158, 80
  %v1433 = vpop.permute.xlu0 %1432
  %1434 = vrot.lane.b32.xlu0 %v162, 80
  %v1435 = vpop.permute.xlu0 %1434
  %1436 = vrot.lane.b32.xlu0 %v168, 80
  %v1437 = vpop.permute.xlu0 %1436
  %1438 = vrot.lane.b32.xlu0 %v172, 80
  %v1439 = vpop.permute.xlu0 %1438
  %1440 = vrot.lane.b32.xlu0 %v158, 72
  %v1441 = vpop.permute.xlu0 %1440
  %1442 = vrot.lane.b32.xlu0 %v162, 72
  %v1443 = vpop.permute.xlu0 %1442
  %1444 = vrot.lane.b32.xlu0 %v168, 72
  %v1445 = vpop.permute.xlu0 %1444
  %1446 = vrot.lane.b32.xlu0 %v172, 72
  %v1447 = vpop.permute.xlu0 %1446
  %1448 = vrot.lane.b32.xlu0 %v158, 64
  %v1449 = vpop.permute.xlu0 %1448
  %1450 = vrot.lane.b32.xlu0 %v162, 64
  %v1451 = vpop.permute.xlu0 %1450
  %1452 = vrot.lane.b32.xlu0 %v168, 64
  %v1453 = vpop.permute.xlu0 %1452
  %1454 = vrot.lane.b32.xlu0 %v172, 64
  %v1455 = vpop.permute.xlu0 %1454
  %1456 = vrot.lane.b32.xlu0 %v1393, 64
  %v1457 = vpop.permute.xlu0 %1456
  %1458 = vrot.lane.b32.xlu0 %v1395, 64
  %v1459 = vpop.permute.xlu0 %1458
  %1460 = vrot.lane.b32.xlu0 %v1397, 64
  %v1461 = vpop.permute.xlu0 %1460
  %1462 = vrot.lane.b32.xlu0 %v1399, 64
  %v1463 = vpop.permute.xlu0 %1462
  %1464 = vrot.lane.b32.xlu0 %v1401, 64
  %v1465 = vpop.permute.xlu0 %1464
  %1466 = vrot.lane.b32.xlu0 %v1403, 64
  %v1467 = vpop.permute.xlu0 %1466
  %1468 = vrot.lane.b32.xlu0 %v1405, 64
  %v1469 = vpop.permute.xlu0 %1468
  %1470 = vrot.lane.b32.xlu0 %v1407, 64
  %v1471 = vpop.permute.xlu0 %1470
  %1472 = vrot.lane.b32.xlu0 %v1409, 64
  %v1473 = vpop.permute.xlu0 %1472
  %1474 = vrot.lane.b32.xlu0 %v1411, 64
  %v1475 = vpop.permute.xlu0 %1474
  %1476 = vrot.lane.b32.xlu0 %v1413, 64
  %v1477 = vpop.permute.xlu0 %1476
  %1478 = vrot.lane.b32.xlu0 %v1415, 64
  %v1479 = vpop.permute.xlu0 %1478
  %1480 = vrot.lane.b32.xlu0 %v1417, 64
  %v1481 = vpop.permute.xlu0 %1480
  %1482 = vrot.lane.b32.xlu0 %v1419, 64
  %v1483 = vpop.permute.xlu0 %1482
  %1484 = vrot.lane.b32.xlu0 %v1421, 64
  %v1485 = vpop.permute.xlu0 %1484
  %1486 = vrot.lane.b32.xlu0 %v1423, 64
  %v1487 = vpop.permute.xlu0 %1486
  %1488 = vrot.lane.b32.xlu0 %v1425, 64
  %v1489 = vpop.permute.xlu0 %1488
  %1490 = vrot.lane.b32.xlu0 %v1427, 64
  %v1491 = vpop.permute.xlu0 %1490
  %1492 = vrot.lane.b32.xlu0 %v1429, 64
  %v1493 = vpop.permute.xlu0 %1492
  %1494 = vrot.lane.b32.xlu0 %v1431, 64
  %v1495 = vpop.permute.xlu0 %1494
  %1496 = vrot.lane.b32.xlu0 %v1433, 64
  %v1497 = vpop.permute.xlu0 %1496
  %1498 = vrot.lane.b32.xlu0 %v1435, 64
  %v1499 = vpop.permute.xlu0 %1498
  %1500 = vrot.lane.b32.xlu0 %v1437, 64
  %v1501 = vpop.permute.xlu0 %1500
  %1502 = vrot.lane.b32.xlu0 %v1439, 64
  %v1503 = vpop.permute.xlu0 %1502
  %1504 = vrot.lane.b32.xlu0 %v1441, 64
  %v1505 = vpop.permute.xlu0 %1504
  %1506 = vrot.lane.b32.xlu0 %v1443, 64
  %v1507 = vpop.permute.xlu0 %1506
  %1508 = vrot.lane.b32.xlu0 %v1445, 64
  %v1509 = vpop.permute.xlu0 %1508
  %1510 = vrot.lane.b32.xlu0 %v1447, 64
  %v1511 = vpop.permute.xlu0 %1510
  %v1544 = vcombine.low %v1449, %v1465
  %v1545 = vcombine.high %v1449, %v1465
  %v1547 = vunpack.c.l.s4 1983009808
  %v1548 = vunpack.c.0.s8 %v1547
  %v1549 = vlaneseq
  %v1550 = vshrl.u32 %v1549, 7
  %v1551 = vsub.s32 %v1548, %v1550
  %v1552 = vrot.slane %v1544, %v1551
  %v1554 = vunpack.c.l.s4 1983009808
  %v1555 = vunpack.c.0.s8 %v1554
  %v1556 = vlaneseq
  %v1557 = vshrl.u32 %v1556, 7
  %v1558 = vsub.s32 %v1555, %v1557
  %v1559 = vrot.slane %v1545, %v1558
  %v1560 = vcombine.low %v1457, %v1473
  %v1561 = vcombine.high %v1457, %v1473
  %v1563 = vunpack.c.l.s4 1983009808
  %v1564 = vunpack.c.0.s8 %v1563
  %v1565 = vlaneseq
  %v1566 = vshrl.u32 %v1565, 7
  %v1567 = vsub.s32 %v1564, %v1566
  %v1568 = vrot.slane %v1560, %v1567
  %v1570 = vunpack.c.l.s4 1983009808
  %v1571 = vunpack.c.0.s8 %v1570
  %v1572 = vlaneseq
  %v1573 = vshrl.u32 %v1572, 7
  %v1574 = vsub.s32 %v1571, %v1573
  %v1575 = vrot.slane %v1561, %v1574
  %v1576 = vcombine.low %v1481, %v1497
  %v1577 = vcombine.high %v1481, %v1497
  %v1579 = vunpack.c.l.s4 1983009808
  %v1580 = vunpack.c.0.s8 %v1579
  %v1581 = vlaneseq
  %v1582 = vshrl.u32 %v1581, 7
  %v1583 = vsub.s32 %v1580, %v1582
  %v1584 = vrot.slane %v1576, %v1583
  %v1586 = vunpack.c.l.s4 1983009808
  %v1587 = vunpack.c.0.s8 %v1586
  %v1588 = vlaneseq
  %v1589 = vshrl.u32 %v1588, 7
  %v1590 = vsub.s32 %v1587, %v1589
  %v1591 = vrot.slane %v1577, %v1590
  %v1592 = vcombine.low %v1489, %v1505
  %v1593 = vcombine.high %v1489, %v1505
  %v1595 = vunpack.c.l.s4 1983009808
  %v1596 = vunpack.c.0.s8 %v1595
  %v1597 = vlaneseq
  %v1598 = vshrl.u32 %v1597, 7
  %v1599 = vsub.s32 %v1596, %v1598
  %v1600 = vrot.slane %v1592, %v1599
  %v1602 = vunpack.c.l.s4 1983009808
  %v1603 = vunpack.c.0.s8 %v1602
  %v1604 = vlaneseq
  %v1605 = vshrl.u32 %v1604, 7
  %v1606 = vsub.s32 %v1603, %v1605
  %v1607 = vrot.slane %v1593, %v1606
  %v1608 = vcombine.low %v1552, %v1568
  %v1609 = vcombine.high %v1552, %v1568
  %v1611 = vunpack.c.l.s4 1934713408
  %v1612 = vunpack.c.0.s8 %v1611
  %v1613 = vlaneseq
  %v1614 = vshrl.u32 %v1613, 7
  %v1615 = vsub.s32 %v1612, %v1614
  %v1616 = vrot.slane %v1608, %v1615
  %v1618 = vunpack.c.l.s4 1934713408
  %v1619 = vunpack.c.0.s8 %v1618
  %v1620 = vlaneseq
  %v1621 = vshrl.u32 %v1620, 7
  %v1622 = vsub.s32 %v1619, %v1621
  %v1623 = vrot.slane %v1609, %v1622
  %v1624 = vcombine.low %v1559, %v1575
  %v1625 = vcombine.high %v1559, %v1575
  %v1627 = vunpack.c.l.s4 1934713408
  %v1628 = vunpack.c.0.s8 %v1627
  %v1629 = vlaneseq
  %v1630 = vshrl.u32 %v1629, 7
  %v1631 = vsub.s32 %v1628, %v1630
  %v1632 = vrot.slane %v1624, %v1631
  %v1634 = vunpack.c.l.s4 1934713408
  %v1635 = vunpack.c.0.s8 %v1634
  %v1636 = vlaneseq
  %v1637 = vshrl.u32 %v1636, 7
  %v1638 = vsub.s32 %v1635, %v1637
  %v1639 = vrot.slane %v1625, %v1638
  %v1640 = vcombine.low %v1584, %v1600
  %v1641 = vcombine.high %v1584, %v1600
  %v1643 = vunpack.c.l.s4 1934713408
  %v1644 = vunpack.c.0.s8 %v1643
  %v1645 = vlaneseq
  %v1646 = vshrl.u32 %v1645, 7
  %v1647 = vsub.s32 %v1644, %v1646
  %v1648 = vrot.slane %v1640, %v1647
  %v1650 = vunpack.c.l.s4 1934713408
  %v1651 = vunpack.c.0.s8 %v1650
  %v1652 = vlaneseq
  %v1653 = vshrl.u32 %v1652, 7
  %v1654 = vsub.s32 %v1651, %v1653
  %v1655 = vrot.slane %v1641, %v1654
  %v1656 = vcombine.low %v1591, %v1607
  %v1657 = vcombine.high %v1591, %v1607
  %v1659 = vunpack.c.l.s4 1934713408
  %v1660 = vunpack.c.0.s8 %v1659
  %v1661 = vlaneseq
  %v1662 = vshrl.u32 %v1661, 7
  %v1663 = vsub.s32 %v1660, %v1662
  %v1664 = vrot.slane %v1656, %v1663
  %v1666 = vunpack.c.l.s4 1934713408
  %v1667 = vunpack.c.0.s8 %v1666
  %v1668 = vlaneseq
  %v1669 = vshrl.u32 %v1668, 7
  %v1670 = vsub.s32 %v1667, %v1669
  %v1671 = vrot.slane %v1657, %v1670
  %v1672 = vcombine.low %v1616, %v1648
  %v1673 = vcombine.high %v1616, %v1648
  %v1674 = vcombine.low %v1623, %v1655
  %v1675 = vcombine.high %v1623, %v1655
  %v1676 = vcombine.low %v1632, %v1664
  %v1677 = vcombine.high %v1632, %v1664
  %v1678 = vcombine.low %v1639, %v1671
  %v1679 = vcombine.high %v1639, %v1671
  %v1680 = vcombine.low %v1451, %v1467
  %v1681 = vcombine.high %v1451, %v1467
  %v1683 = vunpack.c.l.s4 1983009808
  %v1684 = vunpack.c.0.s8 %v1683
  %v1685 = vlaneseq
  %v1686 = vshrl.u32 %v1685, 7
  %v1687 = vsub.s32 %v1684, %v1686
  %v1688 = vrot.slane %v1680, %v1687
  %v1690 = vunpack.c.l.s4 1983009808
  %v1691 = vunpack.c.0.s8 %v1690
  %v1692 = vlaneseq
  %v1693 = vshrl.u32 %v1692, 7
  %v1694 = vsub.s32 %v1691, %v1693
  %v1695 = vrot.slane %v1681, %v1694
  %v1696 = vcombine.low %v1459, %v1475
  %v1697 = vcombine.high %v1459, %v1475
  %v1699 = vunpack.c.l.s4 1983009808
  %v1700 = vunpack.c.0.s8 %v1699
  %v1701 = vlaneseq
  %v1702 = vshrl.u32 %v1701, 7
  %v1703 = vsub.s32 %v1700, %v1702
  %v1704 = vrot.slane %v1696, %v1703
  %v1706 = vunpack.c.l.s4 1983009808
  %v1707 = vunpack.c.0.s8 %v1706
  %v1708 = vlaneseq
  %v1709 = vshrl.u32 %v1708, 7
  %v1710 = vsub.s32 %v1707, %v1709
  %v1711 = vrot.slane %v1697, %v1710
  %v1712 = vcombine.low %v1483, %v1499
  %v1713 = vcombine.high %v1483, %v1499
  %v1715 = vunpack.c.l.s4 1983009808
  %v1716 = vunpack.c.0.s8 %v1715
  %v1717 = vlaneseq
  %v1718 = vshrl.u32 %v1717, 7
  %v1719 = vsub.s32 %v1716, %v1718
  %v1720 = vrot.slane %v1712, %v1719
  %v1722 = vunpack.c.l.s4 1983009808
  %v1723 = vunpack.c.0.s8 %v1722
  %v1724 = vlaneseq
  %v1725 = vshrl.u32 %v1724, 7
  %v1726 = vsub.s32 %v1723, %v1725
  %v1727 = vrot.slane %v1713, %v1726
  %v1728 = vcombine.low %v1491, %v1507
  %v1729 = vcombine.high %v1491, %v1507
  %v1731 = vunpack.c.l.s4 1983009808
  %v1732 = vunpack.c.0.s8 %v1731
  %v1733 = vlaneseq
  %v1734 = vshrl.u32 %v1733, 7
  %v1735 = vsub.s32 %v1732, %v1734
  %v1736 = vrot.slane %v1728, %v1735
  %v1738 = vunpack.c.l.s4 1983009808
  %v1739 = vunpack.c.0.s8 %v1738
  %v1740 = vlaneseq
  %v1741 = vshrl.u32 %v1740, 7
  %v1742 = vsub.s32 %v1739, %v1741
  %v1743 = vrot.slane %v1729, %v1742
  %v1744 = vcombine.low %v1688, %v1704
  %v1745 = vcombine.high %v1688, %v1704
  %v1747 = vunpack.c.l.s4 1934713408
  %v1748 = vunpack.c.0.s8 %v1747
  %v1749 = vlaneseq
  %v1750 = vshrl.u32 %v1749, 7
  %v1751 = vsub.s32 %v1748, %v1750
  %v1752 = vrot.slane %v1744, %v1751
  %v1754 = vunpack.c.l.s4 1934713408
  %v1755 = vunpack.c.0.s8 %v1754
  %v1756 = vlaneseq
  %v1757 = vshrl.u32 %v1756, 7
  %v1758 = vsub.s32 %v1755, %v1757
  %v1759 = vrot.slane %v1745, %v1758
  %v1760 = vcombine.low %v1695, %v1711
  %v1761 = vcombine.high %v1695, %v1711
  %v1763 = vunpack.c.l.s4 1934713408
  %v1764 = vunpack.c.0.s8 %v1763
  %v1765 = vlaneseq
  %v1766 = vshrl.u32 %v1765, 7
  %v1767 = vsub.s32 %v1764, %v1766
  %v1768 = vrot.slane %v1760, %v1767
  %v1770 = vunpack.c.l.s4 1934713408
  %v1771 = vunpack.c.0.s8 %v1770
  %v1772 = vlaneseq
  %v1773 = vshrl.u32 %v1772, 7
  %v1774 = vsub.s32 %v1771, %v1773
  %v1775 = vrot.slane %v1761, %v1774
  %v1776 = vcombine.low %v1720, %v1736
  %v1777 = vcombine.high %v1720, %v1736
  %v1779 = vunpack.c.l.s4 1934713408
  %v1780 = vunpack.c.0.s8 %v1779
  %v1781 = vlaneseq
  %v1782 = vshrl.u32 %v1781, 7
  %v1783 = vsub.s32 %v1780, %v1782
  %v1784 = vrot.slane %v1776, %v1783
  %v1786 = vunpack.c.l.s4 1934713408
  %v1787 = vunpack.c.0.s8 %v1786
  %v1788 = vlaneseq
  %v1789 = vshrl.u32 %v1788, 7
  %v1790 = vsub.s32 %v1787, %v1789
  %v1791 = vrot.slane %v1777, %v1790
  %v1792 = vcombine.low %v1727, %v1743
  %v1793 = vcombine.high %v1727, %v1743
  %v1795 = vunpack.c.l.s4 1934713408
  %v1796 = vunpack.c.0.s8 %v1795
  %v1797 = vlaneseq
  %v1798 = vshrl.u32 %v1797, 7
  %v1799 = vsub.s32 %v1796, %v1798
  %v1800 = vrot.slane %v1792, %v1799
  %v1802 = vunpack.c.l.s4 1934713408
  %v1803 = vunpack.c.0.s8 %v1802
  %v1804 = vlaneseq
  %v1805 = vshrl.u32 %v1804, 7
  %v1806 = vsub.s32 %v1803, %v1805
  %v1807 = vrot.slane %v1793, %v1806
  %v1808 = vcombine.low %v1752, %v1784
  %v1809 = vcombine.high %v1752, %v1784
  %v1810 = vcombine.low %v1759, %v1791
  %v1811 = vcombine.high %v1759, %v1791
  %v1812 = vcombine.low %v1768, %v1800
  %v1813 = vcombine.high %v1768, %v1800
  %v1814 = vcombine.low %v1775, %v1807
  %v1815 = vcombine.high %v1775, %v1807
  %v1816 = vcombine.low %v1453, %v1469
  %v1817 = vcombine.high %v1453, %v1469
  %v1819 = vunpack.c.l.s4 1983009808
  %v1820 = vunpack.c.0.s8 %v1819
  %v1821 = vlaneseq
  %v1822 = vshrl.u32 %v1821, 7
  %v1823 = vsub.s32 %v1820, %v1822
  %v1824 = vrot.slane %v1816, %v1823
  %v1826 = vunpack.c.l.s4 1983009808
  %v1827 = vunpack.c.0.s8 %v1826
  %v1828 = vlaneseq
  %v1829 = vshrl.u32 %v1828, 7
  %v1830 = vsub.s32 %v1827, %v1829
  %v1831 = vrot.slane %v1817, %v1830
  %v1832 = vcombine.low %v1461, %v1477
  %v1833 = vcombine.high %v1461, %v1477
  %v1835 = vunpack.c.l.s4 1983009808
  %v1836 = vunpack.c.0.s8 %v1835
  %v1837 = vlaneseq
  %v1838 = vshrl.u32 %v1837, 7
  %v1839 = vsub.s32 %v1836, %v1838
  %v1840 = vrot.slane %v1832, %v1839
  %v1842 = vunpack.c.l.s4 1983009808
  %v1843 = vunpack.c.0.s8 %v1842
  %v1844 = vlaneseq
  %v1845 = vshrl.u32 %v1844, 7
  %v1846 = vsub.s32 %v1843, %v1845
  %v1847 = vrot.slane %v1833, %v1846
  %v1848 = vcombine.low %v1485, %v1501
  %v1849 = vcombine.high %v1485, %v1501
  %v1851 = vunpack.c.l.s4 1983009808
  %v1852 = vunpack.c.0.s8 %v1851
  %v1853 = vlaneseq
  %v1854 = vshrl.u32 %v1853, 7
  %v1855 = vsub.s32 %v1852, %v1854
  %v1856 = vrot.slane %v1848, %v1855
  %v1858 = vunpack.c.l.s4 1983009808
  %v1859 = vunpack.c.0.s8 %v1858
  %v1860 = vlaneseq
  %v1861 = vshrl.u32 %v1860, 7
  %v1862 = vsub.s32 %v1859, %v1861
  %v1863 = vrot.slane %v1849, %v1862
  %v1864 = vcombine.low %v1493, %v1509
  %v1865 = vcombine.high %v1493, %v1509
  %v1867 = vunpack.c.l.s4 1983009808
  %v1868 = vunpack.c.0.s8 %v1867
  %v1869 = vlaneseq
  %v1870 = vshrl.u32 %v1869, 7
  %v1871 = vsub.s32 %v1868, %v1870
  %v1872 = vrot.slane %v1864, %v1871
  %v1874 = vunpack.c.l.s4 1983009808
  %v1875 = vunpack.c.0.s8 %v1874
  %v1876 = vlaneseq
  %v1877 = vshrl.u32 %v1876, 7
  %v1878 = vsub.s32 %v1875, %v1877
  %v1879 = vrot.slane %v1865, %v1878
  %v1880 = vcombine.low %v1824, %v1840
  %v1881 = vcombine.high %v1824, %v1840
  %v1883 = vunpack.c.l.s4 1934713408
  %v1884 = vunpack.c.0.s8 %v1883
  %v1885 = vlaneseq
  %v1886 = vshrl.u32 %v1885, 7
  %v1887 = vsub.s32 %v1884, %v1886
  %v1888 = vrot.slane %v1880, %v1887
  %v1890 = vunpack.c.l.s4 1934713408
  %v1891 = vunpack.c.0.s8 %v1890
  %v1892 = vlaneseq
  %v1893 = vshrl.u32 %v1892, 7
  %v1894 = vsub.s32 %v1891, %v1893
  %v1895 = vrot.slane %v1881, %v1894
  %v1896 = vcombine.low %v1831, %v1847
  %v1897 = vcombine.high %v1831, %v1847
  %v1899 = vunpack.c.l.s4 1934713408
  %v1900 = vunpack.c.0.s8 %v1899
  %v1901 = vlaneseq
  %v1902 = vshrl.u32 %v1901, 7
  %v1903 = vsub.s32 %v1900, %v1902
  %v1904 = vrot.slane %v1896, %v1903
  %v1906 = vunpack.c.l.s4 1934713408
  %v1907 = vunpack.c.0.s8 %v1906
  %v1908 = vlaneseq
  %v1909 = vshrl.u32 %v1908, 7
  %v1910 = vsub.s32 %v1907, %v1909
  %v1911 = vrot.slane %v1897, %v1910
  %v1912 = vcombine.low %v1856, %v1872
  %v1913 = vcombine.high %v1856, %v1872
  %v1915 = vunpack.c.l.s4 1934713408
  %v1916 = vunpack.c.0.s8 %v1915
  %v1917 = vlaneseq
  %v1918 = vshrl.u32 %v1917, 7
  %v1919 = vsub.s32 %v1916, %v1918
  %v1920 = vrot.slane %v1912, %v1919
  %v1922 = vunpack.c.l.s4 1934713408
  %v1923 = vunpack.c.0.s8 %v1922
  %v1924 = vlaneseq
  %v1925 = vshrl.u32 %v1924, 7
  %v1926 = vsub.s32 %v1923, %v1925
  %v1927 = vrot.slane %v1913, %v1926
  %v1928 = vcombine.low %v1863, %v1879
  %v1929 = vcombine.high %v1863, %v1879
  %v1931 = vunpack.c.l.s4 1934713408
  %v1932 = vunpack.c.0.s8 %v1931
  %v1933 = vlaneseq
  %v1934 = vshrl.u32 %v1933, 7
  %v1935 = vsub.s32 %v1932, %v1934
  %v1936 = vrot.slane %v1928, %v1935
  %v1938 = vunpack.c.l.s4 1934713408
  %v1939 = vunpack.c.0.s8 %v1938
  %v1940 = vlaneseq
  %v1941 = vshrl.u32 %v1940, 7
  %v1942 = vsub.s32 %v1939, %v1941
  %v1943 = vrot.slane %v1929, %v1942
  %v1944 = vcombine.low %v1888, %v1920
  %v1945 = vcombine.high %v1888, %v1920
  %v1946 = vcombine.low %v1895, %v1927
  %v1947 = vcombine.high %v1895, %v1927
  %v1948 = vcombine.low %v1904, %v1936
  %v1949 = vcombine.high %v1904, %v1936
  %v1950 = vcombine.low %v1911, %v1943
  %v1951 = vcombine.high %v1911, %v1943
  %v1952 = vcombine.low %v1455, %v1471
  %v1953 = vcombine.high %v1455, %v1471
  %v1955 = vunpack.c.l.s4 1983009808
  %v1956 = vunpack.c.0.s8 %v1955
  %v1957 = vlaneseq
  %v1958 = vshrl.u32 %v1957, 7
  %v1959 = vsub.s32 %v1956, %v1958
  %v1960 = vrot.slane %v1952, %v1959
  %v1962 = vunpack.c.l.s4 1983009808
  %v1963 = vunpack.c.0.s8 %v1962
  %v1964 = vlaneseq
  %v1965 = vshrl.u32 %v1964, 7
  %v1966 = vsub.s32 %v1963, %v1965
  %v1967 = vrot.slane %v1953, %v1966
  %v1968 = vcombine.low %v1463, %v1479
  %v1969 = vcombine.high %v1463, %v1479
  %v1971 = vunpack.c.l.s4 1983009808
  %v1972 = vunpack.c.0.s8 %v1971
  %v1973 = vlaneseq
  %v1974 = vshrl.u32 %v1973, 7
  %v1975 = vsub.s32 %v1972, %v1974
  %v1976 = vrot.slane %v1968, %v1975
  %v1978 = vunpack.c.l.s4 1983009808
  %v1979 = vunpack.c.0.s8 %v1978
  %v1980 = vlaneseq
  %v1981 = vshrl.u32 %v1980, 7
  %v1982 = vsub.s32 %v1979, %v1981
  %v1983 = vrot.slane %v1969, %v1982
  %v1984 = vcombine.low %v1487, %v1503
  %v1985 = vcombine.high %v1487, %v1503
  %v1987 = vunpack.c.l.s4 1983009808
  %v1988 = vunpack.c.0.s8 %v1987
  %v1989 = vlaneseq
  %v1990 = vshrl.u32 %v1989, 7
  %v1991 = vsub.s32 %v1988, %v1990
  %v1992 = vrot.slane %v1984, %v1991
  %v1994 = vunpack.c.l.s4 1983009808
  %v1995 = vunpack.c.0.s8 %v1994
  %v1996 = vlaneseq
  %v1997 = vshrl.u32 %v1996, 7
  %v1998 = vsub.s32 %v1995, %v1997
  %v1999 = vrot.slane %v1985, %v1998
  %v2000 = vcombine.low %v1495, %v1511
  %v2001 = vcombine.high %v1495, %v1511
  %v2003 = vunpack.c.l.s4 1983009808
  %v2004 = vunpack.c.0.s8 %v2003
  %v2005 = vlaneseq
  %v2006 = vshrl.u32 %v2005, 7
  %v2007 = vsub.s32 %v2004, %v2006
  %v2008 = vrot.slane %v2000, %v2007
  %v2010 = vunpack.c.l.s4 1983009808
  %v2011 = vunpack.c.0.s8 %v2010
  %v2012 = vlaneseq
  %v2013 = vshrl.u32 %v2012, 7
  %v2014 = vsub.s32 %v2011, %v2013
  %v2015 = vrot.slane %v2001, %v2014
  %v2016 = vcombine.low %v1960, %v1976
  %v2017 = vcombine.high %v1960, %v1976
  %v2019 = vunpack.c.l.s4 1934713408
  %v2020 = vunpack.c.0.s8 %v2019
  %v2021 = vlaneseq
  %v2022 = vshrl.u32 %v2021, 7
  %v2023 = vsub.s32 %v2020, %v2022
  %v2024 = vrot.slane %v2016, %v2023
  %v2026 = vunpack.c.l.s4 1934713408
  %v2027 = vunpack.c.0.s8 %v2026
  %v2028 = vlaneseq
  %v2029 = vshrl.u32 %v2028, 7
  %v2030 = vsub.s32 %v2027, %v2029
  %v2031 = vrot.slane %v2017, %v2030
  %v2032 = vcombine.low %v1967, %v1983
  %v2033 = vcombine.high %v1967, %v1983
  %v2035 = vunpack.c.l.s4 1934713408
  %v2036 = vunpack.c.0.s8 %v2035
  %v2037 = vlaneseq
  %v2038 = vshrl.u32 %v2037, 7
  %v2039 = vsub.s32 %v2036, %v2038
  %v2040 = vrot.slane %v2032, %v2039
  %v2042 = vunpack.c.l.s4 1934713408
  %v2043 = vunpack.c.0.s8 %v2042
  %v2044 = vlaneseq
  %v2045 = vshrl.u32 %v2044, 7
  %v2046 = vsub.s32 %v2043, %v2045
  %v2047 = vrot.slane %v2033, %v2046
  %v2048 = vcombine.low %v1992, %v2008
  %v2049 = vcombine.high %v1992, %v2008
  %v2051 = vunpack.c.l.s4 1934713408
  %v2052 = vunpack.c.0.s8 %v2051
  %v2053 = vlaneseq
  %v2054 = vshrl.u32 %v2053, 7
  %v2055 = vsub.s32 %v2052, %v2054
  %v2056 = vrot.slane %v2048, %v2055
  %v2058 = vunpack.c.l.s4 1934713408
  %v2059 = vunpack.c.0.s8 %v2058
  %v2060 = vlaneseq
  %v2061 = vshrl.u32 %v2060, 7
  %v2062 = vsub.s32 %v2059, %v2061
  %v2063 = vrot.slane %v2049, %v2062
  %v2064 = vcombine.low %v1999, %v2015
  %v2065 = vcombine.high %v1999, %v2015
  %v2067 = vunpack.c.l.s4 1934713408
  %v2068 = vunpack.c.0.s8 %v2067
  %v2069 = vlaneseq
  %v2070 = vshrl.u32 %v2069, 7
  %v2071 = vsub.s32 %v2068, %v2070
  %v2072 = vrot.slane %v2064, %v2071
  %v2074 = vunpack.c.l.s4 1934713408
  %v2075 = vunpack.c.0.s8 %v2074
  %v2076 = vlaneseq
  %v2077 = vshrl.u32 %v2076, 7
  %v2078 = vsub.s32 %v2075, %v2077
  %v2079 = vrot.slane %v2065, %v2078
  %v2080 = vcombine.low %v2024, %v2056
  %v2081 = vcombine.high %v2024, %v2056
  %v2082 = vcombine.low %v2031, %v2063
  %v2083 = vcombine.high %v2031, %v2063
  %v2084 = vcombine.low %v2040, %v2072
  %v2085 = vcombine.high %v2040, %v2072
  %v2086 = vcombine.low %v2047, %v2079
  %v2087 = vcombine.high %v2047, %v2079
  %2088 = vxpose.xlu0.b32.start [1/16] %v1672, 128
  %2089 = vxpose.xlu0.b32.cont [2/16] 0.0, 128
  %2090 = vxpose.xlu0.b32.cont [3/16] 0.0, 128
  %2091 = vxpose.xlu0.b32.cont [4/16] 0.0, 128
  %2092 = vxpose.xlu0.b32.cont [5/16] 0.0, 128
  %2093 = vxpose.xlu0.b32.cont [6/16] 0.0, 128
  %2094 = vxpose.xlu0.b32.cont [7/16] 0.0, 128
  %2095 = vxpose.xlu0.b32.cont [8/16] 0.0, 128
  %2096 = vxpose.xlu0.b32.cont [9/16] 0.0, 128
  %2097 = vxpose.xlu0.b32.cont [10/16] 0.0, 128
  %2098 = vxpose.xlu0.b32.cont [11/16] 0.0, 128
  %2099 = vxpose.xlu0.b32.cont [12/16] 0.0, 128
  %2100 = vxpose.xlu0.b32.cont [13/16] 0.0, 128
  %2101 = vxpose.xlu0.b32.cont [14/16] 0.0, 128
  %2102 = vxpose.xlu0.b32.cont [15/16] 0.0, 128
  %2103 = vxpose.xlu0.b32.end [16/16] 0.0, 128
  %v2104 = vpop.trf.xlu0
  %v2105 = vpop.trf.xlu0
  %v2106 = vpop.trf.xlu0
  %v2107 = vpop.trf.xlu0
  %v2108 = vpop.trf.xlu0
  %v2109 = vpop.trf.xlu0
  %v2110 = vpop.trf.xlu0
  %v2111 = vpop.trf.xlu0
  %v2112 = vpop.trf.xlu0
  %v2113 = vpop.trf.xlu0
  %v2114 = vpop.trf.xlu0
  %v2115 = vpop.trf.xlu0
  %v2116 = vpop.trf.xlu0
  %v2117 = vpop.trf.xlu0
  %v2118 = vpop.trf.xlu0
  %v2119 = vpop.trf.xlu0
  %2120 = vxpose.xlu0.b32.start [1/16] %v1673, 128
  %2121 = vxpose.xlu0.b32.cont [2/16] 0.0, 128
  %2122 = vxpose.xlu0.b32.cont [3/16] 0.0, 128
  %2123 = vxpose.xlu0.b32.cont [4/16] 0.0, 128
  %2124 = vxpose.xlu0.b32.cont [5/16] 0.0, 128
  %2125 = vxpose.xlu0.b32.cont [6/16] 0.0, 128
  %2126 = vxpose.xlu0.b32.cont [7/16] 0.0, 128
  %2127 = vxpose.xlu0.b32.cont [8/16] 0.0, 128
  %2128 = vxpose.xlu0.b32.cont [9/16] 0.0, 128
  %2129 = vxpose.xlu0.b32.cont [10/16] 0.0, 128
  %2130 = vxpose.xlu0.b32.cont [11/16] 0.0, 128
  %2131 = vxpose.xlu0.b32.cont [12/16] 0.0, 128
  %2132 = vxpose.xlu0.b32.cont [13/16] 0.0, 128
  %2133 = vxpose.xlu0.b32.cont [14/16] 0.0, 128
  %2134 = vxpose.xlu0.b32.cont [15/16] 0.0, 128
  %2135 = vxpose.xlu0.b32.end [16/16] 0.0, 128
  %v2136 = vpop.trf.xlu0
  %v2137 = vpop.trf.xlu0
  %v2138 = vpop.trf.xlu0
  %v2139 = vpop.trf.xlu0
  %v2140 = vpop.trf.xlu0
  %v2141 = vpop.trf.xlu0
  %v2142 = vpop.trf.xlu0
  %v2143 = vpop.trf.xlu0
  %v2144 = vpop.trf.xlu0
  %v2145 = vpop.trf.xlu0
  %v2146 = vpop.trf.xlu0
  %v2147 = vpop.trf.xlu0
  %v2148 = vpop.trf.xlu0
  %v2149 = vpop.trf.xlu0
  %v2150 = vpop.trf.xlu0
  %v2151 = vpop.trf.xlu0
  %2152 = vxpose.xlu0.b32.start [1/16] %v1674, 128
  %2153 = vxpose.xlu0.b32.cont [2/16] 0.0, 128
  %2154 = vxpose.xlu0.b32.cont [3/16] 0.0, 128
  %2155 = vxpose.xlu0.b32.cont [4/16] 0.0, 128
  %2156 = vxpose.xlu0.b32.cont [5/16] 0.0, 128
  %2157 = vxpose.xlu0.b32.cont [6/16] 0.0, 128
  %2158 = vxpose.xlu0.b32.cont [7/16] 0.0, 128
  %2159 = vxpose.xlu0.b32.cont [8/16] 0.0, 128
  %2160 = vxpose.xlu0.b32.cont [9/16] 0.0, 128
  %2161 = vxpose.xlu0.b32.cont [10/16] 0.0, 128
  %2162 = vxpose.xlu0.b32.cont [11/16] 0.0, 128
  %2163 = vxpose.xlu0.b32.cont [12/16] 0.0, 128
  %2164 = vxpose.xlu0.b32.cont [13/16] 0.0, 128
  %2165 = vxpose.xlu0.b32.cont [14/16] 0.0, 128
  %2166 = vxpose.xlu0.b32.cont [15/16] 0.0, 128
  %2167 = vxpose.xlu0.b32.end [16/16] 0.0, 128
  %v2168 = vpop.trf.xlu0
  %v2169 = vpop.trf.xlu0
  %v2170 = vpop.trf.xlu0
  %v2171 = vpop.trf.xlu0
  %v2172 = vpop.trf.xlu0
  %v2173 = vpop.trf.xlu0
  %v2174 = vpop.trf.xlu0
  %v2175 = vpop.trf.xlu0
  %v2176 = vpop.trf.xlu0
  %v2177 = vpop.trf.xlu0
  %v2178 = vpop.trf.xlu0
  %v2179 = vpop.trf.xlu0
  %v2180 = vpop.trf.xlu0
  %v2181 = vpop.trf.xlu0
  %v2182 = vpop.trf.xlu0
  %v2183 = vpop.trf.xlu0
  %2184 = vxpose.xlu0.b32.start [1/16] %v1675, 128
  %2185 = vxpose.xlu0.b32.cont [2/16] 0.0, 128
  %2186 = vxpose.xlu0.b32.cont [3/16] 0.0, 128
  %2187 = vxpose.xlu0.b32.cont [4/16] 0.0, 128
  %2188 = vxpose.xlu0.b32.cont [5/16] 0.0, 128
  %2189 = vxpose.xlu0.b32.cont [6/16] 0.0, 128
  %2190 = vxpose.xlu0.b32.cont [7/16] 0.0, 128
  %2191 = vxpose.xlu0.b32.cont [8/16] 0.0, 128
  %2192 = vxpose.xlu0.b32.cont [9/16] 0.0, 128
  %2193 = vxpose.xlu0.b32.cont [10/16] 0.0, 128
  %2194 = vxpose.xlu0.b32.cont [11/16] 0.0, 128
  %2195 = vxpose.xlu0.b32.cont [12/16] 0.0, 128
  %2196 = vxpose.xlu0.b32.cont [13/16] 0.0, 128
  %2197 = vxpose.xlu0.b32.cont [14/16] 0.0, 128
  %2198 = vxpose.xlu0.b32.cont [15/16] 0.0, 128
  %2199 = vxpose.xlu0.b32.end [16/16] 0.0, 128
  %v2200 = vpop.trf.xlu0
  %v2201 = vpop.trf.xlu0
  %v2202 = vpop.trf.xlu0
  %v2203 = vpop.trf.xlu0
  %v2204 = vpop.trf.xlu0
  %v2205 = vpop.trf.xlu0
  %v2206 = vpop.trf.xlu0
  %v2207 = vpop.trf.xlu0
  %v2208 = vpop.trf.xlu0
  %v2209 = vpop.trf.xlu0
  %v2210 = vpop.trf.xlu0
  %v2211 = vpop.trf.xlu0
  %v2212 = vpop.trf.xlu0
  %v2213 = vpop.trf.xlu0
  %v2214 = vpop.trf.xlu0
  %v2215 = vpop.trf.xlu0
  %2216 = vxpose.xlu0.b32.start [1/16] %v1676, 128
  %2217 = vxpose.xlu0.b32.cont [2/16] 0.0, 128
  %2218 = vxpose.xlu0.b32.cont [3/16] 0.0, 128
  %2219 = vxpose.xlu0.b32.cont [4/16] 0.0, 128
  %2220 = vxpose.xlu0.b32.cont [5/16] 0.0, 128
  %2221 = vxpose.xlu0.b32.cont [6/16] 0.0, 128
  %2222 = vxpose.xlu0.b32.cont [7/16] 0.0, 128
  %2223 = vxpose.xlu0.b32.cont [8/16] 0.0, 128
  %2224 = vxpose.xlu0.b32.cont [9/16] 0.0, 128
  %2225 = vxpose.xlu0.b32.cont [10/16] 0.0, 128
  %2226 = vxpose.xlu0.b32.cont [11/16] 0.0, 128
  %2227 = vxpose.xlu0.b32.cont [12/16] 0.0, 128
  %2228 = vxpose.xlu0.b32.cont [13/16] 0.0, 128
  %2229 = vxpose.xlu0.b32.cont [14/16] 0.0, 128
  %2230 = vxpose.xlu0.b32.cont [15/16] 0.0, 128
  %2231 = vxpose.xlu0.b32.end [16/16] 0.0, 128
  %v2232 = vpop.trf.xlu0
  %v2233 = vpop.trf.xlu0
  %v2234 = vpop.trf.xlu0
  %v2235 = vpop.trf.xlu0
  %v2236 = vpop.trf.xlu0
  %v2237 = vpop.trf.xlu0
  %v2238 = vpop.trf.xlu0
  %v2239 = vpop.trf.xlu0
  %v2240 = vpop.trf.xlu0
  %v2241 = vpop.trf.xlu0
  %v2242 = vpop.trf.xlu0
  %v2243 = vpop.trf.xlu0
  %v2244 = vpop.trf.xlu0
  %v2245 = vpop.trf.xlu0
  %v2246 = vpop.trf.xlu0
  %v2247 = vpop.trf.xlu0
  %2248 = vxpose.xlu0.b32.start [1/16] %v1677, 128
  %2249 = vxpose.xlu0.b32.cont [2/16] 0.0, 128
  %2250 = vxpose.xlu0.b32.cont [3/16] 0.0, 128
  %2251 = vxpose.xlu0.b32.cont [4/16] 0.0, 128
  %2252 = vxpose.xlu0.b32.cont [5/16] 0.0, 128
  %2253 = vxpose.xlu0.b32.cont [6/16] 0.0, 128
  %2254 = vxpose.xlu0.b32.cont [7/16] 0.0, 128
  %2255 = vxpose.xlu0.b32.cont [8/16] 0.0, 128
  %2256 = vxpose.xlu0.b32.cont [9/16] 0.0, 128
  %2257 = vxpose.xlu0.b32.cont [10/16] 0.0, 128
  %2258 = vxpose.xlu0.b32.cont [11/16] 0.0, 128
  %2259 = vxpose.xlu0.b32.cont [12/16] 0.0, 128
  %2260 = vxpose.xlu0.b32.cont [13/16] 0.0, 128
  %2261 = vxpose.xlu0.b32.cont [14/16] 0.0, 128
  %2262 = vxpose.xlu0.b32.cont [15/16] 0.0, 128
  %2263 = vxpose.xlu0.b32.end [16/16] 0.0, 128
  %v2264 = vpop.trf.xlu0
  %v2265 = vpop.trf.xlu0
  %v2266 = vpop.trf.xlu0
  %v2267 = vpop.trf.xlu0
  %v2268 = vpop.trf.xlu0
  %v2269 = vpop.trf.xlu0
  %v2270 = vpop.trf.xlu0
  %v2271 = vpop.trf.xlu0
  %v2272 = vpop.trf.xlu0
  %v2273 = vpop.trf.xlu0
  %v2274 = vpop.trf.xlu0
  %v2275 = vpop.trf.xlu0
  %v2276 = vpop.trf.xlu0
  %v2277 = vpop.trf.xlu0
  %v2278 = vpop.trf.xlu0
  %v2279 = vpop.trf.xlu0
  %2280 = vxpose.xlu0.b32.start [1/16] %v1678, 128
  %2281 = vxpose.xlu0.b32.cont [2/16] 0.0, 128
  %2282 = vxpose.xlu0.b32.cont [3/16] 0.0, 128
  %2283 = vxpose.xlu0.b32.cont [4/16] 0.0, 128
  %2284 = vxpose.xlu0.b32.cont [5/16] 0.0, 128
  %2285 = vxpose.xlu0.b32.cont [6/16] 0.0, 128
  %2286 = vxpose.xlu0.b32.cont [7/16] 0.0, 128
  %2287 = vxpose.xlu0.b32.cont [8/16] 0.0, 128
  %2288 = vxpose.xlu0.b32.cont [9/16] 0.0, 128
  %2289 = vxpose.xlu0.b32.cont [10/16] 0.0, 128
  %2290 = vxpose.xlu0.b32.cont [11/16] 0.0, 128
  %2291 = vxpose.xlu0.b32.cont [12/16] 0.0, 128
  %2292 = vxpose.xlu0.b32.cont [13/16] 0.0, 128
  %2293 = vxpose.xlu0.b32.cont [14/16] 0.0, 128
  %2294 = vxpose.xlu0.b32.cont [15/16] 0.0, 128
  %2295 = vxpose.xlu0.b32.end [16/16] 0.0, 128
  %v2296 = vpop.trf.xlu0
  %v2297 = vpop.trf.xlu0
  %v2298 = vpop.trf.xlu0
  %v2299 = vpop.trf.xlu0
  %v2300 = vpop.trf.xlu0
  %v2301 = vpop.trf.xlu0
  %v2302 = vpop.trf.xlu0
  %v2303 = vpop.trf.xlu0
  %v2304 = vpop.trf.xlu0
  %v2305 = vpop.trf.xlu0
  %v2306 = vpop.trf.xlu0
  %v2307 = vpop.trf.xlu0
  %v2308 = vpop.trf.xlu0
  %v2309 = vpop.trf.xlu0
  %v2310 = vpop.trf.xlu0
  %v2311 = vpop.trf.xlu0
  %2312 = vxpose.xlu0.b32.start [1/16] %v1679, 128
  %2313 = vxpose.xlu0.b32.cont [2/16] 0.0, 128
  %2314 = vxpose.xlu0.b32.cont [3/16] 0.0, 128
  %2315 = vxpose.xlu0.b32.cont [4/16] 0.0, 128
  %2316 = vxpose.xlu0.b32.cont [5/16] 0.0, 128
  %2317 = vxpose.xlu0.b32.cont [6/16] 0.0, 128
  %2318 = vxpose.xlu0.b32.cont [7/16] 0.0, 128
  %2319 = vxpose.xlu0.b32.cont [8/16] 0.0, 128
  %2320 = vxpose.xlu0.b32.cont [9/16] 0.0, 128
  %2321 = vxpose.xlu0.b32.cont [10/16] 0.0, 128
  %2322 = vxpose.xlu0.b32.cont [11/16] 0.0, 128
  %2323 = vxpose.xlu0.b32.cont [12/16] 0.0, 128
  %2324 = vxpose.xlu0.b32.cont [13/16] 0.0, 128
  %2325 = vxpose.xlu0.b32.cont [14/16] 0.0, 128
  %2326 = vxpose.xlu0.b32.cont [15/16] 0.0, 128
  %2327 = vxpose.xlu0.b32.end [16/16] 0.0, 128
  %v2328 = vpop.trf.xlu0
  %v2329 = vpop.trf.xlu0
  %v2330 = vpop.trf.xlu0
  %v2331 = vpop.trf.xlu0
  %v2332 = vpop.trf.xlu0
  %v2333 = vpop.trf.xlu0
  %v2334 = vpop.trf.xlu0
  %v2335 = vpop.trf.xlu0
  %v2336 = vpop.trf.xlu0
  %v2337 = vpop.trf.xlu0
  %v2338 = vpop.trf.xlu0
  %v2339 = vpop.trf.xlu0
  %v2340 = vpop.trf.xlu0
  %v2341 = vpop.trf.xlu0
  %v2342 = vpop.trf.xlu0
  %v2343 = vpop.trf.xlu0
  %2344 = vxpose.xlu0.b32.start [1/16] %v1808, 128
  %2345 = vxpose.xlu0.b32.cont [2/16] 0.0, 128
  %2346 = vxpose.xlu0.b32.cont [3/16] 0.0, 128
  %2347 = vxpose.xlu0.b32.cont [4/16] 0.0, 128
  %2348 = vxpose.xlu0.b32.cont [5/16] 0.0, 128
  %2349 = vxpose.xlu0.b32.cont [6/16] 0.0, 128
  %2350 = vxpose.xlu0.b32.cont [7/16] 0.0, 128
  %2351 = vxpose.xlu0.b32.cont [8/16] 0.0, 128
  %2352 = vxpose.xlu0.b32.cont [9/16] 0.0, 128
  %2353 = vxpose.xlu0.b32.cont [10/16] 0.0, 128
  %2354 = vxpose.xlu0.b32.cont [11/16] 0.0, 128
  %2355 = vxpose.xlu0.b32.cont [12/16] 0.0, 128
  %2356 = vxpose.xlu0.b32.cont [13/16] 0.0, 128
  %2357 = vxpose.xlu0.b32.cont [14/16] 0.0, 128
  %2358 = vxpose.xlu0.b32.cont [15/16] 0.0, 128
  %2359 = vxpose.xlu0.b32.end [16/16] 0.0, 128
  %v2360 = vpop.trf.xlu0
  %v2361 = vpop.trf.xlu0
  %v2362 = vpop.trf.xlu0
  %v2363 = vpop.trf.xlu0
  %v2364 = vpop.trf.xlu0
  %v2365 = vpop.trf.xlu0
  %v2366 = vpop.trf.xlu0
  %v2367 = vpop.trf.xlu0
  %v2368 = vpop.trf.xlu0
  %v2369 = vpop.trf.xlu0
  %v2370 = vpop.trf.xlu0
  %v2371 = vpop.trf.xlu0
  %v2372 = vpop.trf.xlu0
  %v2373 = vpop.trf.xlu0
  %v2374 = vpop.trf.xlu0
  %v2375 = vpop.trf.xlu0
  %2376 = vxpose.xlu0.b32.start [1/16] %v1809, 128
  %2377 = vxpose.xlu0.b32.cont [2/16] 0.0, 128
  %2378 = vxpose.xlu0.b32.cont [3/16] 0.0, 128
  %2379 = vxpose.xlu0.b32.cont [4/16] 0.0, 128
  %2380 = vxpose.xlu0.b32.cont [5/16] 0.0, 128
  %2381 = vxpose.xlu0.b32.cont [6/16] 0.0, 128
  %2382 = vxpose.xlu0.b32.cont [7/16] 0.0, 128
  %2383 = vxpose.xlu0.b32.cont [8/16] 0.0, 128
  %2384 = vxpose.xlu0.b32.cont [9/16] 0.0, 128
  %2385 = vxpose.xlu0.b32.cont [10/16] 0.0, 128
  %2386 = vxpose.xlu0.b32.cont [11/16] 0.0, 128
  %2387 = vxpose.xlu0.b32.cont [12/16] 0.0, 128
  %2388 = vxpose.xlu0.b32.cont [13/16] 0.0, 128
  %2389 = vxpose.xlu0.b32.cont [14/16] 0.0, 128
  %2390 = vxpose.xlu0.b32.cont [15/16] 0.0, 128
  %2391 = vxpose.xlu0.b32.end [16/16] 0.0, 128
  %v2392 = vpop.trf.xlu0
  %v2393 = vpop.trf.xlu0
  %v2394 = vpop.trf.xlu0
  %v2395 = vpop.trf.xlu0
  %v2396 = vpop.trf.xlu0
  %v2397 = vpop.trf.xlu0
  %v2398 = vpop.trf.xlu0
  %v2399 = vpop.trf.xlu0
  %v2400 = vpop.trf.xlu0
  %v2401 = vpop.trf.xlu0
  %v2402 = vpop.trf.xlu0
  %v2403 = vpop.trf.xlu0
  %v2404 = vpop.trf.xlu0
  %v2405 = vpop.trf.xlu0
  %v2406 = vpop.trf.xlu0
  %v2407 = vpop.trf.xlu0
  %2408 = vxpose.xlu0.b32.start [1/16] %v1810, 128
  %2409 = vxpose.xlu0.b32.cont [2/16] 0.0, 128
  %2410 = vxpose.xlu0.b32.cont [3/16] 0.0, 128
  %2411 = vxpose.xlu0.b32.cont [4/16] 0.0, 128
  %2412 = vxpose.xlu0.b32.cont [5/16] 0.0, 128
  %2413 = vxpose.xlu0.b32.cont [6/16] 0.0, 128
  %2414 = vxpose.xlu0.b32.cont [7/16] 0.0, 128
  %2415 = vxpose.xlu0.b32.cont [8/16] 0.0, 128
  %2416 = vxpose.xlu0.b32.cont [9/16] 0.0, 128
  %2417 = vxpose.xlu0.b32.cont [10/16] 0.0, 128
  %2418 = vxpose.xlu0.b32.cont [11/16] 0.0, 128
  %2419 = vxpose.xlu0.b32.cont [12/16] 0.0, 128
  %2420 = vxpose.xlu0.b32.cont [13/16] 0.0, 128
  %2421 = vxpose.xlu0.b32.cont [14/16] 0.0, 128
  %2422 = vxpose.xlu0.b32.cont [15/16] 0.0, 128
  %2423 = vxpose.xlu0.b32.end [16/16] 0.0, 128
  %v2424 = vpop.trf.xlu0
  %v2425 = vpop.trf.xlu0
  %v2426 = vpop.trf.xlu0
  %v2427 = vpop.trf.xlu0
  %v2428 = vpop.trf.xlu0
  %v2429 = vpop.trf.xlu0
  %v2430 = vpop.trf.xlu0
  %v2431 = vpop.trf.xlu0
  %v2432 = vpop.trf.xlu0
  %v2433 = vpop.trf.xlu0
  %v2434 = vpop.trf.xlu0
  %v2435 = vpop.trf.xlu0
  %v2436 = vpop.trf.xlu0
  %v2437 = vpop.trf.xlu0
  %v2438 = vpop.trf.xlu0
  %v2439 = vpop.trf.xlu0
  %2440 = vxpose.xlu0.b32.start [1/16] %v1811, 128
  %2441 = vxpose.xlu0.b32.cont [2/16] 0.0, 128
  %2442 = vxpose.xlu0.b32.cont [3/16] 0.0, 128
  %2443 = vxpose.xlu0.b32.cont [4/16] 0.0, 128
  %2444 = vxpose.xlu0.b32.cont [5/16] 0.0, 128
  %2445 = vxpose.xlu0.b32.cont [6/16] 0.0, 128
  %2446 = vxpose.xlu0.b32.cont [7/16] 0.0, 128
  %2447 = vxpose.xlu0.b32.cont [8/16] 0.0, 128
  %2448 = vxpose.xlu0.b32.cont [9/16] 0.0, 128
  %2449 = vxpose.xlu0.b32.cont [10/16] 0.0, 128
  %2450 = vxpose.xlu0.b32.cont [11/16] 0.0, 128
  %2451 = vxpose.xlu0.b32.cont [12/16] 0.0, 128
  %2452 = vxpose.xlu0.b32.cont [13/16] 0.0, 128
  %2453 = vxpose.xlu0.b32.cont [14/16] 0.0, 128
  %2454 = vxpose.xlu0.b32.cont [15/16] 0.0, 128
  %2455 = vxpose.xlu0.b32.end [16/16] 0.0, 128
  %v2456 = vpop.trf.xlu0
  %v2457 = vpop.trf.xlu0
  %v2458 = vpop.trf.xlu0
  %v2459 = vpop.trf.xlu0
  %v2460 = vpop.trf.xlu0
  %v2461 = vpop.trf.xlu0
  %v2462 = vpop.trf.xlu0
  %v2463 = vpop.trf.xlu0
  %v2464 = vpop.trf.xlu0
  %v2465 = vpop.trf.xlu0
  %v2466 = vpop.trf.xlu0
  %v2467 = vpop.trf.xlu0
  %v2468 = vpop.trf.xlu0
  %v2469 = vpop.trf.xlu0
  %v2470 = vpop.trf.xlu0
  %v2471 = vpop.trf.xlu0
  %2472 = vxpose.xlu0.b32.start [1/16] %v1812, 128
  %2473 = vxpose.xlu0.b32.cont [2/16] 0.0, 128
  %2474 = vxpose.xlu0.b32.cont [3/16] 0.0, 128
  %2475 = vxpose.xlu0.b32.cont [4/16] 0.0, 128
  %2476 = vxpose.xlu0.b32.cont [5/16] 0.0, 128
  %2477 = vxpose.xlu0.b32.cont [6/16] 0.0, 128
  %2478 = vxpose.xlu0.b32.cont [7/16] 0.0, 128
  %2479 = vxpose.xlu0.b32.cont [8/16] 0.0, 128
  %2480 = vxpose.xlu0.b32.cont [9/16] 0.0, 128
  %2481 = vxpose.xlu0.b32.cont [10/16] 0.0, 128
  %2482 = vxpose.xlu0.b32.cont [11/16] 0.0, 128
  %2483 = vxpose.xlu0.b32.cont [12/16] 0.0, 128
  %2484 = vxpose.xlu0.b32.cont [13/16] 0.0, 128
  %2485 = vxpose.xlu0.b32.cont [14/16] 0.0, 128
  %2486 = vxpose.xlu0.b32.cont [15/16] 0.0, 128
  %2487 = vxpose.xlu0.b32.end [16/16] 0.0, 128
  %v2488 = vpop.trf.xlu0
  %v2489 = vpop.trf.xlu0
  %v2490 = vpop.trf.xlu0
  %v2491 = vpop.trf.xlu0
  %v2492 = vpop.trf.xlu0
  %v2493 = vpop.trf.xlu0
  %v2494 = vpop.trf.xlu0
  %v2495 = vpop.trf.xlu0
  %v2496 = vpop.trf.xlu0
  %v2497 = vpop.trf.xlu0
  %v2498 = vpop.trf.xlu0
  %v2499 = vpop.trf.xlu0
  %v2500 = vpop.trf.xlu0
  %v2501 = vpop.trf.xlu0
  %v2502 = vpop.trf.xlu0
  %v2503 = vpop.trf.xlu0
  %2504 = vxpose.xlu0.b32.start [1/16] %v1813, 128
  %2505 = vxpose.xlu0.b32.cont [2/16] 0.0, 128
  %2506 = vxpose.xlu0.b32.cont [3/16] 0.0, 128
  %2507 = vxpose.xlu0.b32.cont [4/16] 0.0, 128
  %2508 = vxpose.xlu0.b32.cont [5/16] 0.0, 128
  %2509 = vxpose.xlu0.b32.cont [6/16] 0.0, 128
  %2510 = vxpose.xlu0.b32.cont [7/16] 0.0, 128
  %2511 = vxpose.xlu0.b32.cont [8/16] 0.0, 128
  %2512 = vxpose.xlu0.b32.cont [9/16] 0.0, 128
  %2513 = vxpose.xlu0.b32.cont [10/16] 0.0, 128
  %2514 = vxpose.xlu0.b32.cont [11/16] 0.0, 128
  %2515 = vxpose.xlu0.b32.cont [12/16] 0.0, 128
  %2516 = vxpose.xlu0.b32.cont [13/16] 0.0, 128
  %2517 = vxpose.xlu0.b32.cont [14/16] 0.0, 128
  %2518 = vxpose.xlu0.b32.cont [15/16] 0.0, 128
  %2519 = vxpose.xlu0.b32.end [16/16] 0.0, 128
  %v2520 = vpop.trf.xlu0
  %v2521 = vpop.trf.xlu0
  %v2522 = vpop.trf.xlu0
  %v2523 = vpop.trf.xlu0
  %v2524 = vpop.trf.xlu0
  %v2525 = vpop.trf.xlu0
  %v2526 = vpop.trf.xlu0
  %v2527 = vpop.trf.xlu0
  %v2528 = vpop.trf.xlu0
  %v2529 = vpop.trf.xlu0
  %v2530 = vpop.trf.xlu0
  %v2531 = vpop.trf.xlu0
  %v2532 = vpop.trf.xlu0
  %v2533 = vpop.trf.xlu0
  %v2534 = vpop.trf.xlu0
  %v2535 = vpop.trf.xlu0
  %2536 = vxpose.xlu0.b32.start [1/16] %v1814, 128
  %2537 = vxpose.xlu0.b32.cont [2/16] 0.0, 128
  %2538 = vxpose.xlu0.b32.cont [3/16] 0.0, 128
  %2539 = vxpose.xlu0.b32.cont [4/16] 0.0, 128
  %2540 = vxpose.xlu0.b32.cont [5/16] 0.0, 128
  %2541 = vxpose.xlu0.b32.cont [6/16] 0.0, 128
  %2542 = vxpose.xlu0.b32.cont [7/16] 0.0, 128
  %2543 = vxpose.xlu0.b32.cont [8/16] 0.0, 128
  %2544 = vxpose.xlu0.b32.cont [9/16] 0.0, 128
  %2545 = vxpose.xlu0.b32.cont [10/16] 0.0, 128
  %2546 = vxpose.xlu0.b32.cont [11/16] 0.0, 128
  %2547 = vxpose.xlu0.b32.cont [12/16] 0.0, 128
  %2548 = vxpose.xlu0.b32.cont [13/16] 0.0, 128
  %2549 = vxpose.xlu0.b32.cont [14/16] 0.0, 128
  %2550 = vxpose.xlu0.b32.cont [15/16] 0.0, 128
  %2551 = vxpose.xlu0.b32.end [16/16] 0.0, 128
  %v2552 = vpop.trf.xlu0
  %v2553 = vpop.trf.xlu0
  %v2554 = vpop.trf.xlu0
  %v2555 = vpop.trf.xlu0
  %v2556 = vpop.trf.xlu0
  %v2557 = vpop.trf.xlu0
  %v2558 = vpop.trf.xlu0
  %v2559 = vpop.trf.xlu0
  %v2560 = vpop.trf.xlu0
  %v2561 = vpop.trf.xlu0
  %v2562 = vpop.trf.xlu0
  %v2563 = vpop.trf.xlu0
  %v2564 = vpop.trf.xlu0
  %v2565 = vpop.trf.xlu0
  %v2566 = vpop.trf.xlu0
  %v2567 = vpop.trf.xlu0
  %2568 = vxpose.xlu0.b32.start [1/16] %v1815, 128
  %2569 = vxpose.xlu0.b32.cont [2/16] 0.0, 128
  %2570 = vxpose.xlu0.b32.cont [3/16] 0.0, 128
  %2571 = vxpose.xlu0.b32.cont [4/16] 0.0, 128
  %2572 = vxpose.xlu0.b32.cont [5/16] 0.0, 128
  %2573 = vxpose.xlu0.b32.cont [6/16] 0.0, 128
  %2574 = vxpose.xlu0.b32.cont [7/16] 0.0, 128
  %2575 = vxpose.xlu0.b32.cont [8/16] 0.0, 128
  %2576 = vxpose.xlu0.b32.cont [9/16] 0.0, 128
  %2577 = vxpose.xlu0.b32.cont [10/16] 0.0, 128
  %2578 = vxpose.xlu0.b32.cont [11/16] 0.0, 128
  %2579 = vxpose.xlu0.b32.cont [12/16] 0.0, 128
  %2580 = vxpose.xlu0.b32.cont [13/16] 0.0, 128
  %2581 = vxpose.xlu0.b32.cont [14/16] 0.0, 128
  %2582 = vxpose.xlu0.b32.cont [15/16] 0.0, 128
  %2583 = vxpose.xlu0.b32.end [16/16] 0.0, 128
  %v2584 = vpop.trf.xlu0
  %v2585 = vpop.trf.xlu0
  %v2586 = vpop.trf.xlu0
  %v2587 = vpop.trf.xlu0
  %v2588 = vpop.trf.xlu0
  %v2589 = vpop.trf.xlu0
  %v2590 = vpop.trf.xlu0
  %v2591 = vpop.trf.xlu0
  %v2592 = vpop.trf.xlu0
  %v2593 = vpop.trf.xlu0
  %v2594 = vpop.trf.xlu0
  %v2595 = vpop.trf.xlu0
  %v2596 = vpop.trf.xlu0
  %v2597 = vpop.trf.xlu0
  %v2598 = vpop.trf.xlu0
  %v2599 = vpop.trf.xlu0
  %2600 = vxpose.xlu0.b32.start [1/16] %v1944, 128
  %2601 = vxpose.xlu0.b32.cont [2/16] 0.0, 128
  %2602 = vxpose.xlu0.b32.cont [3/16] 0.0, 128
  %2603 = vxpose.xlu0.b32.cont [4/16] 0.0, 128
  %2604 = vxpose.xlu0.b32.cont [5/16] 0.0, 128
  %2605 = vxpose.xlu0.b32.cont [6/16] 0.0, 128
  %2606 = vxpose.xlu0.b32.cont [7/16] 0.0, 128
  %2607 = vxpose.xlu0.b32.cont [8/16] 0.0, 128
  %2608 = vxpose.xlu0.b32.cont [9/16] 0.0, 128
  %2609 = vxpose.xlu0.b32.cont [10/16] 0.0, 128
  %2610 = vxpose.xlu0.b32.cont [11/16] 0.0, 128
  %2611 = vxpose.xlu0.b32.cont [12/16] 0.0, 128
  %2612 = vxpose.xlu0.b32.cont [13/16] 0.0, 128
  %2613 = vxpose.xlu0.b32.cont [14/16] 0.0, 128
  %2614 = vxpose.xlu0.b32.cont [15/16] 0.0, 128
  %2615 = vxpose.xlu0.b32.end [16/16] 0.0, 128
  %v2616 = vpop.trf.xlu0
  %v2617 = vpop.trf.xlu0
  %v2618 = vpop.trf.xlu0
  %v2619 = vpop.trf.xlu0
  %v2620 = vpop.trf.xlu0
  %v2621 = vpop.trf.xlu0
  %v2622 = vpop.trf.xlu0
  %v2623 = vpop.trf.xlu0
  %v2624 = vpop.trf.xlu0
  %v2625 = vpop.trf.xlu0
  %v2626 = vpop.trf.xlu0
  %v2627 = vpop.trf.xlu0
  %v2628 = vpop.trf.xlu0
  %v2629 = vpop.trf.xlu0
  %v2630 = vpop.trf.xlu0
  %v2631 = vpop.trf.xlu0
  %2632 = vxpose.xlu0.b32.start [1/16] %v1945, 128
  %2633 = vxpose.xlu0.b32.cont [2/16] 0.0, 128
  %2634 = vxpose.xlu0.b32.cont [3/16] 0.0, 128
  %2635 = vxpose.xlu0.b32.cont [4/16] 0.0, 128
  %2636 = vxpose.xlu0.b32.cont [5/16] 0.0, 128
  %2637 = vxpose.xlu0.b32.cont [6/16] 0.0, 128
  %2638 = vxpose.xlu0.b32.cont [7/16] 0.0, 128
  %2639 = vxpose.xlu0.b32.cont [8/16] 0.0, 128
  %2640 = vxpose.xlu0.b32.cont [9/16] 0.0, 128
  %2641 = vxpose.xlu0.b32.cont [10/16] 0.0, 128
  %2642 = vxpose.xlu0.b32.cont [11/16] 0.0, 128
  %2643 = vxpose.xlu0.b32.cont [12/16] 0.0, 128
  %2644 = vxpose.xlu0.b32.cont [13/16] 0.0, 128
  %2645 = vxpose.xlu0.b32.cont [14/16] 0.0, 128
  %2646 = vxpose.xlu0.b32.cont [15/16] 0.0, 128
  %2647 = vxpose.xlu0.b32.end [16/16] 0.0, 128
  %v2648 = vpop.trf.xlu0
  %v2649 = vpop.trf.xlu0
  %v2650 = vpop.trf.xlu0
  %v2651 = vpop.trf.xlu0
  %v2652 = vpop.trf.xlu0
  %v2653 = vpop.trf.xlu0
  %v2654 = vpop.trf.xlu0
  %v2655 = vpop.trf.xlu0
  %v2656 = vpop.trf.xlu0
  %v2657 = vpop.trf.xlu0
  %v2658 = vpop.trf.xlu0
  %v2659 = vpop.trf.xlu0
  %v2660 = vpop.trf.xlu0
  %v2661 = vpop.trf.xlu0
  %v2662 = vpop.trf.xlu0
  %v2663 = vpop.trf.xlu0
  %2664 = vxpose.xlu0.b32.start [1/16] %v1946, 128
  %2665 = vxpose.xlu0.b32.cont [2/16] 0.0, 128
  %2666 = vxpose.xlu0.b32.cont [3/16] 0.0, 128
  %2667 = vxpose.xlu0.b32.cont [4/16] 0.0, 128
  %2668 = vxpose.xlu0.b32.cont [5/16] 0.0, 128
  %2669 = vxpose.xlu0.b32.cont [6/16] 0.0, 128
  %2670 = vxpose.xlu0.b32.cont [7/16] 0.0, 128
  %2671 = vxpose.xlu0.b32.cont [8/16] 0.0, 128
  %2672 = vxpose.xlu0.b32.cont [9/16] 0.0, 128
  %2673 = vxpose.xlu0.b32.cont [10/16] 0.0, 128
  %2674 = vxpose.xlu0.b32.cont [11/16] 0.0, 128
  %2675 = vxpose.xlu0.b32.cont [12/16] 0.0, 128
  %2676 = vxpose.xlu0.b32.cont [13/16] 0.0, 128
  %2677 = vxpose.xlu0.b32.cont [14/16] 0.0, 128
  %2678 = vxpose.xlu0.b32.cont [15/16] 0.0, 128
  %2679 = vxpose.xlu0.b32.end [16/16] 0.0, 128
  %v2680 = vpop.trf.xlu0
  %v2681 = vpop.trf.xlu0
  %v2682 = vpop.trf.xlu0
  %v2683 = vpop.trf.xlu0
  %v2684 = vpop.trf.xlu0
  %v2685 = vpop.trf.xlu0
  %v2686 = vpop.trf.xlu0
  %v2687 = vpop.trf.xlu0
  %v2688 = vpop.trf.xlu0
  %v2689 = vpop.trf.xlu0
  %v2690 = vpop.trf.xlu0
  %v2691 = vpop.trf.xlu0
  %v2692 = vpop.trf.xlu0
  %v2693 = vpop.trf.xlu0
  %v2694 = vpop.trf.xlu0
  %v2695 = vpop.trf.xlu0
  %2696 = vxpose.xlu0.b32.start [1/16] %v1947, 128
  %2697 = vxpose.xlu0.b32.cont [2/16] 0.0, 128
  %2698 = vxpose.xlu0.b32.cont [3/16] 0.0, 128
  %2699 = vxpose.xlu0.b32.cont [4/16] 0.0, 128
  %2700 = vxpose.xlu0.b32.cont [5/16] 0.0, 128
  %2701 = vxpose.xlu0.b32.cont [6/16] 0.0, 128
  %2702 = vxpose.xlu0.b32.cont [7/16] 0.0, 128
  %2703 = vxpose.xlu0.b32.cont [8/16] 0.0, 128
  %2704 = vxpose.xlu0.b32.cont [9/16] 0.0, 128
  %2705 = vxpose.xlu0.b32.cont [10/16] 0.0, 128
  %2706 = vxpose.xlu0.b32.cont [11/16] 0.0, 128
  %2707 = vxpose.xlu0.b32.cont [12/16] 0.0, 128
  %2708 = vxpose.xlu0.b32.cont [13/16] 0.0, 128
  %2709 = vxpose.xlu0.b32.cont [14/16] 0.0, 128
  %2710 = vxpose.xlu0.b32.cont [15/16] 0.0, 128
  %2711 = vxpose.xlu0.b32.end [16/16] 0.0, 128
  %v2712 = vpop.trf.xlu0
  %v2713 = vpop.trf.xlu0
  %v2714 = vpop.trf.xlu0
  %v2715 = vpop.trf.xlu0
  %v2716 = vpop.trf.xlu0
  %v2717 = vpop.trf.xlu0
  %v2718 = vpop.trf.xlu0
  %v2719 = vpop.trf.xlu0
  %v2720 = vpop.trf.xlu0
  %v2721 = vpop.trf.xlu0
  %v2722 = vpop.trf.xlu0
  %v2723 = vpop.trf.xlu0
  %v2724 = vpop.trf.xlu0
  %v2725 = vpop.trf.xlu0
  %v2726 = vpop.trf.xlu0
  %v2727 = vpop.trf.xlu0
  %2728 = vxpose.xlu0.b32.start [1/16] %v1948, 128
  %2729 = vxpose.xlu0.b32.cont [2/16] 0.0, 128
  %2730 = vxpose.xlu0.b32.cont [3/16] 0.0, 128
  %2731 = vxpose.xlu0.b32.cont [4/16] 0.0, 128
  %2732 = vxpose.xlu0.b32.cont [5/16] 0.0, 128
  %2733 = vxpose.xlu0.b32.cont [6/16] 0.0, 128
  %2734 = vxpose.xlu0.b32.cont [7/16] 0.0, 128
  %2735 = vxpose.xlu0.b32.cont [8/16] 0.0, 128
  %2736 = vxpose.xlu0.b32.cont [9/16] 0.0, 128
  %2737 = vxpose.xlu0.b32.cont [10/16] 0.0, 128
  %2738 = vxpose.xlu0.b32.cont [11/16] 0.0, 128
  %2739 = vxpose.xlu0.b32.cont [12/16] 0.0, 128
  %2740 = vxpose.xlu0.b32.cont [13/16] 0.0, 128
  %2741 = vxpose.xlu0.b32.cont [14/16] 0.0, 128
  %2742 = vxpose.xlu0.b32.cont [15/16] 0.0, 128
  %2743 = vxpose.xlu0.b32.end [16/16] 0.0, 128
  %v2744 = vpop.trf.xlu0
  %v2745 = vpop.trf.xlu0
  %v2746 = vpop.trf.xlu0
  %v2747 = vpop.trf.xlu0
  %v2748 = vpop.trf.xlu0
  %v2749 = vpop.trf.xlu0
  %v2750 = vpop.trf.xlu0
  %v2751 = vpop.trf.xlu0
  %v2752 = vpop.trf.xlu0
  %v2753 = vpop.trf.xlu0
  %v2754 = vpop.trf.xlu0
  %v2755 = vpop.trf.xlu0
  %v2756 = vpop.trf.xlu0
  %v2757 = vpop.trf.xlu0
  %v2758 = vpop.trf.xlu0
  %v2759 = vpop.trf.xlu0
  %2760 = vxpose.xlu0.b32.start [1/16] %v1949, 128
  %2761 = vxpose.xlu0.b32.cont [2/16] 0.0, 128
  %2762 = vxpose.xlu0.b32.cont [3/16] 0.0, 128
  %2763 = vxpose.xlu0.b32.cont [4/16] 0.0, 128
  %2764 = vxpose.xlu0.b32.cont [5/16] 0.0, 128
  %2765 = vxpose.xlu0.b32.cont [6/16] 0.0, 128
  %2766 = vxpose.xlu0.b32.cont [7/16] 0.0, 128
  %2767 = vxpose.xlu0.b32.cont [8/16] 0.0, 128
  %2768 = vxpose.xlu0.b32.cont [9/16] 0.0, 128
  %2769 = vxpose.xlu0.b32.cont [10/16] 0.0, 128
  %2770 = vxpose.xlu0.b32.cont [11/16] 0.0, 128
  %2771 = vxpose.xlu0.b32.cont [12/16] 0.0, 128
  %2772 = vxpose.xlu0.b32.cont [13/16] 0.0, 128
  %2773 = vxpose.xlu0.b32.cont [14/16] 0.0, 128
  %2774 = vxpose.xlu0.b32.cont [15/16] 0.0, 128
  %2775 = vxpose.xlu0.b32.end [16/16] 0.0, 128
  %v2776 = vpop.trf.xlu0
  %v2777 = vpop.trf.xlu0
  %v2778 = vpop.trf.xlu0
  %v2779 = vpop.trf.xlu0
  %v2780 = vpop.trf.xlu0
  %v2781 = vpop.trf.xlu0
  %v2782 = vpop.trf.xlu0
  %v2783 = vpop.trf.xlu0
  %v2784 = vpop.trf.xlu0
  %v2785 = vpop.trf.xlu0
  %v2786 = vpop.trf.xlu0
  %v2787 = vpop.trf.xlu0
  %v2788 = vpop.trf.xlu0
  %v2789 = vpop.trf.xlu0
  %v2790 = vpop.trf.xlu0
  %v2791 = vpop.trf.xlu0
  %2792 = vxpose.xlu0.b32.start [1/16] %v1950, 128
  %2793 = vxpose.xlu0.b32.cont [2/16] 0.0, 128
  %2794 = vxpose.xlu0.b32.cont [3/16] 0.0, 128
  %2795 = vxpose.xlu0.b32.cont [4/16] 0.0, 128
  %2796 = vxpose.xlu0.b32.cont [5/16] 0.0, 128
  %2797 = vxpose.xlu0.b32.cont [6/16] 0.0, 128
  %2798 = vxpose.xlu0.b32.cont [7/16] 0.0, 128
  %2799 = vxpose.xlu0.b32.cont [8/16] 0.0, 128
  %2800 = vxpose.xlu0.b32.cont [9/16] 0.0, 128
  %2801 = vxpose.xlu0.b32.cont [10/16] 0.0, 128
  %2802 = vxpose.xlu0.b32.cont [11/16] 0.0, 128
  %2803 = vxpose.xlu0.b32.cont [12/16] 0.0, 128
  %2804 = vxpose.xlu0.b32.cont [13/16] 0.0, 128
  %2805 = vxpose.xlu0.b32.cont [14/16] 0.0, 128
  %2806 = vxpose.xlu0.b32.cont [15/16] 0.0, 128
  %2807 = vxpose.xlu0.b32.end [16/16] 0.0, 128
  %v2808 = vpop.trf.xlu0
  %v2809 = vpop.trf.xlu0
  %v2810 = vpop.trf.xlu0
  %v2811 = vpop.trf.xlu0
  %v2812 = vpop.trf.xlu0
  %v2813 = vpop.trf.xlu0
  %v2814 = vpop.trf.xlu0
  %v2815 = vpop.trf.xlu0
  %v2816 = vpop.trf.xlu0
  %v2817 = vpop.trf.xlu0
  %v2818 = vpop.trf.xlu0
  %v2819 = vpop.trf.xlu0
  %v2820 = vpop.trf.xlu0
  %v2821 = vpop.trf.xlu0
  %v2822 = vpop.trf.xlu0
  %v2823 = vpop.trf.xlu0
  %2824 = vxpose.xlu0.b32.start [1/16] %v1951, 128
  %2825 = vxpose.xlu0.b32.cont [2/16] 0.0, 128
  %2826 = vxpose.xlu0.b32.cont [3/16] 0.0, 128
  %2827 = vxpose.xlu0.b32.cont [4/16] 0.0, 128
  %2828 = vxpose.xlu0.b32.cont [5/16] 0.0, 128
  %2829 = vxpose.xlu0.b32.cont [6/16] 0.0, 128
  %2830 = vxpose.xlu0.b32.cont [7/16] 0.0, 128
  %2831 = vxpose.xlu0.b32.cont [8/16] 0.0, 128
  %2832 = vxpose.xlu0.b32.cont [9/16] 0.0, 128
  %2833 = vxpose.xlu0.b32.cont [10/16] 0.0, 128
  %2834 = vxpose.xlu0.b32.cont [11/16] 0.0, 128
  %2835 = vxpose.xlu0.b32.cont [12/16] 0.0, 128
  %2836 = vxpose.xlu0.b32.cont [13/16] 0.0, 128
  %2837 = vxpose.xlu0.b32.cont [14/16] 0.0, 128
  %2838 = vxpose.xlu0.b32.cont [15/16] 0.0, 128
  %2839 = vxpose.xlu0.b32.end [16/16] 0.0, 128
  %v2840 = vpop.trf.xlu0
  %v2841 = vpop.trf.xlu0
  %v2842 = vpop.trf.xlu0
  %v2843 = vpop.trf.xlu0
  %v2844 = vpop.trf.xlu0
  %v2845 = vpop.trf.xlu0
  %v2846 = vpop.trf.xlu0
  %v2847 = vpop.trf.xlu0
  %v2848 = vpop.trf.xlu0
  %v2849 = vpop.trf.xlu0
  %v2850 = vpop.trf.xlu0
  %v2851 = vpop.trf.xlu0
  %v2852 = vpop.trf.xlu0
  %v2853 = vpop.trf.xlu0
  %v2854 = vpop.trf.xlu0
  %v2855 = vpop.trf.xlu0
  %2856 = vxpose.xlu0.b32.start [1/16] %v2080, 128
  %2857 = vxpose.xlu0.b32.cont [2/16] 0.0, 128
  %2858 = vxpose.xlu0.b32.cont [3/16] 0.0, 128
  %2859 = vxpose.xlu0.b32.cont [4/16] 0.0, 128
  %2860 = vxpose.xlu0.b32.cont [5/16] 0.0, 128
  %2861 = vxpose.xlu0.b32.cont [6/16] 0.0, 128
  %2862 = vxpose.xlu0.b32.cont [7/16] 0.0, 128
  %2863 = vxpose.xlu0.b32.cont [8/16] 0.0, 128
  %2864 = vxpose.xlu0.b32.cont [9/16] 0.0, 128
  %2865 = vxpose.xlu0.b32.cont [10/16] 0.0, 128
  %2866 = vxpose.xlu0.b32.cont [11/16] 0.0, 128
  %2867 = vxpose.xlu0.b32.cont [12/16] 0.0, 128
  %2868 = vxpose.xlu0.b32.cont [13/16] 0.0, 128
  %2869 = vxpose.xlu0.b32.cont [14/16] 0.0, 128
  %2870 = vxpose.xlu0.b32.cont [15/16] 0.0, 128
  %2871 = vxpose.xlu0.b32.end [16/16] 0.0, 128
  %v2872 = vpop.trf.xlu0
  %v2873 = vpop.trf.xlu0
  %v2874 = vpop.trf.xlu0
  %v2875 = vpop.trf.xlu0
  %v2876 = vpop.trf.xlu0
  %v2877 = vpop.trf.xlu0
  %v2878 = vpop.trf.xlu0
  %v2879 = vpop.trf.xlu0
  %v2880 = vpop.trf.xlu0
  %v2881 = vpop.trf.xlu0
  %v2882 = vpop.trf.xlu0
  %v2883 = vpop.trf.xlu0
  %v2884 = vpop.trf.xlu0
  %v2885 = vpop.trf.xlu0
  %v2886 = vpop.trf.xlu0
  %v2887 = vpop.trf.xlu0
  %2888 = vxpose.xlu0.b32.start [1/16] %v2081, 128
  %2889 = vxpose.xlu0.b32.cont [2/16] 0.0, 128
  %2890 = vxpose.xlu0.b32.cont [3/16] 0.0, 128
  %2891 = vxpose.xlu0.b32.cont [4/16] 0.0, 128
  %2892 = vxpose.xlu0.b32.cont [5/16] 0.0, 128
  %2893 = vxpose.xlu0.b32.cont [6/16] 0.0, 128
  %2894 = vxpose.xlu0.b32.cont [7/16] 0.0, 128
  %2895 = vxpose.xlu0.b32.cont [8/16] 0.0, 128
  %2896 = vxpose.xlu0.b32.cont [9/16] 0.0, 128
  %2897 = vxpose.xlu0.b32.cont [10/16] 0.0, 128
  %2898 = vxpose.xlu0.b32.cont [11/16] 0.0, 128
  %2899 = vxpose.xlu0.b32.cont [12/16] 0.0, 128
  %2900 = vxpose.xlu0.b32.cont [13/16] 0.0, 128
  %2901 = vxpose.xlu0.b32.cont [14/16] 0.0, 128
  %2902 = vxpose.xlu0.b32.cont [15/16] 0.0, 128
  %2903 = vxpose.xlu0.b32.end [16/16] 0.0, 128
  %v2904 = vpop.trf.xlu0
  %v2905 = vpop.trf.xlu0
  %v2906 = vpop.trf.xlu0
  %v2907 = vpop.trf.xlu0
  %v2908 = vpop.trf.xlu0
  %v2909 = vpop.trf.xlu0
  %v2910 = vpop.trf.xlu0
  %v2911 = vpop.trf.xlu0
  %v2912 = vpop.trf.xlu0
  %v2913 = vpop.trf.xlu0
  %v2914 = vpop.trf.xlu0
  %v2915 = vpop.trf.xlu0
  %v2916 = vpop.trf.xlu0
  %v2917 = vpop.trf.xlu0
  %v2918 = vpop.trf.xlu0
  %v2919 = vpop.trf.xlu0
  %2920 = vxpose.xlu0.b32.start [1/16] %v2082, 128
  %2921 = vxpose.xlu0.b32.cont [2/16] 0.0, 128
  %2922 = vxpose.xlu0.b32.cont [3/16] 0.0, 128
  %2923 = vxpose.xlu0.b32.cont [4/16] 0.0, 128
  %2924 = vxpose.xlu0.b32.cont [5/16] 0.0, 128
  %2925 = vxpose.xlu0.b32.cont [6/16] 0.0, 128
  %2926 = vxpose.xlu0.b32.cont [7/16] 0.0, 128
  %2927 = vxpose.xlu0.b32.cont [8/16] 0.0, 128
  %2928 = vxpose.xlu0.b32.cont [9/16] 0.0, 128
  %2929 = vxpose.xlu0.b32.cont [10/16] 0.0, 128
  %2930 = vxpose.xlu0.b32.cont [11/16] 0.0, 128
  %2931 = vxpose.xlu0.b32.cont [12/16] 0.0, 128
  %2932 = vxpose.xlu0.b32.cont [13/16] 0.0, 128
  %2933 = vxpose.xlu0.b32.cont [14/16] 0.0, 128
  %2934 = vxpose.xlu0.b32.cont [15/16] 0.0, 128
  %2935 = vxpose.xlu0.b32.end [16/16] 0.0, 128
  %v2936 = vpop.trf.xlu0
  %v2937 = vpop.trf.xlu0
  %v2938 = vpop.trf.xlu0
  %v2939 = vpop.trf.xlu0
  %v2940 = vpop.trf.xlu0
  %v2941 = vpop.trf.xlu0
  %v2942 = vpop.trf.xlu0
  %v2943 = vpop.trf.xlu0
  %v2944 = vpop.trf.xlu0
  %v2945 = vpop.trf.xlu0
  %v2946 = vpop.trf.xlu0
  %v2947 = vpop.trf.xlu0
  %v2948 = vpop.trf.xlu0
  %v2949 = vpop.trf.xlu0
  %v2950 = vpop.trf.xlu0
  %v2951 = vpop.trf.xlu0
  %2952 = vxpose.xlu0.b32.start [1/16] %v2083, 128
  %2953 = vxpose.xlu0.b32.cont [2/16] 0.0, 128
  %2954 = vxpose.xlu0.b32.cont [3/16] 0.0, 128
  %2955 = vxpose.xlu0.b32.cont [4/16] 0.0, 128
  %2956 = vxpose.xlu0.b32.cont [5/16] 0.0, 128
  %2957 = vxpose.xlu0.b32.cont [6/16] 0.0, 128
  %2958 = vxpose.xlu0.b32.cont [7/16] 0.0, 128
  %2959 = vxpose.xlu0.b32.cont [8/16] 0.0, 128
  %2960 = vxpose.xlu0.b32.cont [9/16] 0.0, 128
  %2961 = vxpose.xlu0.b32.cont [10/16] 0.0, 128
  %2962 = vxpose.xlu0.b32.cont [11/16] 0.0, 128
  %2963 = vxpose.xlu0.b32.cont [12/16] 0.0, 128
  %2964 = vxpose.xlu0.b32.cont [13/16] 0.0, 128
  %2965 = vxpose.xlu0.b32.cont [14/16] 0.0, 128
  %2966 = vxpose.xlu0.b32.cont [15/16] 0.0, 128
  %2967 = vxpose.xlu0.b32.end [16/16] 0.0, 128
  %v2968 = vpop.trf.xlu0
  %v2969 = vpop.trf.xlu0
  %v2970 = vpop.trf.xlu0
  %v2971 = vpop.trf.xlu0
  %v2972 = vpop.trf.xlu0
  %v2973 = vpop.trf.xlu0
  %v2974 = vpop.trf.xlu0
  %v2975 = vpop.trf.xlu0
  %v2976 = vpop.trf.xlu0
  %v2977 = vpop.trf.xlu0
  %v2978 = vpop.trf.xlu0
  %v2979 = vpop.trf.xlu0
  %v2980 = vpop.trf.xlu0
  %v2981 = vpop.trf.xlu0
  %v2982 = vpop.trf.xlu0
  %v2983 = vpop.trf.xlu0
  %2984 = vxpose.xlu0.b32.start [1/16] %v2084, 128
  %2985 = vxpose.xlu0.b32.cont [2/16] 0.0, 128
  %2986 = vxpose.xlu0.b32.cont [3/16] 0.0, 128
  %2987 = vxpose.xlu0.b32.cont [4/16] 0.0, 128
  %2988 = vxpose.xlu0.b32.cont [5/16] 0.0, 128
  %2989 = vxpose.xlu0.b32.cont [6/16] 0.0, 128
  %2990 = vxpose.xlu0.b32.cont [7/16] 0.0, 128
  %2991 = vxpose.xlu0.b32.cont [8/16] 0.0, 128
  %2992 = vxpose.xlu0.b32.cont [9/16] 0.0, 128
  %2993 = vxpose.xlu0.b32.cont [10/16] 0.0, 128
  %2994 = vxpose.xlu0.b32.cont [11/16] 0.0, 128
  %2995 = vxpose.xlu0.b32.cont [12/16] 0.0, 128
  %2996 = vxpose.xlu0.b32.cont [13/16] 0.0, 128
  %2997 = vxpose.xlu0.b32.cont [14/16] 0.0, 128
  %2998 = vxpose.xlu0.b32.cont [15/16] 0.0, 128
  %2999 = vxpose.xlu0.b32.end [16/16] 0.0, 128
  %v3000 = vpop.trf.xlu0
  %v3001 = vpop.trf.xlu0
  %v3002 = vpop.trf.xlu0
  %v3003 = vpop.trf.xlu0
  %v3004 = vpop.trf.xlu0
  %v3005 = vpop.trf.xlu0
  %v3006 = vpop.trf.xlu0
  %v3007 = vpop.trf.xlu0
  %v3008 = vpop.trf.xlu0
  %v3009 = vpop.trf.xlu0
  %v3010 = vpop.trf.xlu0
  %v3011 = vpop.trf.xlu0
  %v3012 = vpop.trf.xlu0
  %v3013 = vpop.trf.xlu0
  %v3014 = vpop.trf.xlu0
  %v3015 = vpop.trf.xlu0
  %3016 = vxpose.xlu0.b32.start [1/16] %v2085, 128
  %3017 = vxpose.xlu0.b32.cont [2/16] 0.0, 128
  %3018 = vxpose.xlu0.b32.cont [3/16] 0.0, 128
  %3019 = vxpose.xlu0.b32.cont [4/16] 0.0, 128
  %3020 = vxpose.xlu0.b32.cont [5/16] 0.0, 128
  %3021 = vxpose.xlu0.b32.cont [6/16] 0.0, 128
  %3022 = vxpose.xlu0.b32.cont [7/16] 0.0, 128
  %3023 = vxpose.xlu0.b32.cont [8/16] 0.0, 128
  %3024 = vxpose.xlu0.b32.cont [9/16] 0.0, 128
  %3025 = vxpose.xlu0.b32.cont [10/16] 0.0, 128
  %3026 = vxpose.xlu0.b32.cont [11/16] 0.0, 128
  %3027 = vxpose.xlu0.b32.cont [12/16] 0.0, 128
  %3028 = vxpose.xlu0.b32.cont [13/16] 0.0, 128
  %3029 = vxpose.xlu0.b32.cont [14/16] 0.0, 128
  %3030 = vxpose.xlu0.b32.cont [15/16] 0.0, 128
  %3031 = vxpose.xlu0.b32.end [16/16] 0.0, 128
  %v3032 = vpop.trf.xlu0
  %v3033 = vpop.trf.xlu0
  %v3034 = vpop.trf.xlu0
  %v3035 = vpop.trf.xlu0
  %v3036 = vpop.trf.xlu0
  %v3037 = vpop.trf.xlu0
  %v3038 = vpop.trf.xlu0
  %v3039 = vpop.trf.xlu0
  %v3040 = vpop.trf.xlu0
  %v3041 = vpop.trf.xlu0
  %v3042 = vpop.trf.xlu0
  %v3043 = vpop.trf.xlu0
  %v3044 = vpop.trf.xlu0
  %v3045 = vpop.trf.xlu0
  %v3046 = vpop.trf.xlu0
  %v3047 = vpop.trf.xlu0
  %3048 = vxpose.xlu0.b32.start [1/16] %v2086, 128
  %3049 = vxpose.xlu0.b32.cont [2/16] 0.0, 128
  %3050 = vxpose.xlu0.b32.cont [3/16] 0.0, 128
  %3051 = vxpose.xlu0.b32.cont [4/16] 0.0, 128
  %3052 = vxpose.xlu0.b32.cont [5/16] 0.0, 128
  %3053 = vxpose.xlu0.b32.cont [6/16] 0.0, 128
  %3054 = vxpose.xlu0.b32.cont [7/16] 0.0, 128
  %3055 = vxpose.xlu0.b32.cont [8/16] 0.0, 128
  %3056 = vxpose.xlu0.b32.cont [9/16] 0.0, 128
  %3057 = vxpose.xlu0.b32.cont [10/16] 0.0, 128
  %3058 = vxpose.xlu0.b32.cont [11/16] 0.0, 128
  %3059 = vxpose.xlu0.b32.cont [12/16] 0.0, 128
  %3060 = vxpose.xlu0.b32.cont [13/16] 0.0, 128
  %3061 = vxpose.xlu0.b32.cont [14/16] 0.0, 128
  %3062 = vxpose.xlu0.b32.cont [15/16] 0.0, 128
  %3063 = vxpose.xlu0.b32.end [16/16] 0.0, 128
  %v3064 = vpop.trf.xlu0
  %v3065 = vpop.trf.xlu0
  %v3066 = vpop.trf.xlu0
  %v3067 = vpop.trf.xlu0
  %v3068 = vpop.trf.xlu0
  %v3069 = vpop.trf.xlu0
  %v3070 = vpop.trf.xlu0
  %v3071 = vpop.trf.xlu0
  %v3072 = vpop.trf.xlu0
  %v3073 = vpop.trf.xlu0
  %v3074 = vpop.trf.xlu0
  %v3075 = vpop.trf.xlu0
  %v3076 = vpop.trf.xlu0
  %v3077 = vpop.trf.xlu0
  %v3078 = vpop.trf.xlu0
  %v3079 = vpop.trf.xlu0
  %3080 = vxpose.xlu0.b32.start [1/16] %v2087, 128
  %3081 = vxpose.xlu0.b32.cont [2/16] 0.0, 128
  %3082 = vxpose.xlu0.b32.cont [3/16] 0.0, 128
  %3083 = vxpose.xlu0.b32.cont [4/16] 0.0, 128
  %3084 = vxpose.xlu0.b32.cont [5/16] 0.0, 128
  %3085 = vxpose.xlu0.b32.cont [6/16] 0.0, 128
  %3086 = vxpose.xlu0.b32.cont [7/16] 0.0, 128
  %3087 = vxpose.xlu0.b32.cont [8/16] 0.0, 128
  %3088 = vxpose.xlu0.b32.cont [9/16] 0.0, 128
  %3089 = vxpose.xlu0.b32.cont [10/16] 0.0, 128
  %3090 = vxpose.xlu0.b32.cont [11/16] 0.0, 128
  %3091 = vxpose.xlu0.b32.cont [12/16] 0.0, 128
  %3092 = vxpose.xlu0.b32.cont [13/16] 0.0, 128
  %3093 = vxpose.xlu0.b32.cont [14/16] 0.0, 128
  %3094 = vxpose.xlu0.b32.cont [15/16] 0.0, 128
  %3095 = vxpose.xlu0.b32.end [16/16] 0.0, 128
  %v3096 = vpop.trf.xlu0
  %v3097 = vpop.trf.xlu0
  %v3098 = vpop.trf.xlu0
  %v3099 = vpop.trf.xlu0
  %v3100 = vpop.trf.xlu0
  %v3101 = vpop.trf.xlu0
  %v3102 = vpop.trf.xlu0
  %v3103 = vpop.trf.xlu0
  %v3104 = vpop.trf.xlu0
  %v3105 = vpop.trf.xlu0
  %v3106 = vpop.trf.xlu0
  %v3107 = vpop.trf.xlu0
  %v3108 = vpop.trf.xlu0
  %v3109 = vpop.trf.xlu0
  %v3110 = vpop.trf.xlu0
  %v3111 = vpop.trf.xlu0
  %v3112 = vcombine.low %v2104, %v2168
  %v3113 = vcombine.high %v2104, %v2168
  %v3115 = vunpack.c.l.s4 1983009808
  %v3116 = vunpack.c.0.s8 %v3115
  %v3117 = vlaneseq
  %v3118 = vshrl.u32 %v3117, 7
  %v3119 = vsub.s32 %v3116, %v3118
  %v3120 = vrot.slane %v3112, %v3119
  %v3122 = vunpack.c.l.s4 1983009808
  %v3123 = vunpack.c.0.s8 %v3122
  %v3124 = vlaneseq
  %v3125 = vshrl.u32 %v3124, 7
  %v3126 = vsub.s32 %v3123, %v3125
  %v3127 = vrot.slane %v3113, %v3126
  %v3128 = vcombine.low %v2136, %v2200
  %v3129 = vcombine.high %v2136, %v2200
  %v3131 = vunpack.c.l.s4 1983009808
  %v3132 = vunpack.c.0.s8 %v3131
  %v3133 = vlaneseq
  %v3134 = vshrl.u32 %v3133, 7
  %v3135 = vsub.s32 %v3132, %v3134
  %v3136 = vrot.slane %v3128, %v3135
  %v3138 = vunpack.c.l.s4 1983009808
  %v3139 = vunpack.c.0.s8 %v3138
  %v3140 = vlaneseq
  %v3141 = vshrl.u32 %v3140, 7
  %v3142 = vsub.s32 %v3139, %v3141
  %v3143 = vrot.slane %v3129, %v3142
  %v3144 = vcombine.low %v2232, %v2296
  %v3145 = vcombine.high %v2232, %v2296
  %v3147 = vunpack.c.l.s4 1983009808
  %v3148 = vunpack.c.0.s8 %v3147
  %v3149 = vlaneseq
  %v3150 = vshrl.u32 %v3149, 7
  %v3151 = vsub.s32 %v3148, %v3150
  %v3152 = vrot.slane %v3144, %v3151
  %v3154 = vunpack.c.l.s4 1983009808
  %v3155 = vunpack.c.0.s8 %v3154
  %v3156 = vlaneseq
  %v3157 = vshrl.u32 %v3156, 7
  %v3158 = vsub.s32 %v3155, %v3157
  %v3159 = vrot.slane %v3145, %v3158
  %v3160 = vcombine.low %v2264, %v2328
  %v3161 = vcombine.high %v2264, %v2328
  %v3163 = vunpack.c.l.s4 1983009808
  %v3164 = vunpack.c.0.s8 %v3163
  %v3165 = vlaneseq
  %v3166 = vshrl.u32 %v3165, 7
  %v3167 = vsub.s32 %v3164, %v3166
  %v3168 = vrot.slane %v3160, %v3167
  %v3170 = vunpack.c.l.s4 1983009808
  %v3171 = vunpack.c.0.s8 %v3170
  %v3172 = vlaneseq
  %v3173 = vshrl.u32 %v3172, 7
  %v3174 = vsub.s32 %v3171, %v3173
  %v3175 = vrot.slane %v3161, %v3174
  %v3176 = vcombine.low %v3120, %v3136
  %v3177 = vcombine.high %v3120, %v3136
  %v3179 = vunpack.c.l.s4 1934713408
  %v3180 = vunpack.c.0.s8 %v3179
  %v3181 = vlaneseq
  %v3182 = vshrl.u32 %v3181, 7
  %v3183 = vsub.s32 %v3180, %v3182
  %v3184 = vrot.slane %v3176, %v3183
  %v3186 = vunpack.c.l.s4 1934713408
  %v3187 = vunpack.c.0.s8 %v3186
  %v3188 = vlaneseq
  %v3189 = vshrl.u32 %v3188, 7
  %v3190 = vsub.s32 %v3187, %v3189
  %v3191 = vrot.slane %v3177, %v3190
  %v3192 = vcombine.low %v3127, %v3143
  %v3193 = vcombine.high %v3127, %v3143
  %v3195 = vunpack.c.l.s4 1934713408
  %v3196 = vunpack.c.0.s8 %v3195
  %v3197 = vlaneseq
  %v3198 = vshrl.u32 %v3197, 7
  %v3199 = vsub.s32 %v3196, %v3198
  %v3200 = vrot.slane %v3192, %v3199
  %v3202 = vunpack.c.l.s4 1934713408
  %v3203 = vunpack.c.0.s8 %v3202
  %v3204 = vlaneseq
  %v3205 = vshrl.u32 %v3204, 7
  %v3206 = vsub.s32 %v3203, %v3205
  %v3207 = vrot.slane %v3193, %v3206
  %v3208 = vcombine.low %v3152, %v3168
  %v3209 = vcombine.high %v3152, %v3168
  %v3211 = vunpack.c.l.s4 1934713408
  %v3212 = vunpack.c.0.s8 %v3211
  %v3213 = vlaneseq
  %v3214 = vshrl.u32 %v3213, 7
  %v3215 = vsub.s32 %v3212, %v3214
  %v3216 = vrot.slane %v3208, %v3215
  %v3218 = vunpack.c.l.s4 1934713408
  %v3219 = vunpack.c.0.s8 %v3218
  %v3220 = vlaneseq
  %v3221 = vshrl.u32 %v3220, 7
  %v3222 = vsub.s32 %v3219, %v3221
  %v3223 = vrot.slane %v3209, %v3222
  %v3224 = vcombine.low %v3159, %v3175
  %v3225 = vcombine.high %v3159, %v3175
  %v3227 = vunpack.c.l.s4 1934713408
  %v3228 = vunpack.c.0.s8 %v3227
  %v3229 = vlaneseq
  %v3230 = vshrl.u32 %v3229, 7
  %v3231 = vsub.s32 %v3228, %v3230
  %v3232 = vrot.slane %v3224, %v3231
  %v3234 = vunpack.c.l.s4 1934713408
  %v3235 = vunpack.c.0.s8 %v3234
  %v3236 = vlaneseq
  %v3237 = vshrl.u32 %v3236, 7
  %v3238 = vsub.s32 %v3235, %v3237
  %v3239 = vrot.slane %v3225, %v3238
  %v3240 = vcombine.low %v3184, %v3216
  %v3241 = vcombine.high %v3184, %v3216
  %v3242 = vcombine.low %v3191, %v3223
  %v3243 = vcombine.high %v3191, %v3223
  %v3244 = vcombine.low %v3200, %v3232
  %v3245 = vcombine.high %v3200, %v3232
  %v3246 = vcombine.low %v3207, %v3239
  %v3247 = vcombine.high %v3207, %v3239
  %v3248 = vcombine.low %v2360, %v2424
  %v3249 = vcombine.high %v2360, %v2424
  %v3251 = vunpack.c.l.s4 1983009808
  %v3252 = vunpack.c.0.s8 %v3251
  %v3253 = vlaneseq
  %v3254 = vshrl.u32 %v3253, 7
  %v3255 = vsub.s32 %v3252, %v3254
  %v3256 = vrot.slane %v3248, %v3255
  %v3258 = vunpack.c.l.s4 1983009808
  %v3259 = vunpack.c.0.s8 %v3258
  %v3260 = vlaneseq
  %v3261 = vshrl.u32 %v3260, 7
  %v3262 = vsub.s32 %v3259, %v3261
  %v3263 = vrot.slane %v3249, %v3262
  %v3264 = vcombine.low %v2392, %v2456
  %v3265 = vcombine.high %v2392, %v2456
  %v3267 = vunpack.c.l.s4 1983009808
  %v3268 = vunpack.c.0.s8 %v3267
  %v3269 = vlaneseq
  %v3270 = vshrl.u32 %v3269, 7
  %v3271 = vsub.s32 %v3268, %v3270
  %v3272 = vrot.slane %v3264, %v3271
  %v3274 = vunpack.c.l.s4 1983009808
  %v3275 = vunpack.c.0.s8 %v3274
  %v3276 = vlaneseq
  %v3277 = vshrl.u32 %v3276, 7
  %v3278 = vsub.s32 %v3275, %v3277
  %v3279 = vrot.slane %v3265, %v3278
  %v3280 = vcombine.low %v2488, %v2552
  %v3281 = vcombine.high %v2488, %v2552
  %v3283 = vunpack.c.l.s4 1983009808
  %v3284 = vunpack.c.0.s8 %v3283
  %v3285 = vlaneseq
  %v3286 = vshrl.u32 %v3285, 7
  %v3287 = vsub.s32 %v3284, %v3286
  %v3288 = vrot.slane %v3280, %v3287
  %v3290 = vunpack.c.l.s4 1983009808
  %v3291 = vunpack.c.0.s8 %v3290
  %v3292 = vlaneseq
  %v3293 = vshrl.u32 %v3292, 7
  %v3294 = vsub.s32 %v3291, %v3293
  %v3295 = vrot.slane %v3281, %v3294
  %v3296 = vcombine.low %v2520, %v2584
  %v3297 = vcombine.high %v2520, %v2584
  %v3299 = vunpack.c.l.s4 1983009808
  %v3300 = vunpack.c.0.s8 %v3299
  %v3301 = vlaneseq
  %v3302 = vshrl.u32 %v3301, 7
  %v3303 = vsub.s32 %v3300, %v3302
  %v3304 = vrot.slane %v3296, %v3303
  %v3306 = vunpack.c.l.s4 1983009808
  %v3307 = vunpack.c.0.s8 %v3306
  %v3308 = vlaneseq
  %v3309 = vshrl.u32 %v3308, 7
  %v3310 = vsub.s32 %v3307, %v3309
  %v3311 = vrot.slane %v3297, %v3310
  %v3312 = vcombine.low %v3256, %v3272
  %v3313 = vcombine.high %v3256, %v3272
  %v3315 = vunpack.c.l.s4 1934713408
  %v3316 = vunpack.c.0.s8 %v3315
  %v3317 = vlaneseq
  %v3318 = vshrl.u32 %v3317, 7
  %v3319 = vsub.s32 %v3316, %v3318
  %v3320 = vrot.slane %v3312, %v3319
  %v3322 = vunpack.c.l.s4 1934713408
  %v3323 = vunpack.c.0.s8 %v3322
  %v3324 = vlaneseq
  %v3325 = vshrl.u32 %v3324, 7
  %v3326 = vsub.s32 %v3323, %v3325
  %v3327 = vrot.slane %v3313, %v3326
  %v3328 = vcombine.low %v3263, %v3279
  %v3329 = vcombine.high %v3263, %v3279
  %v3331 = vunpack.c.l.s4 1934713408
  %v3332 = vunpack.c.0.s8 %v3331
  %v3333 = vlaneseq
  %v3334 = vshrl.u32 %v3333, 7
  %v3335 = vsub.s32 %v3332, %v3334
  %v3336 = vrot.slane %v3328, %v3335
  %v3338 = vunpack.c.l.s4 1934713408
  %v3339 = vunpack.c.0.s8 %v3338
  %v3340 = vlaneseq
  %v3341 = vshrl.u32 %v3340, 7
  %v3342 = vsub.s32 %v3339, %v3341
  %v3343 = vrot.slane %v3329, %v3342
  %v3344 = vcombine.low %v3288, %v3304
  %v3345 = vcombine.high %v3288, %v3304
  %v3347 = vunpack.c.l.s4 1934713408
  %v3348 = vunpack.c.0.s8 %v3347
  %v3349 = vlaneseq
  %v3350 = vshrl.u32 %v3349, 7
  %v3351 = vsub.s32 %v3348, %v3350
  %v3352 = vrot.slane %v3344, %v3351
  %v3354 = vunpack.c.l.s4 1934713408
  %v3355 = vunpack.c.0.s8 %v3354
  %v3356 = vlaneseq
  %v3357 = vshrl.u32 %v3356, 7
  %v3358 = vsub.s32 %v3355, %v3357
  %v3359 = vrot.slane %v3345, %v3358
  %v3360 = vcombine.low %v3295, %v3311
  %v3361 = vcombine.high %v3295, %v3311
  %v3363 = vunpack.c.l.s4 1934713408
  %v3364 = vunpack.c.0.s8 %v3363
  %v3365 = vlaneseq
  %v3366 = vshrl.u32 %v3365, 7
  %v3367 = vsub.s32 %v3364, %v3366
  %v3368 = vrot.slane %v3360, %v3367
  %v3370 = vunpack.c.l.s4 1934713408
  %v3371 = vunpack.c.0.s8 %v3370
  %v3372 = vlaneseq
  %v3373 = vshrl.u32 %v3372, 7
  %v3374 = vsub.s32 %v3371, %v3373
  %v3375 = vrot.slane %v3361, %v3374
  %v3376 = vcombine.low %v3320, %v3352
  %v3377 = vcombine.high %v3320, %v3352
  %v3378 = vcombine.low %v3327, %v3359
  %v3379 = vcombine.high %v3327, %v3359
  %v3380 = vcombine.low %v3336, %v3368
  %v3381 = vcombine.high %v3336, %v3368
  %v3382 = vcombine.low %v3343, %v3375
  %v3383 = vcombine.high %v3343, %v3375
  %v3384 = vcombine.low %v2616, %v2680
  %v3385 = vcombine.high %v2616, %v2680
  %v3387 = vunpack.c.l.s4 1983009808
  %v3388 = vunpack.c.0.s8 %v3387
  %v3389 = vlaneseq
  %v3390 = vshrl.u32 %v3389, 7
  %v3391 = vsub.s32 %v3388, %v3390
  %v3392 = vrot.slane %v3384, %v3391
  %v3394 = vunpack.c.l.s4 1983009808
  %v3395 = vunpack.c.0.s8 %v3394
  %v3396 = vlaneseq
  %v3397 = vshrl.u32 %v3396, 7
  %v3398 = vsub.s32 %v3395, %v3397
  %v3399 = vrot.slane %v3385, %v3398
  %v3400 = vcombine.low %v2648, %v2712
  %v3401 = vcombine.high %v2648, %v2712
  %v3403 = vunpack.c.l.s4 1983009808
  %v3404 = vunpack.c.0.s8 %v3403
  %v3405 = vlaneseq
  %v3406 = vshrl.u32 %v3405, 7
  %v3407 = vsub.s32 %v3404, %v3406
  %v3408 = vrot.slane %v3400, %v3407
  %v3410 = vunpack.c.l.s4 1983009808
  %v3411 = vunpack.c.0.s8 %v3410
  %v3412 = vlaneseq
  %v3413 = vshrl.u32 %v3412, 7
  %v3414 = vsub.s32 %v3411, %v3413
  %v3415 = vrot.slane %v3401, %v3414
  %v3416 = vcombine.low %v2744, %v2808
  %v3417 = vcombine.high %v2744, %v2808
  %v3419 = vunpack.c.l.s4 1983009808
  %v3420 = vunpack.c.0.s8 %v3419
  %v3421 = vlaneseq
  %v3422 = vshrl.u32 %v3421, 7
  %v3423 = vsub.s32 %v3420, %v3422
  %v3424 = vrot.slane %v3416, %v3423
  %v3426 = vunpack.c.l.s4 1983009808
  %v3427 = vunpack.c.0.s8 %v3426
  %v3428 = vlaneseq
  %v3429 = vshrl.u32 %v3428, 7
  %v3430 = vsub.s32 %v3427, %v3429
  %v3431 = vrot.slane %v3417, %v3430
  %v3432 = vcombine.low %v2776, %v2840
  %v3433 = vcombine.high %v2776, %v2840
  %v3435 = vunpack.c.l.s4 1983009808
  %v3436 = vunpack.c.0.s8 %v3435
  %v3437 = vlaneseq
  %v3438 = vshrl.u32 %v3437, 7
  %v3439 = vsub.s32 %v3436, %v3438
  %v3440 = vrot.slane %v3432, %v3439
  %v3442 = vunpack.c.l.s4 1983009808
  %v3443 = vunpack.c.0.s8 %v3442
  %v3444 = vlaneseq
  %v3445 = vshrl.u32 %v3444, 7
  %v3446 = vsub.s32 %v3443, %v3445
  %v3447 = vrot.slane %v3433, %v3446
  %v3448 = vcombine.low %v3392, %v3408
  %v3449 = vcombine.high %v3392, %v3408
  %v3451 = vunpack.c.l.s4 1934713408
  %v3452 = vunpack.c.0.s8 %v3451
  %v3453 = vlaneseq
  %v3454 = vshrl.u32 %v3453, 7
  %v3455 = vsub.s32 %v3452, %v3454
  %v3456 = vrot.slane %v3448, %v3455
  %v3458 = vunpack.c.l.s4 1934713408
  %v3459 = vunpack.c.0.s8 %v3458
  %v3460 = vlaneseq
  %v3461 = vshrl.u32 %v3460, 7
  %v3462 = vsub.s32 %v3459, %v3461
  %v3463 = vrot.slane %v3449, %v3462
  %v3464 = vcombine.low %v3399, %v3415
  %v3465 = vcombine.high %v3399, %v3415
  %v3467 = vunpack.c.l.s4 1934713408
  %v3468 = vunpack.c.0.s8 %v3467
  %v3469 = vlaneseq
  %v3470 = vshrl.u32 %v3469, 7
  %v3471 = vsub.s32 %v3468, %v3470
  %v3472 = vrot.slane %v3464, %v3471
  %v3474 = vunpack.c.l.s4 1934713408
  %v3475 = vunpack.c.0.s8 %v3474
  %v3476 = vlaneseq
  %v3477 = vshrl.u32 %v3476, 7
  %v3478 = vsub.s32 %v3475, %v3477
  %v3479 = vrot.slane %v3465, %v3478
  %v3480 = vcombine.low %v3424, %v3440
  %v3481 = vcombine.high %v3424, %v3440
  %v3483 = vunpack.c.l.s4 1934713408
  %v3484 = vunpack.c.0.s8 %v3483
  %v3485 = vlaneseq
  %v3486 = vshrl.u32 %v3485, 7
  %v3487 = vsub.s32 %v3484, %v3486
  %v3488 = vrot.slane %v3480, %v3487
  %v3490 = vunpack.c.l.s4 1934713408
  %v3491 = vunpack.c.0.s8 %v3490
  %v3492 = vlaneseq
  %v3493 = vshrl.u32 %v3492, 7
  %v3494 = vsub.s32 %v3491, %v3493
  %v3495 = vrot.slane %v3481, %v3494
  %v3496 = vcombine.low %v3431, %v3447
  %v3497 = vcombine.high %v3431, %v3447
  %v3499 = vunpack.c.l.s4 1934713408
  %v3500 = vunpack.c.0.s8 %v3499
  %v3501 = vlaneseq
  %v3502 = vshrl.u32 %v3501, 7
  %v3503 = vsub.s32 %v3500, %v3502
  %v3504 = vrot.slane %v3496, %v3503
  %v3506 = vunpack.c.l.s4 1934713408
  %v3507 = vunpack.c.0.s8 %v3506
  %v3508 = vlaneseq
  %v3509 = vshrl.u32 %v3508, 7
  %v3510 = vsub.s32 %v3507, %v3509
  %v3511 = vrot.slane %v3497, %v3510
  %v3512 = vcombine.low %v3456, %v3488
  %v3513 = vcombine.high %v3456, %v3488
  %v3514 = vcombine.low %v3463, %v3495
  %v3515 = vcombine.high %v3463, %v3495
  %v3516 = vcombine.low %v3472, %v3504
  %v3517 = vcombine.high %v3472, %v3504
  %v3518 = vcombine.low %v3479, %v3511
  %v3519 = vcombine.high %v3479, %v3511
  %v3520 = vcombine.low %v2872, %v2936
  %v3521 = vcombine.high %v2872, %v2936
  %v3523 = vunpack.c.l.s4 1983009808
  %v3524 = vunpack.c.0.s8 %v3523
  %v3525 = vlaneseq
  %v3526 = vshrl.u32 %v3525, 7
  %v3527 = vsub.s32 %v3524, %v3526
  %v3528 = vrot.slane %v3520, %v3527
  %v3530 = vunpack.c.l.s4 1983009808
  %v3531 = vunpack.c.0.s8 %v3530
  %v3532 = vlaneseq
  %v3533 = vshrl.u32 %v3532, 7
  %v3534 = vsub.s32 %v3531, %v3533
  %v3535 = vrot.slane %v3521, %v3534
  %v3536 = vcombine.low %v2904, %v2968
  %v3537 = vcombine.high %v2904, %v2968
  %v3539 = vunpack.c.l.s4 1983009808
  %v3540 = vunpack.c.0.s8 %v3539
  %v3541 = vlaneseq
  %v3542 = vshrl.u32 %v3541, 7
  %v3543 = vsub.s32 %v3540, %v3542
  %v3544 = vrot.slane %v3536, %v3543
  %v3546 = vunpack.c.l.s4 1983009808
  %v3547 = vunpack.c.0.s8 %v3546
  %v3548 = vlaneseq
  %v3549 = vshrl.u32 %v3548, 7
  %v3550 = vsub.s32 %v3547, %v3549
  %v3551 = vrot.slane %v3537, %v3550
  %v3552 = vcombine.low %v3000, %v3064
  %v3553 = vcombine.high %v3000, %v3064
  %v3555 = vunpack.c.l.s4 1983009808
  %v3556 = vunpack.c.0.s8 %v3555
  %v3557 = vlaneseq
  %v3558 = vshrl.u32 %v3557, 7
  %v3559 = vsub.s32 %v3556, %v3558
  %v3560 = vrot.slane %v3552, %v3559
  %v3562 = vunpack.c.l.s4 1983009808
  %v3563 = vunpack.c.0.s8 %v3562
  %v3564 = vlaneseq
  %v3565 = vshrl.u32 %v3564, 7
  %v3566 = vsub.s32 %v3563, %v3565
  %v3567 = vrot.slane %v3553, %v3566
  %v3568 = vcombine.low %v3032, %v3096
  %v3569 = vcombine.high %v3032, %v3096
  %v3571 = vunpack.c.l.s4 1983009808
  %v3572 = vunpack.c.0.s8 %v3571
  %v3573 = vlaneseq
  %v3574 = vshrl.u32 %v3573, 7
  %v3575 = vsub.s32 %v3572, %v3574
  %v3576 = vrot.slane %v3568, %v3575
  %v3578 = vunpack.c.l.s4 1983009808
  %v3579 = vunpack.c.0.s8 %v3578
  %v3580 = vlaneseq
  %v3581 = vshrl.u32 %v3580, 7
  %v3582 = vsub.s32 %v3579, %v3581
  %v3583 = vrot.slane %v3569, %v3582
  %v3584 = vcombine.low %v3528, %v3544
  %v3585 = vcombine.high %v3528, %v3544
  %v3587 = vunpack.c.l.s4 1934713408
  %v3588 = vunpack.c.0.s8 %v3587
  %v3589 = vlaneseq
  %v3590 = vshrl.u32 %v3589, 7
  %v3591 = vsub.s32 %v3588, %v3590
  %v3592 = vrot.slane %v3584, %v3591
  %v3594 = vunpack.c.l.s4 1934713408
  %v3595 = vunpack.c.0.s8 %v3594
  %v3596 = vlaneseq
  %v3597 = vshrl.u32 %v3596, 7
  %v3598 = vsub.s32 %v3595, %v3597
  %v3599 = vrot.slane %v3585, %v3598
  %v3600 = vcombine.low %v3535, %v3551
  %v3601 = vcombine.high %v3535, %v3551
  %v3603 = vunpack.c.l.s4 1934713408
  %v3604 = vunpack.c.0.s8 %v3603
  %v3605 = vlaneseq
  %v3606 = vshrl.u32 %v3605, 7
  %v3607 = vsub.s32 %v3604, %v3606
  %v3608 = vrot.slane %v3600, %v3607
  %v3610 = vunpack.c.l.s4 1934713408
  %v3611 = vunpack.c.0.s8 %v3610
  %v3612 = vlaneseq
  %v3613 = vshrl.u32 %v3612, 7
  %v3614 = vsub.s32 %v3611, %v3613
  %v3615 = vrot.slane %v3601, %v3614
  %v3616 = vcombine.low %v3560, %v3576
  %v3617 = vcombine.high %v3560, %v3576
  %v3619 = vunpack.c.l.s4 1934713408
  %v3620 = vunpack.c.0.s8 %v3619
  %v3621 = vlaneseq
  %v3622 = vshrl.u32 %v3621, 7
  %v3623 = vsub.s32 %v3620, %v3622
  %v3624 = vrot.slane %v3616, %v3623
  %v3626 = vunpack.c.l.s4 1934713408
  %v3627 = vunpack.c.0.s8 %v3626
  %v3628 = vlaneseq
  %v3629 = vshrl.u32 %v3628, 7
  %v3630 = vsub.s32 %v3627, %v3629
  %v3631 = vrot.slane %v3617, %v3630
  %v3632 = vcombine.low %v3567, %v3583
  %v3633 = vcombine.high %v3567, %v3583
  %v3635 = vunpack.c.l.s4 1934713408
  %v3636 = vunpack.c.0.s8 %v3635
  %v3637 = vlaneseq
  %v3638 = vshrl.u32 %v3637, 7
  %v3639 = vsub.s32 %v3636, %v3638
  %v3640 = vrot.slane %v3632, %v3639
  %v3642 = vunpack.c.l.s4 1934713408
  %v3643 = vunpack.c.0.s8 %v3642
  %v3644 = vlaneseq
  %v3645 = vshrl.u32 %v3644, 7
  %v3646 = vsub.s32 %v3643, %v3645
  %v3647 = vrot.slane %v3633, %v3646
  %v3648 = vcombine.low %v3592, %v3624
  %v3649 = vcombine.high %v3592, %v3624
  %v3650 = vcombine.low %v3599, %v3631
  %v3651 = vcombine.high %v3599, %v3631
  %v3652 = vcombine.low %v3608, %v3640
  %v3653 = vcombine.high %v3608, %v3640
  %v3654 = vcombine.low %v3615, %v3647
  %v3655 = vcombine.high %v3615, %v3647
  %3656 = vxpose.xlu0.b32.start [1/16] %v3240, 128
  %3657 = vxpose.xlu0.b32.cont [2/16] 0.0, 128
  %3658 = vxpose.xlu0.b32.cont [3/16] 0.0, 128
  %3659 = vxpose.xlu0.b32.cont [4/16] 0.0, 128
  %3660 = vxpose.xlu0.b32.cont [5/16] 0.0, 128
  %3661 = vxpose.xlu0.b32.cont [6/16] 0.0, 128
  %3662 = vxpose.xlu0.b32.cont [7/16] 0.0, 128
  %3663 = vxpose.xlu0.b32.cont [8/16] 0.0, 128
  %3664 = vxpose.xlu0.b32.cont [9/16] 0.0, 128
  %3665 = vxpose.xlu0.b32.cont [10/16] 0.0, 128
  %3666 = vxpose.xlu0.b32.cont [11/16] 0.0, 128
  %3667 = vxpose.xlu0.b32.cont [12/16] 0.0, 128
  %3668 = vxpose.xlu0.b32.cont [13/16] 0.0, 128
  %3669 = vxpose.xlu0.b32.cont [14/16] 0.0, 128
  %3670 = vxpose.xlu0.b32.cont [15/16] 0.0, 128
  %3671 = vxpose.xlu0.b32.end [16/16] 0.0, 128
  %v3672 = vpop.trf.xlu0
  %v3673 = vpop.trf.xlu0
  %v3674 = vpop.trf.xlu0
  %v3675 = vpop.trf.xlu0
  %v3676 = vpop.trf.xlu0
  %v3677 = vpop.trf.xlu0
  %v3678 = vpop.trf.xlu0
  %v3679 = vpop.trf.xlu0
  %v3680 = vpop.trf.xlu0
  %v3681 = vpop.trf.xlu0
  %v3682 = vpop.trf.xlu0
  %v3683 = vpop.trf.xlu0
  %v3684 = vpop.trf.xlu0
  %v3685 = vpop.trf.xlu0
  %v3686 = vpop.trf.xlu0
  %v3687 = vpop.trf.xlu0
  %3688 = vxpose.xlu0.b32.start [1/16] %v3241, 128
  %3689 = vxpose.xlu0.b32.cont [2/16] 0.0, 128
  %3690 = vxpose.xlu0.b32.cont [3/16] 0.0, 128
  %3691 = vxpose.xlu0.b32.cont [4/16] 0.0, 128
  %3692 = vxpose.xlu0.b32.cont [5/16] 0.0, 128
  %3693 = vxpose.xlu0.b32.cont [6/16] 0.0, 128
  %3694 = vxpose.xlu0.b32.cont [7/16] 0.0, 128
  %3695 = vxpose.xlu0.b32.cont [8/16] 0.0, 128
  %3696 = vxpose.xlu0.b32.cont [9/16] 0.0, 128
  %3697 = vxpose.xlu0.b32.cont [10/16] 0.0, 128
  %3698 = vxpose.xlu0.b32.cont [11/16] 0.0, 128
  %3699 = vxpose.xlu0.b32.cont [12/16] 0.0, 128
  %3700 = vxpose.xlu0.b32.cont [13/16] 0.0, 128
  %3701 = vxpose.xlu0.b32.cont [14/16] 0.0, 128
  %3702 = vxpose.xlu0.b32.cont [15/16] 0.0, 128
  %3703 = vxpose.xlu0.b32.end [16/16] 0.0, 128
  %v3704 = vpop.trf.xlu0
  %v3705 = vpop.trf.xlu0
  %v3706 = vpop.trf.xlu0
  %v3707 = vpop.trf.xlu0
  %v3708 = vpop.trf.xlu0
  %v3709 = vpop.trf.xlu0
  %v3710 = vpop.trf.xlu0
  %v3711 = vpop.trf.xlu0
  %v3712 = vpop.trf.xlu0
  %v3713 = vpop.trf.xlu0
  %v3714 = vpop.trf.xlu0
  %v3715 = vpop.trf.xlu0
  %v3716 = vpop.trf.xlu0
  %v3717 = vpop.trf.xlu0
  %v3718 = vpop.trf.xlu0
  %v3719 = vpop.trf.xlu0
  %3720 = vxpose.xlu0.b32.start [1/16] %v3242, 128
  %3721 = vxpose.xlu0.b32.cont [2/16] 0.0, 128
  %3722 = vxpose.xlu0.b32.cont [3/16] 0.0, 128
  %3723 = vxpose.xlu0.b32.cont [4/16] 0.0, 128
  %3724 = vxpose.xlu0.b32.cont [5/16] 0.0, 128
  %3725 = vxpose.xlu0.b32.cont [6/16] 0.0, 128
  %3726 = vxpose.xlu0.b32.cont [7/16] 0.0, 128
  %3727 = vxpose.xlu0.b32.cont [8/16] 0.0, 128
  %3728 = vxpose.xlu0.b32.cont [9/16] 0.0, 128
  %3729 = vxpose.xlu0.b32.cont [10/16] 0.0, 128
  %3730 = vxpose.xlu0.b32.cont [11/16] 0.0, 128
  %3731 = vxpose.xlu0.b32.cont [12/16] 0.0, 128
  %3732 = vxpose.xlu0.b32.cont [13/16] 0.0, 128
  %3733 = vxpose.xlu0.b32.cont [14/16] 0.0, 128
  %3734 = vxpose.xlu0.b32.cont [15/16] 0.0, 128
  %3735 = vxpose.xlu0.b32.end [16/16] 0.0, 128
  %v3736 = vpop.trf.xlu0
  %v3737 = vpop.trf.xlu0
  %v3738 = vpop.trf.xlu0
  %v3739 = vpop.trf.xlu0
  %v3740 = vpop.trf.xlu0
  %v3741 = vpop.trf.xlu0
  %v3742 = vpop.trf.xlu0
  %v3743 = vpop.trf.xlu0
  %v3744 = vpop.trf.xlu0
  %v3745 = vpop.trf.xlu0
  %v3746 = vpop.trf.xlu0
  %v3747 = vpop.trf.xlu0
  %v3748 = vpop.trf.xlu0
  %v3749 = vpop.trf.xlu0
  %v3750 = vpop.trf.xlu0
  %v3751 = vpop.trf.xlu0
  %3752 = vxpose.xlu0.b32.start [1/16] %v3243, 128
  %3753 = vxpose.xlu0.b32.cont [2/16] 0.0, 128
  %3754 = vxpose.xlu0.b32.cont [3/16] 0.0, 128
  %3755 = vxpose.xlu0.b32.cont [4/16] 0.0, 128
  %3756 = vxpose.xlu0.b32.cont [5/16] 0.0, 128
  %3757 = vxpose.xlu0.b32.cont [6/16] 0.0, 128
  %3758 = vxpose.xlu0.b32.cont [7/16] 0.0, 128
  %3759 = vxpose.xlu0.b32.cont [8/16] 0.0, 128
  %3760 = vxpose.xlu0.b32.cont [9/16] 0.0, 128
  %3761 = vxpose.xlu0.b32.cont [10/16] 0.0, 128
  %3762 = vxpose.xlu0.b32.cont [11/16] 0.0, 128
  %3763 = vxpose.xlu0.b32.cont [12/16] 0.0, 128
  %3764 = vxpose.xlu0.b32.cont [13/16] 0.0, 128
  %3765 = vxpose.xlu0.b32.cont [14/16] 0.0, 128
  %3766 = vxpose.xlu0.b32.cont [15/16] 0.0, 128
  %3767 = vxpose.xlu0.b32.end [16/16] 0.0, 128
  %v3768 = vpop.trf.xlu0
  %v3769 = vpop.trf.xlu0
  %v3770 = vpop.trf.xlu0
  %v3771 = vpop.trf.xlu0
  %v3772 = vpop.trf.xlu0
  %v3773 = vpop.trf.xlu0
  %v3774 = vpop.trf.xlu0
  %v3775 = vpop.trf.xlu0
  %v3776 = vpop.trf.xlu0
  %v3777 = vpop.trf.xlu0
  %v3778 = vpop.trf.xlu0
  %v3779 = vpop.trf.xlu0
  %v3780 = vpop.trf.xlu0
  %v3781 = vpop.trf.xlu0
  %v3782 = vpop.trf.xlu0
  %v3783 = vpop.trf.xlu0
  %3784 = vxpose.xlu0.b32.start [1/16] %v3244, 128
  %3785 = vxpose.xlu0.b32.cont [2/16] 0.0, 128
  %3786 = vxpose.xlu0.b32.cont [3/16] 0.0, 128
  %3787 = vxpose.xlu0.b32.cont [4/16] 0.0, 128
  %3788 = vxpose.xlu0.b32.cont [5/16] 0.0, 128
  %3789 = vxpose.xlu0.b32.cont [6/16] 0.0, 128
  %3790 = vxpose.xlu0.b32.cont [7/16] 0.0, 128
  %3791 = vxpose.xlu0.b32.cont [8/16] 0.0, 128
  %3792 = vxpose.xlu0.b32.cont [9/16] 0.0, 128
  %3793 = vxpose.xlu0.b32.cont [10/16] 0.0, 128
  %3794 = vxpose.xlu0.b32.cont [11/16] 0.0, 128
  %3795 = vxpose.xlu0.b32.cont [12/16] 0.0, 128
  %3796 = vxpose.xlu0.b32.cont [13/16] 0.0, 128
  %3797 = vxpose.xlu0.b32.cont [14/16] 0.0, 128
  %3798 = vxpose.xlu0.b32.cont [15/16] 0.0, 128
  %3799 = vxpose.xlu0.b32.end [16/16] 0.0, 128
  %v3800 = vpop.trf.xlu0
  %v3801 = vpop.trf.xlu0
  %v3802 = vpop.trf.xlu0
  %v3803 = vpop.trf.xlu0
  %v3804 = vpop.trf.xlu0
  %v3805 = vpop.trf.xlu0
  %v3806 = vpop.trf.xlu0
  %v3807 = vpop.trf.xlu0
  %v3808 = vpop.trf.xlu0
  %v3809 = vpop.trf.xlu0
  %v3810 = vpop.trf.xlu0
  %v3811 = vpop.trf.xlu0
  %v3812 = vpop.trf.xlu0
  %v3813 = vpop.trf.xlu0
  %v3814 = vpop.trf.xlu0
  %v3815 = vpop.trf.xlu0
  %3816 = vxpose.xlu0.b32.start [1/16] %v3245, 128
  %3817 = vxpose.xlu0.b32.cont [2/16] 0.0, 128
  %3818 = vxpose.xlu0.b32.cont [3/16] 0.0, 128
  %3819 = vxpose.xlu0.b32.cont [4/16] 0.0, 128
  %3820 = vxpose.xlu0.b32.cont [5/16] 0.0, 128
  %3821 = vxpose.xlu0.b32.cont [6/16] 0.0, 128
  %3822 = vxpose.xlu0.b32.cont [7/16] 0.0, 128
  %3823 = vxpose.xlu0.b32.cont [8/16] 0.0, 128
  %3824 = vxpose.xlu0.b32.cont [9/16] 0.0, 128
  %3825 = vxpose.xlu0.b32.cont [10/16] 0.0, 128
  %3826 = vxpose.xlu0.b32.cont [11/16] 0.0, 128
  %3827 = vxpose.xlu0.b32.cont [12/16] 0.0, 128
  %3828 = vxpose.xlu0.b32.cont [13/16] 0.0, 128
  %3829 = vxpose.xlu0.b32.cont [14/16] 0.0, 128
  %3830 = vxpose.xlu0.b32.cont [15/16] 0.0, 128
  %3831 = vxpose.xlu0.b32.end [16/16] 0.0, 128
  %v3832 = vpop.trf.xlu0
  %v3833 = vpop.trf.xlu0
  %v3834 = vpop.trf.xlu0
  %v3835 = vpop.trf.xlu0
  %v3836 = vpop.trf.xlu0
  %v3837 = vpop.trf.xlu0
  %v3838 = vpop.trf.xlu0
  %v3839 = vpop.trf.xlu0
  %v3840 = vpop.trf.xlu0
  %v3841 = vpop.trf.xlu0
  %v3842 = vpop.trf.xlu0
  %v3843 = vpop.trf.xlu0
  %v3844 = vpop.trf.xlu0
  %v3845 = vpop.trf.xlu0
  %v3846 = vpop.trf.xlu0
  %v3847 = vpop.trf.xlu0
  %3848 = vxpose.xlu0.b32.start [1/16] %v3246, 128
  %3849 = vxpose.xlu0.b32.cont [2/16] 0.0, 128
  %3850 = vxpose.xlu0.b32.cont [3/16] 0.0, 128
  %3851 = vxpose.xlu0.b32.cont [4/16] 0.0, 128
  %3852 = vxpose.xlu0.b32.cont [5/16] 0.0, 128
  %3853 = vxpose.xlu0.b32.cont [6/16] 0.0, 128
  %3854 = vxpose.xlu0.b32.cont [7/16] 0.0, 128
  %3855 = vxpose.xlu0.b32.cont [8/16] 0.0, 128
  %3856 = vxpose.xlu0.b32.cont [9/16] 0.0, 128
  %3857 = vxpose.xlu0.b32.cont [10/16] 0.0, 128
  %3858 = vxpose.xlu0.b32.cont [11/16] 0.0, 128
  %3859 = vxpose.xlu0.b32.cont [12/16] 0.0, 128
  %3860 = vxpose.xlu0.b32.cont [13/16] 0.0, 128
  %3861 = vxpose.xlu0.b32.cont [14/16] 0.0, 128
  %3862 = vxpose.xlu0.b32.cont [15/16] 0.0, 128
  %3863 = vxpose.xlu0.b32.end [16/16] 0.0, 128
  %v3864 = vpop.trf.xlu0
  %v3865 = vpop.trf.xlu0
  %v3866 = vpop.trf.xlu0
  %v3867 = vpop.trf.xlu0
  %v3868 = vpop.trf.xlu0
  %v3869 = vpop.trf.xlu0
  %v3870 = vpop.trf.xlu0
  %v3871 = vpop.trf.xlu0
  %v3872 = vpop.trf.xlu0
  %v3873 = vpop.trf.xlu0
  %v3874 = vpop.trf.xlu0
  %v3875 = vpop.trf.xlu0
  %v3876 = vpop.trf.xlu0
  %v3877 = vpop.trf.xlu0
  %v3878 = vpop.trf.xlu0
  %v3879 = vpop.trf.xlu0
  %3880 = vxpose.xlu0.b32.start [1/16] %v3247, 128
  %3881 = vxpose.xlu0.b32.cont [2/16] 0.0, 128
  %3882 = vxpose.xlu0.b32.cont [3/16] 0.0, 128
  %3883 = vxpose.xlu0.b32.cont [4/16] 0.0, 128
  %3884 = vxpose.xlu0.b32.cont [5/16] 0.0, 128
  %3885 = vxpose.xlu0.b32.cont [6/16] 0.0, 128
  %3886 = vxpose.xlu0.b32.cont [7/16] 0.0, 128
  %3887 = vxpose.xlu0.b32.cont [8/16] 0.0, 128
  %3888 = vxpose.xlu0.b32.cont [9/16] 0.0, 128
  %3889 = vxpose.xlu0.b32.cont [10/16] 0.0, 128
  %3890 = vxpose.xlu0.b32.cont [11/16] 0.0, 128
  %3891 = vxpose.xlu0.b32.cont [12/16] 0.0, 128
  %3892 = vxpose.xlu0.b32.cont [13/16] 0.0, 128
  %3893 = vxpose.xlu0.b32.cont [14/16] 0.0, 128
  %3894 = vxpose.xlu0.b32.cont [15/16] 0.0, 128
  %3895 = vxpose.xlu0.b32.end [16/16] 0.0, 128
  %v3896 = vpop.trf.xlu0
  %v3897 = vpop.trf.xlu0
  %v3898 = vpop.trf.xlu0
  %v3899 = vpop.trf.xlu0
  %v3900 = vpop.trf.xlu0
  %v3901 = vpop.trf.xlu0
  %v3902 = vpop.trf.xlu0
  %v3903 = vpop.trf.xlu0
  %v3904 = vpop.trf.xlu0
  %v3905 = vpop.trf.xlu0
  %v3906 = vpop.trf.xlu0
  %v3907 = vpop.trf.xlu0
  %v3908 = vpop.trf.xlu0
  %v3909 = vpop.trf.xlu0
  %v3910 = vpop.trf.xlu0
  %v3911 = vpop.trf.xlu0
  %3912 = vxpose.xlu0.b32.start [1/16] %v3376, 128
  %3913 = vxpose.xlu0.b32.cont [2/16] 0.0, 128
  %3914 = vxpose.xlu0.b32.cont [3/16] 0.0, 128
  %3915 = vxpose.xlu0.b32.cont [4/16] 0.0, 128
  %3916 = vxpose.xlu0.b32.cont [5/16] 0.0, 128
  %3917 = vxpose.xlu0.b32.cont [6/16] 0.0, 128
  %3918 = vxpose.xlu0.b32.cont [7/16] 0.0, 128
  %3919 = vxpose.xlu0.b32.cont [8/16] 0.0, 128
  %3920 = vxpose.xlu0.b32.cont [9/16] 0.0, 128
  %3921 = vxpose.xlu0.b32.cont [10/16] 0.0, 128
  %3922 = vxpose.xlu0.b32.cont [11/16] 0.0, 128
  %3923 = vxpose.xlu0.b32.cont [12/16] 0.0, 128
  %3924 = vxpose.xlu0.b32.cont [13/16] 0.0, 128
  %3925 = vxpose.xlu0.b32.cont [14/16] 0.0, 128
  %3926 = vxpose.xlu0.b32.cont [15/16] 0.0, 128
  %3927 = vxpose.xlu0.b32.end [16/16] 0.0, 128
  %v3928 = vpop.trf.xlu0
  %v3929 = vpop.trf.xlu0
  %v3930 = vpop.trf.xlu0
  %v3931 = vpop.trf.xlu0
  %v3932 = vpop.trf.xlu0
  %v3933 = vpop.trf.xlu0
  %v3934 = vpop.trf.xlu0
  %v3935 = vpop.trf.xlu0
  %v3936 = vpop.trf.xlu0
  %v3937 = vpop.trf.xlu0
  %v3938 = vpop.trf.xlu0
  %v3939 = vpop.trf.xlu0
  %v3940 = vpop.trf.xlu0
  %v3941 = vpop.trf.xlu0
  %v3942 = vpop.trf.xlu0
  %v3943 = vpop.trf.xlu0
  %3944 = vxpose.xlu0.b32.start [1/16] %v3377, 128
  %3945 = vxpose.xlu0.b32.cont [2/16] 0.0, 128
  %3946 = vxpose.xlu0.b32.cont [3/16] 0.0, 128
  %3947 = vxpose.xlu0.b32.cont [4/16] 0.0, 128
  %3948 = vxpose.xlu0.b32.cont [5/16] 0.0, 128
  %3949 = vxpose.xlu0.b32.cont [6/16] 0.0, 128
  %3950 = vxpose.xlu0.b32.cont [7/16] 0.0, 128
  %3951 = vxpose.xlu0.b32.cont [8/16] 0.0, 128
  %3952 = vxpose.xlu0.b32.cont [9/16] 0.0, 128
  %3953 = vxpose.xlu0.b32.cont [10/16] 0.0, 128
  %3954 = vxpose.xlu0.b32.cont [11/16] 0.0, 128
  %3955 = vxpose.xlu0.b32.cont [12/16] 0.0, 128
  %3956 = vxpose.xlu0.b32.cont [13/16] 0.0, 128
  %3957 = vxpose.xlu0.b32.cont [14/16] 0.0, 128
  %3958 = vxpose.xlu0.b32.cont [15/16] 0.0, 128
  %3959 = vxpose.xlu0.b32.end [16/16] 0.0, 128
  %v3960 = vpop.trf.xlu0
  %v3961 = vpop.trf.xlu0
  %v3962 = vpop.trf.xlu0
  %v3963 = vpop.trf.xlu0
  %v3964 = vpop.trf.xlu0
  %v3965 = vpop.trf.xlu0
  %v3966 = vpop.trf.xlu0
  %v3967 = vpop.trf.xlu0
  %v3968 = vpop.trf.xlu0
  %v3969 = vpop.trf.xlu0
  %v3970 = vpop.trf.xlu0
  %v3971 = vpop.trf.xlu0
  %v3972 = vpop.trf.xlu0
  %v3973 = vpop.trf.xlu0
  %v3974 = vpop.trf.xlu0
  %v3975 = vpop.trf.xlu0
  %3976 = vxpose.xlu0.b32.start [1/16] %v3378, 128
  %3977 = vxpose.xlu0.b32.cont [2/16] 0.0, 128
  %3978 = vxpose.xlu0.b32.cont [3/16] 0.0, 128
  %3979 = vxpose.xlu0.b32.cont [4/16] 0.0, 128
  %3980 = vxpose.xlu0.b32.cont [5/16] 0.0, 128
  %3981 = vxpose.xlu0.b32.cont [6/16] 0.0, 128
  %3982 = vxpose.xlu0.b32.cont [7/16] 0.0, 128
  %3983 = vxpose.xlu0.b32.cont [8/16] 0.0, 128
  %3984 = vxpose.xlu0.b32.cont [9/16] 0.0, 128
  %3985 = vxpose.xlu0.b32.cont [10/16] 0.0, 128
  %3986 = vxpose.xlu0.b32.cont [11/16] 0.0, 128
  %3987 = vxpose.xlu0.b32.cont [12/16] 0.0, 128
  %3988 = vxpose.xlu0.b32.cont [13/16] 0.0, 128
  %3989 = vxpose.xlu0.b32.cont [14/16] 0.0, 128
  %3990 = vxpose.xlu0.b32.cont [15/16] 0.0, 128
  %3991 = vxpose.xlu0.b32.end [16/16] 0.0, 128
  %v3992 = vpop.trf.xlu0
  %v3993 = vpop.trf.xlu0
  %v3994 = vpop.trf.xlu0
  %v3995 = vpop.trf.xlu0
  %v3996 = vpop.trf.xlu0
  %v3997 = vpop.trf.xlu0
  %v3998 = vpop.trf.xlu0
  %v3999 = vpop.trf.xlu0
  %v4000 = vpop.trf.xlu0
  %v4001 = vpop.trf.xlu0
  %v4002 = vpop.trf.xlu0
  %v4003 = vpop.trf.xlu0
  %v4004 = vpop.trf.xlu0
  %v4005 = vpop.trf.xlu0
  %v4006 = vpop.trf.xlu0
  %v4007 = vpop.trf.xlu0
  %4008 = vxpose.xlu0.b32.start [1/16] %v3379, 128
  %4009 = vxpose.xlu0.b32.cont [2/16] 0.0, 128
  %4010 = vxpose.xlu0.b32.cont [3/16] 0.0, 128
  %4011 = vxpose.xlu0.b32.cont [4/16] 0.0, 128
  %4012 = vxpose.xlu0.b32.cont [5/16] 0.0, 128
  %4013 = vxpose.xlu0.b32.cont [6/16] 0.0, 128
  %4014 = vxpose.xlu0.b32.cont [7/16] 0.0, 128
  %4015 = vxpose.xlu0.b32.cont [8/16] 0.0, 128
  %4016 = vxpose.xlu0.b32.cont [9/16] 0.0, 128
  %4017 = vxpose.xlu0.b32.cont [10/16] 0.0, 128
  %4018 = vxpose.xlu0.b32.cont [11/16] 0.0, 128
  %4019 = vxpose.xlu0.b32.cont [12/16] 0.0, 128
  %4020 = vxpose.xlu0.b32.cont [13/16] 0.0, 128
  %4021 = vxpose.xlu0.b32.cont [14/16] 0.0, 128
  %4022 = vxpose.xlu0.b32.cont [15/16] 0.0, 128
  %4023 = vxpose.xlu0.b32.end [16/16] 0.0, 128
  %v4024 = vpop.trf.xlu0
  %v4025 = vpop.trf.xlu0
  %v4026 = vpop.trf.xlu0
  %v4027 = vpop.trf.xlu0
  %v4028 = vpop.trf.xlu0
  %v4029 = vpop.trf.xlu0
  %v4030 = vpop.trf.xlu0
  %v4031 = vpop.trf.xlu0
  %v4032 = vpop.trf.xlu0
  %v4033 = vpop.trf.xlu0
  %v4034 = vpop.trf.xlu0
  %v4035 = vpop.trf.xlu0
  %v4036 = vpop.trf.xlu0
  %v4037 = vpop.trf.xlu0
  %v4038 = vpop.trf.xlu0
  %v4039 = vpop.trf.xlu0
  %4040 = vxpose.xlu0.b32.start [1/16] %v3380, 128
  %4041 = vxpose.xlu0.b32.cont [2/16] 0.0, 128
  %4042 = vxpose.xlu0.b32.cont [3/16] 0.0, 128
  %4043 = vxpose.xlu0.b32.cont [4/16] 0.0, 128
  %4044 = vxpose.xlu0.b32.cont [5/16] 0.0, 128
  %4045 = vxpose.xlu0.b32.cont [6/16] 0.0, 128
  %4046 = vxpose.xlu0.b32.cont [7/16] 0.0, 128
  %4047 = vxpose.xlu0.b32.cont [8/16] 0.0, 128
  %4048 = vxpose.xlu0.b32.cont [9/16] 0.0, 128
  %4049 = vxpose.xlu0.b32.cont [10/16] 0.0, 128
  %4050 = vxpose.xlu0.b32.cont [11/16] 0.0, 128
  %4051 = vxpose.xlu0.b32.cont [12/16] 0.0, 128
  %4052 = vxpose.xlu0.b32.cont [13/16] 0.0, 128
  %4053 = vxpose.xlu0.b32.cont [14/16] 0.0, 128
  %4054 = vxpose.xlu0.b32.cont [15/16] 0.0, 128
  %4055 = vxpose.xlu0.b32.end [16/16] 0.0, 128
  %v4056 = vpop.trf.xlu0
  %v4057 = vpop.trf.xlu0
  %v4058 = vpop.trf.xlu0
  %v4059 = vpop.trf.xlu0
  %v4060 = vpop.trf.xlu0
  %v4061 = vpop.trf.xlu0
  %v4062 = vpop.trf.xlu0
  %v4063 = vpop.trf.xlu0
  %v4064 = vpop.trf.xlu0
  %v4065 = vpop.trf.xlu0
  %v4066 = vpop.trf.xlu0
  %v4067 = vpop.trf.xlu0
  %v4068 = vpop.trf.xlu0
  %v4069 = vpop.trf.xlu0
  %v4070 = vpop.trf.xlu0
  %v4071 = vpop.trf.xlu0
  %4072 = vxpose.xlu0.b32.start [1/16] %v3381, 128
  %4073 = vxpose.xlu0.b32.cont [2/16] 0.0, 128
  %4074 = vxpose.xlu0.b32.cont [3/16] 0.0, 128
  %4075 = vxpose.xlu0.b32.cont [4/16] 0.0, 128
  %4076 = vxpose.xlu0.b32.cont [5/16] 0.0, 128
  %4077 = vxpose.xlu0.b32.cont [6/16] 0.0, 128
  %4078 = vxpose.xlu0.b32.cont [7/16] 0.0, 128
  %4079 = vxpose.xlu0.b32.cont [8/16] 0.0, 128
  %4080 = vxpose.xlu0.b32.cont [9/16] 0.0, 128
  %4081 = vxpose.xlu0.b32.cont [10/16] 0.0, 128
  %4082 = vxpose.xlu0.b32.cont [11/16] 0.0, 128
  %4083 = vxpose.xlu0.b32.cont [12/16] 0.0, 128
  %4084 = vxpose.xlu0.b32.cont [13/16] 0.0, 128
  %4085 = vxpose.xlu0.b32.cont [14/16] 0.0, 128
  %4086 = vxpose.xlu0.b32.cont [15/16] 0.0, 128
  %4087 = vxpose.xlu0.b32.end [16/16] 0.0, 128
  %v4088 = vpop.trf.xlu0
  %v4089 = vpop.trf.xlu0
  %v4090 = vpop.trf.xlu0
  %v4091 = vpop.trf.xlu0
  %v4092 = vpop.trf.xlu0
  %v4093 = vpop.trf.xlu0
  %v4094 = vpop.trf.xlu0
  %v4095 = vpop.trf.xlu0
  %v4096 = vpop.trf.xlu0
  %v4097 = vpop.trf.xlu0
  %v4098 = vpop.trf.xlu0
  %v4099 = vpop.trf.xlu0
  %v4100 = vpop.trf.xlu0
  %v4101 = vpop.trf.xlu0
  %v4102 = vpop.trf.xlu0
  %v4103 = vpop.trf.xlu0
  %4104 = vxpose.xlu0.b32.start [1/16] %v3382, 128
  %4105 = vxpose.xlu0.b32.cont [2/16] 0.0, 128
  %4106 = vxpose.xlu0.b32.cont [3/16] 0.0, 128
  %4107 = vxpose.xlu0.b32.cont [4/16] 0.0, 128
  %4108 = vxpose.xlu0.b32.cont [5/16] 0.0, 128
  %4109 = vxpose.xlu0.b32.cont [6/16] 0.0, 128
  %4110 = vxpose.xlu0.b32.cont [7/16] 0.0, 128
  %4111 = vxpose.xlu0.b32.cont [8/16] 0.0, 128
  %4112 = vxpose.xlu0.b32.cont [9/16] 0.0, 128
  %4113 = vxpose.xlu0.b32.cont [10/16] 0.0, 128
  %4114 = vxpose.xlu0.b32.cont [11/16] 0.0, 128
  %4115 = vxpose.xlu0.b32.cont [12/16] 0.0, 128
  %4116 = vxpose.xlu0.b32.cont [13/16] 0.0, 128
  %4117 = vxpose.xlu0.b32.cont [14/16] 0.0, 128
  %4118 = vxpose.xlu0.b32.cont [15/16] 0.0, 128
  %4119 = vxpose.xlu0.b32.end [16/16] 0.0, 128
  %v4120 = vpop.trf.xlu0
  %v4121 = vpop.trf.xlu0
  %v4122 = vpop.trf.xlu0
  %v4123 = vpop.trf.xlu0
  %v4124 = vpop.trf.xlu0
  %v4125 = vpop.trf.xlu0
  %v4126 = vpop.trf.xlu0
  %v4127 = vpop.trf.xlu0
  %v4128 = vpop.trf.xlu0
  %v4129 = vpop.trf.xlu0
  %v4130 = vpop.trf.xlu0
  %v4131 = vpop.trf.xlu0
  %v4132 = vpop.trf.xlu0
  %v4133 = vpop.trf.xlu0
  %v4134 = vpop.trf.xlu0
  %v4135 = vpop.trf.xlu0
  %4136 = vxpose.xlu0.b32.start [1/16] %v3383, 128
  %4137 = vxpose.xlu0.b32.cont [2/16] 0.0, 128
  %4138 = vxpose.xlu0.b32.cont [3/16] 0.0, 128
  %4139 = vxpose.xlu0.b32.cont [4/16] 0.0, 128
  %4140 = vxpose.xlu0.b32.cont [5/16] 0.0, 128
  %4141 = vxpose.xlu0.b32.cont [6/16] 0.0, 128
  %4142 = vxpose.xlu0.b32.cont [7/16] 0.0, 128
  %4143 = vxpose.xlu0.b32.cont [8/16] 0.0, 128
  %4144 = vxpose.xlu0.b32.cont [9/16] 0.0, 128
  %4145 = vxpose.xlu0.b32.cont [10/16] 0.0, 128
  %4146 = vxpose.xlu0.b32.cont [11/16] 0.0, 128
  %4147 = vxpose.xlu0.b32.cont [12/16] 0.0, 128
  %4148 = vxpose.xlu0.b32.cont [13/16] 0.0, 128
  %4149 = vxpose.xlu0.b32.cont [14/16] 0.0, 128
  %4150 = vxpose.xlu0.b32.cont [15/16] 0.0, 128
  %4151 = vxpose.xlu0.b32.end [16/16] 0.0, 128
  %v4152 = vpop.trf.xlu0
  %v4153 = vpop.trf.xlu0
  %v4154 = vpop.trf.xlu0
  %v4155 = vpop.trf.xlu0
  %v4156 = vpop.trf.xlu0
  %v4157 = vpop.trf.xlu0
  %v4158 = vpop.trf.xlu0
  %v4159 = vpop.trf.xlu0
  %v4160 = vpop.trf.xlu0
  %v4161 = vpop.trf.xlu0
  %v4162 = vpop.trf.xlu0
  %v4163 = vpop.trf.xlu0
  %v4164 = vpop.trf.xlu0
  %v4165 = vpop.trf.xlu0
  %v4166 = vpop.trf.xlu0
  %v4167 = vpop.trf.xlu0
  %4168 = vxpose.xlu0.b32.start [1/16] %v3512, 128
  %4169 = vxpose.xlu0.b32.cont [2/16] 0.0, 128
  %4170 = vxpose.xlu0.b32.cont [3/16] 0.0, 128
  %4171 = vxpose.xlu0.b32.cont [4/16] 0.0, 128
  %4172 = vxpose.xlu0.b32.cont [5/16] 0.0, 128
  %4173 = vxpose.xlu0.b32.cont [6/16] 0.0, 128
  %4174 = vxpose.xlu0.b32.cont [7/16] 0.0, 128
  %4175 = vxpose.xlu0.b32.cont [8/16] 0.0, 128
  %4176 = vxpose.xlu0.b32.cont [9/16] 0.0, 128
  %4177 = vxpose.xlu0.b32.cont [10/16] 0.0, 128
  %4178 = vxpose.xlu0.b32.cont [11/16] 0.0, 128
  %4179 = vxpose.xlu0.b32.cont [12/16] 0.0, 128
  %4180 = vxpose.xlu0.b32.cont [13/16] 0.0, 128
  %4181 = vxpose.xlu0.b32.cont [14/16] 0.0, 128
  %4182 = vxpose.xlu0.b32.cont [15/16] 0.0, 128
  %4183 = vxpose.xlu0.b32.end [16/16] 0.0, 128
  %v4184 = vpop.trf.xlu0
  %v4185 = vpop.trf.xlu0
  %v4186 = vpop.trf.xlu0
  %v4187 = vpop.trf.xlu0
  %v4188 = vpop.trf.xlu0
  %v4189 = vpop.trf.xlu0
  %v4190 = vpop.trf.xlu0
  %v4191 = vpop.trf.xlu0
  %v4192 = vpop.trf.xlu0
  %v4193 = vpop.trf.xlu0
  %v4194 = vpop.trf.xlu0
  %v4195 = vpop.trf.xlu0
  %v4196 = vpop.trf.xlu0
  %v4197 = vpop.trf.xlu0
  %v4198 = vpop.trf.xlu0
  %v4199 = vpop.trf.xlu0
  %4200 = vxpose.xlu0.b32.start [1/16] %v3513, 128
  %4201 = vxpose.xlu0.b32.cont [2/16] 0.0, 128
  %4202 = vxpose.xlu0.b32.cont [3/16] 0.0, 128
  %4203 = vxpose.xlu0.b32.cont [4/16] 0.0, 128
  %4204 = vxpose.xlu0.b32.cont [5/16] 0.0, 128
  %4205 = vxpose.xlu0.b32.cont [6/16] 0.0, 128
  %4206 = vxpose.xlu0.b32.cont [7/16] 0.0, 128
  %4207 = vxpose.xlu0.b32.cont [8/16] 0.0, 128
  %4208 = vxpose.xlu0.b32.cont [9/16] 0.0, 128
  %4209 = vxpose.xlu0.b32.cont [10/16] 0.0, 128
  %4210 = vxpose.xlu0.b32.cont [11/16] 0.0, 128
  %4211 = vxpose.xlu0.b32.cont [12/16] 0.0, 128
  %4212 = vxpose.xlu0.b32.cont [13/16] 0.0, 128
  %4213 = vxpose.xlu0.b32.cont [14/16] 0.0, 128
  %4214 = vxpose.xlu0.b32.cont [15/16] 0.0, 128
  %4215 = vxpose.xlu0.b32.end [16/16] 0.0, 128
  %v4216 = vpop.trf.xlu0
  %v4217 = vpop.trf.xlu0
  %v4218 = vpop.trf.xlu0
  %v4219 = vpop.trf.xlu0
  %v4220 = vpop.trf.xlu0
  %v4221 = vpop.trf.xlu0
  %v4222 = vpop.trf.xlu0
  %v4223 = vpop.trf.xlu0
  %v4224 = vpop.trf.xlu0
  %v4225 = vpop.trf.xlu0
  %v4226 = vpop.trf.xlu0
  %v4227 = vpop.trf.xlu0
  %v4228 = vpop.trf.xlu0
  %v4229 = vpop.trf.xlu0
  %v4230 = vpop.trf.xlu0
  %v4231 = vpop.trf.xlu0
  %4232 = vxpose.xlu0.b32.start [1/16] %v3514, 128
  %4233 = vxpose.xlu0.b32.cont [2/16] 0.0, 128
  %4234 = vxpose.xlu0.b32.cont [3/16] 0.0, 128
  %4235 = vxpose.xlu0.b32.cont [4/16] 0.0, 128
  %4236 = vxpose.xlu0.b32.cont [5/16] 0.0, 128
  %4237 = vxpose.xlu0.b32.cont [6/16] 0.0, 128
  %4238 = vxpose.xlu0.b32.cont [7/16] 0.0, 128
  %4239 = vxpose.xlu0.b32.cont [8/16] 0.0, 128
  %4240 = vxpose.xlu0.b32.cont [9/16] 0.0, 128
  %4241 = vxpose.xlu0.b32.cont [10/16] 0.0, 128
  %4242 = vxpose.xlu0.b32.cont [11/16] 0.0, 128
  %4243 = vxpose.xlu0.b32.cont [12/16] 0.0, 128
  %4244 = vxpose.xlu0.b32.cont [13/16] 0.0, 128
  %4245 = vxpose.xlu0.b32.cont [14/16] 0.0, 128
  %4246 = vxpose.xlu0.b32.cont [15/16] 0.0, 128
  %4247 = vxpose.xlu0.b32.end [16/16] 0.0, 128
  %v4248 = vpop.trf.xlu0
  %v4249 = vpop.trf.xlu0
  %v4250 = vpop.trf.xlu0
  %v4251 = vpop.trf.xlu0
  %v4252 = vpop.trf.xlu0
  %v4253 = vpop.trf.xlu0
  %v4254 = vpop.trf.xlu0
  %v4255 = vpop.trf.xlu0
  %v4256 = vpop.trf.xlu0
  %v4257 = vpop.trf.xlu0
  %v4258 = vpop.trf.xlu0
  %v4259 = vpop.trf.xlu0
  %v4260 = vpop.trf.xlu0
  %v4261 = vpop.trf.xlu0
  %v4262 = vpop.trf.xlu0
  %v4263 = vpop.trf.xlu0
  %4264 = vxpose.xlu0.b32.start [1/16] %v3515, 128
  %4265 = vxpose.xlu0.b32.cont [2/16] 0.0, 128
  %4266 = vxpose.xlu0.b32.cont [3/16] 0.0, 128
  %4267 = vxpose.xlu0.b32.cont [4/16] 0.0, 128
  %4268 = vxpose.xlu0.b32.cont [5/16] 0.0, 128
  %4269 = vxpose.xlu0.b32.cont [6/16] 0.0, 128
  %4270 = vxpose.xlu0.b32.cont [7/16] 0.0, 128
  %4271 = vxpose.xlu0.b32.cont [8/16] 0.0, 128
  %4272 = vxpose.xlu0.b32.cont [9/16] 0.0, 128
  %4273 = vxpose.xlu0.b32.cont [10/16] 0.0, 128
  %4274 = vxpose.xlu0.b32.cont [11/16] 0.0, 128
  %4275 = vxpose.xlu0.b32.cont [12/16] 0.0, 128
  %4276 = vxpose.xlu0.b32.cont [13/16] 0.0, 128
  %4277 = vxpose.xlu0.b32.cont [14/16] 0.0, 128
  %4278 = vxpose.xlu0.b32.cont [15/16] 0.0, 128
  %4279 = vxpose.xlu0.b32.end [16/16] 0.0, 128
  %v4280 = vpop.trf.xlu0
  %v4281 = vpop.trf.xlu0
  %v4282 = vpop.trf.xlu0
  %v4283 = vpop.trf.xlu0
  %v4284 = vpop.trf.xlu0
  %v4285 = vpop.trf.xlu0
  %v4286 = vpop.trf.xlu0
  %v4287 = vpop.trf.xlu0
  %v4288 = vpop.trf.xlu0
  %v4289 = vpop.trf.xlu0
  %v4290 = vpop.trf.xlu0
  %v4291 = vpop.trf.xlu0
  %v4292 = vpop.trf.xlu0
  %v4293 = vpop.trf.xlu0
  %v4294 = vpop.trf.xlu0
  %v4295 = vpop.trf.xlu0
  %4296 = vxpose.xlu0.b32.start [1/16] %v3516, 128
  %4297 = vxpose.xlu0.b32.cont [2/16] 0.0, 128
  %4298 = vxpose.xlu0.b32.cont [3/16] 0.0, 128
  %4299 = vxpose.xlu0.b32.cont [4/16] 0.0, 128
  %4300 = vxpose.xlu0.b32.cont [5/16] 0.0, 128
  %4301 = vxpose.xlu0.b32.cont [6/16] 0.0, 128
  %4302 = vxpose.xlu0.b32.cont [7/16] 0.0, 128
  %4303 = vxpose.xlu0.b32.cont [8/16] 0.0, 128
  %4304 = vxpose.xlu0.b32.cont [9/16] 0.0, 128
  %4305 = vxpose.xlu0.b32.cont [10/16] 0.0, 128
  %4306 = vxpose.xlu0.b32.cont [11/16] 0.0, 128
  %4307 = vxpose.xlu0.b32.cont [12/16] 0.0, 128
  %4308 = vxpose.xlu0.b32.cont [13/16] 0.0, 128
  %4309 = vxpose.xlu0.b32.cont [14/16] 0.0, 128
  %4310 = vxpose.xlu0.b32.cont [15/16] 0.0, 128
  %4311 = vxpose.xlu0.b32.end [16/16] 0.0, 128
  %v4312 = vpop.trf.xlu0
  %v4313 = vpop.trf.xlu0
  %v4314 = vpop.trf.xlu0
  %v4315 = vpop.trf.xlu0
  %v4316 = vpop.trf.xlu0
  %v4317 = vpop.trf.xlu0
  %v4318 = vpop.trf.xlu0
  %v4319 = vpop.trf.xlu0
  %v4320 = vpop.trf.xlu0
  %v4321 = vpop.trf.xlu0
  %v4322 = vpop.trf.xlu0
  %v4323 = vpop.trf.xlu0
  %v4324 = vpop.trf.xlu0
  %v4325 = vpop.trf.xlu0
  %v4326 = vpop.trf.xlu0
  %v4327 = vpop.trf.xlu0
  %4328 = vxpose.xlu0.b32.start [1/16] %v3517, 128
  %4329 = vxpose.xlu0.b32.cont [2/16] 0.0, 128
  %4330 = vxpose.xlu0.b32.cont [3/16] 0.0, 128
  %4331 = vxpose.xlu0.b32.cont [4/16] 0.0, 128
  %4332 = vxpose.xlu0.b32.cont [5/16] 0.0, 128
  %4333 = vxpose.xlu0.b32.cont [6/16] 0.0, 128
  %4334 = vxpose.xlu0.b32.cont [7/16] 0.0, 128
  %4335 = vxpose.xlu0.b32.cont [8/16] 0.0, 128
  %4336 = vxpose.xlu0.b32.cont [9/16] 0.0, 128
  %4337 = vxpose.xlu0.b32.cont [10/16] 0.0, 128
  %4338 = vxpose.xlu0.b32.cont [11/16] 0.0, 128
  %4339 = vxpose.xlu0.b32.cont [12/16] 0.0, 128
  %4340 = vxpose.xlu0.b32.cont [13/16] 0.0, 128
  %4341 = vxpose.xlu0.b32.cont [14/16] 0.0, 128
  %4342 = vxpose.xlu0.b32.cont [15/16] 0.0, 128
  %4343 = vxpose.xlu0.b32.end [16/16] 0.0, 128
  %v4344 = vpop.trf.xlu0
  %v4345 = vpop.trf.xlu0
  %v4346 = vpop.trf.xlu0
  %v4347 = vpop.trf.xlu0
  %v4348 = vpop.trf.xlu0
  %v4349 = vpop.trf.xlu0
  %v4350 = vpop.trf.xlu0
  %v4351 = vpop.trf.xlu0
  %v4352 = vpop.trf.xlu0
  %v4353 = vpop.trf.xlu0
  %v4354 = vpop.trf.xlu0
  %v4355 = vpop.trf.xlu0
  %v4356 = vpop.trf.xlu0
  %v4357 = vpop.trf.xlu0
  %v4358 = vpop.trf.xlu0
  %v4359 = vpop.trf.xlu0
  %4360 = vxpose.xlu0.b32.start [1/16] %v3518, 128
  %4361 = vxpose.xlu0.b32.cont [2/16] 0.0, 128
  %4362 = vxpose.xlu0.b32.cont [3/16] 0.0, 128
  %4363 = vxpose.xlu0.b32.cont [4/16] 0.0, 128
  %4364 = vxpose.xlu0.b32.cont [5/16] 0.0, 128
  %4365 = vxpose.xlu0.b32.cont [6/16] 0.0, 128
  %4366 = vxpose.xlu0.b32.cont [7/16] 0.0, 128
  %4367 = vxpose.xlu0.b32.cont [8/16] 0.0, 128
  %4368 = vxpose.xlu0.b32.cont [9/16] 0.0, 128
  %4369 = vxpose.xlu0.b32.cont [10/16] 0.0, 128
  %4370 = vxpose.xlu0.b32.cont [11/16] 0.0, 128
  %4371 = vxpose.xlu0.b32.cont [12/16] 0.0, 128
  %4372 = vxpose.xlu0.b32.cont [13/16] 0.0, 128
  %4373 = vxpose.xlu0.b32.cont [14/16] 0.0, 128
  %4374 = vxpose.xlu0.b32.cont [15/16] 0.0, 128
  %4375 = vxpose.xlu0.b32.end [16/16] 0.0, 128
  %v4376 = vpop.trf.xlu0
  %v4377 = vpop.trf.xlu0
  %v4378 = vpop.trf.xlu0
  %v4379 = vpop.trf.xlu0
  %v4380 = vpop.trf.xlu0
  %v4381 = vpop.trf.xlu0
  %v4382 = vpop.trf.xlu0
  %v4383 = vpop.trf.xlu0
  %v4384 = vpop.trf.xlu0
  %v4385 = vpop.trf.xlu0
  %v4386 = vpop.trf.xlu0
  %v4387 = vpop.trf.xlu0
  %v4388 = vpop.trf.xlu0
  %v4389 = vpop.trf.xlu0
  %v4390 = vpop.trf.xlu0
  %v4391 = vpop.trf.xlu0
  %4392 = vxpose.xlu0.b32.start [1/16] %v3519, 128
  %4393 = vxpose.xlu0.b32.cont [2/16] 0.0, 128
  %4394 = vxpose.xlu0.b32.cont [3/16] 0.0, 128
  %4395 = vxpose.xlu0.b32.cont [4/16] 0.0, 128
  %4396 = vxpose.xlu0.b32.cont [5/16] 0.0, 128
  %4397 = vxpose.xlu0.b32.cont [6/16] 0.0, 128
  %4398 = vxpose.xlu0.b32.cont [7/16] 0.0, 128
  %4399 = vxpose.xlu0.b32.cont [8/16] 0.0, 128
  %4400 = vxpose.xlu0.b32.cont [9/16] 0.0, 128
  %4401 = vxpose.xlu0.b32.cont [10/16] 0.0, 128
  %4402 = vxpose.xlu0.b32.cont [11/16] 0.0, 128
  %4403 = vxpose.xlu0.b32.cont [12/16] 0.0, 128
  %4404 = vxpose.xlu0.b32.cont [13/16] 0.0, 128
  %4405 = vxpose.xlu0.b32.cont [14/16] 0.0, 128
  %4406 = vxpose.xlu0.b32.cont [15/16] 0.0, 128
  %4407 = vxpose.xlu0.b32.end [16/16] 0.0, 128
  %v4408 = vpop.trf.xlu0
  %v4409 = vpop.trf.xlu0
  %v4410 = vpop.trf.xlu0
  %v4411 = vpop.trf.xlu0
  %v4412 = vpop.trf.xlu0
  %v4413 = vpop.trf.xlu0
  %v4414 = vpop.trf.xlu0
  %v4415 = vpop.trf.xlu0
  %v4416 = vpop.trf.xlu0
  %v4417 = vpop.trf.xlu0
  %v4418 = vpop.trf.xlu0
  %v4419 = vpop.trf.xlu0
  %v4420 = vpop.trf.xlu0
  %v4421 = vpop.trf.xlu0
  %v4422 = vpop.trf.xlu0
  %v4423 = vpop.trf.xlu0
  %4424 = vxpose.xlu0.b32.start [1/16] %v3648, 128
  %4425 = vxpose.xlu0.b32.cont [2/16] 0.0, 128
  %4426 = vxpose.xlu0.b32.cont [3/16] 0.0, 128
  %4427 = vxpose.xlu0.b32.cont [4/16] 0.0, 128
  %4428 = vxpose.xlu0.b32.cont [5/16] 0.0, 128
  %4429 = vxpose.xlu0.b32.cont [6/16] 0.0, 128
  %4430 = vxpose.xlu0.b32.cont [7/16] 0.0, 128
  %4431 = vxpose.xlu0.b32.cont [8/16] 0.0, 128
  %4432 = vxpose.xlu0.b32.cont [9/16] 0.0, 128
  %4433 = vxpose.xlu0.b32.cont [10/16] 0.0, 128
  %4434 = vxpose.xlu0.b32.cont [11/16] 0.0, 128
  %4435 = vxpose.xlu0.b32.cont [12/16] 0.0, 128
  %4436 = vxpose.xlu0.b32.cont [13/16] 0.0, 128
  %4437 = vxpose.xlu0.b32.cont [14/16] 0.0, 128
  %4438 = vxpose.xlu0.b32.cont [15/16] 0.0, 128
  %4439 = vxpose.xlu0.b32.end [16/16] 0.0, 128
  %v4440 = vpop.trf.xlu0
  %v4441 = vpop.trf.xlu0
  %v4442 = vpop.trf.xlu0
  %v4443 = vpop.trf.xlu0
  %v4444 = vpop.trf.xlu0
  %v4445 = vpop.trf.xlu0
  %v4446 = vpop.trf.xlu0
  %v4447 = vpop.trf.xlu0
  %v4448 = vpop.trf.xlu0
  %v4449 = vpop.trf.xlu0
  %v4450 = vpop.trf.xlu0
  %v4451 = vpop.trf.xlu0
  %v4452 = vpop.trf.xlu0
  %v4453 = vpop.trf.xlu0
  %v4454 = vpop.trf.xlu0
  %v4455 = vpop.trf.xlu0
  %4456 = vxpose.xlu0.b32.start [1/16] %v3649, 128
  %4457 = vxpose.xlu0.b32.cont [2/16] 0.0, 128
  %4458 = vxpose.xlu0.b32.cont [3/16] 0.0, 128
  %4459 = vxpose.xlu0.b32.cont [4/16] 0.0, 128
  %4460 = vxpose.xlu0.b32.cont [5/16] 0.0, 128
  %4461 = vxpose.xlu0.b32.cont [6/16] 0.0, 128
  %4462 = vxpose.xlu0.b32.cont [7/16] 0.0, 128
  %4463 = vxpose.xlu0.b32.cont [8/16] 0.0, 128
  %4464 = vxpose.xlu0.b32.cont [9/16] 0.0, 128
  %4465 = vxpose.xlu0.b32.cont [10/16] 0.0, 128
  %4466 = vxpose.xlu0.b32.cont [11/16] 0.0, 128
  %4467 = vxpose.xlu0.b32.cont [12/16] 0.0, 128
  %4468 = vxpose.xlu0.b32.cont [13/16] 0.0, 128
  %4469 = vxpose.xlu0.b32.cont [14/16] 0.0, 128
  %4470 = vxpose.xlu0.b32.cont [15/16] 0.0, 128
  %4471 = vxpose.xlu0.b32.end [16/16] 0.0, 128
  %v4472 = vpop.trf.xlu0
  %v4473 = vpop.trf.xlu0
  %v4474 = vpop.trf.xlu0
  %v4475 = vpop.trf.xlu0
  %v4476 = vpop.trf.xlu0
  %v4477 = vpop.trf.xlu0
  %v4478 = vpop.trf.xlu0
  %v4479 = vpop.trf.xlu0
  %v4480 = vpop.trf.xlu0
  %v4481 = vpop.trf.xlu0
  %v4482 = vpop.trf.xlu0
  %v4483 = vpop.trf.xlu0
  %v4484 = vpop.trf.xlu0
  %v4485 = vpop.trf.xlu0
  %v4486 = vpop.trf.xlu0
  %v4487 = vpop.trf.xlu0
  %4488 = vxpose.xlu0.b32.start [1/16] %v3650, 128
  %4489 = vxpose.xlu0.b32.cont [2/16] 0.0, 128
  %4490 = vxpose.xlu0.b32.cont [3/16] 0.0, 128
  %4491 = vxpose.xlu0.b32.cont [4/16] 0.0, 128
  %4492 = vxpose.xlu0.b32.cont [5/16] 0.0, 128
  %4493 = vxpose.xlu0.b32.cont [6/16] 0.0, 128
  %4494 = vxpose.xlu0.b32.cont [7/16] 0.0, 128
  %4495 = vxpose.xlu0.b32.cont [8/16] 0.0, 128
  %4496 = vxpose.xlu0.b32.cont [9/16] 0.0, 128
  %4497 = vxpose.xlu0.b32.cont [10/16] 0.0, 128
  %4498 = vxpose.xlu0.b32.cont [11/16] 0.0, 128
  %4499 = vxpose.xlu0.b32.cont [12/16] 0.0, 128
  %4500 = vxpose.xlu0.b32.cont [13/16] 0.0, 128
  %4501 = vxpose.xlu0.b32.cont [14/16] 0.0, 128
  %4502 = vxpose.xlu0.b32.cont [15/16] 0.0, 128
  %4503 = vxpose.xlu0.b32.end [16/16] 0.0, 128
  %v4504 = vpop.trf.xlu0
  %v4505 = vpop.trf.xlu0
  %v4506 = vpop.trf.xlu0
  %v4507 = vpop.trf.xlu0
  %v4508 = vpop.trf.xlu0
  %v4509 = vpop.trf.xlu0
  %v4510 = vpop.trf.xlu0
  %v4511 = vpop.trf.xlu0
  %v4512 = vpop.trf.xlu0
  %v4513 = vpop.trf.xlu0
  %v4514 = vpop.trf.xlu0
  %v4515 = vpop.trf.xlu0
  %v4516 = vpop.trf.xlu0
  %v4517 = vpop.trf.xlu0
  %v4518 = vpop.trf.xlu0
  %v4519 = vpop.trf.xlu0
  %4520 = vxpose.xlu0.b32.start [1/16] %v3651, 128
  %4521 = vxpose.xlu0.b32.cont [2/16] 0.0, 128
  %4522 = vxpose.xlu0.b32.cont [3/16] 0.0, 128
  %4523 = vxpose.xlu0.b32.cont [4/16] 0.0, 128
  %4524 = vxpose.xlu0.b32.cont [5/16] 0.0, 128
  %4525 = vxpose.xlu0.b32.cont [6/16] 0.0, 128
  %4526 = vxpose.xlu0.b32.cont [7/16] 0.0, 128
  %4527 = vxpose.xlu0.b32.cont [8/16] 0.0, 128
  %4528 = vxpose.xlu0.b32.cont [9/16] 0.0, 128
  %4529 = vxpose.xlu0.b32.cont [10/16] 0.0, 128
  %4530 = vxpose.xlu0.b32.cont [11/16] 0.0, 128
  %4531 = vxpose.xlu0.b32.cont [12/16] 0.0, 128
  %4532 = vxpose.xlu0.b32.cont [13/16] 0.0, 128
  %4533 = vxpose.xlu0.b32.cont [14/16] 0.0, 128
  %4534 = vxpose.xlu0.b32.cont [15/16] 0.0, 128
  %4535 = vxpose.xlu0.b32.end [16/16] 0.0, 128
  %v4536 = vpop.trf.xlu0
  %v4537 = vpop.trf.xlu0
  %v4538 = vpop.trf.xlu0
  %v4539 = vpop.trf.xlu0
  %v4540 = vpop.trf.xlu0
  %v4541 = vpop.trf.xlu0
  %v4542 = vpop.trf.xlu0
  %v4543 = vpop.trf.xlu0
  %v4544 = vpop.trf.xlu0
  %v4545 = vpop.trf.xlu0
  %v4546 = vpop.trf.xlu0
  %v4547 = vpop.trf.xlu0
  %v4548 = vpop.trf.xlu0
  %v4549 = vpop.trf.xlu0
  %v4550 = vpop.trf.xlu0
  %v4551 = vpop.trf.xlu0
  %4552 = vxpose.xlu0.b32.start [1/16] %v3652, 128
  %4553 = vxpose.xlu0.b32.cont [2/16] 0.0, 128
  %4554 = vxpose.xlu0.b32.cont [3/16] 0.0, 128
  %4555 = vxpose.xlu0.b32.cont [4/16] 0.0, 128
  %4556 = vxpose.xlu0.b32.cont [5/16] 0.0, 128
  %4557 = vxpose.xlu0.b32.cont [6/16] 0.0, 128
  %4558 = vxpose.xlu0.b32.cont [7/16] 0.0, 128
  %4559 = vxpose.xlu0.b32.cont [8/16] 0.0, 128
  %4560 = vxpose.xlu0.b32.cont [9/16] 0.0, 128
  %4561 = vxpose.xlu0.b32.cont [10/16] 0.0, 128
  %4562 = vxpose.xlu0.b32.cont [11/16] 0.0, 128
  %4563 = vxpose.xlu0.b32.cont [12/16] 0.0, 128
  %4564 = vxpose.xlu0.b32.cont [13/16] 0.0, 128
  %4565 = vxpose.xlu0.b32.cont [14/16] 0.0, 128
  %4566 = vxpose.xlu0.b32.cont [15/16] 0.0, 128
  %4567 = vxpose.xlu0.b32.end [16/16] 0.0, 128
  %v4568 = vpop.trf.xlu0
  %v4569 = vpop.trf.xlu0
  %v4570 = vpop.trf.xlu0
  %v4571 = vpop.trf.xlu0
  %v4572 = vpop.trf.xlu0
  %v4573 = vpop.trf.xlu0
  %v4574 = vpop.trf.xlu0
  %v4575 = vpop.trf.xlu0
  %v4576 = vpop.trf.xlu0
  %v4577 = vpop.trf.xlu0
  %v4578 = vpop.trf.xlu0
  %v4579 = vpop.trf.xlu0
  %v4580 = vpop.trf.xlu0
  %v4581 = vpop.trf.xlu0
  %v4582 = vpop.trf.xlu0
  %v4583 = vpop.trf.xlu0
  %4584 = vxpose.xlu0.b32.start [1/16] %v3653, 128
  %4585 = vxpose.xlu0.b32.cont [2/16] 0.0, 128
  %4586 = vxpose.xlu0.b32.cont [3/16] 0.0, 128
  %4587 = vxpose.xlu0.b32.cont [4/16] 0.0, 128
  %4588 = vxpose.xlu0.b32.cont [5/16] 0.0, 128
  %4589 = vxpose.xlu0.b32.cont [6/16] 0.0, 128
  %4590 = vxpose.xlu0.b32.cont [7/16] 0.0, 128
  %4591 = vxpose.xlu0.b32.cont [8/16] 0.0, 128
  %4592 = vxpose.xlu0.b32.cont [9/16] 0.0, 128
  %4593 = vxpose.xlu0.b32.cont [10/16] 0.0, 128
  %4594 = vxpose.xlu0.b32.cont [11/16] 0.0, 128
  %4595 = vxpose.xlu0.b32.cont [12/16] 0.0, 128
  %4596 = vxpose.xlu0.b32.cont [13/16] 0.0, 128
  %4597 = vxpose.xlu0.b32.cont [14/16] 0.0, 128
  %4598 = vxpose.xlu0.b32.cont [15/16] 0.0, 128
  %4599 = vxpose.xlu0.b32.end [16/16] 0.0, 128
  %v4600 = vpop.trf.xlu0
  %v4601 = vpop.trf.xlu0
  %v4602 = vpop.trf.xlu0
  %v4603 = vpop.trf.xlu0
  %v4604 = vpop.trf.xlu0
  %v4605 = vpop.trf.xlu0
  %v4606 = vpop.trf.xlu0
  %v4607 = vpop.trf.xlu0
  %v4608 = vpop.trf.xlu0
  %v4609 = vpop.trf.xlu0
  %v4610 = vpop.trf.xlu0
  %v4611 = vpop.trf.xlu0
  %v4612 = vpop.trf.xlu0
  %v4613 = vpop.trf.xlu0
  %v4614 = vpop.trf.xlu0
  %v4615 = vpop.trf.xlu0
  %4616 = vxpose.xlu0.b32.start [1/16] %v3654, 128
  %4617 = vxpose.xlu0.b32.cont [2/16] 0.0, 128
  %4618 = vxpose.xlu0.b32.cont [3/16] 0.0, 128
  %4619 = vxpose.xlu0.b32.cont [4/16] 0.0, 128
  %4620 = vxpose.xlu0.b32.cont [5/16] 0.0, 128
  %4621 = vxpose.xlu0.b32.cont [6/16] 0.0, 128
  %4622 = vxpose.xlu0.b32.cont [7/16] 0.0, 128
  %4623 = vxpose.xlu0.b32.cont [8/16] 0.0, 128
  %4624 = vxpose.xlu0.b32.cont [9/16] 0.0, 128
  %4625 = vxpose.xlu0.b32.cont [10/16] 0.0, 128
  %4626 = vxpose.xlu0.b32.cont [11/16] 0.0, 128
  %4627 = vxpose.xlu0.b32.cont [12/16] 0.0, 128
  %4628 = vxpose.xlu0.b32.cont [13/16] 0.0, 128
  %4629 = vxpose.xlu0.b32.cont [14/16] 0.0, 128
  %4630 = vxpose.xlu0.b32.cont [15/16] 0.0, 128
  %4631 = vxpose.xlu0.b32.end [16/16] 0.0, 128
  %v4632 = vpop.trf.xlu0
  %v4633 = vpop.trf.xlu0
  %v4634 = vpop.trf.xlu0
  %v4635 = vpop.trf.xlu0
  %v4636 = vpop.trf.xlu0
  %v4637 = vpop.trf.xlu0
  %v4638 = vpop.trf.xlu0
  %v4639 = vpop.trf.xlu0
  %v4640 = vpop.trf.xlu0
  %v4641 = vpop.trf.xlu0
  %v4642 = vpop.trf.xlu0
  %v4643 = vpop.trf.xlu0
  %v4644 = vpop.trf.xlu0
  %v4645 = vpop.trf.xlu0
  %v4646 = vpop.trf.xlu0
  %v4647 = vpop.trf.xlu0
  %4648 = vxpose.xlu0.b32.start [1/16] %v3655, 128
  %4649 = vxpose.xlu0.b32.cont [2/16] 0.0, 128
  %4650 = vxpose.xlu0.b32.cont [3/16] 0.0, 128
  %4651 = vxpose.xlu0.b32.cont [4/16] 0.0, 128
  %4652 = vxpose.xlu0.b32.cont [5/16] 0.0, 128
  %4653 = vxpose.xlu0.b32.cont [6/16] 0.0, 128
  %4654 = vxpose.xlu0.b32.cont [7/16] 0.0, 128
  %4655 = vxpose.xlu0.b32.cont [8/16] 0.0, 128
  %4656 = vxpose.xlu0.b32.cont [9/16] 0.0, 128
  %4657 = vxpose.xlu0.b32.cont [10/16] 0.0, 128
  %4658 = vxpose.xlu0.b32.cont [11/16] 0.0, 128
  %4659 = vxpose.xlu0.b32.cont [12/16] 0.0, 128
  %4660 = vxpose.xlu0.b32.cont [13/16] 0.0, 128
  %4661 = vxpose.xlu0.b32.cont [14/16] 0.0, 128
  %4662 = vxpose.xlu0.b32.cont [15/16] 0.0, 128
  %4663 = vxpose.xlu0.b32.end [16/16] 0.0, 128
  %v4664 = vpop.trf.xlu0
  %v4665 = vpop.trf.xlu0
  %v4666 = vpop.trf.xlu0
  %v4667 = vpop.trf.xlu0
  %v4668 = vpop.trf.xlu0
  %v4669 = vpop.trf.xlu0
  %v4670 = vpop.trf.xlu0
  %v4671 = vpop.trf.xlu0
  %v4672 = vpop.trf.xlu0
  %v4673 = vpop.trf.xlu0
  %v4674 = vpop.trf.xlu0
  %v4675 = vpop.trf.xlu0
  %v4676 = vpop.trf.xlu0
  %v4677 = vpop.trf.xlu0
  %v4678 = vpop.trf.xlu0
  %v4679 = vpop.trf.xlu0
  %v4680 = vcombine.low %v3672, %v3736
  %v4681 = vcombine.high %v3672, %v3736
  %v4683 = vunpack.c.l.s4 1983009808
  %v4684 = vunpack.c.0.s8 %v4683
  %v4685 = vlaneseq
  %v4686 = vshrl.u32 %v4685, 7
  %v4687 = vsub.s32 %v4684, %v4686
  %v4688 = vrot.slane %v4680, %v4687
  %v4690 = vunpack.c.l.s4 1983009808
  %v4691 = vunpack.c.0.s8 %v4690
  %v4692 = vlaneseq
  %v4693 = vshrl.u32 %v4692, 7
  %v4694 = vsub.s32 %v4691, %v4693
  %v4695 = vrot.slane %v4681, %v4694
  %v4696 = vcombine.low %v3704, %v3768
  %v4697 = vcombine.high %v3704, %v3768
  %v4699 = vunpack.c.l.s4 1983009808
  %v4700 = vunpack.c.0.s8 %v4699
  %v4701 = vlaneseq
  %v4702 = vshrl.u32 %v4701, 7
  %v4703 = vsub.s32 %v4700, %v4702
  %v4704 = vrot.slane %v4696, %v4703
  %v4706 = vunpack.c.l.s4 1983009808
  %v4707 = vunpack.c.0.s8 %v4706
  %v4708 = vlaneseq
  %v4709 = vshrl.u32 %v4708, 7
  %v4710 = vsub.s32 %v4707, %v4709
  %v4711 = vrot.slane %v4697, %v4710
  %v4712 = vcombine.low %v3800, %v3864
  %v4713 = vcombine.high %v3800, %v3864
  %v4715 = vunpack.c.l.s4 1983009808
  %v4716 = vunpack.c.0.s8 %v4715
  %v4717 = vlaneseq
  %v4718 = vshrl.u32 %v4717, 7
  %v4719 = vsub.s32 %v4716, %v4718
  %v4720 = vrot.slane %v4712, %v4719
  %v4722 = vunpack.c.l.s4 1983009808
  %v4723 = vunpack.c.0.s8 %v4722
  %v4724 = vlaneseq
  %v4725 = vshrl.u32 %v4724, 7
  %v4726 = vsub.s32 %v4723, %v4725
  %v4727 = vrot.slane %v4713, %v4726
  %v4728 = vcombine.low %v3832, %v3896
  %v4729 = vcombine.high %v3832, %v3896
  %v4731 = vunpack.c.l.s4 1983009808
  %v4732 = vunpack.c.0.s8 %v4731
  %v4733 = vlaneseq
  %v4734 = vshrl.u32 %v4733, 7
  %v4735 = vsub.s32 %v4732, %v4734
  %v4736 = vrot.slane %v4728, %v4735
  %v4738 = vunpack.c.l.s4 1983009808
  %v4739 = vunpack.c.0.s8 %v4738
  %v4740 = vlaneseq
  %v4741 = vshrl.u32 %v4740, 7
  %v4742 = vsub.s32 %v4739, %v4741
  %v4743 = vrot.slane %v4729, %v4742
  %v4744 = vcombine.low %v4688, %v4704
  %v4745 = vcombine.high %v4688, %v4704
  %v4747 = vunpack.c.l.s4 1934713408
  %v4748 = vunpack.c.0.s8 %v4747
  %v4749 = vlaneseq
  %v4750 = vshrl.u32 %v4749, 7
  %v4751 = vsub.s32 %v4748, %v4750
  %v4752 = vrot.slane %v4744, %v4751
  %v4754 = vunpack.c.l.s4 1934713408
  %v4755 = vunpack.c.0.s8 %v4754
  %v4756 = vlaneseq
  %v4757 = vshrl.u32 %v4756, 7
  %v4758 = vsub.s32 %v4755, %v4757
  %v4759 = vrot.slane %v4745, %v4758
  %v4760 = vcombine.low %v4695, %v4711
  %v4761 = vcombine.high %v4695, %v4711
  %v4763 = vunpack.c.l.s4 1934713408
  %v4764 = vunpack.c.0.s8 %v4763
  %v4765 = vlaneseq
  %v4766 = vshrl.u32 %v4765, 7
  %v4767 = vsub.s32 %v4764, %v4766
  %v4768 = vrot.slane %v4760, %v4767
  %v4770 = vunpack.c.l.s4 1934713408
  %v4771 = vunpack.c.0.s8 %v4770
  %v4772 = vlaneseq
  %v4773 = vshrl.u32 %v4772, 7
  %v4774 = vsub.s32 %v4771, %v4773
  %v4775 = vrot.slane %v4761, %v4774
  %v4776 = vcombine.low %v4720, %v4736
  %v4777 = vcombine.high %v4720, %v4736
  %v4779 = vunpack.c.l.s4 1934713408
  %v4780 = vunpack.c.0.s8 %v4779
  %v4781 = vlaneseq
  %v4782 = vshrl.u32 %v4781, 7
  %v4783 = vsub.s32 %v4780, %v4782
  %v4784 = vrot.slane %v4776, %v4783
  %v4786 = vunpack.c.l.s4 1934713408
  %v4787 = vunpack.c.0.s8 %v4786
  %v4788 = vlaneseq
  %v4789 = vshrl.u32 %v4788, 7
  %v4790 = vsub.s32 %v4787, %v4789
  %v4791 = vrot.slane %v4777, %v4790
  %v4792 = vcombine.low %v4727, %v4743
  %v4793 = vcombine.high %v4727, %v4743
  %v4795 = vunpack.c.l.s4 1934713408
  %v4796 = vunpack.c.0.s8 %v4795
  %v4797 = vlaneseq
  %v4798 = vshrl.u32 %v4797, 7
  %v4799 = vsub.s32 %v4796, %v4798
  %v4800 = vrot.slane %v4792, %v4799
  %v4802 = vunpack.c.l.s4 1934713408
  %v4803 = vunpack.c.0.s8 %v4802
  %v4804 = vlaneseq
  %v4805 = vshrl.u32 %v4804, 7
  %v4806 = vsub.s32 %v4803, %v4805
  %v4807 = vrot.slane %v4793, %v4806
  %v4808 = vcombine.low %v4752, %v4784
  %v4809 = vcombine.high %v4752, %v4784
  %v4810 = vcombine.low %v4759, %v4791
  %v4811 = vcombine.high %v4759, %v4791
  %v4812 = vcombine.low %v4768, %v4800
  %v4813 = vcombine.high %v4768, %v4800
  %v4814 = vcombine.low %v4775, %v4807
  %v4815 = vcombine.high %v4775, %v4807
  %v4816 = vcombine.low %v3928, %v3992
  %v4817 = vcombine.high %v3928, %v3992
  %v4819 = vunpack.c.l.s4 1983009808
  %v4820 = vunpack.c.0.s8 %v4819
  %v4821 = vlaneseq
  %v4822 = vshrl.u32 %v4821, 7
  %v4823 = vsub.s32 %v4820, %v4822
  %v4824 = vrot.slane %v4816, %v4823
  %v4826 = vunpack.c.l.s4 1983009808
  %v4827 = vunpack.c.0.s8 %v4826
  %v4828 = vlaneseq
  %v4829 = vshrl.u32 %v4828, 7
  %v4830 = vsub.s32 %v4827, %v4829
  %v4831 = vrot.slane %v4817, %v4830
  %v4832 = vcombine.low %v3960, %v4024
  %v4833 = vcombine.high %v3960, %v4024
  %v4835 = vunpack.c.l.s4 1983009808
  %v4836 = vunpack.c.0.s8 %v4835
  %v4837 = vlaneseq
  %v4838 = vshrl.u32 %v4837, 7
  %v4839 = vsub.s32 %v4836, %v4838
  %v4840 = vrot.slane %v4832, %v4839
  %v4842 = vunpack.c.l.s4 1983009808
  %v4843 = vunpack.c.0.s8 %v4842
  %v4844 = vlaneseq
  %v4845 = vshrl.u32 %v4844, 7
  %v4846 = vsub.s32 %v4843, %v4845
  %v4847 = vrot.slane %v4833, %v4846
  %v4848 = vcombine.low %v4056, %v4120
  %v4849 = vcombine.high %v4056, %v4120
  %v4851 = vunpack.c.l.s4 1983009808
  %v4852 = vunpack.c.0.s8 %v4851
  %v4853 = vlaneseq
  %v4854 = vshrl.u32 %v4853, 7
  %v4855 = vsub.s32 %v4852, %v4854
  %v4856 = vrot.slane %v4848, %v4855
  %v4858 = vunpack.c.l.s4 1983009808
  %v4859 = vunpack.c.0.s8 %v4858
  %v4860 = vlaneseq
  %v4861 = vshrl.u32 %v4860, 7
  %v4862 = vsub.s32 %v4859, %v4861
  %v4863 = vrot.slane %v4849, %v4862
  %v4864 = vcombine.low %v4088, %v4152
  %v4865 = vcombine.high %v4088, %v4152
  %v4867 = vunpack.c.l.s4 1983009808
  %v4868 = vunpack.c.0.s8 %v4867
  %v4869 = vlaneseq
  %v4870 = vshrl.u32 %v4869, 7
  %v4871 = vsub.s32 %v4868, %v4870
  %v4872 = vrot.slane %v4864, %v4871
  %v4874 = vunpack.c.l.s4 1983009808
  %v4875 = vunpack.c.0.s8 %v4874
  %v4876 = vlaneseq
  %v4877 = vshrl.u32 %v4876, 7
  %v4878 = vsub.s32 %v4875, %v4877
  %v4879 = vrot.slane %v4865, %v4878
  %v4880 = vcombine.low %v4824, %v4840
  %v4881 = vcombine.high %v4824, %v4840
  %v4883 = vunpack.c.l.s4 1934713408
  %v4884 = vunpack.c.0.s8 %v4883
  %v4885 = vlaneseq
  %v4886 = vshrl.u32 %v4885, 7
  %v4887 = vsub.s32 %v4884, %v4886
  %v4888 = vrot.slane %v4880, %v4887
  %v4890 = vunpack.c.l.s4 1934713408
  %v4891 = vunpack.c.0.s8 %v4890
  %v4892 = vlaneseq
  %v4893 = vshrl.u32 %v4892, 7
  %v4894 = vsub.s32 %v4891, %v4893
  %v4895 = vrot.slane %v4881, %v4894
  %v4896 = vcombine.low %v4831, %v4847
  %v4897 = vcombine.high %v4831, %v4847
  %v4899 = vunpack.c.l.s4 1934713408
  %v4900 = vunpack.c.0.s8 %v4899
  %v4901 = vlaneseq
  %v4902 = vshrl.u32 %v4901, 7
  %v4903 = vsub.s32 %v4900, %v4902
  %v4904 = vrot.slane %v4896, %v4903
  %v4906 = vunpack.c.l.s4 1934713408
  %v4907 = vunpack.c.0.s8 %v4906
  %v4908 = vlaneseq
  %v4909 = vshrl.u32 %v4908, 7
  %v4910 = vsub.s32 %v4907, %v4909
  %v4911 = vrot.slane %v4897, %v4910
  %v4912 = vcombine.low %v4856, %v4872
  %v4913 = vcombine.high %v4856, %v4872
  %v4915 = vunpack.c.l.s4 1934713408
  %v4916 = vunpack.c.0.s8 %v4915
  %v4917 = vlaneseq
  %v4918 = vshrl.u32 %v4917, 7
  %v4919 = vsub.s32 %v4916, %v4918
  %v4920 = vrot.slane %v4912, %v4919
  %v4922 = vunpack.c.l.s4 1934713408
  %v4923 = vunpack.c.0.s8 %v4922
  %v4924 = vlaneseq
  %v4925 = vshrl.u32 %v4924, 7
  %v4926 = vsub.s32 %v4923, %v4925
  %v4927 = vrot.slane %v4913, %v4926
  %v4928 = vcombine.low %v4863, %v4879
  %v4929 = vcombine.high %v4863, %v4879
  %v4931 = vunpack.c.l.s4 1934713408
  %v4932 = vunpack.c.0.s8 %v4931
  %v4933 = vlaneseq
  %v4934 = vshrl.u32 %v4933, 7
  %v4935 = vsub.s32 %v4932, %v4934
  %v4936 = vrot.slane %v4928, %v4935
  %v4938 = vunpack.c.l.s4 1934713408
  %v4939 = vunpack.c.0.s8 %v4938
  %v4940 = vlaneseq
  %v4941 = vshrl.u32 %v4940, 7
  %v4942 = vsub.s32 %v4939, %v4941
  %v4943 = vrot.slane %v4929, %v4942
  %v4944 = vcombine.low %v4888, %v4920
  %v4945 = vcombine.high %v4888, %v4920
  %v4946 = vcombine.low %v4895, %v4927
  %v4947 = vcombine.high %v4895, %v4927
  %v4948 = vcombine.low %v4904, %v4936
  %v4949 = vcombine.high %v4904, %v4936
  %v4950 = vcombine.low %v4911, %v4943
  %v4951 = vcombine.high %v4911, %v4943
  %v4952 = vcombine.low %v4184, %v4248
  %v4953 = vcombine.high %v4184, %v4248
  %v4955 = vunpack.c.l.s4 1983009808
  %v4956 = vunpack.c.0.s8 %v4955
  %v4957 = vlaneseq
  %v4958 = vshrl.u32 %v4957, 7
  %v4959 = vsub.s32 %v4956, %v4958
  %v4960 = vrot.slane %v4952, %v4959
  %v4962 = vunpack.c.l.s4 1983009808
  %v4963 = vunpack.c.0.s8 %v4962
  %v4964 = vlaneseq
  %v4965 = vshrl.u32 %v4964, 7
  %v4966 = vsub.s32 %v4963, %v4965
  %v4967 = vrot.slane %v4953, %v4966
  %v4968 = vcombine.low %v4216, %v4280
  %v4969 = vcombine.high %v4216, %v4280
  %v4971 = vunpack.c.l.s4 1983009808
  %v4972 = vunpack.c.0.s8 %v4971
  %v4973 = vlaneseq
  %v4974 = vshrl.u32 %v4973, 7
  %v4975 = vsub.s32 %v4972, %v4974
  %v4976 = vrot.slane %v4968, %v4975
  %v4978 = vunpack.c.l.s4 1983009808
  %v4979 = vunpack.c.0.s8 %v4978
  %v4980 = vlaneseq
  %v4981 = vshrl.u32 %v4980, 7
  %v4982 = vsub.s32 %v4979, %v4981
  %v4983 = vrot.slane %v4969, %v4982
  %v4984 = vcombine.low %v4312, %v4376
  %v4985 = vcombine.high %v4312, %v4376
  %v4987 = vunpack.c.l.s4 1983009808
  %v4988 = vunpack.c.0.s8 %v4987
  %v4989 = vlaneseq
  %v4990 = vshrl.u32 %v4989, 7
  %v4991 = vsub.s32 %v4988, %v4990
  %v4992 = vrot.slane %v4984, %v4991
  %v4994 = vunpack.c.l.s4 1983009808
  %v4995 = vunpack.c.0.s8 %v4994
  %v4996 = vlaneseq
  %v4997 = vshrl.u32 %v4996, 7
  %v4998 = vsub.s32 %v4995, %v4997
  %v4999 = vrot.slane %v4985, %v4998
  %v5000 = vcombine.low %v4344, %v4408
  %v5001 = vcombine.high %v4344, %v4408
  %v5003 = vunpack.c.l.s4 1983009808
  %v5004 = vunpack.c.0.s8 %v5003
  %v5005 = vlaneseq
  %v5006 = vshrl.u32 %v5005, 7
  %v5007 = vsub.s32 %v5004, %v5006
  %v5008 = vrot.slane %v5000, %v5007
  %v5010 = vunpack.c.l.s4 1983009808
  %v5011 = vunpack.c.0.s8 %v5010
  %v5012 = vlaneseq
  %v5013 = vshrl.u32 %v5012, 7
  %v5014 = vsub.s32 %v5011, %v5013
  %v5015 = vrot.slane %v5001, %v5014
  %v5016 = vcombine.low %v4960, %v4976
  %v5017 = vcombine.high %v4960, %v4976
  %v5019 = vunpack.c.l.s4 1934713408
  %v5020 = vunpack.c.0.s8 %v5019
  %v5021 = vlaneseq
  %v5022 = vshrl.u32 %v5021, 7
  %v5023 = vsub.s32 %v5020, %v5022
  %v5024 = vrot.slane %v5016, %v5023
  %v5026 = vunpack.c.l.s4 1934713408
  %v5027 = vunpack.c.0.s8 %v5026
  %v5028 = vlaneseq
  %v5029 = vshrl.u32 %v5028, 7
  %v5030 = vsub.s32 %v5027, %v5029
  %v5031 = vrot.slane %v5017, %v5030
  %v5032 = vcombine.low %v4967, %v4983
  %v5033 = vcombine.high %v4967, %v4983
  %v5035 = vunpack.c.l.s4 1934713408
  %v5036 = vunpack.c.0.s8 %v5035
  %v5037 = vlaneseq
  %v5038 = vshrl.u32 %v5037, 7
  %v5039 = vsub.s32 %v5036, %v5038
  %v5040 = vrot.slane %v5032, %v5039
  %v5042 = vunpack.c.l.s4 1934713408
  %v5043 = vunpack.c.0.s8 %v5042
  %v5044 = vlaneseq
  %v5045 = vshrl.u32 %v5044, 7
  %v5046 = vsub.s32 %v5043, %v5045
  %v5047 = vrot.slane %v5033, %v5046
  %v5048 = vcombine.low %v4992, %v5008
  %v5049 = vcombine.high %v4992, %v5008
  %v5051 = vunpack.c.l.s4 1934713408
  %v5052 = vunpack.c.0.s8 %v5051
  %v5053 = vlaneseq
  %v5054 = vshrl.u32 %v5053, 7
  %v5055 = vsub.s32 %v5052, %v5054
  %v5056 = vrot.slane %v5048, %v5055
  %v5058 = vunpack.c.l.s4 1934713408
  %v5059 = vunpack.c.0.s8 %v5058
  %v5060 = vlaneseq
  %v5061 = vshrl.u32 %v5060, 7
  %v5062 = vsub.s32 %v5059, %v5061
  %v5063 = vrot.slane %v5049, %v5062
  %v5064 = vcombine.low %v4999, %v5015
  %v5065 = vcombine.high %v4999, %v5015
  %v5067 = vunpack.c.l.s4 1934713408
  %v5068 = vunpack.c.0.s8 %v5067
  %v5069 = vlaneseq
  %v5070 = vshrl.u32 %v5069, 7
  %v5071 = vsub.s32 %v5068, %v5070
  %v5072 = vrot.slane %v5064, %v5071
  %v5074 = vunpack.c.l.s4 1934713408
  %v5075 = vunpack.c.0.s8 %v5074
  %v5076 = vlaneseq
  %v5077 = vshrl.u32 %v5076, 7
  %v5078 = vsub.s32 %v5075, %v5077
  %v5079 = vrot.slane %v5065, %v5078
  %v5080 = vcombine.low %v5024, %v5056
  %v5081 = vcombine.high %v5024, %v5056
  %v5082 = vcombine.low %v5031, %v5063
  %v5083 = vcombine.high %v5031, %v5063
  %v5084 = vcombine.low %v5040, %v5072
  %v5085 = vcombine.high %v5040, %v5072
  %v5086 = vcombine.low %v5047, %v5079
  %v5087 = vcombine.high %v5047, %v5079
  %v5088 = vcombine.low %v4440, %v4504
  %v5089 = vcombine.high %v4440, %v4504
  %v5091 = vunpack.c.l.s4 1983009808
  %v5092 = vunpack.c.0.s8 %v5091
  %v5093 = vlaneseq
  %v5094 = vshrl.u32 %v5093, 7
  %v5095 = vsub.s32 %v5092, %v5094
  %v5096 = vrot.slane %v5088, %v5095
  %v5098 = vunpack.c.l.s4 1983009808
  %v5099 = vunpack.c.0.s8 %v5098
  %v5100 = vlaneseq
  %v5101 = vshrl.u32 %v5100, 7
  %v5102 = vsub.s32 %v5099, %v5101
  %v5103 = vrot.slane %v5089, %v5102
  %v5104 = vcombine.low %v4472, %v4536
  %v5105 = vcombine.high %v4472, %v4536
  %v5107 = vunpack.c.l.s4 1983009808
  %v5108 = vunpack.c.0.s8 %v5107
  %v5109 = vlaneseq
  %v5110 = vshrl.u32 %v5109, 7
  %v5111 = vsub.s32 %v5108, %v5110
  %v5112 = vrot.slane %v5104, %v5111
  %v5114 = vunpack.c.l.s4 1983009808
  %v5115 = vunpack.c.0.s8 %v5114
  %v5116 = vlaneseq
  %v5117 = vshrl.u32 %v5116, 7
  %v5118 = vsub.s32 %v5115, %v5117
  %v5119 = vrot.slane %v5105, %v5118
  %v5120 = vcombine.low %v4568, %v4632
  %v5121 = vcombine.high %v4568, %v4632
  %v5123 = vunpack.c.l.s4 1983009808
  %v5124 = vunpack.c.0.s8 %v5123
  %v5125 = vlaneseq
  %v5126 = vshrl.u32 %v5125, 7
  %v5127 = vsub.s32 %v5124, %v5126
  %v5128 = vrot.slane %v5120, %v5127
  %v5130 = vunpack.c.l.s4 1983009808
  %v5131 = vunpack.c.0.s8 %v5130
  %v5132 = vlaneseq
  %v5133 = vshrl.u32 %v5132, 7
  %v5134 = vsub.s32 %v5131, %v5133
  %v5135 = vrot.slane %v5121, %v5134
  %v5136 = vcombine.low %v4600, %v4664
  %v5137 = vcombine.high %v4600, %v4664
  %v5139 = vunpack.c.l.s4 1983009808
  %v5140 = vunpack.c.0.s8 %v5139
  %v5141 = vlaneseq
  %v5142 = vshrl.u32 %v5141, 7
  %v5143 = vsub.s32 %v5140, %v5142
  %v5144 = vrot.slane %v5136, %v5143
  %v5146 = vunpack.c.l.s4 1983009808
  %v5147 = vunpack.c.0.s8 %v5146
  %v5148 = vlaneseq
  %v5149 = vshrl.u32 %v5148, 7
  %v5150 = vsub.s32 %v5147, %v5149
  %v5151 = vrot.slane %v5137, %v5150
  %v5152 = vcombine.low %v5096, %v5112
  %v5153 = vcombine.high %v5096, %v5112
  %v5155 = vunpack.c.l.s4 1934713408
  %v5156 = vunpack.c.0.s8 %v5155
  %v5157 = vlaneseq
  %v5158 = vshrl.u32 %v5157, 7
  %v5159 = vsub.s32 %v5156, %v5158
  %v5160 = vrot.slane %v5152, %v5159
  %v5162 = vunpack.c.l.s4 1934713408
  %v5163 = vunpack.c.0.s8 %v5162
  %v5164 = vlaneseq
  %v5165 = vshrl.u32 %v5164, 7
  %v5166 = vsub.s32 %v5163, %v5165
  %v5167 = vrot.slane %v5153, %v5166
  %v5168 = vcombine.low %v5103, %v5119
  %v5169 = vcombine.high %v5103, %v5119
  %v5171 = vunpack.c.l.s4 1934713408
  %v5172 = vunpack.c.0.s8 %v5171
  %v5173 = vlaneseq
  %v5174 = vshrl.u32 %v5173, 7
  %v5175 = vsub.s32 %v5172, %v5174
  %v5176 = vrot.slane %v5168, %v5175
  %v5178 = vunpack.c.l.s4 1934713408
  %v5179 = vunpack.c.0.s8 %v5178
  %v5180 = vlaneseq
  %v5181 = vshrl.u32 %v5180, 7
  %v5182 = vsub.s32 %v5179, %v5181
  %v5183 = vrot.slane %v5169, %v5182
  %v5184 = vcombine.low %v5128, %v5144
  %v5185 = vcombine.high %v5128, %v5144
  %v5187 = vunpack.c.l.s4 1934713408
  %v5188 = vunpack.c.0.s8 %v5187
  %v5189 = vlaneseq
  %v5190 = vshrl.u32 %v5189, 7
  %v5191 = vsub.s32 %v5188, %v5190
  %v5192 = vrot.slane %v5184, %v5191
  %v5194 = vunpack.c.l.s4 1934713408
  %v5195 = vunpack.c.0.s8 %v5194
  %v5196 = vlaneseq
  %v5197 = vshrl.u32 %v5196, 7
  %v5198 = vsub.s32 %v5195, %v5197
  %v5199 = vrot.slane %v5185, %v5198
  %v5200 = vcombine.low %v5135, %v5151
  %v5201 = vcombine.high %v5135, %v5151
  %v5203 = vunpack.c.l.s4 1934713408
  %v5204 = vunpack.c.0.s8 %v5203
  %v5205 = vlaneseq
  %v5206 = vshrl.u32 %v5205, 7
  %v5207 = vsub.s32 %v5204, %v5206
  %v5208 = vrot.slane %v5200, %v5207
  %v5210 = vunpack.c.l.s4 1934713408
  %v5211 = vunpack.c.0.s8 %v5210
  %v5212 = vlaneseq
  %v5213 = vshrl.u32 %v5212, 7
  %v5214 = vsub.s32 %v5211, %v5213
  %v5215 = vrot.slane %v5201, %v5214
  %v5216 = vcombine.low %v5160, %v5192
  %v5217 = vcombine.high %v5160, %v5192
  %v5218 = vcombine.low %v5167, %v5199
  %v5219 = vcombine.high %v5167, %v5199
  %v5220 = vcombine.low %v5176, %v5208
  %v5221 = vcombine.high %v5176, %v5208
  %v5222 = vcombine.low %v5183, %v5215
  %v5223 = vcombine.high %v5183, %v5215
  %v5224 = vpack.c.bf16 %v4808, %v4808
  %v5225 = vpack.c.bf16 %v4809, %v4809
  %v5226 = vpack.c.bf16 %v4810, %v4810
  %v5227 = vpack.c.bf16 %v4811, %v4811
  %v5228 = vpack.c.bf16 %v4812, %v4812
  %v5229 = vpack.c.bf16 %v4813, %v4813
  %v5230 = vpack.c.bf16 %v4814, %v4814
  %v5231 = vpack.c.bf16 %v4815, %v4815
  %v5232 = vpack.c.bf16 %v4944, %v4944
  %v5233 = vpack.c.bf16 %v4945, %v4945
  %v5234 = vpack.c.bf16 %v4946, %v4946
  %v5235 = vpack.c.bf16 %v4947, %v4947
  %v5236 = vpack.c.bf16 %v4948, %v4948
  %v5237 = vpack.c.bf16 %v4949, %v4949
  %v5238 = vpack.c.bf16 %v4950, %v4950
  %v5239 = vpack.c.bf16 %v4951, %v4951
  %v5240 = vpack.c.bf16 %v5080, %v5080
  %v5241 = vpack.c.bf16 %v5081, %v5081
  %v5242 = vpack.c.bf16 %v5082, %v5082
  %v5243 = vpack.c.bf16 %v5083, %v5083
  %v5244 = vpack.c.bf16 %v5084, %v5084
  %v5245 = vpack.c.bf16 %v5085, %v5085
  %v5246 = vpack.c.bf16 %v5086, %v5086
  %v5247 = vpack.c.bf16 %v5087, %v5087
  %v5248 = vpack.c.bf16 %v5216, %v5216
  %v5249 = vpack.c.bf16 %v5217, %v5217
  %v5250 = vpack.c.bf16 %v5218, %v5218
  %v5251 = vpack.c.bf16 %v5219, %v5219
  %v5252 = vpack.c.bf16 %v5220, %v5220
  %v5253 = vpack.c.bf16 %v5221, %v5221
  %v5254 = vpack.c.bf16 %v5222, %v5222
  %v5255 = vpack.c.bf16 %v5223, %v5223
  %5260 = vrot.lane.b32.xlu0 %v160, 120
  %v5261 = vpop.permute.xlu0 %5260
  %5262 = vrot.lane.b32.xlu0 %v164, 120
  %v5263 = vpop.permute.xlu0 %5262
  %5264 = vrot.lane.b32.xlu0 %v170, 120
  %v5265 = vpop.permute.xlu0 %5264
  %5266 = vrot.lane.b32.xlu0 %v174, 120
  %v5267 = vpop.permute.xlu0 %5266
  %5272 = vrot.lane.b32.xlu0 %v160, 112
  %v5273 = vpop.permute.xlu0 %5272
  %5274 = vrot.lane.b32.xlu0 %v164, 112
  %v5275 = vpop.permute.xlu0 %5274
  %5276 = vrot.lane.b32.xlu0 %v170, 112
  %v5277 = vpop.permute.xlu0 %5276
  %5278 = vrot.lane.b32.xlu0 %v174, 112
  %v5279 = vpop.permute.xlu0 %5278
  %5284 = vrot.lane.b32.xlu0 %v160, 104
  %v5285 = vpop.permute.xlu0 %5284
  %5286 = vrot.lane.b32.xlu0 %v164, 104
  %v5287 = vpop.permute.xlu0 %5286
  %5288 = vrot.lane.b32.xlu0 %v170, 104
  %v5289 = vpop.permute.xlu0 %5288
  %5290 = vrot.lane.b32.xlu0 %v174, 104
  %v5291 = vpop.permute.xlu0 %5290
  %5296 = vrot.lane.b32.xlu0 %v160, 96
  %v5297 = vpop.permute.xlu0 %5296
  %5298 = vrot.lane.b32.xlu0 %v164, 96
  %v5299 = vpop.permute.xlu0 %5298
  %5300 = vrot.lane.b32.xlu0 %v170, 96
  %v5301 = vpop.permute.xlu0 %5300
  %5302 = vrot.lane.b32.xlu0 %v174, 96
  %v5303 = vpop.permute.xlu0 %5302
  %5308 = vrot.lane.b32.xlu0 %v160, 88
  %v5309 = vpop.permute.xlu0 %5308
  %5310 = vrot.lane.b32.xlu0 %v164, 88
  %v5311 = vpop.permute.xlu0 %5310
  %5312 = vrot.lane.b32.xlu0 %v170, 88
  %v5313 = vpop.permute.xlu0 %5312
  %5314 = vrot.lane.b32.xlu0 %v174, 88
  %v5315 = vpop.permute.xlu0 %5314
  %5320 = vrot.lane.b32.xlu0 %v160, 80
  %v5321 = vpop.permute.xlu0 %5320
  %5322 = vrot.lane.b32.xlu0 %v164, 80
  %v5323 = vpop.permute.xlu0 %5322
  %5324 = vrot.lane.b32.xlu0 %v170, 80
  %v5325 = vpop.permute.xlu0 %5324
  %5326 = vrot.lane.b32.xlu0 %v174, 80
  %v5327 = vpop.permute.xlu0 %5326
  %5332 = vrot.lane.b32.xlu0 %v160, 72
  %v5333 = vpop.permute.xlu0 %5332
  %5334 = vrot.lane.b32.xlu0 %v164, 72
  %v5335 = vpop.permute.xlu0 %5334
  %5336 = vrot.lane.b32.xlu0 %v170, 72
  %v5337 = vpop.permute.xlu0 %5336
  %5338 = vrot.lane.b32.xlu0 %v174, 72
  %v5339 = vpop.permute.xlu0 %5338
  %v5344 = vcombine.low %v160, %v5273
  %v5345 = vcombine.high %v160, %v5273
  %v5347 = vunpack.c.l.s4 1983009808
  %v5348 = vunpack.c.0.s8 %v5347
  %v5349 = vlaneseq
  %v5350 = vshrl.u32 %v5349, 7
  %v5351 = vsub.s32 %v5348, %v5350
  %v5352 = vrot.slane %v5344, %v5351
  %v5354 = vunpack.c.l.s4 1983009808
  %v5355 = vunpack.c.0.s8 %v5354
  %v5356 = vlaneseq
  %v5357 = vshrl.u32 %v5356, 7
  %v5358 = vsub.s32 %v5355, %v5357
  %v5359 = vrot.slane %v5345, %v5358
  %v5360 = vcombine.low %v5261, %v5285
  %v5361 = vcombine.high %v5261, %v5285
  %v5363 = vunpack.c.l.s4 1983009808
  %v5364 = vunpack.c.0.s8 %v5363
  %v5365 = vlaneseq
  %v5366 = vshrl.u32 %v5365, 7
  %v5367 = vsub.s32 %v5364, %v5366
  %v5368 = vrot.slane %v5360, %v5367
  %v5370 = vunpack.c.l.s4 1983009808
  %v5371 = vunpack.c.0.s8 %v5370
  %v5372 = vlaneseq
  %v5373 = vshrl.u32 %v5372, 7
  %v5374 = vsub.s32 %v5371, %v5373
  %v5375 = vrot.slane %v5361, %v5374
  %v5376 = vcombine.low %v5297, %v5321
  %v5377 = vcombine.high %v5297, %v5321
  %v5379 = vunpack.c.l.s4 1983009808
  %v5380 = vunpack.c.0.s8 %v5379
  %v5381 = vlaneseq
  %v5382 = vshrl.u32 %v5381, 7
  %v5383 = vsub.s32 %v5380, %v5382
  %v5384 = vrot.slane %v5376, %v5383
  %v5386 = vunpack.c.l.s4 1983009808
  %v5387 = vunpack.c.0.s8 %v5386
  %v5388 = vlaneseq
  %v5389 = vshrl.u32 %v5388, 7
  %v5390 = vsub.s32 %v5387, %v5389
  %v5391 = vrot.slane %v5377, %v5390
  %v5392 = vcombine.low %v5309, %v5333
  %v5393 = vcombine.high %v5309, %v5333
  %v5395 = vunpack.c.l.s4 1983009808
  %v5396 = vunpack.c.0.s8 %v5395
  %v5397 = vlaneseq
  %v5398 = vshrl.u32 %v5397, 7
  %v5399 = vsub.s32 %v5396, %v5398
  %v5400 = vrot.slane %v5392, %v5399
  %v5402 = vunpack.c.l.s4 1983009808
  %v5403 = vunpack.c.0.s8 %v5402
  %v5404 = vlaneseq
  %v5405 = vshrl.u32 %v5404, 7
  %v5406 = vsub.s32 %v5403, %v5405
  %v5407 = vrot.slane %v5393, %v5406
  %v5408 = vcombine.low %v5352, %v5368
  %v5409 = vcombine.high %v5352, %v5368
  %v5411 = vunpack.c.l.s4 1934713408
  %v5412 = vunpack.c.0.s8 %v5411
  %v5413 = vlaneseq
  %v5414 = vshrl.u32 %v5413, 7
  %v5415 = vsub.s32 %v5412, %v5414
  %v5416 = vrot.slane %v5408, %v5415
  %v5418 = vunpack.c.l.s4 1934713408
  %v5419 = vunpack.c.0.s8 %v5418
  %v5420 = vlaneseq
  %v5421 = vshrl.u32 %v5420, 7
  %v5422 = vsub.s32 %v5419, %v5421
  %v5423 = vrot.slane %v5409, %v5422
  %v5424 = vcombine.low %v5359, %v5375
  %v5425 = vcombine.high %v5359, %v5375
  %v5427 = vunpack.c.l.s4 1934713408
  %v5428 = vunpack.c.0.s8 %v5427
  %v5429 = vlaneseq
  %v5430 = vshrl.u32 %v5429, 7
  %v5431 = vsub.s32 %v5428, %v5430
  %v5432 = vrot.slane %v5424, %v5431
  %v5434 = vunpack.c.l.s4 1934713408
  %v5435 = vunpack.c.0.s8 %v5434
  %v5436 = vlaneseq
  %v5437 = vshrl.u32 %v5436, 7
  %v5438 = vsub.s32 %v5435, %v5437
  %v5439 = vrot.slane %v5425, %v5438
  %v5440 = vcombine.low %v5384, %v5400
  %v5441 = vcombine.high %v5384, %v5400
  %v5443 = vunpack.c.l.s4 1934713408
  %v5444 = vunpack.c.0.s8 %v5443
  %v5445 = vlaneseq
  %v5446 = vshrl.u32 %v5445, 7
  %v5447 = vsub.s32 %v5444, %v5446
  %v5448 = vrot.slane %v5440, %v5447
  %v5450 = vunpack.c.l.s4 1934713408
  %v5451 = vunpack.c.0.s8 %v5450
  %v5452 = vlaneseq
  %v5453 = vshrl.u32 %v5452, 7
  %v5454 = vsub.s32 %v5451, %v5453
  %v5455 = vrot.slane %v5441, %v5454
  %v5456 = vcombine.low %v5391, %v5407
  %v5457 = vcombine.high %v5391, %v5407
  %v5459 = vunpack.c.l.s4 1934713408
  %v5460 = vunpack.c.0.s8 %v5459
  %v5461 = vlaneseq
  %v5462 = vshrl.u32 %v5461, 7
  %v5463 = vsub.s32 %v5460, %v5462
  %v5464 = vrot.slane %v5456, %v5463
  %v5466 = vunpack.c.l.s4 1934713408
  %v5467 = vunpack.c.0.s8 %v5466
  %v5468 = vlaneseq
  %v5469 = vshrl.u32 %v5468, 7
  %v5470 = vsub.s32 %v5467, %v5469
  %v5471 = vrot.slane %v5457, %v5470
  %v5472 = vcombine.low %v5416, %v5448
  %v5473 = vcombine.high %v5416, %v5448
  %v5474 = vcombine.low %v5423, %v5455
  %v5475 = vcombine.high %v5423, %v5455
  %v5476 = vcombine.low %v5432, %v5464
  %v5477 = vcombine.high %v5432, %v5464
  %v5478 = vcombine.low %v5439, %v5471
  %v5479 = vcombine.high %v5439, %v5471
  %v5480 = vcombine.low %v164, %v5275
  %v5481 = vcombine.high %v164, %v5275
  %v5483 = vunpack.c.l.s4 1983009808
  %v5484 = vunpack.c.0.s8 %v5483
  %v5485 = vlaneseq
  %v5486 = vshrl.u32 %v5485, 7
  %v5487 = vsub.s32 %v5484, %v5486
  %v5488 = vrot.slane %v5480, %v5487
  %v5490 = vunpack.c.l.s4 1983009808
  %v5491 = vunpack.c.0.s8 %v5490
  %v5492 = vlaneseq
  %v5493 = vshrl.u32 %v5492, 7
  %v5494 = vsub.s32 %v5491, %v5493
  %v5495 = vrot.slane %v5481, %v5494
  %v5496 = vcombine.low %v5263, %v5287
  %v5497 = vcombine.high %v5263, %v5287
  %v5499 = vunpack.c.l.s4 1983009808
  %v5500 = vunpack.c.0.s8 %v5499
  %v5501 = vlaneseq
  %v5502 = vshrl.u32 %v5501, 7
  %v5503 = vsub.s32 %v5500, %v5502
  %v5504 = vrot.slane %v5496, %v5503
  %v5506 = vunpack.c.l.s4 1983009808
  %v5507 = vunpack.c.0.s8 %v5506
  %v5508 = vlaneseq
  %v5509 = vshrl.u32 %v5508, 7
  %v5510 = vsub.s32 %v5507, %v5509
  %v5511 = vrot.slane %v5497, %v5510
  %v5512 = vcombine.low %v5299, %v5323
  %v5513 = vcombine.high %v5299, %v5323
  %v5515 = vunpack.c.l.s4 1983009808
  %v5516 = vunpack.c.0.s8 %v5515
  %v5517 = vlaneseq
  %v5518 = vshrl.u32 %v5517, 7
  %v5519 = vsub.s32 %v5516, %v5518
  %v5520 = vrot.slane %v5512, %v5519
  %v5522 = vunpack.c.l.s4 1983009808
  %v5523 = vunpack.c.0.s8 %v5522
  %v5524 = vlaneseq
  %v5525 = vshrl.u32 %v5524, 7
  %v5526 = vsub.s32 %v5523, %v5525
  %v5527 = vrot.slane %v5513, %v5526
  %v5528 = vcombine.low %v5311, %v5335
  %v5529 = vcombine.high %v5311, %v5335
  %v5531 = vunpack.c.l.s4 1983009808
  %v5532 = vunpack.c.0.s8 %v5531
  %v5533 = vlaneseq
  %v5534 = vshrl.u32 %v5533, 7
  %v5535 = vsub.s32 %v5532, %v5534
  %v5536 = vrot.slane %v5528, %v5535
  %v5538 = vunpack.c.l.s4 1983009808
  %v5539 = vunpack.c.0.s8 %v5538
  %v5540 = vlaneseq
  %v5541 = vshrl.u32 %v5540, 7
  %v5542 = vsub.s32 %v5539, %v5541
  %v5543 = vrot.slane %v5529, %v5542
  %v5544 = vcombine.low %v5488, %v5504
  %v5545 = vcombine.high %v5488, %v5504
  %v5547 = vunpack.c.l.s4 1934713408
  %v5548 = vunpack.c.0.s8 %v5547
  %v5549 = vlaneseq
  %v5550 = vshrl.u32 %v5549, 7
  %v5551 = vsub.s32 %v5548, %v5550
  %v5552 = vrot.slane %v5544, %v5551
  %v5554 = vunpack.c.l.s4 1934713408
  %v5555 = vunpack.c.0.s8 %v5554
  %v5556 = vlaneseq
  %v5557 = vshrl.u32 %v5556, 7
  %v5558 = vsub.s32 %v5555, %v5557
  %v5559 = vrot.slane %v5545, %v5558
  %v5560 = vcombine.low %v5495, %v5511
  %v5561 = vcombine.high %v5495, %v5511
  %v5563 = vunpack.c.l.s4 1934713408
  %v5564 = vunpack.c.0.s8 %v5563
  %v5565 = vlaneseq
  %v5566 = vshrl.u32 %v5565, 7
  %v5567 = vsub.s32 %v5564, %v5566
  %v5568 = vrot.slane %v5560, %v5567
  %v5570 = vunpack.c.l.s4 1934713408
  %v5571 = vunpack.c.0.s8 %v5570
  %v5572 = vlaneseq
  %v5573 = vshrl.u32 %v5572, 7
  %v5574 = vsub.s32 %v5571, %v5573
  %v5575 = vrot.slane %v5561, %v5574
  %v5576 = vcombine.low %v5520, %v5536
  %v5577 = vcombine.high %v5520, %v5536
  %v5579 = vunpack.c.l.s4 1934713408
  %v5580 = vunpack.c.0.s8 %v5579
  %v5581 = vlaneseq
  %v5582 = vshrl.u32 %v5581, 7
  %v5583 = vsub.s32 %v5580, %v5582
  %v5584 = vrot.slane %v5576, %v5583
  %v5586 = vunpack.c.l.s4 1934713408
  %v5587 = vunpack.c.0.s8 %v5586
  %v5588 = vlaneseq
  %v5589 = vshrl.u32 %v5588, 7
  %v5590 = vsub.s32 %v5587, %v5589
  %v5591 = vrot.slane %v5577, %v5590
  %v5592 = vcombine.low %v5527, %v5543
  %v5593 = vcombine.high %v5527, %v5543
  %v5595 = vunpack.c.l.s4 1934713408
  %v5596 = vunpack.c.0.s8 %v5595
  %v5597 = vlaneseq
  %v5598 = vshrl.u32 %v5597, 7
  %v5599 = vsub.s32 %v5596, %v5598
  %v5600 = vrot.slane %v5592, %v5599
  %v5602 = vunpack.c.l.s4 1934713408
  %v5603 = vunpack.c.0.s8 %v5602
  %v5604 = vlaneseq
  %v5605 = vshrl.u32 %v5604, 7
  %v5606 = vsub.s32 %v5603, %v5605
  %v5607 = vrot.slane %v5593, %v5606
  %v5608 = vcombine.low %v5552, %v5584
  %v5609 = vcombine.high %v5552, %v5584
  %v5610 = vcombine.low %v5559, %v5591
  %v5611 = vcombine.high %v5559, %v5591
  %v5612 = vcombine.low %v5568, %v5600
  %v5613 = vcombine.high %v5568, %v5600
  %v5614 = vcombine.low %v5575, %v5607
  %v5615 = vcombine.high %v5575, %v5607
  %v5616 = vcombine.low %v170, %v5277
  %v5617 = vcombine.high %v170, %v5277
  %v5619 = vunpack.c.l.s4 1983009808
  %v5620 = vunpack.c.0.s8 %v5619
  %v5621 = vlaneseq
  %v5622 = vshrl.u32 %v5621, 7
  %v5623 = vsub.s32 %v5620, %v5622
  %v5624 = vrot.slane %v5616, %v5623
  %v5626 = vunpack.c.l.s4 1983009808
  %v5627 = vunpack.c.0.s8 %v5626
  %v5628 = vlaneseq
  %v5629 = vshrl.u32 %v5628, 7
  %v5630 = vsub.s32 %v5627, %v5629
  %v5631 = vrot.slane %v5617, %v5630
  %v5632 = vcombine.low %v5265, %v5289
  %v5633 = vcombine.high %v5265, %v5289
  %v5635 = vunpack.c.l.s4 1983009808
  %v5636 = vunpack.c.0.s8 %v5635
  %v5637 = vlaneseq
  %v5638 = vshrl.u32 %v5637, 7
  %v5639 = vsub.s32 %v5636, %v5638
  %v5640 = vrot.slane %v5632, %v5639
  %v5642 = vunpack.c.l.s4 1983009808
  %v5643 = vunpack.c.0.s8 %v5642
  %v5644 = vlaneseq
  %v5645 = vshrl.u32 %v5644, 7
  %v5646 = vsub.s32 %v5643, %v5645
  %v5647 = vrot.slane %v5633, %v5646
  %v5648 = vcombine.low %v5301, %v5325
  %v5649 = vcombine.high %v5301, %v5325
  %v5651 = vunpack.c.l.s4 1983009808
  %v5652 = vunpack.c.0.s8 %v5651
  %v5653 = vlaneseq
  %v5654 = vshrl.u32 %v5653, 7
  %v5655 = vsub.s32 %v5652, %v5654
  %v5656 = vrot.slane %v5648, %v5655
  %v5658 = vunpack.c.l.s4 1983009808
  %v5659 = vunpack.c.0.s8 %v5658
  %v5660 = vlaneseq
  %v5661 = vshrl.u32 %v5660, 7
  %v5662 = vsub.s32 %v5659, %v5661
  %v5663 = vrot.slane %v5649, %v5662
  %v5664 = vcombine.low %v5313, %v5337
  %v5665 = vcombine.high %v5313, %v5337
  %v5667 = vunpack.c.l.s4 1983009808
  %v5668 = vunpack.c.0.s8 %v5667
  %v5669 = vlaneseq
  %v5670 = vshrl.u32 %v5669, 7
  %v5671 = vsub.s32 %v5668, %v5670
  %v5672 = vrot.slane %v5664, %v5671
  %v5674 = vunpack.c.l.s4 1983009808
  %v5675 = vunpack.c.0.s8 %v5674
  %v5676 = vlaneseq
  %v5677 = vshrl.u32 %v5676, 7
  %v5678 = vsub.s32 %v5675, %v5677
  %v5679 = vrot.slane %v5665, %v5678
  %v5680 = vcombine.low %v5624, %v5640
  %v5681 = vcombine.high %v5624, %v5640
  %v5683 = vunpack.c.l.s4 1934713408
  %v5684 = vunpack.c.0.s8 %v5683
  %v5685 = vlaneseq
  %v5686 = vshrl.u32 %v5685, 7
  %v5687 = vsub.s32 %v5684, %v5686
  %v5688 = vrot.slane %v5680, %v5687
  %v5690 = vunpack.c.l.s4 1934713408
  %v5691 = vunpack.c.0.s8 %v5690
  %v5692 = vlaneseq
  %v5693 = vshrl.u32 %v5692, 7
  %v5694 = vsub.s32 %v5691, %v5693
  %v5695 = vrot.slane %v5681, %v5694
  %v5696 = vcombine.low %v5631, %v5647
  %v5697 = vcombine.high %v5631, %v5647
  %v5699 = vunpack.c.l.s4 1934713408
  %v5700 = vunpack.c.0.s8 %v5699
  %v5701 = vlaneseq
  %v5702 = vshrl.u32 %v5701, 7
  %v5703 = vsub.s32 %v5700, %v5702
  %v5704 = vrot.slane %v5696, %v5703
  %v5706 = vunpack.c.l.s4 1934713408
  %v5707 = vunpack.c.0.s8 %v5706
  %v5708 = vlaneseq
  %v5709 = vshrl.u32 %v5708, 7
  %v5710 = vsub.s32 %v5707, %v5709
  %v5711 = vrot.slane %v5697, %v5710
  %v5712 = vcombine.low %v5656, %v5672
  %v5713 = vcombine.high %v5656, %v5672
  %v5715 = vunpack.c.l.s4 1934713408
  %v5716 = vunpack.c.0.s8 %v5715
  %v5717 = vlaneseq
  %v5718 = vshrl.u32 %v5717, 7
  %v5719 = vsub.s32 %v5716, %v5718
  %v5720 = vrot.slane %v5712, %v5719
  %v5722 = vunpack.c.l.s4 1934713408
  %v5723 = vunpack.c.0.s8 %v5722
  %v5724 = vlaneseq
  %v5725 = vshrl.u32 %v5724, 7
  %v5726 = vsub.s32 %v5723, %v5725
  %v5727 = vrot.slane %v5713, %v5726
  %v5728 = vcombine.low %v5663, %v5679
  %v5729 = vcombine.high %v5663, %v5679
  %v5731 = vunpack.c.l.s4 1934713408
  %v5732 = vunpack.c.0.s8 %v5731
  %v5733 = vlaneseq
  %v5734 = vshrl.u32 %v5733, 7
  %v5735 = vsub.s32 %v5732, %v5734
  %v5736 = vrot.slane %v5728, %v5735
  %v5738 = vunpack.c.l.s4 1934713408
  %v5739 = vunpack.c.0.s8 %v5738
  %v5740 = vlaneseq
  %v5741 = vshrl.u32 %v5740, 7
  %v5742 = vsub.s32 %v5739, %v5741
  %v5743 = vrot.slane %v5729, %v5742
  %v5744 = vcombine.low %v5688, %v5720
  %v5745 = vcombine.high %v5688, %v5720
  %v5746 = vcombine.low %v5695, %v5727
  %v5747 = vcombine.high %v5695, %v5727
  %v5748 = vcombine.low %v5704, %v5736
  %v5749 = vcombine.high %v5704, %v5736
  %v5750 = vcombine.low %v5711, %v5743
  %v5751 = vcombine.high %v5711, %v5743
  %v5752 = vcombine.low %v174, %v5279
  %v5753 = vcombine.high %v174, %v5279
  %v5755 = vunpack.c.l.s4 1983009808
  %v5756 = vunpack.c.0.s8 %v5755
  %v5757 = vlaneseq
  %v5758 = vshrl.u32 %v5757, 7
  %v5759 = vsub.s32 %v5756, %v5758
  %v5760 = vrot.slane %v5752, %v5759
  %v5762 = vunpack.c.l.s4 1983009808
  %v5763 = vunpack.c.0.s8 %v5762
  %v5764 = vlaneseq
  %v5765 = vshrl.u32 %v5764, 7
  %v5766 = vsub.s32 %v5763, %v5765
  %v5767 = vrot.slane %v5753, %v5766
  %v5768 = vcombine.low %v5267, %v5291
  %v5769 = vcombine.high %v5267, %v5291
  %v5771 = vunpack.c.l.s4 1983009808
  %v5772 = vunpack.c.0.s8 %v5771
  %v5773 = vlaneseq
  %v5774 = vshrl.u32 %v5773, 7
  %v5775 = vsub.s32 %v5772, %v5774
  %v5776 = vrot.slane %v5768, %v5775
  %v5778 = vunpack.c.l.s4 1983009808
  %v5779 = vunpack.c.0.s8 %v5778
  %v5780 = vlaneseq
  %v5781 = vshrl.u32 %v5780, 7
  %v5782 = vsub.s32 %v5779, %v5781
  %v5783 = vrot.slane %v5769, %v5782
  %v5784 = vcombine.low %v5303, %v5327
  %v5785 = vcombine.high %v5303, %v5327
  %v5787 = vunpack.c.l.s4 1983009808
  %v5788 = vunpack.c.0.s8 %v5787
  %v5789 = vlaneseq
  %v5790 = vshrl.u32 %v5789, 7
  %v5791 = vsub.s32 %v5788, %v5790
  %v5792 = vrot.slane %v5784, %v5791
  %v5794 = vunpack.c.l.s4 1983009808
  %v5795 = vunpack.c.0.s8 %v5794
  %v5796 = vlaneseq
  %v5797 = vshrl.u32 %v5796, 7
  %v5798 = vsub.s32 %v5795, %v5797
  %v5799 = vrot.slane %v5785, %v5798
  %v5800 = vcombine.low %v5315, %v5339
  %v5801 = vcombine.high %v5315, %v5339
  %v5803 = vunpack.c.l.s4 1983009808
  %v5804 = vunpack.c.0.s8 %v5803
  %v5805 = vlaneseq
  %v5806 = vshrl.u32 %v5805, 7
  %v5807 = vsub.s32 %v5804, %v5806
  %v5808 = vrot.slane %v5800, %v5807
  %v5810 = vunpack.c.l.s4 1983009808
  %v5811 = vunpack.c.0.s8 %v5810
  %v5812 = vlaneseq
  %v5813 = vshrl.u32 %v5812, 7
  %v5814 = vsub.s32 %v5811, %v5813
  %v5815 = vrot.slane %v5801, %v5814
  %v5816 = vcombine.low %v5760, %v5776
  %v5817 = vcombine.high %v5760, %v5776
  %v5819 = vunpack.c.l.s4 1934713408
  %v5820 = vunpack.c.0.s8 %v5819
  %v5821 = vlaneseq
  %v5822 = vshrl.u32 %v5821, 7
  %v5823 = vsub.s32 %v5820, %v5822
  %v5824 = vrot.slane %v5816, %v5823
  %v5826 = vunpack.c.l.s4 1934713408
  %v5827 = vunpack.c.0.s8 %v5826
  %v5828 = vlaneseq
  %v5829 = vshrl.u32 %v5828, 7
  %v5830 = vsub.s32 %v5827, %v5829
  %v5831 = vrot.slane %v5817, %v5830
  %v5832 = vcombine.low %v5767, %v5783
  %v5833 = vcombine.high %v5767, %v5783
  %v5835 = vunpack.c.l.s4 1934713408
  %v5836 = vunpack.c.0.s8 %v5835
  %v5837 = vlaneseq
  %v5838 = vshrl.u32 %v5837, 7
  %v5839 = vsub.s32 %v5836, %v5838
  %v5840 = vrot.slane %v5832, %v5839
  %v5842 = vunpack.c.l.s4 1934713408
  %v5843 = vunpack.c.0.s8 %v5842
  %v5844 = vlaneseq
  %v5845 = vshrl.u32 %v5844, 7
  %v5846 = vsub.s32 %v5843, %v5845
  %v5847 = vrot.slane %v5833, %v5846
  %v5848 = vcombine.low %v5792, %v5808
  %v5849 = vcombine.high %v5792, %v5808
  %v5851 = vunpack.c.l.s4 1934713408
  %v5852 = vunpack.c.0.s8 %v5851
  %v5853 = vlaneseq
  %v5854 = vshrl.u32 %v5853, 7
  %v5855 = vsub.s32 %v5852, %v5854
  %v5856 = vrot.slane %v5848, %v5855
  %v5858 = vunpack.c.l.s4 1934713408
  %v5859 = vunpack.c.0.s8 %v5858
  %v5860 = vlaneseq
  %v5861 = vshrl.u32 %v5860, 7
  %v5862 = vsub.s32 %v5859, %v5861
  %v5863 = vrot.slane %v5849, %v5862
  %v5864 = vcombine.low %v5799, %v5815
  %v5865 = vcombine.high %v5799, %v5815
  %v5867 = vunpack.c.l.s4 1934713408
  %v5868 = vunpack.c.0.s8 %v5867
  %v5869 = vlaneseq
  %v5870 = vshrl.u32 %v5869, 7
  %v5871 = vsub.s32 %v5868, %v5870
  %v5872 = vrot.slane %v5864, %v5871
  %v5874 = vunpack.c.l.s4 1934713408
  %v5875 = vunpack.c.0.s8 %v5874
  %v5876 = vlaneseq
  %v5877 = vshrl.u32 %v5876, 7
  %v5878 = vsub.s32 %v5875, %v5877
  %v5879 = vrot.slane %v5865, %v5878
  %v5880 = vcombine.low %v5824, %v5856
  %v5881 = vcombine.high %v5824, %v5856
  %v5882 = vcombine.low %v5831, %v5863
  %v5883 = vcombine.high %v5831, %v5863
  %v5884 = vcombine.low %v5840, %v5872
  %v5885 = vcombine.high %v5840, %v5872
  %v5886 = vcombine.low %v5847, %v5879
  %v5887 = vcombine.high %v5847, %v5879
  %v5888 = vcombine.low %v5472, %v5474
  %v5889 = vcombine.high %v5472, %v5474
  %v5891 = vunpack.c.l.s4 1983009808
  %v5892 = vunpack.c.0.s8 %v5891
  %v5893 = vlaneseq
  %v5894 = vshrl.u32 %v5893, 7
  %v5895 = vsub.s32 %v5892, %v5894
  %v5896 = vrot.slane %v5888, %v5895
  %v5898 = vunpack.c.l.s4 1983009808
  %v5899 = vunpack.c.0.s8 %v5898
  %v5900 = vlaneseq
  %v5901 = vshrl.u32 %v5900, 7
  %v5902 = vsub.s32 %v5899, %v5901
  %v5903 = vrot.slane %v5889, %v5902
  %v5904 = vcombine.low %v5473, %v5475
  %v5905 = vcombine.high %v5473, %v5475
  %v5907 = vunpack.c.l.s4 1983009808
  %v5908 = vunpack.c.0.s8 %v5907
  %v5909 = vlaneseq
  %v5910 = vshrl.u32 %v5909, 7
  %v5911 = vsub.s32 %v5908, %v5910
  %v5912 = vrot.slane %v5904, %v5911
  %v5914 = vunpack.c.l.s4 1983009808
  %v5915 = vunpack.c.0.s8 %v5914
  %v5916 = vlaneseq
  %v5917 = vshrl.u32 %v5916, 7
  %v5918 = vsub.s32 %v5915, %v5917
  %v5919 = vrot.slane %v5905, %v5918
  %v5920 = vcombine.low %v5476, %v5478
  %v5921 = vcombine.high %v5476, %v5478
  %v5923 = vunpack.c.l.s4 1983009808
  %v5924 = vunpack.c.0.s8 %v5923
  %v5925 = vlaneseq
  %v5926 = vshrl.u32 %v5925, 7
  %v5927 = vsub.s32 %v5924, %v5926
  %v5928 = vrot.slane %v5920, %v5927
  %v5930 = vunpack.c.l.s4 1983009808
  %v5931 = vunpack.c.0.s8 %v5930
  %v5932 = vlaneseq
  %v5933 = vshrl.u32 %v5932, 7
  %v5934 = vsub.s32 %v5931, %v5933
  %v5935 = vrot.slane %v5921, %v5934
  %v5936 = vcombine.low %v5477, %v5479
  %v5937 = vcombine.high %v5477, %v5479
  %v5939 = vunpack.c.l.s4 1983009808
  %v5940 = vunpack.c.0.s8 %v5939
  %v5941 = vlaneseq
  %v5942 = vshrl.u32 %v5941, 7
  %v5943 = vsub.s32 %v5940, %v5942
  %v5944 = vrot.slane %v5936, %v5943
  %v5946 = vunpack.c.l.s4 1983009808
  %v5947 = vunpack.c.0.s8 %v5946
  %v5948 = vlaneseq
  %v5949 = vshrl.u32 %v5948, 7
  %v5950 = vsub.s32 %v5947, %v5949
  %v5951 = vrot.slane %v5937, %v5950
  %v5952 = vcombine.low %v5896, %v5912
  %v5953 = vcombine.high %v5896, %v5912
  %v5955 = vunpack.c.l.s4 1934713408
  %v5956 = vunpack.c.0.s8 %v5955
  %v5957 = vlaneseq
  %v5958 = vshrl.u32 %v5957, 7
  %v5959 = vsub.s32 %v5956, %v5958
  %v5960 = vrot.slane %v5952, %v5959
  %v5962 = vunpack.c.l.s4 1934713408
  %v5963 = vunpack.c.0.s8 %v5962
  %v5964 = vlaneseq
  %v5965 = vshrl.u32 %v5964, 7
  %v5966 = vsub.s32 %v5963, %v5965
  %v5967 = vrot.slane %v5953, %v5966
  %v5968 = vcombine.low %v5903, %v5919
  %v5969 = vcombine.high %v5903, %v5919
  %v5971 = vunpack.c.l.s4 1934713408
  %v5972 = vunpack.c.0.s8 %v5971
  %v5973 = vlaneseq
  %v5974 = vshrl.u32 %v5973, 7
  %v5975 = vsub.s32 %v5972, %v5974
  %v5976 = vrot.slane %v5968, %v5975
  %v5978 = vunpack.c.l.s4 1934713408
  %v5979 = vunpack.c.0.s8 %v5978
  %v5980 = vlaneseq
  %v5981 = vshrl.u32 %v5980, 7
  %v5982 = vsub.s32 %v5979, %v5981
  %v5983 = vrot.slane %v5969, %v5982
  %v5984 = vcombine.low %v5928, %v5944
  %v5985 = vcombine.high %v5928, %v5944
  %v5987 = vunpack.c.l.s4 1934713408
  %v5988 = vunpack.c.0.s8 %v5987
  %v5989 = vlaneseq
  %v5990 = vshrl.u32 %v5989, 7
  %v5991 = vsub.s32 %v5988, %v5990
  %v5992 = vrot.slane %v5984, %v5991
  %v5994 = vunpack.c.l.s4 1934713408
  %v5995 = vunpack.c.0.s8 %v5994
  %v5996 = vlaneseq
  %v5997 = vshrl.u32 %v5996, 7
  %v5998 = vsub.s32 %v5995, %v5997
  %v5999 = vrot.slane %v5985, %v5998
  %v6000 = vcombine.low %v5935, %v5951
  %v6001 = vcombine.high %v5935, %v5951
  %v6003 = vunpack.c.l.s4 1934713408
  %v6004 = vunpack.c.0.s8 %v6003
  %v6005 = vlaneseq
  %v6006 = vshrl.u32 %v6005, 7
  %v6007 = vsub.s32 %v6004, %v6006
  %v6008 = vrot.slane %v6000, %v6007
  %v6010 = vunpack.c.l.s4 1934713408
  %v6011 = vunpack.c.0.s8 %v6010
  %v6012 = vlaneseq
  %v6013 = vshrl.u32 %v6012, 7
  %v6014 = vsub.s32 %v6011, %v6013
  %v6015 = vrot.slane %v6001, %v6014
  %v6016 = vcombine.low %v5960, %v5992
  %v6017 = vcombine.high %v5960, %v5992
  %v6018 = vcombine.low %v5967, %v5999
  %v6019 = vcombine.high %v5967, %v5999
  %v6020 = vcombine.low %v5976, %v6008
  %v6021 = vcombine.high %v5976, %v6008
  %v6022 = vcombine.low %v5983, %v6015
  %v6023 = vcombine.high %v5983, %v6015
  %v6024 = vcombine.low %v5608, %v5610
  %v6025 = vcombine.high %v5608, %v5610
  %v6027 = vunpack.c.l.s4 1983009808
  %v6028 = vunpack.c.0.s8 %v6027
  %v6029 = vlaneseq
  %v6030 = vshrl.u32 %v6029, 7
  %v6031 = vsub.s32 %v6028, %v6030
  %v6032 = vrot.slane %v6024, %v6031
  %v6034 = vunpack.c.l.s4 1983009808
  %v6035 = vunpack.c.0.s8 %v6034
  %v6036 = vlaneseq
  %v6037 = vshrl.u32 %v6036, 7
  %v6038 = vsub.s32 %v6035, %v6037
  %v6039 = vrot.slane %v6025, %v6038
  %v6040 = vcombine.low %v5609, %v5611
  %v6041 = vcombine.high %v5609, %v5611
  %v6043 = vunpack.c.l.s4 1983009808
  %v6044 = vunpack.c.0.s8 %v6043
  %v6045 = vlaneseq
  %v6046 = vshrl.u32 %v6045, 7
  %v6047 = vsub.s32 %v6044, %v6046
  %v6048 = vrot.slane %v6040, %v6047
  %v6050 = vunpack.c.l.s4 1983009808
  %v6051 = vunpack.c.0.s8 %v6050
  %v6052 = vlaneseq
  %v6053 = vshrl.u32 %v6052, 7
  %v6054 = vsub.s32 %v6051, %v6053
  %v6055 = vrot.slane %v6041, %v6054
  %v6056 = vcombine.low %v5612, %v5614
  %v6057 = vcombine.high %v5612, %v5614
  %v6059 = vunpack.c.l.s4 1983009808
  %v6060 = vunpack.c.0.s8 %v6059
  %v6061 = vlaneseq
  %v6062 = vshrl.u32 %v6061, 7
  %v6063 = vsub.s32 %v6060, %v6062
  %v6064 = vrot.slane %v6056, %v6063
  %v6066 = vunpack.c.l.s4 1983009808
  %v6067 = vunpack.c.0.s8 %v6066
  %v6068 = vlaneseq
  %v6069 = vshrl.u32 %v6068, 7
  %v6070 = vsub.s32 %v6067, %v6069
  %v6071 = vrot.slane %v6057, %v6070
  %v6072 = vcombine.low %v5613, %v5615
  %v6073 = vcombine.high %v5613, %v5615
  %v6075 = vunpack.c.l.s4 1983009808
  %v6076 = vunpack.c.0.s8 %v6075
  %v6077 = vlaneseq
  %v6078 = vshrl.u32 %v6077, 7
  %v6079 = vsub.s32 %v6076, %v6078
  %v6080 = vrot.slane %v6072, %v6079
  %v6082 = vunpack.c.l.s4 1983009808
  %v6083 = vunpack.c.0.s8 %v6082
  %v6084 = vlaneseq
  %v6085 = vshrl.u32 %v6084, 7
  %v6086 = vsub.s32 %v6083, %v6085
  %v6087 = vrot.slane %v6073, %v6086
  %v6088 = vcombine.low %v6032, %v6048
  %v6089 = vcombine.high %v6032, %v6048
  %v6091 = vunpack.c.l.s4 1934713408
  %v6092 = vunpack.c.0.s8 %v6091
  %v6093 = vlaneseq
  %v6094 = vshrl.u32 %v6093, 7
  %v6095 = vsub.s32 %v6092, %v6094
  %v6096 = vrot.slane %v6088, %v6095
  %v6098 = vunpack.c.l.s4 1934713408
  %v6099 = vunpack.c.0.s8 %v6098
  %v6100 = vlaneseq
  %v6101 = vshrl.u32 %v6100, 7
  %v6102 = vsub.s32 %v6099, %v6101
  %v6103 = vrot.slane %v6089, %v6102
  %v6104 = vcombine.low %v6039, %v6055
  %v6105 = vcombine.high %v6039, %v6055
  %v6107 = vunpack.c.l.s4 1934713408
  %v6108 = vunpack.c.0.s8 %v6107
  %v6109 = vlaneseq
  %v6110 = vshrl.u32 %v6109, 7
  %v6111 = vsub.s32 %v6108, %v6110
  %v6112 = vrot.slane %v6104, %v6111
  %v6114 = vunpack.c.l.s4 1934713408
  %v6115 = vunpack.c.0.s8 %v6114
  %v6116 = vlaneseq
  %v6117 = vshrl.u32 %v6116, 7
  %v6118 = vsub.s32 %v6115, %v6117
  %v6119 = vrot.slane %v6105, %v6118
  %v6120 = vcombine.low %v6064, %v6080
  %v6121 = vcombine.high %v6064, %v6080
  %v6123 = vunpack.c.l.s4 1934713408
  %v6124 = vunpack.c.0.s8 %v6123
  %v6125 = vlaneseq
  %v6126 = vshrl.u32 %v6125, 7
  %v6127 = vsub.s32 %v6124, %v6126
  %v6128 = vrot.slane %v6120, %v6127
  %v6130 = vunpack.c.l.s4 1934713408
  %v6131 = vunpack.c.0.s8 %v6130
  %v6132 = vlaneseq
  %v6133 = vshrl.u32 %v6132, 7
  %v6134 = vsub.s32 %v6131, %v6133
  %v6135 = vrot.slane %v6121, %v6134
  %v6136 = vcombine.low %v6071, %v6087
  %v6137 = vcombine.high %v6071, %v6087
  %v6139 = vunpack.c.l.s4 1934713408
  %v6140 = vunpack.c.0.s8 %v6139
  %v6141 = vlaneseq
  %v6142 = vshrl.u32 %v6141, 7
  %v6143 = vsub.s32 %v6140, %v6142
  %v6144 = vrot.slane %v6136, %v6143
  %v6146 = vunpack.c.l.s4 1934713408
  %v6147 = vunpack.c.0.s8 %v6146
  %v6148 = vlaneseq
  %v6149 = vshrl.u32 %v6148, 7
  %v6150 = vsub.s32 %v6147, %v6149
  %v6151 = vrot.slane %v6137, %v6150
  %v6152 = vcombine.low %v6096, %v6128
  %v6153 = vcombine.high %v6096, %v6128
  %v6154 = vcombine.low %v6103, %v6135
  %v6155 = vcombine.high %v6103, %v6135
  %v6156 = vcombine.low %v6112, %v6144
  %v6157 = vcombine.high %v6112, %v6144
  %v6158 = vcombine.low %v6119, %v6151
  %v6159 = vcombine.high %v6119, %v6151
  %v6160 = vcombine.low %v5744, %v5746
  %v6161 = vcombine.high %v5744, %v5746
  %v6163 = vunpack.c.l.s4 1983009808
  %v6164 = vunpack.c.0.s8 %v6163
  %v6165 = vlaneseq
  %v6166 = vshrl.u32 %v6165, 7
  %v6167 = vsub.s32 %v6164, %v6166
  %v6168 = vrot.slane %v6160, %v6167
  %v6170 = vunpack.c.l.s4 1983009808
  %v6171 = vunpack.c.0.s8 %v6170
  %v6172 = vlaneseq
  %v6173 = vshrl.u32 %v6172, 7
  %v6174 = vsub.s32 %v6171, %v6173
  %v6175 = vrot.slane %v6161, %v6174
  %v6176 = vcombine.low %v5745, %v5747
  %v6177 = vcombine.high %v5745, %v5747
  %v6179 = vunpack.c.l.s4 1983009808
  %v6180 = vunpack.c.0.s8 %v6179
  %v6181 = vlaneseq
  %v6182 = vshrl.u32 %v6181, 7
  %v6183 = vsub.s32 %v6180, %v6182
  %v6184 = vrot.slane %v6176, %v6183
  %v6186 = vunpack.c.l.s4 1983009808
  %v6187 = vunpack.c.0.s8 %v6186
  %v6188 = vlaneseq
  %v6189 = vshrl.u32 %v6188, 7
  %v6190 = vsub.s32 %v6187, %v6189
  %v6191 = vrot.slane %v6177, %v6190
  %v6192 = vcombine.low %v5748, %v5750
  %v6193 = vcombine.high %v5748, %v5750
  %v6195 = vunpack.c.l.s4 1983009808
  %v6196 = vunpack.c.0.s8 %v6195
  %v6197 = vlaneseq
  %v6198 = vshrl.u32 %v6197, 7
  %v6199 = vsub.s32 %v6196, %v6198
  %v6200 = vrot.slane %v6192, %v6199
  %v6202 = vunpack.c.l.s4 1983009808
  %v6203 = vunpack.c.0.s8 %v6202
  %v6204 = vlaneseq
  %v6205 = vshrl.u32 %v6204, 7
  %v6206 = vsub.s32 %v6203, %v6205
  %v6207 = vrot.slane %v6193, %v6206
  %v6208 = vcombine.low %v5749, %v5751
  %v6209 = vcombine.high %v5749, %v5751
  %v6211 = vunpack.c.l.s4 1983009808
  %v6212 = vunpack.c.0.s8 %v6211
  %v6213 = vlaneseq
  %v6214 = vshrl.u32 %v6213, 7
  %v6215 = vsub.s32 %v6212, %v6214
  %v6216 = vrot.slane %v6208, %v6215
  %v6218 = vunpack.c.l.s4 1983009808
  %v6219 = vunpack.c.0.s8 %v6218
  %v6220 = vlaneseq
  %v6221 = vshrl.u32 %v6220, 7
  %v6222 = vsub.s32 %v6219, %v6221
  %v6223 = vrot.slane %v6209, %v6222
  %v6224 = vcombine.low %v6168, %v6184
  %v6225 = vcombine.high %v6168, %v6184
  %v6227 = vunpack.c.l.s4 1934713408
  %v6228 = vunpack.c.0.s8 %v6227
  %v6229 = vlaneseq
  %v6230 = vshrl.u32 %v6229, 7
  %v6231 = vsub.s32 %v6228, %v6230
  %v6232 = vrot.slane %v6224, %v6231
  %v6234 = vunpack.c.l.s4 1934713408
  %v6235 = vunpack.c.0.s8 %v6234
  %v6236 = vlaneseq
  %v6237 = vshrl.u32 %v6236, 7
  %v6238 = vsub.s32 %v6235, %v6237
  %v6239 = vrot.slane %v6225, %v6238
  %v6240 = vcombine.low %v6175, %v6191
  %v6241 = vcombine.high %v6175, %v6191
  %v6243 = vunpack.c.l.s4 1934713408
  %v6244 = vunpack.c.0.s8 %v6243
  %v6245 = vlaneseq
  %v6246 = vshrl.u32 %v6245, 7
  %v6247 = vsub.s32 %v6244, %v6246
  %v6248 = vrot.slane %v6240, %v6247
  %v6250 = vunpack.c.l.s4 1934713408
  %v6251 = vunpack.c.0.s8 %v6250
  %v6252 = vlaneseq
  %v6253 = vshrl.u32 %v6252, 7
  %v6254 = vsub.s32 %v6251, %v6253
  %v6255 = vrot.slane %v6241, %v6254
  %v6256 = vcombine.low %v6200, %v6216
  %v6257 = vcombine.high %v6200, %v6216
  %v6259 = vunpack.c.l.s4 1934713408
  %v6260 = vunpack.c.0.s8 %v6259
  %v6261 = vlaneseq
  %v6262 = vshrl.u32 %v6261, 7
  %v6263 = vsub.s32 %v6260, %v6262
  %v6264 = vrot.slane %v6256, %v6263
  %v6266 = vunpack.c.l.s4 1934713408
  %v6267 = vunpack.c.0.s8 %v6266
  %v6268 = vlaneseq
  %v6269 = vshrl.u32 %v6268, 7
  %v6270 = vsub.s32 %v6267, %v6269
  %v6271 = vrot.slane %v6257, %v6270
  %v6272 = vcombine.low %v6207, %v6223
  %v6273 = vcombine.high %v6207, %v6223
  %v6275 = vunpack.c.l.s4 1934713408
  %v6276 = vunpack.c.0.s8 %v6275
  %v6277 = vlaneseq
  %v6278 = vshrl.u32 %v6277, 7
  %v6279 = vsub.s32 %v6276, %v6278
  %v6280 = vrot.slane %v6272, %v6279
  %v6282 = vunpack.c.l.s4 1934713408
  %v6283 = vunpack.c.0.s8 %v6282
  %v6284 = vlaneseq
  %v6285 = vshrl.u32 %v6284, 7
  %v6286 = vsub.s32 %v6283, %v6285
  %v6287 = vrot.slane %v6273, %v6286
  %v6288 = vcombine.low %v6232, %v6264
  %v6289 = vcombine.high %v6232, %v6264
  %v6290 = vcombine.low %v6239, %v6271
  %v6291 = vcombine.high %v6239, %v6271
  %v6292 = vcombine.low %v6248, %v6280
  %v6293 = vcombine.high %v6248, %v6280
  %v6294 = vcombine.low %v6255, %v6287
  %v6295 = vcombine.high %v6255, %v6287
  %v6296 = vcombine.low %v5880, %v5882
  %v6297 = vcombine.high %v5880, %v5882
  %v6299 = vunpack.c.l.s4 1983009808
  %v6300 = vunpack.c.0.s8 %v6299
  %v6301 = vlaneseq
  %v6302 = vshrl.u32 %v6301, 7
  %v6303 = vsub.s32 %v6300, %v6302
  %v6304 = vrot.slane %v6296, %v6303
  %v6306 = vunpack.c.l.s4 1983009808
  %v6307 = vunpack.c.0.s8 %v6306
  %v6308 = vlaneseq
  %v6309 = vshrl.u32 %v6308, 7
  %v6310 = vsub.s32 %v6307, %v6309
  %v6311 = vrot.slane %v6297, %v6310
  %v6312 = vcombine.low %v5881, %v5883
  %v6313 = vcombine.high %v5881, %v5883
  %v6315 = vunpack.c.l.s4 1983009808
  %v6316 = vunpack.c.0.s8 %v6315
  %v6317 = vlaneseq
  %v6318 = vshrl.u32 %v6317, 7
  %v6319 = vsub.s32 %v6316, %v6318
  %v6320 = vrot.slane %v6312, %v6319
  %v6322 = vunpack.c.l.s4 1983009808
  %v6323 = vunpack.c.0.s8 %v6322
  %v6324 = vlaneseq
  %v6325 = vshrl.u32 %v6324, 7
  %v6326 = vsub.s32 %v6323, %v6325
  %v6327 = vrot.slane %v6313, %v6326
  %v6328 = vcombine.low %v5884, %v5886
  %v6329 = vcombine.high %v5884, %v5886
  %v6331 = vunpack.c.l.s4 1983009808
  %v6332 = vunpack.c.0.s8 %v6331
  %v6333 = vlaneseq
  %v6334 = vshrl.u32 %v6333, 7
  %v6335 = vsub.s32 %v6332, %v6334
  %v6336 = vrot.slane %v6328, %v6335
  %v6338 = vunpack.c.l.s4 1983009808
  %v6339 = vunpack.c.0.s8 %v6338
  %v6340 = vlaneseq
  %v6341 = vshrl.u32 %v6340, 7
  %v6342 = vsub.s32 %v6339, %v6341
  %v6343 = vrot.slane %v6329, %v6342
  %v6344 = vcombine.low %v5885, %v5887
  %v6345 = vcombine.high %v5885, %v5887
  %v6347 = vunpack.c.l.s4 1983009808
  %v6348 = vunpack.c.0.s8 %v6347
  %v6349 = vlaneseq
  %v6350 = vshrl.u32 %v6349, 7
  %v6351 = vsub.s32 %v6348, %v6350
  %v6352 = vrot.slane %v6344, %v6351
  %v6354 = vunpack.c.l.s4 1983009808
  %v6355 = vunpack.c.0.s8 %v6354
  %v6356 = vlaneseq
  %v6357 = vshrl.u32 %v6356, 7
  %v6358 = vsub.s32 %v6355, %v6357
  %v6359 = vrot.slane %v6345, %v6358
  %v6360 = vcombine.low %v6304, %v6320
  %v6361 = vcombine.high %v6304, %v6320
  %v6363 = vunpack.c.l.s4 1934713408
  %v6364 = vunpack.c.0.s8 %v6363
  %v6365 = vlaneseq
  %v6366 = vshrl.u32 %v6365, 7
  %v6367 = vsub.s32 %v6364, %v6366
  %v6368 = vrot.slane %v6360, %v6367
  %v6370 = vunpack.c.l.s4 1934713408
  %v6371 = vunpack.c.0.s8 %v6370
  %v6372 = vlaneseq
  %v6373 = vshrl.u32 %v6372, 7
  %v6374 = vsub.s32 %v6371, %v6373
  %v6375 = vrot.slane %v6361, %v6374
  %v6376 = vcombine.low %v6311, %v6327
  %v6377 = vcombine.high %v6311, %v6327
  %v6379 = vunpack.c.l.s4 1934713408
  %v6380 = vunpack.c.0.s8 %v6379
  %v6381 = vlaneseq
  %v6382 = vshrl.u32 %v6381, 7
  %v6383 = vsub.s32 %v6380, %v6382
  %v6384 = vrot.slane %v6376, %v6383
  %v6386 = vunpack.c.l.s4 1934713408
  %v6387 = vunpack.c.0.s8 %v6386
  %v6388 = vlaneseq
  %v6389 = vshrl.u32 %v6388, 7
  %v6390 = vsub.s32 %v6387, %v6389
  %v6391 = vrot.slane %v6377, %v6390
  %v6392 = vcombine.low %v6336, %v6352
  %v6393 = vcombine.high %v6336, %v6352
  %v6395 = vunpack.c.l.s4 1934713408
  %v6396 = vunpack.c.0.s8 %v6395
  %v6397 = vlaneseq
  %v6398 = vshrl.u32 %v6397, 7
  %v6399 = vsub.s32 %v6396, %v6398
  %v6400 = vrot.slane %v6392, %v6399
  %v6402 = vunpack.c.l.s4 1934713408
  %v6403 = vunpack.c.0.s8 %v6402
  %v6404 = vlaneseq
  %v6405 = vshrl.u32 %v6404, 7
  %v6406 = vsub.s32 %v6403, %v6405
  %v6407 = vrot.slane %v6393, %v6406
  %v6408 = vcombine.low %v6343, %v6359
  %v6409 = vcombine.high %v6343, %v6359
  %v6411 = vunpack.c.l.s4 1934713408
  %v6412 = vunpack.c.0.s8 %v6411
  %v6413 = vlaneseq
  %v6414 = vshrl.u32 %v6413, 7
  %v6415 = vsub.s32 %v6412, %v6414
  %v6416 = vrot.slane %v6408, %v6415
  %v6418 = vunpack.c.l.s4 1934713408
  %v6419 = vunpack.c.0.s8 %v6418
  %v6420 = vlaneseq
  %v6421 = vshrl.u32 %v6420, 7
  %v6422 = vsub.s32 %v6419, %v6421
  %v6423 = vrot.slane %v6409, %v6422
  %v6424 = vcombine.low %v6368, %v6400
  %v6425 = vcombine.high %v6368, %v6400
  %v6426 = vcombine.low %v6375, %v6407
  %v6427 = vcombine.high %v6375, %v6407
  %v6428 = vcombine.low %v6384, %v6416
  %v6429 = vcombine.high %v6384, %v6416
  %v6430 = vcombine.low %v6391, %v6423
  %v6431 = vcombine.high %v6391, %v6423
  %v6432 = vpack.c.bf16 %v6016, %v6016
  %v6433 = vpack.c.bf16 %v6017, %v6017
  %v6434 = vpack.c.bf16 %v6018, %v6018
  %v6435 = vpack.c.bf16 %v6019, %v6019
  %v6436 = vpack.c.bf16 %v6020, %v6020
  %v6437 = vpack.c.bf16 %v6021, %v6021
  %v6438 = vpack.c.bf16 %v6022, %v6022
  %v6439 = vpack.c.bf16 %v6023, %v6023
  %v6440 = vpack.c.bf16 %v6152, %v6152
  %v6441 = vpack.c.bf16 %v6153, %v6153
  %v6442 = vpack.c.bf16 %v6154, %v6154
  %v6443 = vpack.c.bf16 %v6155, %v6155
  %v6444 = vpack.c.bf16 %v6156, %v6156
  %v6445 = vpack.c.bf16 %v6157, %v6157
  %v6446 = vpack.c.bf16 %v6158, %v6158
  %v6447 = vpack.c.bf16 %v6159, %v6159
  %v6448 = vpack.c.bf16 %v6288, %v6288
  %v6449 = vpack.c.bf16 %v6289, %v6289
  %v6450 = vpack.c.bf16 %v6290, %v6290
  %v6451 = vpack.c.bf16 %v6291, %v6291
  %v6452 = vpack.c.bf16 %v6292, %v6292
  %v6453 = vpack.c.bf16 %v6293, %v6293
  %v6454 = vpack.c.bf16 %v6294, %v6294
  %v6455 = vpack.c.bf16 %v6295, %v6295
  %v6456 = vpack.c.bf16 %v6424, %v6424
  %v6457 = vpack.c.bf16 %v6425, %v6425
  %v6458 = vpack.c.bf16 %v6426, %v6426
  %v6459 = vpack.c.bf16 %v6427, %v6427
  %v6460 = vpack.c.bf16 %v6428, %v6428
  %v6461 = vpack.c.bf16 %v6429, %v6429
  %v6462 = vpack.c.bf16 %v6430, %v6430
  %v6463 = vpack.c.bf16 %v6431, %v6431
  %vm6464 = vcmask 64512
  %v6466 = vsel %vm6464, %v1356, 0
  %vm6468 = vcmask 1043456
  %v6470 = vsel %vm6468, %v5224, 0
  %6472 = vmatprep.subr.bf16.mxu0 0
  %6473 = vmatpush1.bf16.msra.mxu0 %v6470
  %6474 = vmatprep.subr.bf16.mxu0 0
  %6475 = vmatpush1.bf16.msra.mxu0 0
  %6476 = vmatprep.subr.bf16.mxu0 0
  %6477 = vmatpush1.bf16.msra.mxu0 0
  %6478 = vmatprep.subr.bf16.mxu0 0
  %6479 = vmatpush1.bf16.msra.mxu0 0
  %6480 = vmatprep.subr.bf16.mxu0 0
  %6481 = vmatpush1.bf16.msra.mxu0 0
  %6482 = vmatprep.subr.bf16.mxu0 0
  %6483 = vmatpush1.bf16.msra.mxu0 0
  %6484 = vmatprep.subr.bf16.mxu0 0
  %6485 = vmatpush1.bf16.msra.mxu0 0
  %6486 = vmatprep.subr.bf16.mxu0 0
  %6487 = vmatpush1.bf16.msra.mxu0 0
  %6488 = vmatprep.subr.bf16.mxu0 0
  %6489 = vmatpush1.bf16.msra.mxu0 0
  %6490 = vmatprep.subr.bf16.mxu0 0
  %6491 = vmatpush1.bf16.msra.mxu0 0
  %6492 = vmatprep.subr.bf16.mxu0 0
  %6493 = vmatpush1.bf16.msra.mxu0 0
  %6494 = vmatprep.subr.bf16.mxu0 0
  %6495 = vmatpush1.bf16.msra.mxu0 0
  %6496 = vmatprep.subr.bf16.mxu0 0
  %6497 = vmatpush1.bf16.msra.mxu0 0
  %6498 = vmatprep.subr.bf16.mxu0 0
  %6499 = vmatpush1.bf16.msra.mxu0 0
  %6500 = vmatprep.subr.bf16.mxu0 0
  %6501 = vmatpush1.bf16.msra.mxu0 0
  %6502 = vmatprep.subr.bf16.mxu0 0
  %6503 = vmatpush1.bf16.msra.mxu0 0
  %6504 = vmatprep.mubr.bf16.mxu0 0
  %6505 = vmatmul.mubr.bf16.gmra.mrb[0].mxu0 %v6466
  %v6506 = vpop.f32.mrb[0].mxu0
  %v6507 = vadd.f32 0.0, %v6506
  %v6508 = vpop.f32.mrb[0].mxu0
  %v6509 = vpop.f32.mrb[0].mxu0
  %v6510 = vpop.f32.mrb[0].mxu0
  %6511 = vdwg.mxu0
  %v6513 = vsel %vm6464, %v1357, 0
  %v6516 = vsel %vm6468, %v5225, 0
  %6518 = vmatprep.subr.bf16.mxu0 0
  %6519 = vmatpush1.bf16.msra.mxu0 %v6516
  %6520 = vmatprep.subr.bf16.mxu0 0
  %6521 = vmatpush1.bf16.msra.mxu0 0
  %6522 = vmatprep.subr.bf16.mxu0 0
  %6523 = vmatpush1.bf16.msra.mxu0 0
  %6524 = vmatprep.subr.bf16.mxu0 0
  %6525 = vmatpush1.bf16.msra.mxu0 0
  %6526 = vmatprep.subr.bf16.mxu0 0
  %6527 = vmatpush1.bf16.msra.mxu0 0
  %6528 = vmatprep.subr.bf16.mxu0 0
  %6529 = vmatpush1.bf16.msra.mxu0 0
  %6530 = vmatprep.subr.bf16.mxu0 0
  %6531 = vmatpush1.bf16.msra.mxu0 0
  %6532 = vmatprep.subr.bf16.mxu0 0
  %6533 = vmatpush1.bf16.msra.mxu0 0
  %6534 = vmatprep.subr.bf16.mxu0 0
  %6535 = vmatpush1.bf16.msra.mxu0 0
  %6536 = vmatprep.subr.bf16.mxu0 0
  %6537 = vmatpush1.bf16.msra.mxu0 0
  %6538 = vmatprep.subr.bf16.mxu0 0
  %6539 = vmatpush1.bf16.msra.mxu0 0
  %6540 = vmatprep.subr.bf16.mxu0 0
  %6541 = vmatpush1.bf16.msra.mxu0 0
  %6542 = vmatprep.subr.bf16.mxu0 0
  %6543 = vmatpush1.bf16.msra.mxu0 0
  %6544 = vmatprep.subr.bf16.mxu0 0
  %6545 = vmatpush1.bf16.msra.mxu0 0
  %6546 = vmatprep.subr.bf16.mxu0 0
  %6547 = vmatpush1.bf16.msra.mxu0 0
  %6548 = vmatprep.subr.bf16.mxu0 0
  %6549 = vmatpush1.bf16.msra.mxu0 0
  %6550 = vmatprep.mubr.bf16.mxu0 0
  %6551 = vmatmul.mubr.bf16.gmra.mrb[0].mxu0 %v6513
  %v6552 = vpop.f32.mrb[0].mxu0
  %v6553 = vadd.f32 0.0, %v6552
  %v6554 = vpop.f32.mrb[0].mxu0
  %v6555 = vpop.f32.mrb[0].mxu0
  %v6556 = vpop.f32.mrb[0].mxu0
  %6557 = vdwg.mxu0
  %v6559 = vsel %vm6464, %v1358, 0
  %v6562 = vsel %vm6468, %v5226, 0
  %6564 = vmatprep.subr.bf16.mxu0 0
  %6565 = vmatpush1.bf16.msra.mxu0 %v6562
  %6566 = vmatprep.subr.bf16.mxu0 0
  %6567 = vmatpush1.bf16.msra.mxu0 0
  %6568 = vmatprep.subr.bf16.mxu0 0
  %6569 = vmatpush1.bf16.msra.mxu0 0
  %6570 = vmatprep.subr.bf16.mxu0 0
  %6571 = vmatpush1.bf16.msra.mxu0 0
  %6572 = vmatprep.subr.bf16.mxu0 0
  %6573 = vmatpush1.bf16.msra.mxu0 0
  %6574 = vmatprep.subr.bf16.mxu0 0
  %6575 = vmatpush1.bf16.msra.mxu0 0
  %6576 = vmatprep.subr.bf16.mxu0 0
  %6577 = vmatpush1.bf16.msra.mxu0 0
  %6578 = vmatprep.subr.bf16.mxu0 0
  %6579 = vmatpush1.bf16.msra.mxu0 0
  %6580 = vmatprep.subr.bf16.mxu0 0
  %6581 = vmatpush1.bf16.msra.mxu0 0
  %6582 = vmatprep.subr.bf16.mxu0 0
  %6583 = vmatpush1.bf16.msra.mxu0 0
  %6584 = vmatprep.subr.bf16.mxu0 0
  %6585 = vmatpush1.bf16.msra.mxu0 0
  %6586 = vmatprep.subr.bf16.mxu0 0
  %6587 = vmatpush1.bf16.msra.mxu0 0
  %6588 = vmatprep.subr.bf16.mxu0 0
  %6589 = vmatpush1.bf16.msra.mxu0 0
  %6590 = vmatprep.subr.bf16.mxu0 0
  %6591 = vmatpush1.bf16.msra.mxu0 0
  %6592 = vmatprep.subr.bf16.mxu0 0
  %6593 = vmatpush1.bf16.msra.mxu0 0
  %6594 = vmatprep.subr.bf16.mxu0 0
  %6595 = vmatpush1.bf16.msra.mxu0 0
  %6596 = vmatprep.mubr.bf16.mxu0 0
  %6597 = vmatmul.mubr.bf16.gmra.mrb[0].mxu0 %v6559
  %v6598 = vpop.f32.mrb[0].mxu0
  %v6599 = vadd.f32 0.0, %v6598
  %v6600 = vpop.f32.mrb[0].mxu0
  %v6601 = vpop.f32.mrb[0].mxu0
  %v6602 = vpop.f32.mrb[0].mxu0
  %6603 = vdwg.mxu0
  %v6605 = vsel %vm6464, %v1359, 0
  %v6608 = vsel %vm6468, %v5227, 0
  %6610 = vmatprep.subr.bf16.mxu0 0
  %6611 = vmatpush1.bf16.msra.mxu0 %v6608
  %6612 = vmatprep.subr.bf16.mxu0 0
  %6613 = vmatpush1.bf16.msra.mxu0 0
  %6614 = vmatprep.subr.bf16.mxu0 0
  %6615 = vmatpush1.bf16.msra.mxu0 0
  %6616 = vmatprep.subr.bf16.mxu0 0
  %6617 = vmatpush1.bf16.msra.mxu0 0
  %6618 = vmatprep.subr.bf16.mxu0 0
  %6619 = vmatpush1.bf16.msra.mxu0 0
  %6620 = vmatprep.subr.bf16.mxu0 0
  %6621 = vmatpush1.bf16.msra.mxu0 0
  %6622 = vmatprep.subr.bf16.mxu0 0
  %6623 = vmatpush1.bf16.msra.mxu0 0
  %6624 = vmatprep.subr.bf16.mxu0 0
  %6625 = vmatpush1.bf16.msra.mxu0 0
  %6626 = vmatprep.subr.bf16.mxu0 0
  %6627 = vmatpush1.bf16.msra.mxu0 0
  %6628 = vmatprep.subr.bf16.mxu0 0
  %6629 = vmatpush1.bf16.msra.mxu0 0
  %6630 = vmatprep.subr.bf16.mxu0 0
  %6631 = vmatpush1.bf16.msra.mxu0 0
  %6632 = vmatprep.subr.bf16.mxu0 0
  %6633 = vmatpush1.bf16.msra.mxu0 0
  %6634 = vmatprep.subr.bf16.mxu0 0
  %6635 = vmatpush1.bf16.msra.mxu0 0
  %6636 = vmatprep.subr.bf16.mxu0 0
  %6637 = vmatpush1.bf16.msra.mxu0 0
  %6638 = vmatprep.subr.bf16.mxu0 0
  %6639 = vmatpush1.bf16.msra.mxu0 0
  %6640 = vmatprep.subr.bf16.mxu0 0
  %6641 = vmatpush1.bf16.msra.mxu0 0
  %6642 = vmatprep.mubr.bf16.mxu0 0
  %6643 = vmatmul.mubr.bf16.gmra.mrb[0].mxu0 %v6605
  %v6644 = vpop.f32.mrb[0].mxu0
  %v6645 = vadd.f32 0.0, %v6644
  %v6646 = vpop.f32.mrb[0].mxu0
  %v6647 = vpop.f32.mrb[0].mxu0
  %v6648 = vpop.f32.mrb[0].mxu0
  %6649 = vdwg.mxu0
  %v6651 = vsel %vm6464, %v1360, 0
  %v6654 = vsel %vm6468, %v5228, 0
  %6656 = vmatprep.subr.bf16.mxu0 0
  %6657 = vmatpush1.bf16.msra.mxu0 %v6654
  %6658 = vmatprep.subr.bf16.mxu0 0
  %6659 = vmatpush1.bf16.msra.mxu0 0
  %6660 = vmatprep.subr.bf16.mxu0 0
  %6661 = vmatpush1.bf16.msra.mxu0 0
  %6662 = vmatprep.subr.bf16.mxu0 0
  %6663 = vmatpush1.bf16.msra.mxu0 0
  %6664 = vmatprep.subr.bf16.mxu0 0
  %6665 = vmatpush1.bf16.msra.mxu0 0
  %6666 = vmatprep.subr.bf16.mxu0 0
  %6667 = vmatpush1.bf16.msra.mxu0 0
  %6668 = vmatprep.subr.bf16.mxu0 0
  %6669 = vmatpush1.bf16.msra.mxu0 0
  %6670 = vmatprep.subr.bf16.mxu0 0
  %6671 = vmatpush1.bf16.msra.mxu0 0
  %6672 = vmatprep.subr.bf16.mxu0 0
  %6673 = vmatpush1.bf16.msra.mxu0 0
  %6674 = vmatprep.subr.bf16.mxu0 0
  %6675 = vmatpush1.bf16.msra.mxu0 0
  %6676 = vmatprep.subr.bf16.mxu0 0
  %6677 = vmatpush1.bf16.msra.mxu0 0
  %6678 = vmatprep.subr.bf16.mxu0 0
  %6679 = vmatpush1.bf16.msra.mxu0 0
  %6680 = vmatprep.subr.bf16.mxu0 0
  %6681 = vmatpush1.bf16.msra.mxu0 0
  %6682 = vmatprep.subr.bf16.mxu0 0
  %6683 = vmatpush1.bf16.msra.mxu0 0
  %6684 = vmatprep.subr.bf16.mxu0 0
  %6685 = vmatpush1.bf16.msra.mxu0 0
  %6686 = vmatprep.subr.bf16.mxu0 0
  %6687 = vmatpush1.bf16.msra.mxu0 0
  %6688 = vmatprep.mubr.bf16.mxu0 0
  %6689 = vmatmul.mubr.bf16.gmra.mrb[0].mxu0 %v6651
  %v6690 = vpop.f32.mrb[0].mxu0
  %v6691 = vadd.f32 0.0, %v6690
  %v6692 = vpop.f32.mrb[0].mxu0
  %v6693 = vpop.f32.mrb[0].mxu0
  %v6694 = vpop.f32.mrb[0].mxu0
  %6695 = vdwg.mxu0
  %v6697 = vsel %vm6464, %v1361, 0
  %v6700 = vsel %vm6468, %v5229, 0
  %6702 = vmatprep.subr.bf16.mxu0 0
  %6703 = vmatpush1.bf16.msra.mxu0 %v6700
  %6704 = vmatprep.subr.bf16.mxu0 0
  %6705 = vmatpush1.bf16.msra.mxu0 0
  %6706 = vmatprep.subr.bf16.mxu0 0
  %6707 = vmatpush1.bf16.msra.mxu0 0
  %6708 = vmatprep.subr.bf16.mxu0 0
  %6709 = vmatpush1.bf16.msra.mxu0 0
  %6710 = vmatprep.subr.bf16.mxu0 0
  %6711 = vmatpush1.bf16.msra.mxu0 0
  %6712 = vmatprep.subr.bf16.mxu0 0
  %6713 = vmatpush1.bf16.msra.mxu0 0
  %6714 = vmatprep.subr.bf16.mxu0 0
  %6715 = vmatpush1.bf16.msra.mxu0 0
  %6716 = vmatprep.subr.bf16.mxu0 0
  %6717 = vmatpush1.bf16.msra.mxu0 0
  %6718 = vmatprep.subr.bf16.mxu0 0
  %6719 = vmatpush1.bf16.msra.mxu0 0
  %6720 = vmatprep.subr.bf16.mxu0 0
  %6721 = vmatpush1.bf16.msra.mxu0 0
  %6722 = vmatprep.subr.bf16.mxu0 0
  %6723 = vmatpush1.bf16.msra.mxu0 0
  %6724 = vmatprep.subr.bf16.mxu0 0
  %6725 = vmatpush1.bf16.msra.mxu0 0
  %6726 = vmatprep.subr.bf16.mxu0 0
  %6727 = vmatpush1.bf16.msra.mxu0 0
  %6728 = vmatprep.subr.bf16.mxu0 0
  %6729 = vmatpush1.bf16.msra.mxu0 0
  %6730 = vmatprep.subr.bf16.mxu0 0
  %6731 = vmatpush1.bf16.msra.mxu0 0
  %6732 = vmatprep.subr.bf16.mxu0 0
  %6733 = vmatpush1.bf16.msra.mxu0 0
  %6734 = vmatprep.mubr.bf16.mxu0 0
  %6735 = vmatmul.mubr.bf16.gmra.mrb[0].mxu0 %v6697
  %v6736 = vpop.f32.mrb[0].mxu0
  %v6737 = vadd.f32 0.0, %v6736
  %v6738 = vpop.f32.mrb[0].mxu0
  %v6739 = vpop.f32.mrb[0].mxu0
  %v6740 = vpop.f32.mrb[0].mxu0
  %6741 = vdwg.mxu0
  %v6743 = vsel %vm6464, %v1362, 0
  %v6746 = vsel %vm6468, %v5230, 0
  %6748 = vmatprep.subr.bf16.mxu0 0
  %6749 = vmatpush1.bf16.msra.mxu0 %v6746
  %6750 = vmatprep.subr.bf16.mxu0 0
  %6751 = vmatpush1.bf16.msra.mxu0 0
  %6752 = vmatprep.subr.bf16.mxu0 0
  %6753 = vmatpush1.bf16.msra.mxu0 0
  %6754 = vmatprep.subr.bf16.mxu0 0
  %6755 = vmatpush1.bf16.msra.mxu0 0
  %6756 = vmatprep.subr.bf16.mxu0 0
  %6757 = vmatpush1.bf16.msra.mxu0 0
  %6758 = vmatprep.subr.bf16.mxu0 0
  %6759 = vmatpush1.bf16.msra.mxu0 0
  %6760 = vmatprep.subr.bf16.mxu0 0
  %6761 = vmatpush1.bf16.msra.mxu0 0
  %6762 = vmatprep.subr.bf16.mxu0 0
  %6763 = vmatpush1.bf16.msra.mxu0 0
  %6764 = vmatprep.subr.bf16.mxu0 0
  %6765 = vmatpush1.bf16.msra.mxu0 0
  %6766 = vmatprep.subr.bf16.mxu0 0
  %6767 = vmatpush1.bf16.msra.mxu0 0
  %6768 = vmatprep.subr.bf16.mxu0 0
  %6769 = vmatpush1.bf16.msra.mxu0 0
  %6770 = vmatprep.subr.bf16.mxu0 0
  %6771 = vmatpush1.bf16.msra.mxu0 0
  %6772 = vmatprep.subr.bf16.mxu0 0
  %6773 = vmatpush1.bf16.msra.mxu0 0
  %6774 = vmatprep.subr.bf16.mxu0 0
  %6775 = vmatpush1.bf16.msra.mxu0 0
  %6776 = vmatprep.subr.bf16.mxu0 0
  %6777 = vmatpush1.bf16.msra.mxu0 0
  %6778 = vmatprep.subr.bf16.mxu0 0
  %6779 = vmatpush1.bf16.msra.mxu0 0
  %6780 = vmatprep.mubr.bf16.mxu0 0
  %6781 = vmatmul.mubr.bf16.gmra.mrb[0].mxu0 %v6743
  %v6782 = vpop.f32.mrb[0].mxu0
  %v6783 = vadd.f32 0.0, %v6782
  %v6784 = vpop.f32.mrb[0].mxu0
  %v6785 = vpop.f32.mrb[0].mxu0
  %v6786 = vpop.f32.mrb[0].mxu0
  %6787 = vdwg.mxu0
  %v6789 = vsel %vm6464, %v1363, 0
  %v6792 = vsel %vm6468, %v5231, 0
  %6794 = vmatprep.subr.bf16.mxu0 0
  %6795 = vmatpush1.bf16.msra.mxu0 %v6792
  %6796 = vmatprep.subr.bf16.mxu0 0
  %6797 = vmatpush1.bf16.msra.mxu0 0
  %6798 = vmatprep.subr.bf16.mxu0 0
  %6799 = vmatpush1.bf16.msra.mxu0 0
  %6800 = vmatprep.subr.bf16.mxu0 0
  %6801 = vmatpush1.bf16.msra.mxu0 0
  %6802 = vmatprep.subr.bf16.mxu0 0
  %6803 = vmatpush1.bf16.msra.mxu0 0
  %6804 = vmatprep.subr.bf16.mxu0 0
  %6805 = vmatpush1.bf16.msra.mxu0 0
  %6806 = vmatprep.subr.bf16.mxu0 0
  %6807 = vmatpush1.bf16.msra.mxu0 0
  %6808 = vmatprep.subr.bf16.mxu0 0
  %6809 = vmatpush1.bf16.msra.mxu0 0
  %6810 = vmatprep.subr.bf16.mxu0 0
  %6811 = vmatpush1.bf16.msra.mxu0 0
  %6812 = vmatprep.subr.bf16.mxu0 0
  %6813 = vmatpush1.bf16.msra.mxu0 0
  %6814 = vmatprep.subr.bf16.mxu0 0
  %6815 = vmatpush1.bf16.msra.mxu0 0
  %6816 = vmatprep.subr.bf16.mxu0 0
  %6817 = vmatpush1.bf16.msra.mxu0 0
  %6818 = vmatprep.subr.bf16.mxu0 0
  %6819 = vmatpush1.bf16.msra.mxu0 0
  %6820 = vmatprep.subr.bf16.mxu0 0
  %6821 = vmatpush1.bf16.msra.mxu0 0
  %6822 = vmatprep.subr.bf16.mxu0 0
  %6823 = vmatpush1.bf16.msra.mxu0 0
  %6824 = vmatprep.subr.bf16.mxu0 0
  %6825 = vmatpush1.bf16.msra.mxu0 0
  %6826 = vmatprep.mubr.bf16.mxu0 0
  %6827 = vmatmul.mubr.bf16.gmra.mrb[0].mxu0 %v6789
  %v6828 = vpop.f32.mrb[0].mxu0
  %v6829 = vadd.f32 0.0, %v6828
  %v6830 = vpop.f32.mrb[0].mxu0
  %v6831 = vpop.f32.mrb[0].mxu0
  %v6832 = vpop.f32.mrb[0].mxu0
  %6833 = vdwg.mxu0
  %v6835 = vsel %vm6464, %v1364, 0
  %v6838 = vsel %vm6468, %v5232, 0
  %6840 = vmatprep.subr.bf16.mxu0 0
  %6841 = vmatpush1.bf16.msra.mxu0 %v6838
  %6842 = vmatprep.subr.bf16.mxu0 0
  %6843 = vmatpush1.bf16.msra.mxu0 0
  %6844 = vmatprep.subr.bf16.mxu0 0
  %6845 = vmatpush1.bf16.msra.mxu0 0
  %6846 = vmatprep.subr.bf16.mxu0 0
  %6847 = vmatpush1.bf16.msra.mxu0 0
  %6848 = vmatprep.subr.bf16.mxu0 0
  %6849 = vmatpush1.bf16.msra.mxu0 0
  %6850 = vmatprep.subr.bf16.mxu0 0
  %6851 = vmatpush1.bf16.msra.mxu0 0
  %6852 = vmatprep.subr.bf16.mxu0 0
  %6853 = vmatpush1.bf16.msra.mxu0 0
  %6854 = vmatprep.subr.bf16.mxu0 0
  %6855 = vmatpush1.bf16.msra.mxu0 0
  %6856 = vmatprep.subr.bf16.mxu0 0
  %6857 = vmatpush1.bf16.msra.mxu0 0
  %6858 = vmatprep.subr.bf16.mxu0 0
  %6859 = vmatpush1.bf16.msra.mxu0 0
  %6860 = vmatprep.subr.bf16.mxu0 0
  %6861 = vmatpush1.bf16.msra.mxu0 0
  %6862 = vmatprep.subr.bf16.mxu0 0
  %6863 = vmatpush1.bf16.msra.mxu0 0
  %6864 = vmatprep.subr.bf16.mxu0 0
  %6865 = vmatpush1.bf16.msra.mxu0 0
  %6866 = vmatprep.subr.bf16.mxu0 0
  %6867 = vmatpush1.bf16.msra.mxu0 0
  %6868 = vmatprep.subr.bf16.mxu0 0
  %6869 = vmatpush1.bf16.msra.mxu0 0
  %6870 = vmatprep.subr.bf16.mxu0 0
  %6871 = vmatpush1.bf16.msra.mxu0 0
  %6872 = vmatprep.mubr.bf16.mxu0 0
  %6873 = vmatmul.mubr.bf16.gmra.mrb[0].mxu0 %v6835
  %v6874 = vpop.f32.mrb[0].mxu0
  %v6875 = vadd.f32 0.0, %v6874
  %v6876 = vpop.f32.mrb[0].mxu0
  %v6877 = vpop.f32.mrb[0].mxu0
  %v6878 = vpop.f32.mrb[0].mxu0
  %6879 = vdwg.mxu0
  %v6881 = vsel %vm6464, %v1365, 0
  %v6884 = vsel %vm6468, %v5233, 0
  %6886 = vmatprep.subr.bf16.mxu0 0
  %6887 = vmatpush1.bf16.msra.mxu0 %v6884
  %6888 = vmatprep.subr.bf16.mxu0 0
  %6889 = vmatpush1.bf16.msra.mxu0 0
  %6890 = vmatprep.subr.bf16.mxu0 0
  %6891 = vmatpush1.bf16.msra.mxu0 0
  %6892 = vmatprep.subr.bf16.mxu0 0
  %6893 = vmatpush1.bf16.msra.mxu0 0
  %6894 = vmatprep.subr.bf16.mxu0 0
  %6895 = vmatpush1.bf16.msra.mxu0 0
  %6896 = vmatprep.subr.bf16.mxu0 0
  %6897 = vmatpush1.bf16.msra.mxu0 0
  %6898 = vmatprep.subr.bf16.mxu0 0
  %6899 = vmatpush1.bf16.msra.mxu0 0
  %6900 = vmatprep.subr.bf16.mxu0 0
  %6901 = vmatpush1.bf16.msra.mxu0 0
  %6902 = vmatprep.subr.bf16.mxu0 0
  %6903 = vmatpush1.bf16.msra.mxu0 0
  %6904 = vmatprep.subr.bf16.mxu0 0
  %6905 = vmatpush1.bf16.msra.mxu0 0
  %6906 = vmatprep.subr.bf16.mxu0 0
  %6907 = vmatpush1.bf16.msra.mxu0 0
  %6908 = vmatprep.subr.bf16.mxu0 0
  %6909 = vmatpush1.bf16.msra.mxu0 0
  %6910 = vmatprep.subr.bf16.mxu0 0
  %6911 = vmatpush1.bf16.msra.mxu0 0
  %6912 = vmatprep.subr.bf16.mxu0 0
  %6913 = vmatpush1.bf16.msra.mxu0 0
  %6914 = vmatprep.subr.bf16.mxu0 0
  %6915 = vmatpush1.bf16.msra.mxu0 0
  %6916 = vmatprep.subr.bf16.mxu0 0
  %6917 = vmatpush1.bf16.msra.mxu0 0
  %6918 = vmatprep.mubr.bf16.mxu0 0
  %6919 = vmatmul.mubr.bf16.gmra.mrb[0].mxu0 %v6881
  %v6920 = vpop.f32.mrb[0].mxu0
  %v6921 = vadd.f32 0.0, %v6920
  %v6922 = vpop.f32.mrb[0].mxu0
  %v6923 = vpop.f32.mrb[0].mxu0
  %v6924 = vpop.f32.mrb[0].mxu0
  %6925 = vdwg.mxu0
  %v6927 = vsel %vm6464, %v1366, 0
  %v6930 = vsel %vm6468, %v5234, 0
  %6932 = vmatprep.subr.bf16.mxu0 0
  %6933 = vmatpush1.bf16.msra.mxu0 %v6930
  %6934 = vmatprep.subr.bf16.mxu0 0
  %6935 = vmatpush1.bf16.msra.mxu0 0
  %6936 = vmatprep.subr.bf16.mxu0 0
  %6937 = vmatpush1.bf16.msra.mxu0 0
  %6938 = vmatprep.subr.bf16.mxu0 0
  %6939 = vmatpush1.bf16.msra.mxu0 0
  %6940 = vmatprep.subr.bf16.mxu0 0
  %6941 = vmatpush1.bf16.msra.mxu0 0
  %6942 = vmatprep.subr.bf16.mxu0 0
  %6943 = vmatpush1.bf16.msra.mxu0 0
  %6944 = vmatprep.subr.bf16.mxu0 0
  %6945 = vmatpush1.bf16.msra.mxu0 0
  %6946 = vmatprep.subr.bf16.mxu0 0
  %6947 = vmatpush1.bf16.msra.mxu0 0
  %6948 = vmatprep.subr.bf16.mxu0 0
  %6949 = vmatpush1.bf16.msra.mxu0 0
  %6950 = vmatprep.subr.bf16.mxu0 0
  %6951 = vmatpush1.bf16.msra.mxu0 0
  %6952 = vmatprep.subr.bf16.mxu0 0
  %6953 = vmatpush1.bf16.msra.mxu0 0
  %6954 = vmatprep.subr.bf16.mxu0 0
  %6955 = vmatpush1.bf16.msra.mxu0 0
  %6956 = vmatprep.subr.bf16.mxu0 0
  %6957 = vmatpush1.bf16.msra.mxu0 0
  %6958 = vmatprep.subr.bf16.mxu0 0
  %6959 = vmatpush1.bf16.msra.mxu0 0
  %6960 = vmatprep.subr.bf16.mxu0 0
  %6961 = vmatpush1.bf16.msra.mxu0 0
  %6962 = vmatprep.subr.bf16.mxu0 0
  %6963 = vmatpush1.bf16.msra.mxu0 0
  %6964 = vmatprep.mubr.bf16.mxu0 0
  %6965 = vmatmul.mubr.bf16.gmra.mrb[0].mxu0 %v6927
  %v6966 = vpop.f32.mrb[0].mxu0
  %v6967 = vadd.f32 0.0, %v6966
  %v6968 = vpop.f32.mrb[0].mxu0
  %v6969 = vpop.f32.mrb[0].mxu0
  %v6970 = vpop.f32.mrb[0].mxu0
  %6971 = vdwg.mxu0
  %v6973 = vsel %vm6464, %v1367, 0
  %v6976 = vsel %vm6468, %v5235, 0
  %6978 = vmatprep.subr.bf16.mxu0 0
  %6979 = vmatpush1.bf16.msra.mxu0 %v6976
  %6980 = vmatprep.subr.bf16.mxu0 0
  %6981 = vmatpush1.bf16.msra.mxu0 0
  %6982 = vmatprep.subr.bf16.mxu0 0
  %6983 = vmatpush1.bf16.msra.mxu0 0
  %6984 = vmatprep.subr.bf16.mxu0 0
  %6985 = vmatpush1.bf16.msra.mxu0 0
  %6986 = vmatprep.subr.bf16.mxu0 0
  %6987 = vmatpush1.bf16.msra.mxu0 0
  %6988 = vmatprep.subr.bf16.mxu0 0
  %6989 = vmatpush1.bf16.msra.mxu0 0
  %6990 = vmatprep.subr.bf16.mxu0 0
  %6991 = vmatpush1.bf16.msra.mxu0 0
  %6992 = vmatprep.subr.bf16.mxu0 0
  %6993 = vmatpush1.bf16.msra.mxu0 0
  %6994 = vmatprep.subr.bf16.mxu0 0
  %6995 = vmatpush1.bf16.msra.mxu0 0
  %6996 = vmatprep.subr.bf16.mxu0 0
  %6997 = vmatpush1.bf16.msra.mxu0 0
  %6998 = vmatprep.subr.bf16.mxu0 0
  %6999 = vmatpush1.bf16.msra.mxu0 0
  %7000 = vmatprep.subr.bf16.mxu0 0
  %7001 = vmatpush1.bf16.msra.mxu0 0
  %7002 = vmatprep.subr.bf16.mxu0 0
  %7003 = vmatpush1.bf16.msra.mxu0 0
  %7004 = vmatprep.subr.bf16.mxu0 0
  %7005 = vmatpush1.bf16.msra.mxu0 0
  %7006 = vmatprep.subr.bf16.mxu0 0
  %7007 = vmatpush1.bf16.msra.mxu0 0
  %7008 = vmatprep.subr.bf16.mxu0 0
  %7009 = vmatpush1.bf16.msra.mxu0 0
  %7010 = vmatprep.mubr.bf16.mxu0 0
  %7011 = vmatmul.mubr.bf16.gmra.mrb[0].mxu0 %v6973
  %v7012 = vpop.f32.mrb[0].mxu0
  %v7013 = vadd.f32 0.0, %v7012
  %v7014 = vpop.f32.mrb[0].mxu0
  %v7015 = vpop.f32.mrb[0].mxu0
  %v7016 = vpop.f32.mrb[0].mxu0
  %7017 = vdwg.mxu0
  %v7019 = vsel %vm6464, %v1368, 0
  %v7022 = vsel %vm6468, %v5236, 0
  %7024 = vmatprep.subr.bf16.mxu0 0
  %7025 = vmatpush1.bf16.msra.mxu0 %v7022
  %7026 = vmatprep.subr.bf16.mxu0 0
  %7027 = vmatpush1.bf16.msra.mxu0 0
  %7028 = vmatprep.subr.bf16.mxu0 0
  %7029 = vmatpush1.bf16.msra.mxu0 0
  %7030 = vmatprep.subr.bf16.mxu0 0
  %7031 = vmatpush1.bf16.msra.mxu0 0
  %7032 = vmatprep.subr.bf16.mxu0 0
  %7033 = vmatpush1.bf16.msra.mxu0 0
  %7034 = vmatprep.subr.bf16.mxu0 0
  %7035 = vmatpush1.bf16.msra.mxu0 0
  %7036 = vmatprep.subr.bf16.mxu0 0
  %7037 = vmatpush1.bf16.msra.mxu0 0
  %7038 = vmatprep.subr.bf16.mxu0 0
  %7039 = vmatpush1.bf16.msra.mxu0 0
  %7040 = vmatprep.subr.bf16.mxu0 0
  %7041 = vmatpush1.bf16.msra.mxu0 0
  %7042 = vmatprep.subr.bf16.mxu0 0
  %7043 = vmatpush1.bf16.msra.mxu0 0
  %7044 = vmatprep.subr.bf16.mxu0 0
  %7045 = vmatpush1.bf16.msra.mxu0 0
  %7046 = vmatprep.subr.bf16.mxu0 0
  %7047 = vmatpush1.bf16.msra.mxu0 0
  %7048 = vmatprep.subr.bf16.mxu0 0
  %7049 = vmatpush1.bf16.msra.mxu0 0
  %7050 = vmatprep.subr.bf16.mxu0 0
  %7051 = vmatpush1.bf16.msra.mxu0 0
  %7052 = vmatprep.subr.bf16.mxu0 0
  %7053 = vmatpush1.bf16.msra.mxu0 0
  %7054 = vmatprep.subr.bf16.mxu0 0
  %7055 = vmatpush1.bf16.msra.mxu0 0
  %7056 = vmatprep.mubr.bf16.mxu0 0
  %7057 = vmatmul.mubr.bf16.gmra.mrb[0].mxu0 %v7019
  %v7058 = vpop.f32.mrb[0].mxu0
  %v7059 = vadd.f32 0.0, %v7058
  %v7060 = vpop.f32.mrb[0].mxu0
  %v7061 = vpop.f32.mrb[0].mxu0
  %v7062 = vpop.f32.mrb[0].mxu0
  %7063 = vdwg.mxu0
  %v7065 = vsel %vm6464, %v1369, 0
  %v7068 = vsel %vm6468, %v5237, 0
  %7070 = vmatprep.subr.bf16.mxu0 0
  %7071 = vmatpush1.bf16.msra.mxu0 %v7068
  %7072 = vmatprep.subr.bf16.mxu0 0
  %7073 = vmatpush1.bf16.msra.mxu0 0
  %7074 = vmatprep.subr.bf16.mxu0 0
  %7075 = vmatpush1.bf16.msra.mxu0 0
  %7076 = vmatprep.subr.bf16.mxu0 0
  %7077 = vmatpush1.bf16.msra.mxu0 0
  %7078 = vmatprep.subr.bf16.mxu0 0
  %7079 = vmatpush1.bf16.msra.mxu0 0
  %7080 = vmatprep.subr.bf16.mxu0 0
  %7081 = vmatpush1.bf16.msra.mxu0 0
  %7082 = vmatprep.subr.bf16.mxu0 0
  %7083 = vmatpush1.bf16.msra.mxu0 0
  %7084 = vmatprep.subr.bf16.mxu0 0
  %7085 = vmatpush1.bf16.msra.mxu0 0
  %7086 = vmatprep.subr.bf16.mxu0 0
  %7087 = vmatpush1.bf16.msra.mxu0 0
  %7088 = vmatprep.subr.bf16.mxu0 0
  %7089 = vmatpush1.bf16.msra.mxu0 0
  %7090 = vmatprep.subr.bf16.mxu0 0
  %7091 = vmatpush1.bf16.msra.mxu0 0
  %7092 = vmatprep.subr.bf16.mxu0 0
  %7093 = vmatpush1.bf16.msra.mxu0 0
  %7094 = vmatprep.subr.bf16.mxu0 0
  %7095 = vmatpush1.bf16.msra.mxu0 0
  %7096 = vmatprep.subr.bf16.mxu0 0
  %7097 = vmatpush1.bf16.msra.mxu0 0
  %7098 = vmatprep.subr.bf16.mxu0 0
  %7099 = vmatpush1.bf16.msra.mxu0 0
  %7100 = vmatprep.subr.bf16.mxu0 0
  %7101 = vmatpush1.bf16.msra.mxu0 0
  %7102 = vmatprep.mubr.bf16.mxu0 0
  %7103 = vmatmul.mubr.bf16.gmra.mrb[0].mxu0 %v7065
  %v7104 = vpop.f32.mrb[0].mxu0
  %v7105 = vadd.f32 0.0, %v7104
  %v7106 = vpop.f32.mrb[0].mxu0
  %v7107 = vpop.f32.mrb[0].mxu0
  %v7108 = vpop.f32.mrb[0].mxu0
  %7109 = vdwg.mxu0
  %v7111 = vsel %vm6464, %v1370, 0
  %v7114 = vsel %vm6468, %v5238, 0
  %7116 = vmatprep.subr.bf16.mxu0 0
  %7117 = vmatpush1.bf16.msra.mxu0 %v7114
  %7118 = vmatprep.subr.bf16.mxu0 0
  %7119 = vmatpush1.bf16.msra.mxu0 0
  %7120 = vmatprep.subr.bf16.mxu0 0
  %7121 = vmatpush1.bf16.msra.mxu0 0
  %7122 = vmatprep.subr.bf16.mxu0 0
  %7123 = vmatpush1.bf16.msra.mxu0 0
  %7124 = vmatprep.subr.bf16.mxu0 0
  %7125 = vmatpush1.bf16.msra.mxu0 0
  %7126 = vmatprep.subr.bf16.mxu0 0
  %7127 = vmatpush1.bf16.msra.mxu0 0
  %7128 = vmatprep.subr.bf16.mxu0 0
  %7129 = vmatpush1.bf16.msra.mxu0 0
  %7130 = vmatprep.subr.bf16.mxu0 0
  %7131 = vmatpush1.bf16.msra.mxu0 0
  %7132 = vmatprep.subr.bf16.mxu0 0
  %7133 = vmatpush1.bf16.msra.mxu0 0
  %7134 = vmatprep.subr.bf16.mxu0 0
  %7135 = vmatpush1.bf16.msra.mxu0 0
  %7136 = vmatprep.subr.bf16.mxu0 0
  %7137 = vmatpush1.bf16.msra.mxu0 0
  %7138 = vmatprep.subr.bf16.mxu0 0
  %7139 = vmatpush1.bf16.msra.mxu0 0
  %7140 = vmatprep.subr.bf16.mxu0 0
  %7141 = vmatpush1.bf16.msra.mxu0 0
  %7142 = vmatprep.subr.bf16.mxu0 0
  %7143 = vmatpush1.bf16.msra.mxu0 0
  %7144 = vmatprep.subr.bf16.mxu0 0
  %7145 = vmatpush1.bf16.msra.mxu0 0
  %7146 = vmatprep.subr.bf16.mxu0 0
  %7147 = vmatpush1.bf16.msra.mxu0 0
  %7148 = vmatprep.mubr.bf16.mxu0 0
  %7149 = vmatmul.mubr.bf16.gmra.mrb[0].mxu0 %v7111
  %v7150 = vpop.f32.mrb[0].mxu0
  %v7151 = vadd.f32 0.0, %v7150
  %v7152 = vpop.f32.mrb[0].mxu0
  %v7153 = vpop.f32.mrb[0].mxu0
  %v7154 = vpop.f32.mrb[0].mxu0
  %7155 = vdwg.mxu0
  %v7157 = vsel %vm6464, %v1371, 0
  %v7160 = vsel %vm6468, %v5239, 0
  %7162 = vmatprep.subr.bf16.mxu0 0
  %7163 = vmatpush1.bf16.msra.mxu0 %v7160
  %7164 = vmatprep.subr.bf16.mxu0 0
  %7165 = vmatpush1.bf16.msra.mxu0 0
  %7166 = vmatprep.subr.bf16.mxu0 0
  %7167 = vmatpush1.bf16.msra.mxu0 0
  %7168 = vmatprep.subr.bf16.mxu0 0
  %7169 = vmatpush1.bf16.msra.mxu0 0
  %7170 = vmatprep.subr.bf16.mxu0 0
  %7171 = vmatpush1.bf16.msra.mxu0 0
  %7172 = vmatprep.subr.bf16.mxu0 0
  %7173 = vmatpush1.bf16.msra.mxu0 0
  %7174 = vmatprep.subr.bf16.mxu0 0
  %7175 = vmatpush1.bf16.msra.mxu0 0
  %7176 = vmatprep.subr.bf16.mxu0 0
  %7177 = vmatpush1.bf16.msra.mxu0 0
  %7178 = vmatprep.subr.bf16.mxu0 0
  %7179 = vmatpush1.bf16.msra.mxu0 0
  %7180 = vmatprep.subr.bf16.mxu0 0
  %7181 = vmatpush1.bf16.msra.mxu0 0
  %7182 = vmatprep.subr.bf16.mxu0 0
  %7183 = vmatpush1.bf16.msra.mxu0 0
  %7184 = vmatprep.subr.bf16.mxu0 0
  %7185 = vmatpush1.bf16.msra.mxu0 0
  %7186 = vmatprep.subr.bf16.mxu0 0
  %7187 = vmatpush1.bf16.msra.mxu0 0
  %7188 = vmatprep.subr.bf16.mxu0 0
  %7189 = vmatpush1.bf16.msra.mxu0 0
  %7190 = vmatprep.subr.bf16.mxu0 0
  %7191 = vmatpush1.bf16.msra.mxu0 0
  %7192 = vmatprep.subr.bf16.mxu0 0
  %7193 = vmatpush1.bf16.msra.mxu0 0
  %7194 = vmatprep.mubr.bf16.mxu0 0
  %7195 = vmatmul.mubr.bf16.gmra.mrb[0].mxu0 %v7157
  %v7196 = vpop.f32.mrb[0].mxu0
  %v7197 = vadd.f32 0.0, %v7196
  %v7198 = vpop.f32.mrb[0].mxu0
  %v7199 = vpop.f32.mrb[0].mxu0
  %v7200 = vpop.f32.mrb[0].mxu0
  %7201 = vdwg.mxu0
  %v7203 = vsel %vm6464, %v1372, 0
  %v7206 = vsel %vm6468, %v5240, 0
  %7208 = vmatprep.subr.bf16.mxu0 0
  %7209 = vmatpush1.bf16.msra.mxu0 %v7206
  %7210 = vmatprep.subr.bf16.mxu0 0
  %7211 = vmatpush1.bf16.msra.mxu0 0
  %7212 = vmatprep.subr.bf16.mxu0 0
  %7213 = vmatpush1.bf16.msra.mxu0 0
  %7214 = vmatprep.subr.bf16.mxu0 0
  %7215 = vmatpush1.bf16.msra.mxu0 0
  %7216 = vmatprep.subr.bf16.mxu0 0
  %7217 = vmatpush1.bf16.msra.mxu0 0
  %7218 = vmatprep.subr.bf16.mxu0 0
  %7219 = vmatpush1.bf16.msra.mxu0 0
  %7220 = vmatprep.subr.bf16.mxu0 0
  %7221 = vmatpush1.bf16.msra.mxu0 0
  %7222 = vmatprep.subr.bf16.mxu0 0
  %7223 = vmatpush1.bf16.msra.mxu0 0
  %7224 = vmatprep.subr.bf16.mxu0 0
  %7225 = vmatpush1.bf16.msra.mxu0 0
  %7226 = vmatprep.subr.bf16.mxu0 0
  %7227 = vmatpush1.bf16.msra.mxu0 0
  %7228 = vmatprep.subr.bf16.mxu0 0
  %7229 = vmatpush1.bf16.msra.mxu0 0
  %7230 = vmatprep.subr.bf16.mxu0 0
  %7231 = vmatpush1.bf16.msra.mxu0 0
  %7232 = vmatprep.subr.bf16.mxu0 0
  %7233 = vmatpush1.bf16.msra.mxu0 0
  %7234 = vmatprep.subr.bf16.mxu0 0
  %7235 = vmatpush1.bf16.msra.mxu0 0
  %7236 = vmatprep.subr.bf16.mxu0 0
  %7237 = vmatpush1.bf16.msra.mxu0 0
  %7238 = vmatprep.subr.bf16.mxu0 0
  %7239 = vmatpush1.bf16.msra.mxu0 0
  %7240 = vmatprep.mubr.bf16.mxu0 0
  %7241 = vmatmul.mubr.bf16.gmra.mrb[0].mxu0 %v7203
  %v7242 = vpop.f32.mrb[0].mxu0
  %v7243 = vadd.f32 0.0, %v7242
  %v7244 = vpop.f32.mrb[0].mxu0
  %v7245 = vpop.f32.mrb[0].mxu0
  %v7246 = vpop.f32.mrb[0].mxu0
  %7247 = vdwg.mxu0
  %v7249 = vsel %vm6464, %v1373, 0
  %v7252 = vsel %vm6468, %v5241, 0
  %7254 = vmatprep.subr.bf16.mxu0 0
  %7255 = vmatpush1.bf16.msra.mxu0 %v7252
  %7256 = vmatprep.subr.bf16.mxu0 0
  %7257 = vmatpush1.bf16.msra.mxu0 0
  %7258 = vmatprep.subr.bf16.mxu0 0
  %7259 = vmatpush1.bf16.msra.mxu0 0
  %7260 = vmatprep.subr.bf16.mxu0 0
  %7261 = vmatpush1.bf16.msra.mxu0 0
  %7262 = vmatprep.subr.bf16.mxu0 0
  %7263 = vmatpush1.bf16.msra.mxu0 0
  %7264 = vmatprep.subr.bf16.mxu0 0
  %7265 = vmatpush1.bf16.msra.mxu0 0
  %7266 = vmatprep.subr.bf16.mxu0 0
  %7267 = vmatpush1.bf16.msra.mxu0 0
  %7268 = vmatprep.subr.bf16.mxu0 0
  %7269 = vmatpush1.bf16.msra.mxu0 0
  %7270 = vmatprep.subr.bf16.mxu0 0
  %7271 = vmatpush1.bf16.msra.mxu0 0
  %7272 = vmatprep.subr.bf16.mxu0 0
  %7273 = vmatpush1.bf16.msra.mxu0 0
  %7274 = vmatprep.subr.bf16.mxu0 0
  %7275 = vmatpush1.bf16.msra.mxu0 0
  %7276 = vmatprep.subr.bf16.mxu0 0
  %7277 = vmatpush1.bf16.msra.mxu0 0
  %7278 = vmatprep.subr.bf16.mxu0 0
  %7279 = vmatpush1.bf16.msra.mxu0 0
  %7280 = vmatprep.subr.bf16.mxu0 0
  %7281 = vmatpush1.bf16.msra.mxu0 0
  %7282 = vmatprep.subr.bf16.mxu0 0
  %7283 = vmatpush1.bf16.msra.mxu0 0
  %7284 = vmatprep.subr.bf16.mxu0 0
  %7285 = vmatpush1.bf16.msra.mxu0 0
  %7286 = vmatprep.mubr.bf16.mxu0 0
  %7287 = vmatmul.mubr.bf16.gmra.mrb[0].mxu0 %v7249
  %v7288 = vpop.f32.mrb[0].mxu0
  %v7289 = vadd.f32 0.0, %v7288
  %v7290 = vpop.f32.mrb[0].mxu0
  %v7291 = vpop.f32.mrb[0].mxu0
  %v7292 = vpop.f32.mrb[0].mxu0
  %7293 = vdwg.mxu0
  %v7295 = vsel %vm6464, %v1374, 0
  %v7298 = vsel %vm6468, %v5242, 0
  %7300 = vmatprep.subr.bf16.mxu0 0
  %7301 = vmatpush1.bf16.msra.mxu0 %v7298
  %7302 = vmatprep.subr.bf16.mxu0 0
  %7303 = vmatpush1.bf16.msra.mxu0 0
  %7304 = vmatprep.subr.bf16.mxu0 0
  %7305 = vmatpush1.bf16.msra.mxu0 0
  %7306 = vmatprep.subr.bf16.mxu0 0
  %7307 = vmatpush1.bf16.msra.mxu0 0
  %7308 = vmatprep.subr.bf16.mxu0 0
  %7309 = vmatpush1.bf16.msra.mxu0 0
  %7310 = vmatprep.subr.bf16.mxu0 0
  %7311 = vmatpush1.bf16.msra.mxu0 0
  %7312 = vmatprep.subr.bf16.mxu0 0
  %7313 = vmatpush1.bf16.msra.mxu0 0
  %7314 = vmatprep.subr.bf16.mxu0 0
  %7315 = vmatpush1.bf16.msra.mxu0 0
  %7316 = vmatprep.subr.bf16.mxu0 0
  %7317 = vmatpush1.bf16.msra.mxu0 0
  %7318 = vmatprep.subr.bf16.mxu0 0
  %7319 = vmatpush1.bf16.msra.mxu0 0
  %7320 = vmatprep.subr.bf16.mxu0 0
  %7321 = vmatpush1.bf16.msra.mxu0 0
  %7322 = vmatprep.subr.bf16.mxu0 0
  %7323 = vmatpush1.bf16.msra.mxu0 0
  %7324 = vmatprep.subr.bf16.mxu0 0
  %7325 = vmatpush1.bf16.msra.mxu0 0
  %7326 = vmatprep.subr.bf16.mxu0 0
  %7327 = vmatpush1.bf16.msra.mxu0 0
  %7328 = vmatprep.subr.bf16.mxu0 0
  %7329 = vmatpush1.bf16.msra.mxu0 0
  %7330 = vmatprep.subr.bf16.mxu0 0
  %7331 = vmatpush1.bf16.msra.mxu0 0
  %7332 = vmatprep.mubr.bf16.mxu0 0
  %7333 = vmatmul.mubr.bf16.gmra.mrb[0].mxu0 %v7295
  %v7334 = vpop.f32.mrb[0].mxu0
  %v7335 = vadd.f32 0.0, %v7334
  %v7336 = vpop.f32.mrb[0].mxu0
  %v7337 = vpop.f32.mrb[0].mxu0
  %v7338 = vpop.f32.mrb[0].mxu0
  %7339 = vdwg.mxu0
  %v7341 = vsel %vm6464, %v1375, 0
  %v7344 = vsel %vm6468, %v5243, 0
  %7346 = vmatprep.subr.bf16.mxu0 0
  %7347 = vmatpush1.bf16.msra.mxu0 %v7344
  %7348 = vmatprep.subr.bf16.mxu0 0
  %7349 = vmatpush1.bf16.msra.mxu0 0
  %7350 = vmatprep.subr.bf16.mxu0 0
  %7351 = vmatpush1.bf16.msra.mxu0 0
  %7352 = vmatprep.subr.bf16.mxu0 0
  %7353 = vmatpush1.bf16.msra.mxu0 0
  %7354 = vmatprep.subr.bf16.mxu0 0
  %7355 = vmatpush1.bf16.msra.mxu0 0
  %7356 = vmatprep.subr.bf16.mxu0 0
  %7357 = vmatpush1.bf16.msra.mxu0 0
  %7358 = vmatprep.subr.bf16.mxu0 0
  %7359 = vmatpush1.bf16.msra.mxu0 0
  %7360 = vmatprep.subr.bf16.mxu0 0
  %7361 = vmatpush1.bf16.msra.mxu0 0
  %7362 = vmatprep.subr.bf16.mxu0 0
  %7363 = vmatpush1.bf16.msra.mxu0 0
  %7364 = vmatprep.subr.bf16.mxu0 0
  %7365 = vmatpush1.bf16.msra.mxu0 0
  %7366 = vmatprep.subr.bf16.mxu0 0
  %7367 = vmatpush1.bf16.msra.mxu0 0
  %7368 = vmatprep.subr.bf16.mxu0 0
  %7369 = vmatpush1.bf16.msra.mxu0 0
  %7370 = vmatprep.subr.bf16.mxu0 0
  %7371 = vmatpush1.bf16.msra.mxu0 0
  %7372 = vmatprep.subr.bf16.mxu0 0
  %7373 = vmatpush1.bf16.msra.mxu0 0
  %7374 = vmatprep.subr.bf16.mxu0 0
  %7375 = vmatpush1.bf16.msra.mxu0 0
  %7376 = vmatprep.subr.bf16.mxu0 0
  %7377 = vmatpush1.bf16.msra.mxu0 0
  %7378 = vmatprep.mubr.bf16.mxu0 0
  %7379 = vmatmul.mubr.bf16.gmra.mrb[0].mxu0 %v7341
  %v7380 = vpop.f32.mrb[0].mxu0
  %v7381 = vadd.f32 0.0, %v7380
  %v7382 = vpop.f32.mrb[0].mxu0
  %v7383 = vpop.f32.mrb[0].mxu0
  %v7384 = vpop.f32.mrb[0].mxu0
  %7385 = vdwg.mxu0
  %v7387 = vsel %vm6464, %v1376, 0
  %v7390 = vsel %vm6468, %v5244, 0
  %7392 = vmatprep.subr.bf16.mxu0 0
  %7393 = vmatpush1.bf16.msra.mxu0 %v7390
  %7394 = vmatprep.subr.bf16.mxu0 0
  %7395 = vmatpush1.bf16.msra.mxu0 0
  %7396 = vmatprep.subr.bf16.mxu0 0
  %7397 = vmatpush1.bf16.msra.mxu0 0
  %7398 = vmatprep.subr.bf16.mxu0 0
  %7399 = vmatpush1.bf16.msra.mxu0 0
  %7400 = vmatprep.subr.bf16.mxu0 0
  %7401 = vmatpush1.bf16.msra.mxu0 0
  %7402 = vmatprep.subr.bf16.mxu0 0
  %7403 = vmatpush1.bf16.msra.mxu0 0
  %7404 = vmatprep.subr.bf16.mxu0 0
  %7405 = vmatpush1.bf16.msra.mxu0 0
  %7406 = vmatprep.subr.bf16.mxu0 0
  %7407 = vmatpush1.bf16.msra.mxu0 0
  %7408 = vmatprep.subr.bf16.mxu0 0
  %7409 = vmatpush1.bf16.msra.mxu0 0
  %7410 = vmatprep.subr.bf16.mxu0 0
  %7411 = vmatpush1.bf16.msra.mxu0 0
  %7412 = vmatprep.subr.bf16.mxu0 0
  %7413 = vmatpush1.bf16.msra.mxu0 0
  %7414 = vmatprep.subr.bf16.mxu0 0
  %7415 = vmatpush1.bf16.msra.mxu0 0
  %7416 = vmatprep.subr.bf16.mxu0 0
  %7417 = vmatpush1.bf16.msra.mxu0 0
  %7418 = vmatprep.subr.bf16.mxu0 0
  %7419 = vmatpush1.bf16.msra.mxu0 0
  %7420 = vmatprep.subr.bf16.mxu0 0
  %7421 = vmatpush1.bf16.msra.mxu0 0
  %7422 = vmatprep.subr.bf16.mxu0 0
  %7423 = vmatpush1.bf16.msra.mxu0 0
  %7424 = vmatprep.mubr.bf16.mxu0 0
  %7425 = vmatmul.mubr.bf16.gmra.mrb[0].mxu0 %v7387
  %v7426 = vpop.f32.mrb[0].mxu0
  %v7427 = vadd.f32 0.0, %v7426
  %v7428 = vpop.f32.mrb[0].mxu0
  %v7429 = vpop.f32.mrb[0].mxu0
  %v7430 = vpop.f32.mrb[0].mxu0
  %7431 = vdwg.mxu0
  %v7433 = vsel %vm6464, %v1377, 0
  %v7436 = vsel %vm6468, %v5245, 0
  %7438 = vmatprep.subr.bf16.mxu0 0
  %7439 = vmatpush1.bf16.msra.mxu0 %v7436
  %7440 = vmatprep.subr.bf16.mxu0 0
  %7441 = vmatpush1.bf16.msra.mxu0 0
  %7442 = vmatprep.subr.bf16.mxu0 0
  %7443 = vmatpush1.bf16.msra.mxu0 0
  %7444 = vmatprep.subr.bf16.mxu0 0
  %7445 = vmatpush1.bf16.msra.mxu0 0
  %7446 = vmatprep.subr.bf16.mxu0 0
  %7447 = vmatpush1.bf16.msra.mxu0 0
  %7448 = vmatprep.subr.bf16.mxu0 0
  %7449 = vmatpush1.bf16.msra.mxu0 0
  %7450 = vmatprep.subr.bf16.mxu0 0
  %7451 = vmatpush1.bf16.msra.mxu0 0
  %7452 = vmatprep.subr.bf16.mxu0 0
  %7453 = vmatpush1.bf16.msra.mxu0 0
  %7454 = vmatprep.subr.bf16.mxu0 0
  %7455 = vmatpush1.bf16.msra.mxu0 0
  %7456 = vmatprep.subr.bf16.mxu0 0
  %7457 = vmatpush1.bf16.msra.mxu0 0
  %7458 = vmatprep.subr.bf16.mxu0 0
  %7459 = vmatpush1.bf16.msra.mxu0 0
  %7460 = vmatprep.subr.bf16.mxu0 0
  %7461 = vmatpush1.bf16.msra.mxu0 0
  %7462 = vmatprep.subr.bf16.mxu0 0
  %7463 = vmatpush1.bf16.msra.mxu0 0
  %7464 = vmatprep.subr.bf16.mxu0 0
  %7465 = vmatpush1.bf16.msra.mxu0 0
  %7466 = vmatprep.subr.bf16.mxu0 0
  %7467 = vmatpush1.bf16.msra.mxu0 0
  %7468 = vmatprep.subr.bf16.mxu0 0
  %7469 = vmatpush1.bf16.msra.mxu0 0
  %7470 = vmatprep.mubr.bf16.mxu0 0
  %7471 = vmatmul.mubr.bf16.gmra.mrb[0].mxu0 %v7433
  %v7472 = vpop.f32.mrb[0].mxu0
  %v7473 = vadd.f32 0.0, %v7472
  %v7474 = vpop.f32.mrb[0].mxu0
  %v7475 = vpop.f32.mrb[0].mxu0
  %v7476 = vpop.f32.mrb[0].mxu0
  %7477 = vdwg.mxu0
  %v7479 = vsel %vm6464, %v1378, 0
  %v7482 = vsel %vm6468, %v5246, 0
  %7484 = vmatprep.subr.bf16.mxu0 0
  %7485 = vmatpush1.bf16.msra.mxu0 %v7482
  %7486 = vmatprep.subr.bf16.mxu0 0
  %7487 = vmatpush1.bf16.msra.mxu0 0
  %7488 = vmatprep.subr.bf16.mxu0 0
  %7489 = vmatpush1.bf16.msra.mxu0 0
  %7490 = vmatprep.subr.bf16.mxu0 0
  %7491 = vmatpush1.bf16.msra.mxu0 0
  %7492 = vmatprep.subr.bf16.mxu0 0
  %7493 = vmatpush1.bf16.msra.mxu0 0
  %7494 = vmatprep.subr.bf16.mxu0 0
  %7495 = vmatpush1.bf16.msra.mxu0 0
  %7496 = vmatprep.subr.bf16.mxu0 0
  %7497 = vmatpush1.bf16.msra.mxu0 0
  %7498 = vmatprep.subr.bf16.mxu0 0
  %7499 = vmatpush1.bf16.msra.mxu0 0
  %7500 = vmatprep.subr.bf16.mxu0 0
  %7501 = vmatpush1.bf16.msra.mxu0 0
  %7502 = vmatprep.subr.bf16.mxu0 0
  %7503 = vmatpush1.bf16.msra.mxu0 0
  %7504 = vmatprep.subr.bf16.mxu0 0
  %7505 = vmatpush1.bf16.msra.mxu0 0
  %7506 = vmatprep.subr.bf16.mxu0 0
  %7507 = vmatpush1.bf16.msra.mxu0 0
  %7508 = vmatprep.subr.bf16.mxu0 0
  %7509 = vmatpush1.bf16.msra.mxu0 0
  %7510 = vmatprep.subr.bf16.mxu0 0
  %7511 = vmatpush1.bf16.msra.mxu0 0
  %7512 = vmatprep.subr.bf16.mxu0 0
  %7513 = vmatpush1.bf16.msra.mxu0 0
  %7514 = vmatprep.subr.bf16.mxu0 0
  %7515 = vmatpush1.bf16.msra.mxu0 0
  %7516 = vmatprep.mubr.bf16.mxu0 0
  %7517 = vmatmul.mubr.bf16.gmra.mrb[0].mxu0 %v7479
  %v7518 = vpop.f32.mrb[0].mxu0
  %v7519 = vadd.f32 0.0, %v7518
  %v7520 = vpop.f32.mrb[0].mxu0
  %v7521 = vpop.f32.mrb[0].mxu0
  %v7522 = vpop.f32.mrb[0].mxu0
  %7523 = vdwg.mxu0
  %v7525 = vsel %vm6464, %v1379, 0
  %v7528 = vsel %vm6468, %v5247, 0
  %7530 = vmatprep.subr.bf16.mxu0 0
  %7531 = vmatpush1.bf16.msra.mxu0 %v7528
  %7532 = vmatprep.subr.bf16.mxu0 0
  %7533 = vmatpush1.bf16.msra.mxu0 0
  %7534 = vmatprep.subr.bf16.mxu0 0
  %7535 = vmatpush1.bf16.msra.mxu0 0
  %7536 = vmatprep.subr.bf16.mxu0 0
  %7537 = vmatpush1.bf16.msra.mxu0 0
  %7538 = vmatprep.subr.bf16.mxu0 0
  %7539 = vmatpush1.bf16.msra.mxu0 0
  %7540 = vmatprep.subr.bf16.mxu0 0
  %7541 = vmatpush1.bf16.msra.mxu0 0
  %7542 = vmatprep.subr.bf16.mxu0 0
  %7543 = vmatpush1.bf16.msra.mxu0 0
  %7544 = vmatprep.subr.bf16.mxu0 0
  %7545 = vmatpush1.bf16.msra.mxu0 0
  %7546 = vmatprep.subr.bf16.mxu0 0
  %7547 = vmatpush1.bf16.msra.mxu0 0
  %7548 = vmatprep.subr.bf16.mxu0 0
  %7549 = vmatpush1.bf16.msra.mxu0 0
  %7550 = vmatprep.subr.bf16.mxu0 0
  %7551 = vmatpush1.bf16.msra.mxu0 0
  %7552 = vmatprep.subr.bf16.mxu0 0
  %7553 = vmatpush1.bf16.msra.mxu0 0
  %7554 = vmatprep.subr.bf16.mxu0 0
  %7555 = vmatpush1.bf16.msra.mxu0 0
  %7556 = vmatprep.subr.bf16.mxu0 0
  %7557 = vmatpush1.bf16.msra.mxu0 0
  %7558 = vmatprep.subr.bf16.mxu0 0
  %7559 = vmatpush1.bf16.msra.mxu0 0
  %7560 = vmatprep.subr.bf16.mxu0 0
  %7561 = vmatpush1.bf16.msra.mxu0 0
  %7562 = vmatprep.mubr.bf16.mxu0 0
  %7563 = vmatmul.mubr.bf16.gmra.mrb[0].mxu0 %v7525
  %v7564 = vpop.f32.mrb[0].mxu0
  %v7565 = vadd.f32 0.0, %v7564
  %v7566 = vpop.f32.mrb[0].mxu0
  %v7567 = vpop.f32.mrb[0].mxu0
  %v7568 = vpop.f32.mrb[0].mxu0
  %7569 = vdwg.mxu0
  %v7571 = vsel %vm6464, %v1380, 0
  %v7574 = vsel %vm6468, %v5248, 0
  %7576 = vmatprep.subr.bf16.mxu0 0
  %7577 = vmatpush1.bf16.msra.mxu0 %v7574
  %7578 = vmatprep.subr.bf16.mxu0 0
  %7579 = vmatpush1.bf16.msra.mxu0 0
  %7580 = vmatprep.subr.bf16.mxu0 0
  %7581 = vmatpush1.bf16.msra.mxu0 0
  %7582 = vmatprep.subr.bf16.mxu0 0
  %7583 = vmatpush1.bf16.msra.mxu0 0
  %7584 = vmatprep.subr.bf16.mxu0 0
  %7585 = vmatpush1.bf16.msra.mxu0 0
  %7586 = vmatprep.subr.bf16.mxu0 0
  %7587 = vmatpush1.bf16.msra.mxu0 0
  %7588 = vmatprep.subr.bf16.mxu0 0
  %7589 = vmatpush1.bf16.msra.mxu0 0
  %7590 = vmatprep.subr.bf16.mxu0 0
  %7591 = vmatpush1.bf16.msra.mxu0 0
  %7592 = vmatprep.subr.bf16.mxu0 0
  %7593 = vmatpush1.bf16.msra.mxu0 0
  %7594 = vmatprep.subr.bf16.mxu0 0
  %7595 = vmatpush1.bf16.msra.mxu0 0
  %7596 = vmatprep.subr.bf16.mxu0 0
  %7597 = vmatpush1.bf16.msra.mxu0 0
  %7598 = vmatprep.subr.bf16.mxu0 0
  %7599 = vmatpush1.bf16.msra.mxu0 0
  %7600 = vmatprep.subr.bf16.mxu0 0
  %7601 = vmatpush1.bf16.msra.mxu0 0
  %7602 = vmatprep.subr.bf16.mxu0 0
  %7603 = vmatpush1.bf16.msra.mxu0 0
  %7604 = vmatprep.subr.bf16.mxu0 0
  %7605 = vmatpush1.bf16.msra.mxu0 0
  %7606 = vmatprep.subr.bf16.mxu0 0
  %7607 = vmatpush1.bf16.msra.mxu0 0
  %7608 = vmatprep.mubr.bf16.mxu0 0
  %7609 = vmatmul.mubr.bf16.gmra.mrb[0].mxu0 %v7571
  %v7610 = vpop.f32.mrb[0].mxu0
  %v7611 = vadd.f32 0.0, %v7610
  %v7612 = vpop.f32.mrb[0].mxu0
  %v7613 = vpop.f32.mrb[0].mxu0
  %v7614 = vpop.f32.mrb[0].mxu0
  %7615 = vdwg.mxu0
  %v7617 = vsel %vm6464, %v1381, 0
  %v7620 = vsel %vm6468, %v5249, 0
  %7622 = vmatprep.subr.bf16.mxu0 0
  %7623 = vmatpush1.bf16.msra.mxu0 %v7620
  %7624 = vmatprep.subr.bf16.mxu0 0
  %7625 = vmatpush1.bf16.msra.mxu0 0
  %7626 = vmatprep.subr.bf16.mxu0 0
  %7627 = vmatpush1.bf16.msra.mxu0 0
  %7628 = vmatprep.subr.bf16.mxu0 0
  %7629 = vmatpush1.bf16.msra.mxu0 0
  %7630 = vmatprep.subr.bf16.mxu0 0
  %7631 = vmatpush1.bf16.msra.mxu0 0
  %7632 = vmatprep.subr.bf16.mxu0 0
  %7633 = vmatpush1.bf16.msra.mxu0 0
  %7634 = vmatprep.subr.bf16.mxu0 0
  %7635 = vmatpush1.bf16.msra.mxu0 0
  %7636 = vmatprep.subr.bf16.mxu0 0
  %7637 = vmatpush1.bf16.msra.mxu0 0
  %7638 = vmatprep.subr.bf16.mxu0 0
  %7639 = vmatpush1.bf16.msra.mxu0 0
  %7640 = vmatprep.subr.bf16.mxu0 0
  %7641 = vmatpush1.bf16.msra.mxu0 0
  %7642 = vmatprep.subr.bf16.mxu0 0
  %7643 = vmatpush1.bf16.msra.mxu0 0
  %7644 = vmatprep.subr.bf16.mxu0 0
  %7645 = vmatpush1.bf16.msra.mxu0 0
  %7646 = vmatprep.subr.bf16.mxu0 0
  %7647 = vmatpush1.bf16.msra.mxu0 0
  %7648 = vmatprep.subr.bf16.mxu0 0
  %7649 = vmatpush1.bf16.msra.mxu0 0
  %7650 = vmatprep.subr.bf16.mxu0 0
  %7651 = vmatpush1.bf16.msra.mxu0 0
  %7652 = vmatprep.subr.bf16.mxu0 0
  %7653 = vmatpush1.bf16.msra.mxu0 0
  %7654 = vmatprep.mubr.bf16.mxu0 0
  %7655 = vmatmul.mubr.bf16.gmra.mrb[0].mxu0 %v7617
  %v7656 = vpop.f32.mrb[0].mxu0
  %v7657 = vadd.f32 0.0, %v7656
  %v7658 = vpop.f32.mrb[0].mxu0
  %v7659 = vpop.f32.mrb[0].mxu0
  %v7660 = vpop.f32.mrb[0].mxu0
  %7661 = vdwg.mxu0
  %v7663 = vsel %vm6464, %v1382, 0
  %v7666 = vsel %vm6468, %v5250, 0
  %7668 = vmatprep.subr.bf16.mxu0 0
  %7669 = vmatpush1.bf16.msra.mxu0 %v7666
  %7670 = vmatprep.subr.bf16.mxu0 0
  %7671 = vmatpush1.bf16.msra.mxu0 0
  %7672 = vmatprep.subr.bf16.mxu0 0
  %7673 = vmatpush1.bf16.msra.mxu0 0
  %7674 = vmatprep.subr.bf16.mxu0 0
  %7675 = vmatpush1.bf16.msra.mxu0 0
  %7676 = vmatprep.subr.bf16.mxu0 0
  %7677 = vmatpush1.bf16.msra.mxu0 0
  %7678 = vmatprep.subr.bf16.mxu0 0
  %7679 = vmatpush1.bf16.msra.mxu0 0
  %7680 = vmatprep.subr.bf16.mxu0 0
  %7681 = vmatpush1.bf16.msra.mxu0 0
  %7682 = vmatprep.subr.bf16.mxu0 0
  %7683 = vmatpush1.bf16.msra.mxu0 0
  %7684 = vmatprep.subr.bf16.mxu0 0
  %7685 = vmatpush1.bf16.msra.mxu0 0
  %7686 = vmatprep.subr.bf16.mxu0 0
  %7687 = vmatpush1.bf16.msra.mxu0 0
  %7688 = vmatprep.subr.bf16.mxu0 0
  %7689 = vmatpush1.bf16.msra.mxu0 0
  %7690 = vmatprep.subr.bf16.mxu0 0
  %7691 = vmatpush1.bf16.msra.mxu0 0
  %7692 = vmatprep.subr.bf16.mxu0 0
  %7693 = vmatpush1.bf16.msra.mxu0 0
  %7694 = vmatprep.subr.bf16.mxu0 0
  %7695 = vmatpush1.bf16.msra.mxu0 0
  %7696 = vmatprep.subr.bf16.mxu0 0
  %7697 = vmatpush1.bf16.msra.mxu0 0
  %7698 = vmatprep.subr.bf16.mxu0 0
  %7699 = vmatpush1.bf16.msra.mxu0 0
  %7700 = vmatprep.mubr.bf16.mxu0 0
  %7701 = vmatmul.mubr.bf16.gmra.mrb[0].mxu0 %v7663
  %v7702 = vpop.f32.mrb[0].mxu0
  %v7703 = vadd.f32 0.0, %v7702
  %v7704 = vpop.f32.mrb[0].mxu0
  %v7705 = vpop.f32.mrb[0].mxu0
  %v7706 = vpop.f32.mrb[0].mxu0
  %7707 = vdwg.mxu0
  %v7709 = vsel %vm6464, %v1383, 0
  %v7712 = vsel %vm6468, %v5251, 0
  %7714 = vmatprep.subr.bf16.mxu0 0
  %7715 = vmatpush1.bf16.msra.mxu0 %v7712
  %7716 = vmatprep.subr.bf16.mxu0 0
  %7717 = vmatpush1.bf16.msra.mxu0 0
  %7718 = vmatprep.subr.bf16.mxu0 0
  %7719 = vmatpush1.bf16.msra.mxu0 0
  %7720 = vmatprep.subr.bf16.mxu0 0
  %7721 = vmatpush1.bf16.msra.mxu0 0
  %7722 = vmatprep.subr.bf16.mxu0 0
  %7723 = vmatpush1.bf16.msra.mxu0 0
  %7724 = vmatprep.subr.bf16.mxu0 0
  %7725 = vmatpush1.bf16.msra.mxu0 0
  %7726 = vmatprep.subr.bf16.mxu0 0
  %7727 = vmatpush1.bf16.msra.mxu0 0
  %7728 = vmatprep.subr.bf16.mxu0 0
  %7729 = vmatpush1.bf16.msra.mxu0 0
  %7730 = vmatprep.subr.bf16.mxu0 0
  %7731 = vmatpush1.bf16.msra.mxu0 0
  %7732 = vmatprep.subr.bf16.mxu0 0
  %7733 = vmatpush1.bf16.msra.mxu0 0
  %7734 = vmatprep.subr.bf16.mxu0 0
  %7735 = vmatpush1.bf16.msra.mxu0 0
  %7736 = vmatprep.subr.bf16.mxu0 0
  %7737 = vmatpush1.bf16.msra.mxu0 0
  %7738 = vmatprep.subr.bf16.mxu0 0
  %7739 = vmatpush1.bf16.msra.mxu0 0
  %7740 = vmatprep.subr.bf16.mxu0 0
  %7741 = vmatpush1.bf16.msra.mxu0 0
  %7742 = vmatprep.subr.bf16.mxu0 0
  %7743 = vmatpush1.bf16.msra.mxu0 0
  %7744 = vmatprep.subr.bf16.mxu0 0
  %7745 = vmatpush1.bf16.msra.mxu0 0
  %7746 = vmatprep.mubr.bf16.mxu0 0
  %7747 = vmatmul.mubr.bf16.gmra.mrb[0].mxu0 %v7709
  %v7748 = vpop.f32.mrb[0].mxu0
  %v7749 = vadd.f32 0.0, %v7748
  %v7750 = vpop.f32.mrb[0].mxu0
  %v7751 = vpop.f32.mrb[0].mxu0
  %v7752 = vpop.f32.mrb[0].mxu0
  %7753 = vdwg.mxu0
  %v7755 = vsel %vm6464, %v1384, 0
  %v7758 = vsel %vm6468, %v5252, 0
  %7760 = vmatprep.subr.bf16.mxu0 0
  %7761 = vmatpush1.bf16.msra.mxu0 %v7758
  %7762 = vmatprep.subr.bf16.mxu0 0
  %7763 = vmatpush1.bf16.msra.mxu0 0
  %7764 = vmatprep.subr.bf16.mxu0 0
  %7765 = vmatpush1.bf16.msra.mxu0 0
  %7766 = vmatprep.subr.bf16.mxu0 0
  %7767 = vmatpush1.bf16.msra.mxu0 0
  %7768 = vmatprep.subr.bf16.mxu0 0
  %7769 = vmatpush1.bf16.msra.mxu0 0
  %7770 = vmatprep.subr.bf16.mxu0 0
  %7771 = vmatpush1.bf16.msra.mxu0 0
  %7772 = vmatprep.subr.bf16.mxu0 0
  %7773 = vmatpush1.bf16.msra.mxu0 0
  %7774 = vmatprep.subr.bf16.mxu0 0
  %7775 = vmatpush1.bf16.msra.mxu0 0
  %7776 = vmatprep.subr.bf16.mxu0 0
  %7777 = vmatpush1.bf16.msra.mxu0 0
  %7778 = vmatprep.subr.bf16.mxu0 0
  %7779 = vmatpush1.bf16.msra.mxu0 0
  %7780 = vmatprep.subr.bf16.mxu0 0
  %7781 = vmatpush1.bf16.msra.mxu0 0
  %7782 = vmatprep.subr.bf16.mxu0 0
  %7783 = vmatpush1.bf16.msra.mxu0 0
  %7784 = vmatprep.subr.bf16.mxu0 0
  %7785 = vmatpush1.bf16.msra.mxu0 0
  %7786 = vmatprep.subr.bf16.mxu0 0
  %7787 = vmatpush1.bf16.msra.mxu0 0
  %7788 = vmatprep.subr.bf16.mxu0 0
  %7789 = vmatpush1.bf16.msra.mxu0 0
  %7790 = vmatprep.subr.bf16.mxu0 0
  %7791 = vmatpush1.bf16.msra.mxu0 0
  %7792 = vmatprep.mubr.bf16.mxu0 0
  %7793 = vmatmul.mubr.bf16.gmra.mrb[0].mxu0 %v7755
  %v7794 = vpop.f32.mrb[0].mxu0
  %v7795 = vadd.f32 0.0, %v7794
  %v7796 = vpop.f32.mrb[0].mxu0
  %v7797 = vpop.f32.mrb[0].mxu0
  %v7798 = vpop.f32.mrb[0].mxu0
  %7799 = vdwg.mxu0
  %v7801 = vsel %vm6464, %v1385, 0
  %v7804 = vsel %vm6468, %v5253, 0
  %7806 = vmatprep.subr.bf16.mxu0 0
  %7807 = vmatpush1.bf16.msra.mxu0 %v7804
  %7808 = vmatprep.subr.bf16.mxu0 0
  %7809 = vmatpush1.bf16.msra.mxu0 0
  %7810 = vmatprep.subr.bf16.mxu0 0
  %7811 = vmatpush1.bf16.msra.mxu0 0
  %7812 = vmatprep.subr.bf16.mxu0 0
  %7813 = vmatpush1.bf16.msra.mxu0 0
  %7814 = vmatprep.subr.bf16.mxu0 0
  %7815 = vmatpush1.bf16.msra.mxu0 0
  %7816 = vmatprep.subr.bf16.mxu0 0
  %7817 = vmatpush1.bf16.msra.mxu0 0
  %7818 = vmatprep.subr.bf16.mxu0 0
  %7819 = vmatpush1.bf16.msra.mxu0 0
  %7820 = vmatprep.subr.bf16.mxu0 0
  %7821 = vmatpush1.bf16.msra.mxu0 0
  %7822 = vmatprep.subr.bf16.mxu0 0
  %7823 = vmatpush1.bf16.msra.mxu0 0
  %7824 = vmatprep.subr.bf16.mxu0 0
  %7825 = vmatpush1.bf16.msra.mxu0 0
  %7826 = vmatprep.subr.bf16.mxu0 0
  %7827 = vmatpush1.bf16.msra.mxu0 0
  %7828 = vmatprep.subr.bf16.mxu0 0
  %7829 = vmatpush1.bf16.msra.mxu0 0
  %7830 = vmatprep.subr.bf16.mxu0 0
  %7831 = vmatpush1.bf16.msra.mxu0 0
  %7832 = vmatprep.subr.bf16.mxu0 0
  %7833 = vmatpush1.bf16.msra.mxu0 0
  %7834 = vmatprep.subr.bf16.mxu0 0
  %7835 = vmatpush1.bf16.msra.mxu0 0
  %7836 = vmatprep.subr.bf16.mxu0 0
  %7837 = vmatpush1.bf16.msra.mxu0 0
  %7838 = vmatprep.mubr.bf16.mxu0 0
  %7839 = vmatmul.mubr.bf16.gmra.mrb[0].mxu0 %v7801
  %v7840 = vpop.f32.mrb[0].mxu0
  %v7841 = vadd.f32 0.0, %v7840
  %v7842 = vpop.f32.mrb[0].mxu0
  %v7843 = vpop.f32.mrb[0].mxu0
  %v7844 = vpop.f32.mrb[0].mxu0
  %7845 = vdwg.mxu0
  %v7847 = vsel %vm6464, %v1386, 0
  %v7850 = vsel %vm6468, %v5254, 0
  %7852 = vmatprep.subr.bf16.mxu0 0
  %7853 = vmatpush1.bf16.msra.mxu0 %v7850
  %7854 = vmatprep.subr.bf16.mxu0 0
  %7855 = vmatpush1.bf16.msra.mxu0 0
  %7856 = vmatprep.subr.bf16.mxu0 0
  %7857 = vmatpush1.bf16.msra.mxu0 0
  %7858 = vmatprep.subr.bf16.mxu0 0
  %7859 = vmatpush1.bf16.msra.mxu0 0
  %7860 = vmatprep.subr.bf16.mxu0 0
  %7861 = vmatpush1.bf16.msra.mxu0 0
  %7862 = vmatprep.subr.bf16.mxu0 0
  %7863 = vmatpush1.bf16.msra.mxu0 0
  %7864 = vmatprep.subr.bf16.mxu0 0
  %7865 = vmatpush1.bf16.msra.mxu0 0
  %7866 = vmatprep.subr.bf16.mxu0 0
  %7867 = vmatpush1.bf16.msra.mxu0 0
  %7868 = vmatprep.subr.bf16.mxu0 0
  %7869 = vmatpush1.bf16.msra.mxu0 0
  %7870 = vmatprep.subr.bf16.mxu0 0
  %7871 = vmatpush1.bf16.msra.mxu0 0
  %7872 = vmatprep.subr.bf16.mxu0 0
  %7873 = vmatpush1.bf16.msra.mxu0 0
  %7874 = vmatprep.subr.bf16.mxu0 0
  %7875 = vmatpush1.bf16.msra.mxu0 0
  %7876 = vmatprep.subr.bf16.mxu0 0
  %7877 = vmatpush1.bf16.msra.mxu0 0
  %7878 = vmatprep.subr.bf16.mxu0 0
  %7879 = vmatpush1.bf16.msra.mxu0 0
  %7880 = vmatprep.subr.bf16.mxu0 0
  %7881 = vmatpush1.bf16.msra.mxu0 0
  %7882 = vmatprep.subr.bf16.mxu0 0
  %7883 = vmatpush1.bf16.msra.mxu0 0
  %7884 = vmatprep.mubr.bf16.mxu0 0
  %7885 = vmatmul.mubr.bf16.gmra.mrb[0].mxu0 %v7847
  %v7886 = vpop.f32.mrb[0].mxu0
  %v7887 = vadd.f32 0.0, %v7886
  %v7888 = vpop.f32.mrb[0].mxu0
  %v7889 = vpop.f32.mrb[0].mxu0
  %v7890 = vpop.f32.mrb[0].mxu0
  %7891 = vdwg.mxu0
  %v7893 = vsel %vm6464, %v1387, 0
  %v7896 = vsel %vm6468, %v5255, 0
  %7898 = vmatprep.subr.bf16.mxu0 0
  %7899 = vmatpush1.bf16.msra.mxu0 %v7896
  %7900 = vmatprep.subr.bf16.mxu0 0
  %7901 = vmatpush1.bf16.msra.mxu0 0
  %7902 = vmatprep.subr.bf16.mxu0 0
  %7903 = vmatpush1.bf16.msra.mxu0 0
  %7904 = vmatprep.subr.bf16.mxu0 0
  %7905 = vmatpush1.bf16.msra.mxu0 0
  %7906 = vmatprep.subr.bf16.mxu0 0
  %7907 = vmatpush1.bf16.msra.mxu0 0
  %7908 = vmatprep.subr.bf16.mxu0 0
  %7909 = vmatpush1.bf16.msra.mxu0 0
  %7910 = vmatprep.subr.bf16.mxu0 0
  %7911 = vmatpush1.bf16.msra.mxu0 0
  %7912 = vmatprep.subr.bf16.mxu0 0
  %7913 = vmatpush1.bf16.msra.mxu0 0
  %7914 = vmatprep.subr.bf16.mxu0 0
  %7915 = vmatpush1.bf16.msra.mxu0 0
  %7916 = vmatprep.subr.bf16.mxu0 0
  %7917 = vmatpush1.bf16.msra.mxu0 0
  %7918 = vmatprep.subr.bf16.mxu0 0
  %7919 = vmatpush1.bf16.msra.mxu0 0
  %7920 = vmatprep.subr.bf16.mxu0 0
  %7921 = vmatpush1.bf16.msra.mxu0 0
  %7922 = vmatprep.subr.bf16.mxu0 0
  %7923 = vmatpush1.bf16.msra.mxu0 0
  %7924 = vmatprep.subr.bf16.mxu0 0
  %7925 = vmatpush1.bf16.msra.mxu0 0
  %7926 = vmatprep.subr.bf16.mxu0 0
  %7927 = vmatpush1.bf16.msra.mxu0 0
  %7928 = vmatprep.subr.bf16.mxu0 0
  %7929 = vmatpush1.bf16.msra.mxu0 0
  %7930 = vmatprep.mubr.bf16.mxu0 0
  %7931 = vmatmul.mubr.bf16.gmra.mrb[0].mxu0 %v7893
  %v7932 = vpop.f32.mrb[0].mxu0
  %v7933 = vadd.f32 0.0, %v7932
  %v7934 = vpop.f32.mrb[0].mxu0
  %v7935 = vpop.f32.mrb[0].mxu0
  %v7936 = vpop.f32.mrb[0].mxu0
  %7937 = vdwg.mxu0
  %vm7938 = vcmp.eq.f32.partialorder %v52, 0.0
  %vm7939 = vcmp.eq.f32.partialorder %v53, 0.0
  %v7940 = vsel %vm7938, -1e+30, 0.0
  %v7941 = vsel %vm7939, -1e+30, 0.0
  %v7945 = vunpack.c.l.s4 1966171168
  %v7946 = vunpack.c.0.s8 %v7945
  %v7947 = vlaneseq
  %v7948 = vshrl.u32 %v7947, 7
  %v7949 = vsub.s32 %v7946, %v7948
  %v7950 = vrot.slane %v7940, %v7949
  %v7951 = vcombine.high %v7950, %v7950
  %v7953 = vunpack.c.l.s4 1966171168
  %v7954 = vunpack.c.0.s8 %v7953
  %v7955 = vlaneseq
  %v7956 = vshrl.u32 %v7955, 7
  %v7957 = vsub.s32 %v7954, %v7956
  %v7958 = vrot.slane %v7941, %v7957
  %v7959 = vcombine.high %v7958, %v7958
  %v7960 = vlaneseq
  %v7961 = vshrl.u32 %v7960, 7
  %v7962 = vsub.s32 0, %v7961
  %v7963 = vrot.slane %v7950, %v7962
  %v7964 = vlaneseq
  %v7965 = vshrl.u32 %v7964, 7
  %v7966 = vsub.s32 0, %v7965
  %v7967 = vrot.slane %v7951, %v7966
  %v7968 = vlaneseq
  %v7969 = vshrl.u32 %v7968, 7
  %v7970 = vsub.s32 0, %v7969
  %v7971 = vrot.slane %v7958, %v7970
  %v7972 = vlaneseq
  %v7973 = vshrl.u32 %v7972, 7
  %v7974 = vsub.s32 0, %v7973
  %v7975 = vrot.slane %v7959, %v7974
  %v7980 = vadd.f32 %v6507, %v7963
  %v7981 = vadd.f32 %v6553, %v7963
  %v7982 = vadd.f32 %v6599, %v7963
  %v7983 = vadd.f32 %v6645, %v7963
  %v7984 = vadd.f32 %v6691, %v7963
  %v7985 = vadd.f32 %v6737, %v7963
  %v7986 = vadd.f32 %v6783, %v7963
  %v7987 = vadd.f32 %v6829, %v7963
  %v7988 = vadd.f32 %v6875, %v7967
  %v7989 = vadd.f32 %v6921, %v7967
  %v7990 = vadd.f32 %v6967, %v7967
  %v7991 = vadd.f32 %v7013, %v7967
  %v7992 = vadd.f32 %v7059, %v7967
  %v7993 = vadd.f32 %v7105, %v7967
  %v7994 = vadd.f32 %v7151, %v7967
  %v7995 = vadd.f32 %v7197, %v7967
  %v7996 = vadd.f32 %v7243, %v7971
  %v7997 = vadd.f32 %v7289, %v7971
  %v7998 = vadd.f32 %v7335, %v7971
  %v7999 = vadd.f32 %v7381, %v7971
  %v8000 = vadd.f32 %v7427, %v7971
  %v8001 = vadd.f32 %v7473, %v7971
  %v8002 = vadd.f32 %v7519, %v7971
  %v8003 = vadd.f32 %v7565, %v7971
  %v8004 = vadd.f32 %v7611, %v7975
  %v8005 = vadd.f32 %v7657, %v7975
  %v8006 = vadd.f32 %v7703, %v7975
  %v8007 = vadd.f32 %v7749, %v7975
  %v8008 = vadd.f32 %v7795, %v7975
  %v8009 = vadd.f32 %v7841, %v7975
  %v8010 = vadd.f32 %v7887, %v7975
  %v8011 = vadd.f32 %v7933, %v7975
  %v8012 = vsel %vm6464, %v7980, -inf
  %8013 = vmax.xlane.f32.xlu0 %v8012
  %v8014 = vpop.xlane.xlu0 %8013
  %v8015 = vsel %vm6464, %v7981, -inf
  %8016 = vmax.xlane.f32.xlu0 %v8015
  %v8017 = vpop.xlane.xlu0 %8016
  %v8018 = vsel %vm6464, %v7982, -inf
  %8019 = vmax.xlane.f32.xlu0 %v8018
  %v8020 = vpop.xlane.xlu0 %8019
  %v8021 = vsel %vm6464, %v7983, -inf
  %8022 = vmax.xlane.f32.xlu0 %v8021
  %v8023 = vpop.xlane.xlu0 %8022
  %v8024 = vsel %vm6464, %v7984, -inf
  %8025 = vmax.xlane.f32.xlu0 %v8024
  %v8026 = vpop.xlane.xlu0 %8025
  %v8027 = vsel %vm6464, %v7985, -inf
  %8028 = vmax.xlane.f32.xlu0 %v8027
  %v8029 = vpop.xlane.xlu0 %8028
  %v8030 = vsel %vm6464, %v7986, -inf
  %8031 = vmax.xlane.f32.xlu0 %v8030
  %v8032 = vpop.xlane.xlu0 %8031
  %v8033 = vsel %vm6464, %v7987, -inf
  %8034 = vmax.xlane.f32.xlu0 %v8033
  %v8035 = vpop.xlane.xlu0 %8034
  %v8036 = vsel %vm6464, %v7988, -inf
  %8037 = vmax.xlane.f32.xlu0 %v8036
  %v8038 = vpop.xlane.xlu0 %8037
  %v8039 = vsel %vm6464, %v7989, -inf
  %8040 = vmax.xlane.f32.xlu0 %v8039
  %v8041 = vpop.xlane.xlu0 %8040
  %v8042 = vsel %vm6464, %v7990, -inf
  %8043 = vmax.xlane.f32.xlu0 %v8042
  %v8044 = vpop.xlane.xlu0 %8043
  %v8045 = vsel %vm6464, %v7991, -inf
  %8046 = vmax.xlane.f32.xlu0 %v8045
  %v8047 = vpop.xlane.xlu0 %8046
  %v8048 = vsel %vm6464, %v7992, -inf
  %8049 = vmax.xlane.f32.xlu0 %v8048
  %v8050 = vpop.xlane.xlu0 %8049
  %v8051 = vsel %vm6464, %v7993, -inf
  %8052 = vmax.xlane.f32.xlu0 %v8051
  %v8053 = vpop.xlane.xlu0 %8052
  %v8054 = vsel %vm6464, %v7994, -inf
  %8055 = vmax.xlane.f32.xlu0 %v8054
  %v8056 = vpop.xlane.xlu0 %8055
  %v8057 = vsel %vm6464, %v7995, -inf
  %8058 = vmax.xlane.f32.xlu0 %v8057
  %v8059 = vpop.xlane.xlu0 %8058
  %v8060 = vsel %vm6464, %v7996, -inf
  %8061 = vmax.xlane.f32.xlu0 %v8060
  %v8062 = vpop.xlane.xlu0 %8061
  %v8063 = vsel %vm6464, %v7997, -inf
  %8064 = vmax.xlane.f32.xlu0 %v8063
  %v8065 = vpop.xlane.xlu0 %8064
  %v8066 = vsel %vm6464, %v7998, -inf
  %8067 = vmax.xlane.f32.xlu0 %v8066
  %v8068 = vpop.xlane.xlu0 %8067
  %v8069 = vsel %vm6464, %v7999, -inf
  %8070 = vmax.xlane.f32.xlu0 %v8069
  %v8071 = vpop.xlane.xlu0 %8070
  %v8072 = vsel %vm6464, %v8000, -inf
  %8073 = vmax.xlane.f32.xlu0 %v8072
  %v8074 = vpop.xlane.xlu0 %8073
  %v8075 = vsel %vm6464, %v8001, -inf
  %8076 = vmax.xlane.f32.xlu0 %v8075
  %v8077 = vpop.xlane.xlu0 %8076
  %v8078 = vsel %vm6464, %v8002, -inf
  %8079 = vmax.xlane.f32.xlu0 %v8078
  %v8080 = vpop.xlane.xlu0 %8079
  %v8081 = vsel %vm6464, %v8003, -inf
  %8082 = vmax.xlane.f32.xlu0 %v8081
  %v8083 = vpop.xlane.xlu0 %8082
  %v8084 = vsel %vm6464, %v8004, -inf
  %8085 = vmax.xlane.f32.xlu0 %v8084
  %v8086 = vpop.xlane.xlu0 %8085
  %v8087 = vsel %vm6464, %v8005, -inf
  %8088 = vmax.xlane.f32.xlu0 %v8087
  %v8089 = vpop.xlane.xlu0 %8088
  %v8090 = vsel %vm6464, %v8006, -inf
  %8091 = vmax.xlane.f32.xlu0 %v8090
  %v8092 = vpop.xlane.xlu0 %8091
  %v8093 = vsel %vm6464, %v8007, -inf
  %8094 = vmax.xlane.f32.xlu0 %v8093
  %v8095 = vpop.xlane.xlu0 %8094
  %v8096 = vsel %vm6464, %v8008, -inf
  %8097 = vmax.xlane.f32.xlu0 %v8096
  %v8098 = vpop.xlane.xlu0 %8097
  %v8099 = vsel %vm6464, %v8009, -inf
  %8100 = vmax.xlane.f32.xlu0 %v8099
  %v8101 = vpop.xlane.xlu0 %8100
  %v8102 = vsel %vm6464, %v8010, -inf
  %8103 = vmax.xlane.f32.xlu0 %v8102
  %v8104 = vpop.xlane.xlu0 %8103
  %v8105 = vsel %vm6464, %v8011, -inf
  %8106 = vmax.xlane.f32.xlu0 %v8105
  %v8107 = vpop.xlane.xlu0 %8106
  %v8108 = vsub.f32 %v7980, %v8014
  %v8109 = vsub.f32 %v7981, %v8017
  %v8110 = vsub.f32 %v7982, %v8020
  %v8111 = vsub.f32 %v7983, %v8023
  %v8112 = vsub.f32 %v7984, %v8026
  %v8113 = vsub.f32 %v7985, %v8029
  %v8114 = vsub.f32 %v7986, %v8032
  %v8115 = vsub.f32 %v7987, %v8035
  %v8116 = vsub.f32 %v7988, %v8038
  %v8117 = vsub.f32 %v7989, %v8041
  %v8118 = vsub.f32 %v7990, %v8044
  %v8119 = vsub.f32 %v7991, %v8047
  %v8120 = vsub.f32 %v7992, %v8050
  %v8121 = vsub.f32 %v7993, %v8053
  %v8122 = vsub.f32 %v7994, %v8056
  %v8123 = vsub.f32 %v7995, %v8059
  %v8124 = vsub.f32 %v7996, %v8062
  %v8125 = vsub.f32 %v7997, %v8065
  %v8126 = vsub.f32 %v7998, %v8068
  %v8127 = vsub.f32 %v7999, %v8071
  %v8128 = vsub.f32 %v8000, %v8074
  %v8129 = vsub.f32 %v8001, %v8077
  %v8130 = vsub.f32 %v8002, %v8080
  %v8131 = vsub.f32 %v8003, %v8083
  %v8132 = vsub.f32 %v8004, %v8086
  %v8133 = vsub.f32 %v8005, %v8089
  %v8134 = vsub.f32 %v8006, %v8092
  %v8135 = vsub.f32 %v8007, %v8095
  %v8136 = vsub.f32 %v8008, %v8098
  %v8137 = vsub.f32 %v8009, %v8101
  %v8138 = vsub.f32 %v8010, %v8104
  %v8139 = vsub.f32 %v8011, %v8107
  %v8140 = vmul.f32 %v8108, 1.442695
  %v8141 = vpow.pop %v8140
  %v8142 = vmul.f32 %v8109, 1.442695
  %v8143 = vpow.pop %v8142
  %v8144 = vmul.f32 %v8110, 1.442695
  %v8145 = vpow.pop %v8144
  %v8146 = vmul.f32 %v8111, 1.442695
  %v8147 = vpow.pop %v8146
  %v8148 = vmul.f32 %v8112, 1.442695
  %v8149 = vpow.pop %v8148
  %v8150 = vmul.f32 %v8113, 1.442695
  %v8151 = vpow.pop %v8150
  %v8152 = vmul.f32 %v8114, 1.442695
  %v8153 = vpow.pop %v8152
  %v8154 = vmul.f32 %v8115, 1.442695
  %v8155 = vpow.pop %v8154
  %v8156 = vmul.f32 %v8116, 1.442695
  %v8157 = vpow.pop %v8156
  %v8158 = vmul.f32 %v8117, 1.442695
  %v8159 = vpow.pop %v8158
  %v8160 = vmul.f32 %v8118, 1.442695
  %v8161 = vpow.pop %v8160
  %v8162 = vmul.f32 %v8119, 1.442695
  %v8163 = vpow.pop %v8162
  %v8164 = vmul.f32 %v8120, 1.442695
  %v8165 = vpow.pop %v8164
  %v8166 = vmul.f32 %v8121, 1.442695
  %v8167 = vpow.pop %v8166
  %v8168 = vmul.f32 %v8122, 1.442695
  %v8169 = vpow.pop %v8168
  %v8170 = vmul.f32 %v8123, 1.442695
  %v8171 = vpow.pop %v8170
  %v8172 = vmul.f32 %v8124, 1.442695
  %v8173 = vpow.pop %v8172
  %v8174 = vmul.f32 %v8125, 1.442695
  %v8175 = vpow.pop %v8174
  %v8176 = vmul.f32 %v8126, 1.442695
  %v8177 = vpow.pop %v8176
  %v8178 = vmul.f32 %v8127, 1.442695
  %v8179 = vpow.pop %v8178
  %v8180 = vmul.f32 %v8128, 1.442695
  %v8181 = vpow.pop %v8180
  %v8182 = vmul.f32 %v8129, 1.442695
  %v8183 = vpow.pop %v8182
  %v8184 = vmul.f32 %v8130, 1.442695
  %v8185 = vpow.pop %v8184
  %v8186 = vmul.f32 %v8131, 1.442695
  %v8187 = vpow.pop %v8186
  %v8188 = vmul.f32 %v8132, 1.442695
  %v8189 = vpow.pop %v8188
  %v8190 = vmul.f32 %v8133, 1.442695
  %v8191 = vpow.pop %v8190
  %v8192 = vmul.f32 %v8134, 1.442695
  %v8193 = vpow.pop %v8192
  %v8194 = vmul.f32 %v8135, 1.442695
  %v8195 = vpow.pop %v8194
  %v8196 = vmul.f32 %v8136, 1.442695
  %v8197 = vpow.pop %v8196
  %v8198 = vmul.f32 %v8137, 1.442695
  %v8199 = vpow.pop %v8198
  %v8200 = vmul.f32 %v8138, 1.442695
  %v8201 = vpow.pop %v8200
  %v8202 = vmul.f32 %v8139, 1.442695
  %v8203 = vpow.pop %v8202
  %v8204 = vsel %vm6464, %v8141, 0.0
  %8205 = vadd.xlane.f32.xlu0 %v8204
  %v8206 = vpop.xlane.xlu0 %8205
  %v8207 = vsel %vm6464, %v8143, 0.0
  %8208 = vadd.xlane.f32.xlu0 %v8207
  %v8209 = vpop.xlane.xlu0 %8208
  %v8210 = vsel %vm6464, %v8145, 0.0
  %8211 = vadd.xlane.f32.xlu0 %v8210
  %v8212 = vpop.xlane.xlu0 %8211
  %v8213 = vsel %vm6464, %v8147, 0.0
  %8214 = vadd.xlane.f32.xlu0 %v8213
  %v8215 = vpop.xlane.xlu0 %8214
  %v8216 = vsel %vm6464, %v8149, 0.0
  %8217 = vadd.xlane.f32.xlu0 %v8216
  %v8218 = vpop.xlane.xlu0 %8217
  %v8219 = vsel %vm6464, %v8151, 0.0
  %8220 = vadd.xlane.f32.xlu0 %v8219
  %v8221 = vpop.xlane.xlu0 %8220
  %v8222 = vsel %vm6464, %v8153, 0.0
  %8223 = vadd.xlane.f32.xlu0 %v8222
  %v8224 = vpop.xlane.xlu0 %8223
  %v8225 = vsel %vm6464, %v8155, 0.0
  %8226 = vadd.xlane.f32.xlu0 %v8225
  %v8227 = vpop.xlane.xlu0 %8226
  %v8228 = vsel %vm6464, %v8157, 0.0
  %8229 = vadd.xlane.f32.xlu0 %v8228
  %v8230 = vpop.xlane.xlu0 %8229
  %v8231 = vsel %vm6464, %v8159, 0.0
  %8232 = vadd.xlane.f32.xlu0 %v8231
  %v8233 = vpop.xlane.xlu0 %8232
  %v8234 = vsel %vm6464, %v8161, 0.0
  %8235 = vadd.xlane.f32.xlu0 %v8234
  %v8236 = vpop.xlane.xlu0 %8235
  %v8237 = vsel %vm6464, %v8163, 0.0
  %8238 = vadd.xlane.f32.xlu0 %v8237
  %v8239 = vpop.xlane.xlu0 %8238
  %v8240 = vsel %vm6464, %v8165, 0.0
  %8241 = vadd.xlane.f32.xlu0 %v8240
  %v8242 = vpop.xlane.xlu0 %8241
  %v8243 = vsel %vm6464, %v8167, 0.0
  %8244 = vadd.xlane.f32.xlu0 %v8243
  %v8245 = vpop.xlane.xlu0 %8244
  %v8246 = vsel %vm6464, %v8169, 0.0
  %8247 = vadd.xlane.f32.xlu0 %v8246
  %v8248 = vpop.xlane.xlu0 %8247
  %v8249 = vsel %vm6464, %v8171, 0.0
  %8250 = vadd.xlane.f32.xlu0 %v8249
  %v8251 = vpop.xlane.xlu0 %8250
  %v8252 = vsel %vm6464, %v8173, 0.0
  %8253 = vadd.xlane.f32.xlu0 %v8252
  %v8254 = vpop.xlane.xlu0 %8253
  %v8255 = vsel %vm6464, %v8175, 0.0
  %8256 = vadd.xlane.f32.xlu0 %v8255
  %v8257 = vpop.xlane.xlu0 %8256
  %v8258 = vsel %vm6464, %v8177, 0.0
  %8259 = vadd.xlane.f32.xlu0 %v8258
  %v8260 = vpop.xlane.xlu0 %8259
  %v8261 = vsel %vm6464, %v8179, 0.0
  %8262 = vadd.xlane.f32.xlu0 %v8261
  %v8263 = vpop.xlane.xlu0 %8262
  %v8264 = vsel %vm6464, %v8181, 0.0
  %8265 = vadd.xlane.f32.xlu0 %v8264
  %v8266 = vpop.xlane.xlu0 %8265
  %v8267 = vsel %vm6464, %v8183, 0.0
  %8268 = vadd.xlane.f32.xlu0 %v8267
  %v8269 = vpop.xlane.xlu0 %8268
  %v8270 = vsel %vm6464, %v8185, 0.0
  %8271 = vadd.xlane.f32.xlu0 %v8270
  %v8272 = vpop.xlane.xlu0 %8271
  %v8273 = vsel %vm6464, %v8187, 0.0
  %8274 = vadd.xlane.f32.xlu0 %v8273
  %v8275 = vpop.xlane.xlu0 %8274
  %v8276 = vsel %vm6464, %v8189, 0.0
  %8277 = vadd.xlane.f32.xlu0 %v8276
  %v8278 = vpop.xlane.xlu0 %8277
  %v8279 = vsel %vm6464, %v8191, 0.0
  %8280 = vadd.xlane.f32.xlu0 %v8279
  %v8281 = vpop.xlane.xlu0 %8280
  %v8282 = vsel %vm6464, %v8193, 0.0
  %8283 = vadd.xlane.f32.xlu0 %v8282
  %v8284 = vpop.xlane.xlu0 %8283
  %v8285 = vsel %vm6464, %v8195, 0.0
  %8286 = vadd.xlane.f32.xlu0 %v8285
  %v8287 = vpop.xlane.xlu0 %8286
  %v8288 = vsel %vm6464, %v8197, 0.0
  %8289 = vadd.xlane.f32.xlu0 %v8288
  %v8290 = vpop.xlane.xlu0 %8289
  %v8291 = vsel %vm6464, %v8199, 0.0
  %8292 = vadd.xlane.f32.xlu0 %v8291
  %v8293 = vpop.xlane.xlu0 %8292
  %v8294 = vsel %vm6464, %v8201, 0.0
  %8295 = vadd.xlane.f32.xlu0 %v8294
  %v8296 = vpop.xlane.xlu0 %8295
  %v8297 = vsel %vm6464, %v8203, 0.0
  %8298 = vadd.xlane.f32.xlu0 %v8297
  %v8299 = vpop.xlane.xlu0 %8298
  %v8300 = vrcp.pop %v8206
  %v8301 = vrcp.pop %v8209
  %v8302 = vrcp.pop %v8212
  %v8303 = vrcp.pop %v8215
  %v8304 = vrcp.pop %v8218
  %v8305 = vrcp.pop %v8221
  %v8306 = vrcp.pop %v8224
  %v8307 = vrcp.pop %v8227
  %v8308 = vrcp.pop %v8230
  %v8309 = vrcp.pop %v8233
  %v8310 = vrcp.pop %v8236
  %v8311 = vrcp.pop %v8239
  %v8312 = vrcp.pop %v8242
  %v8313 = vrcp.pop %v8245
  %v8314 = vrcp.pop %v8248
  %v8315 = vrcp.pop %v8251
  %v8316 = vrcp.pop %v8254
  %v8317 = vrcp.pop %v8257
  %v8318 = vrcp.pop %v8260
  %v8319 = vrcp.pop %v8263
  %v8320 = vrcp.pop %v8266
  %v8321 = vrcp.pop %v8269
  %v8322 = vrcp.pop %v8272
  %v8323 = vrcp.pop %v8275
  %v8324 = vrcp.pop %v8278
  %v8325 = vrcp.pop %v8281
  %v8326 = vrcp.pop %v8284
  %v8327 = vrcp.pop %v8287
  %v8328 = vrcp.pop %v8290
  %v8329 = vrcp.pop %v8293
  %v8330 = vrcp.pop %v8296
  %v8331 = vrcp.pop %v8299
  %v8332 = vmul.f32 %v8141, %v8300
  %v8333 = vmul.f32 %v8143, %v8301
  %v8334 = vmul.f32 %v8145, %v8302
  %v8335 = vmul.f32 %v8147, %v8303
  %v8336 = vmul.f32 %v8149, %v8304
  %v8337 = vmul.f32 %v8151, %v8305
  %v8338 = vmul.f32 %v8153, %v8306
  %v8339 = vmul.f32 %v8155, %v8307
  %v8340 = vmul.f32 %v8157, %v8308
  %v8341 = vmul.f32 %v8159, %v8309
  %v8342 = vmul.f32 %v8161, %v8310
  %v8343 = vmul.f32 %v8163, %v8311
  %v8344 = vmul.f32 %v8165, %v8312
  %v8345 = vmul.f32 %v8167, %v8313
  %v8346 = vmul.f32 %v8169, %v8314
  %v8347 = vmul.f32 %v8171, %v8315
  %v8348 = vmul.f32 %v8173, %v8316
  %v8349 = vmul.f32 %v8175, %v8317
  %v8350 = vmul.f32 %v8177, %v8318
  %v8351 = vmul.f32 %v8179, %v8319
  %v8352 = vmul.f32 %v8181, %v8320
  %v8353 = vmul.f32 %v8183, %v8321
  %v8354 = vmul.f32 %v8185, %v8322
  %v8355 = vmul.f32 %v8187, %v8323
  %v8356 = vmul.f32 %v8189, %v8324
  %v8357 = vmul.f32 %v8191, %v8325
  %v8358 = vmul.f32 %v8193, %v8326
  %v8359 = vmul.f32 %v8195, %v8327
  %v8360 = vmul.f32 %v8197, %v8328
  %v8361 = vmul.f32 %v8199, %v8329
  %v8362 = vmul.f32 %v8201, %v8330
  %v8363 = vmul.f32 %v8203, %v8331
  %v8364 = vpack.c.bf16 %v8332, %v8332
  %v8365 = vpack.c.bf16 %v8333, %v8333
  %v8366 = vpack.c.bf16 %v8334, %v8334
  %v8367 = vpack.c.bf16 %v8335, %v8335
  %v8368 = vpack.c.bf16 %v8336, %v8336
  %v8369 = vpack.c.bf16 %v8337, %v8337
  %v8370 = vpack.c.bf16 %v8338, %v8338
  %v8371 = vpack.c.bf16 %v8339, %v8339
  %v8372 = vpack.c.bf16 %v8340, %v8340
  %v8373 = vpack.c.bf16 %v8341, %v8341
  %v8374 = vpack.c.bf16 %v8342, %v8342
  %v8375 = vpack.c.bf16 %v8343, %v8343
  %v8376 = vpack.c.bf16 %v8344, %v8344
  %v8377 = vpack.c.bf16 %v8345, %v8345
  %v8378 = vpack.c.bf16 %v8346, %v8346
  %v8379 = vpack.c.bf16 %v8347, %v8347
  %v8380 = vpack.c.bf16 %v8348, %v8348
  %v8381 = vpack.c.bf16 %v8349, %v8349
  %v8382 = vpack.c.bf16 %v8350, %v8350
  %v8383 = vpack.c.bf16 %v8351, %v8351
  %v8384 = vpack.c.bf16 %v8352, %v8352
  %v8385 = vpack.c.bf16 %v8353, %v8353
  %v8386 = vpack.c.bf16 %v8354, %v8354
  %v8387 = vpack.c.bf16 %v8355, %v8355
  %v8388 = vpack.c.bf16 %v8356, %v8356
  %v8389 = vpack.c.bf16 %v8357, %v8357
  %v8390 = vpack.c.bf16 %v8358, %v8358
  %v8391 = vpack.c.bf16 %v8359, %v8359
  %v8392 = vpack.c.bf16 %v8360, %v8360
  %v8393 = vpack.c.bf16 %v8361, %v8361
  %v8394 = vpack.c.bf16 %v8362, %v8362
  %v8395 = vpack.c.bf16 %v8363, %v8363
  %v8397 = vsel %vm6464, %v8364, 0
  %v8400 = vsel %vm6468, %v6432, 0
  %8402 = vmatprep.subr.bf16.mxu0 0
  %8403 = vmatpush1.bf16.msra.mxu0 %v8400
  %8404 = vmatprep.subr.bf16.mxu0 0
  %8405 = vmatpush1.bf16.msra.mxu0 0
  %8406 = vmatprep.subr.bf16.mxu0 0
  %8407 = vmatpush1.bf16.msra.mxu0 0
  %8408 = vmatprep.subr.bf16.mxu0 0
  %8409 = vmatpush1.bf16.msra.mxu0 0
  %8410 = vmatprep.subr.bf16.mxu0 0
  %8411 = vmatpush1.bf16.msra.mxu0 0
  %8412 = vmatprep.subr.bf16.mxu0 0
  %8413 = vmatpush1.bf16.msra.mxu0 0
  %8414 = vmatprep.subr.bf16.mxu0 0
  %8415 = vmatpush1.bf16.msra.mxu0 0
  %8416 = vmatprep.subr.bf16.mxu0 0
  %8417 = vmatpush1.bf16.msra.mxu0 0
  %8418 = vmatprep.subr.bf16.mxu0 0
  %8419 = vmatpush1.bf16.msra.mxu0 0
  %8420 = vmatprep.subr.bf16.mxu0 0
  %8421 = vmatpush1.bf16.msra.mxu0 0
  %8422 = vmatprep.subr.bf16.mxu0 0
  %8423 = vmatpush1.bf16.msra.mxu0 0
  %8424 = vmatprep.subr.bf16.mxu0 0
  %8425 = vmatpush1.bf16.msra.mxu0 0
  %8426 = vmatprep.subr.bf16.mxu0 0
  %8427 = vmatpush1.bf16.msra.mxu0 0
  %8428 = vmatprep.subr.bf16.mxu0 0
  %8429 = vmatpush1.bf16.msra.mxu0 0
  %8430 = vmatprep.subr.bf16.mxu0 0
  %8431 = vmatpush1.bf16.msra.mxu0 0
  %8432 = vmatprep.subr.bf16.mxu0 0
  %8433 = vmatpush1.bf16.msra.mxu0 0
  %8434 = vmatprep.mubr.bf16.mxu0 0
  %8435 = vmatmul.mubr.bf16.gmra.mrb[0].mxu0 %v8397
  %v8436 = vpop.f32.mrb[0].mxu0
  %v8437 = vadd.f32 0.0, %v8436
  %v8438 = vpop.f32.mrb[0].mxu0
  %v8439 = vpop.f32.mrb[0].mxu0
  %v8440 = vpop.f32.mrb[0].mxu0
  %8441 = vdwg.mxu0
  %v8443 = vsel %vm6464, %v8365, 0
  %v8446 = vsel %vm6468, %v6433, 0
  %8448 = vmatprep.subr.bf16.mxu0 0
  %8449 = vmatpush1.bf16.msra.mxu0 %v8446
  %8450 = vmatprep.subr.bf16.mxu0 0
  %8451 = vmatpush1.bf16.msra.mxu0 0
  %8452 = vmatprep.subr.bf16.mxu0 0
  %8453 = vmatpush1.bf16.msra.mxu0 0
  %8454 = vmatprep.subr.bf16.mxu0 0
  %8455 = vmatpush1.bf16.msra.mxu0 0
  %8456 = vmatprep.subr.bf16.mxu0 0
  %8457 = vmatpush1.bf16.msra.mxu0 0
  %8458 = vmatprep.subr.bf16.mxu0 0
  %8459 = vmatpush1.bf16.msra.mxu0 0
  %8460 = vmatprep.subr.bf16.mxu0 0
  %8461 = vmatpush1.bf16.msra.mxu0 0
  %8462 = vmatprep.subr.bf16.mxu0 0
  %8463 = vmatpush1.bf16.msra.mxu0 0
  %8464 = vmatprep.subr.bf16.mxu0 0
  %8465 = vmatpush1.bf16.msra.mxu0 0
  %8466 = vmatprep.subr.bf16.mxu0 0
  %8467 = vmatpush1.bf16.msra.mxu0 0
  %8468 = vmatprep.subr.bf16.mxu0 0
  %8469 = vmatpush1.bf16.msra.mxu0 0
  %8470 = vmatprep.subr.bf16.mxu0 0
  %8471 = vmatpush1.bf16.msra.mxu0 0
  %8472 = vmatprep.subr.bf16.mxu0 0
  %8473 = vmatpush1.bf16.msra.mxu0 0
  %8474 = vmatprep.subr.bf16.mxu0 0
  %8475 = vmatpush1.bf16.msra.mxu0 0
  %8476 = vmatprep.subr.bf16.mxu0 0
  %8477 = vmatpush1.bf16.msra.mxu0 0
  %8478 = vmatprep.subr.bf16.mxu0 0
  %8479 = vmatpush1.bf16.msra.mxu0 0
  %8480 = vmatprep.mubr.bf16.mxu0 0
  %8481 = vmatmul.mubr.bf16.gmra.mrb[0].mxu0 %v8443
  %v8482 = vpop.f32.mrb[0].mxu0
  %v8483 = vadd.f32 0.0, %v8482
  %v8484 = vpop.f32.mrb[0].mxu0
  %v8485 = vpop.f32.mrb[0].mxu0
  %v8486 = vpop.f32.mrb[0].mxu0
  %8487 = vdwg.mxu0
  %v8489 = vsel %vm6464, %v8366, 0
  %v8492 = vsel %vm6468, %v6434, 0
  %8494 = vmatprep.subr.bf16.mxu0 0
  %8495 = vmatpush1.bf16.msra.mxu0 %v8492
  %8496 = vmatprep.subr.bf16.mxu0 0
  %8497 = vmatpush1.bf16.msra.mxu0 0
  %8498 = vmatprep.subr.bf16.mxu0 0
  %8499 = vmatpush1.bf16.msra.mxu0 0
  %8500 = vmatprep.subr.bf16.mxu0 0
  %8501 = vmatpush1.bf16.msra.mxu0 0
  %8502 = vmatprep.subr.bf16.mxu0 0
  %8503 = vmatpush1.bf16.msra.mxu0 0
  %8504 = vmatprep.subr.bf16.mxu0 0
  %8505 = vmatpush1.bf16.msra.mxu0 0
  %8506 = vmatprep.subr.bf16.mxu0 0
  %8507 = vmatpush1.bf16.msra.mxu0 0
  %8508 = vmatprep.subr.bf16.mxu0 0
  %8509 = vmatpush1.bf16.msra.mxu0 0
  %8510 = vmatprep.subr.bf16.mxu0 0
  %8511 = vmatpush1.bf16.msra.mxu0 0
  %8512 = vmatprep.subr.bf16.mxu0 0
  %8513 = vmatpush1.bf16.msra.mxu0 0
  %8514 = vmatprep.subr.bf16.mxu0 0
  %8515 = vmatpush1.bf16.msra.mxu0 0
  %8516 = vmatprep.subr.bf16.mxu0 0
  %8517 = vmatpush1.bf16.msra.mxu0 0
  %8518 = vmatprep.subr.bf16.mxu0 0
  %8519 = vmatpush1.bf16.msra.mxu0 0
  %8520 = vmatprep.subr.bf16.mxu0 0
  %8521 = vmatpush1.bf16.msra.mxu0 0
  %8522 = vmatprep.subr.bf16.mxu0 0
  %8523 = vmatpush1.bf16.msra.mxu0 0
  %8524 = vmatprep.subr.bf16.mxu0 0
  %8525 = vmatpush1.bf16.msra.mxu0 0
  %8526 = vmatprep.mubr.bf16.mxu0 0
  %8527 = vmatmul.mubr.bf16.gmra.mrb[0].mxu0 %v8489
  %v8528 = vpop.f32.mrb[0].mxu0
  %v8529 = vadd.f32 0.0, %v8528
  %v8530 = vpop.f32.mrb[0].mxu0
  %v8531 = vpop.f32.mrb[0].mxu0
  %v8532 = vpop.f32.mrb[0].mxu0
  %8533 = vdwg.mxu0
  %v8535 = vsel %vm6464, %v8367, 0
  %v8538 = vsel %vm6468, %v6435, 0
  %8540 = vmatprep.subr.bf16.mxu0 0
  %8541 = vmatpush1.bf16.msra.mxu0 %v8538
  %8542 = vmatprep.subr.bf16.mxu0 0
  %8543 = vmatpush1.bf16.msra.mxu0 0
  %8544 = vmatprep.subr.bf16.mxu0 0
  %8545 = vmatpush1.bf16.msra.mxu0 0
  %8546 = vmatprep.subr.bf16.mxu0 0
  %8547 = vmatpush1.bf16.msra.mxu0 0
  %8548 = vmatprep.subr.bf16.mxu0 0
  %8549 = vmatpush1.bf16.msra.mxu0 0
  %8550 = vmatprep.subr.bf16.mxu0 0
  %8551 = vmatpush1.bf16.msra.mxu0 0
  %8552 = vmatprep.subr.bf16.mxu0 0
  %8553 = vmatpush1.bf16.msra.mxu0 0
  %8554 = vmatprep.subr.bf16.mxu0 0
  %8555 = vmatpush1.bf16.msra.mxu0 0
  %8556 = vmatprep.subr.bf16.mxu0 0
  %8557 = vmatpush1.bf16.msra.mxu0 0
  %8558 = vmatprep.subr.bf16.mxu0 0
  %8559 = vmatpush1.bf16.msra.mxu0 0
  %8560 = vmatprep.subr.bf16.mxu0 0
  %8561 = vmatpush1.bf16.msra.mxu0 0
  %8562 = vmatprep.subr.bf16.mxu0 0
  %8563 = vmatpush1.bf16.msra.mxu0 0
  %8564 = vmatprep.subr.bf16.mxu0 0
  %8565 = vmatpush1.bf16.msra.mxu0 0
  %8566 = vmatprep.subr.bf16.mxu0 0
  %8567 = vmatpush1.bf16.msra.mxu0 0
  %8568 = vmatprep.subr.bf16.mxu0 0
  %8569 = vmatpush1.bf16.msra.mxu0 0
  %8570 = vmatprep.subr.bf16.mxu0 0
  %8571 = vmatpush1.bf16.msra.mxu0 0
  %8572 = vmatprep.mubr.bf16.mxu0 0
  %8573 = vmatmul.mubr.bf16.gmra.mrb[0].mxu0 %v8535
  %v8574 = vpop.f32.mrb[0].mxu0
  %v8575 = vadd.f32 0.0, %v8574
  %v8576 = vpop.f32.mrb[0].mxu0
  %v8577 = vpop.f32.mrb[0].mxu0
  %v8578 = vpop.f32.mrb[0].mxu0
  %8579 = vdwg.mxu0
  %v8581 = vsel %vm6464, %v8368, 0
  %v8584 = vsel %vm6468, %v6436, 0
  %8586 = vmatprep.subr.bf16.mxu0 0
  %8587 = vmatpush1.bf16.msra.mxu0 %v8584
  %8588 = vmatprep.subr.bf16.mxu0 0
  %8589 = vmatpush1.bf16.msra.mxu0 0
  %8590 = vmatprep.subr.bf16.mxu0 0
  %8591 = vmatpush1.bf16.msra.mxu0 0
  %8592 = vmatprep.subr.bf16.mxu0 0
  %8593 = vmatpush1.bf16.msra.mxu0 0
  %8594 = vmatprep.subr.bf16.mxu0 0
  %8595 = vmatpush1.bf16.msra.mxu0 0
  %8596 = vmatprep.subr.bf16.mxu0 0
  %8597 = vmatpush1.bf16.msra.mxu0 0
  %8598 = vmatprep.subr.bf16.mxu0 0
  %8599 = vmatpush1.bf16.msra.mxu0 0
  %8600 = vmatprep.subr.bf16.mxu0 0
  %8601 = vmatpush1.bf16.msra.mxu0 0
  %8602 = vmatprep.subr.bf16.mxu0 0
  %8603 = vmatpush1.bf16.msra.mxu0 0
  %8604 = vmatprep.subr.bf16.mxu0 0
  %8605 = vmatpush1.bf16.msra.mxu0 0
  %8606 = vmatprep.subr.bf16.mxu0 0
  %8607 = vmatpush1.bf16.msra.mxu0 0
  %8608 = vmatprep.subr.bf16.mxu0 0
  %8609 = vmatpush1.bf16.msra.mxu0 0
  %8610 = vmatprep.subr.bf16.mxu0 0
  %8611 = vmatpush1.bf16.msra.mxu0 0
  %8612 = vmatprep.subr.bf16.mxu0 0
  %8613 = vmatpush1.bf16.msra.mxu0 0
  %8614 = vmatprep.subr.bf16.mxu0 0
  %8615 = vmatpush1.bf16.msra.mxu0 0
  %8616 = vmatprep.subr.bf16.mxu0 0
  %8617 = vmatpush1.bf16.msra.mxu0 0
  %8618 = vmatprep.mubr.bf16.mxu0 0
  %8619 = vmatmul.mubr.bf16.gmra.mrb[0].mxu0 %v8581
  %v8620 = vpop.f32.mrb[0].mxu0
  %v8621 = vadd.f32 0.0, %v8620
  %v8622 = vpop.f32.mrb[0].mxu0
  %v8623 = vpop.f32.mrb[0].mxu0
  %v8624 = vpop.f32.mrb[0].mxu0
  %8625 = vdwg.mxu0
  %v8627 = vsel %vm6464, %v8369, 0
  %v8630 = vsel %vm6468, %v6437, 0
  %8632 = vmatprep.subr.bf16.mxu0 0
  %8633 = vmatpush1.bf16.msra.mxu0 %v8630
  %8634 = vmatprep.subr.bf16.mxu0 0
  %8635 = vmatpush1.bf16.msra.mxu0 0
  %8636 = vmatprep.subr.bf16.mxu0 0
  %8637 = vmatpush1.bf16.msra.mxu0 0
  %8638 = vmatprep.subr.bf16.mxu0 0
  %8639 = vmatpush1.bf16.msra.mxu0 0
  %8640 = vmatprep.subr.bf16.mxu0 0
  %8641 = vmatpush1.bf16.msra.mxu0 0
  %8642 = vmatprep.subr.bf16.mxu0 0
  %8643 = vmatpush1.bf16.msra.mxu0 0
  %8644 = vmatprep.subr.bf16.mxu0 0
  %8645 = vmatpush1.bf16.msra.mxu0 0
  %8646 = vmatprep.subr.bf16.mxu0 0
  %8647 = vmatpush1.bf16.msra.mxu0 0
  %8648 = vmatprep.subr.bf16.mxu0 0
  %8649 = vmatpush1.bf16.msra.mxu0 0
  %8650 = vmatprep.subr.bf16.mxu0 0
  %8651 = vmatpush1.bf16.msra.mxu0 0
  %8652 = vmatprep.subr.bf16.mxu0 0
  %8653 = vmatpush1.bf16.msra.mxu0 0
  %8654 = vmatprep.subr.bf16.mxu0 0
  %8655 = vmatpush1.bf16.msra.mxu0 0
  %8656 = vmatprep.subr.bf16.mxu0 0
  %8657 = vmatpush1.bf16.msra.mxu0 0
  %8658 = vmatprep.subr.bf16.mxu0 0
  %8659 = vmatpush1.bf16.msra.mxu0 0
  %8660 = vmatprep.subr.bf16.mxu0 0
  %8661 = vmatpush1.bf16.msra.mxu0 0
  %8662 = vmatprep.subr.bf16.mxu0 0
  %8663 = vmatpush1.bf16.msra.mxu0 0
  %8664 = vmatprep.mubr.bf16.mxu0 0
  %8665 = vmatmul.mubr.bf16.gmra.mrb[0].mxu0 %v8627
  %v8666 = vpop.f32.mrb[0].mxu0
  %v8667 = vadd.f32 0.0, %v8666
  %v8668 = vpop.f32.mrb[0].mxu0
  %v8669 = vpop.f32.mrb[0].mxu0
  %v8670 = vpop.f32.mrb[0].mxu0
  %8671 = vdwg.mxu0
  %v8673 = vsel %vm6464, %v8370, 0
  %v8676 = vsel %vm6468, %v6438, 0
  %8678 = vmatprep.subr.bf16.mxu0 0
  %8679 = vmatpush1.bf16.msra.mxu0 %v8676
  %8680 = vmatprep.subr.bf16.mxu0 0
  %8681 = vmatpush1.bf16.msra.mxu0 0
  %8682 = vmatprep.subr.bf16.mxu0 0
  %8683 = vmatpush1.bf16.msra.mxu0 0
  %8684 = vmatprep.subr.bf16.mxu0 0
  %8685 = vmatpush1.bf16.msra.mxu0 0
  %8686 = vmatprep.subr.bf16.mxu0 0
  %8687 = vmatpush1.bf16.msra.mxu0 0
  %8688 = vmatprep.subr.bf16.mxu0 0
  %8689 = vmatpush1.bf16.msra.mxu0 0
  %8690 = vmatprep.subr.bf16.mxu0 0
  %8691 = vmatpush1.bf16.msra.mxu0 0
  %8692 = vmatprep.subr.bf16.mxu0 0
  %8693 = vmatpush1.bf16.msra.mxu0 0
  %8694 = vmatprep.subr.bf16.mxu0 0
  %8695 = vmatpush1.bf16.msra.mxu0 0
  %8696 = vmatprep.subr.bf16.mxu0 0
  %8697 = vmatpush1.bf16.msra.mxu0 0
  %8698 = vmatprep.subr.bf16.mxu0 0
  %8699 = vmatpush1.bf16.msra.mxu0 0
  %8700 = vmatprep.subr.bf16.mxu0 0
  %8701 = vmatpush1.bf16.msra.mxu0 0
  %8702 = vmatprep.subr.bf16.mxu0 0
  %8703 = vmatpush1.bf16.msra.mxu0 0
  %8704 = vmatprep.subr.bf16.mxu0 0
  %8705 = vmatpush1.bf16.msra.mxu0 0
  %8706 = vmatprep.subr.bf16.mxu0 0
  %8707 = vmatpush1.bf16.msra.mxu0 0
  %8708 = vmatprep.subr.bf16.mxu0 0
  %8709 = vmatpush1.bf16.msra.mxu0 0
  %8710 = vmatprep.mubr.bf16.mxu0 0
  %8711 = vmatmul.mubr.bf16.gmra.mrb[0].mxu0 %v8673
  %v8712 = vpop.f32.mrb[0].mxu0
  %v8713 = vadd.f32 0.0, %v8712
  %v8714 = vpop.f32.mrb[0].mxu0
  %v8715 = vpop.f32.mrb[0].mxu0
  %v8716 = vpop.f32.mrb[0].mxu0
  %8717 = vdwg.mxu0
  %v8719 = vsel %vm6464, %v8371, 0
  %v8722 = vsel %vm6468, %v6439, 0
  %8724 = vmatprep.subr.bf16.mxu0 0
  %8725 = vmatpush1.bf16.msra.mxu0 %v8722
  %8726 = vmatprep.subr.bf16.mxu0 0
  %8727 = vmatpush1.bf16.msra.mxu0 0
  %8728 = vmatprep.subr.bf16.mxu0 0
  %8729 = vmatpush1.bf16.msra.mxu0 0
  %8730 = vmatprep.subr.bf16.mxu0 0
  %8731 = vmatpush1.bf16.msra.mxu0 0
  %8732 = vmatprep.subr.bf16.mxu0 0
  %8733 = vmatpush1.bf16.msra.mxu0 0
  %8734 = vmatprep.subr.bf16.mxu0 0
  %8735 = vmatpush1.bf16.msra.mxu0 0
  %8736 = vmatprep.subr.bf16.mxu0 0
  %8737 = vmatpush1.bf16.msra.mxu0 0
  %8738 = vmatprep.subr.bf16.mxu0 0
  %8739 = vmatpush1.bf16.msra.mxu0 0
  %8740 = vmatprep.subr.bf16.mxu0 0
  %8741 = vmatpush1.bf16.msra.mxu0 0
  %8742 = vmatprep.subr.bf16.mxu0 0
  %8743 = vmatpush1.bf16.msra.mxu0 0
  %8744 = vmatprep.subr.bf16.mxu0 0
  %8745 = vmatpush1.bf16.msra.mxu0 0
  %8746 = vmatprep.subr.bf16.mxu0 0
  %8747 = vmatpush1.bf16.msra.mxu0 0
  %8748 = vmatprep.subr.bf16.mxu0 0
  %8749 = vmatpush1.bf16.msra.mxu0 0
  %8750 = vmatprep.subr.bf16.mxu0 0
  %8751 = vmatpush1.bf16.msra.mxu0 0
  %8752 = vmatprep.subr.bf16.mxu0 0
  %8753 = vmatpush1.bf16.msra.mxu0 0
  %8754 = vmatprep.subr.bf16.mxu0 0
  %8755 = vmatpush1.bf16.msra.mxu0 0
  %8756 = vmatprep.mubr.bf16.mxu0 0
  %8757 = vmatmul.mubr.bf16.gmra.mrb[0].mxu0 %v8719
  %v8758 = vpop.f32.mrb[0].mxu0
  %v8759 = vadd.f32 0.0, %v8758
  %v8760 = vpop.f32.mrb[0].mxu0
  %v8761 = vpop.f32.mrb[0].mxu0
  %v8762 = vpop.f32.mrb[0].mxu0
  %8763 = vdwg.mxu0
  %v8765 = vsel %vm6464, %v8372, 0
  %v8768 = vsel %vm6468, %v6440, 0
  %8770 = vmatprep.subr.bf16.mxu0 0
  %8771 = vmatpush1.bf16.msra.mxu0 %v8768
  %8772 = vmatprep.subr.bf16.mxu0 0
  %8773 = vmatpush1.bf16.msra.mxu0 0
  %8774 = vmatprep.subr.bf16.mxu0 0
  %8775 = vmatpush1.bf16.msra.mxu0 0
  %8776 = vmatprep.subr.bf16.mxu0 0
  %8777 = vmatpush1.bf16.msra.mxu0 0
  %8778 = vmatprep.subr.bf16.mxu0 0
  %8779 = vmatpush1.bf16.msra.mxu0 0
  %8780 = vmatprep.subr.bf16.mxu0 0
  %8781 = vmatpush1.bf16.msra.mxu0 0
  %8782 = vmatprep.subr.bf16.mxu0 0
  %8783 = vmatpush1.bf16.msra.mxu0 0
  %8784 = vmatprep.subr.bf16.mxu0 0
  %8785 = vmatpush1.bf16.msra.mxu0 0
  %8786 = vmatprep.subr.bf16.mxu0 0
  %8787 = vmatpush1.bf16.msra.mxu0 0
  %8788 = vmatprep.subr.bf16.mxu0 0
  %8789 = vmatpush1.bf16.msra.mxu0 0
  %8790 = vmatprep.subr.bf16.mxu0 0
  %8791 = vmatpush1.bf16.msra.mxu0 0
  %8792 = vmatprep.subr.bf16.mxu0 0
  %8793 = vmatpush1.bf16.msra.mxu0 0
  %8794 = vmatprep.subr.bf16.mxu0 0
  %8795 = vmatpush1.bf16.msra.mxu0 0
  %8796 = vmatprep.subr.bf16.mxu0 0
  %8797 = vmatpush1.bf16.msra.mxu0 0
  %8798 = vmatprep.subr.bf16.mxu0 0
  %8799 = vmatpush1.bf16.msra.mxu0 0
  %8800 = vmatprep.subr.bf16.mxu0 0
  %8801 = vmatpush1.bf16.msra.mxu0 0
  %8802 = vmatprep.mubr.bf16.mxu0 0
  %8803 = vmatmul.mubr.bf16.gmra.mrb[0].mxu0 %v8765
  %v8804 = vpop.f32.mrb[0].mxu0
  %v8805 = vadd.f32 0.0, %v8804
  %v8806 = vpop.f32.mrb[0].mxu0
  %v8807 = vpop.f32.mrb[0].mxu0
  %v8808 = vpop.f32.mrb[0].mxu0
  %8809 = vdwg.mxu0
  %v8811 = vsel %vm6464, %v8373, 0
  %v8814 = vsel %vm6468, %v6441, 0
  %8816 = vmatprep.subr.bf16.mxu0 0
  %8817 = vmatpush1.bf16.msra.mxu0 %v8814
  %8818 = vmatprep.subr.bf16.mxu0 0
  %8819 = vmatpush1.bf16.msra.mxu0 0
  %8820 = vmatprep.subr.bf16.mxu0 0
  %8821 = vmatpush1.bf16.msra.mxu0 0
  %8822 = vmatprep.subr.bf16.mxu0 0
  %8823 = vmatpush1.bf16.msra.mxu0 0
  %8824 = vmatprep.subr.bf16.mxu0 0
  %8825 = vmatpush1.bf16.msra.mxu0 0
  %8826 = vmatprep.subr.bf16.mxu0 0
  %8827 = vmatpush1.bf16.msra.mxu0 0
  %8828 = vmatprep.subr.bf16.mxu0 0
  %8829 = vmatpush1.bf16.msra.mxu0 0
  %8830 = vmatprep.subr.bf16.mxu0 0
  %8831 = vmatpush1.bf16.msra.mxu0 0
  %8832 = vmatprep.subr.bf16.mxu0 0
  %8833 = vmatpush1.bf16.msra.mxu0 0
  %8834 = vmatprep.subr.bf16.mxu0 0
  %8835 = vmatpush1.bf16.msra.mxu0 0
  %8836 = vmatprep.subr.bf16.mxu0 0
  %8837 = vmatpush1.bf16.msra.mxu0 0
  %8838 = vmatprep.subr.bf16.mxu0 0
  %8839 = vmatpush1.bf16.msra.mxu0 0
  %8840 = vmatprep.subr.bf16.mxu0 0
  %8841 = vmatpush1.bf16.msra.mxu0 0
  %8842 = vmatprep.subr.bf16.mxu0 0
  %8843 = vmatpush1.bf16.msra.mxu0 0
  %8844 = vmatprep.subr.bf16.mxu0 0
  %8845 = vmatpush1.bf16.msra.mxu0 0
  %8846 = vmatprep.subr.bf16.mxu0 0
  %8847 = vmatpush1.bf16.msra.mxu0 0
  %8848 = vmatprep.mubr.bf16.mxu0 0
  %8849 = vmatmul.mubr.bf16.gmra.mrb[0].mxu0 %v8811
  %v8850 = vpop.f32.mrb[0].mxu0
  %v8851 = vadd.f32 0.0, %v8850
  %v8852 = vpop.f32.mrb[0].mxu0
  %v8853 = vpop.f32.mrb[0].mxu0
  %v8854 = vpop.f32.mrb[0].mxu0
  %8855 = vdwg.mxu0
  %v8857 = vsel %vm6464, %v8374, 0
  %v8860 = vsel %vm6468, %v6442, 0
  %8862 = vmatprep.subr.bf16.mxu0 0
  %8863 = vmatpush1.bf16.msra.mxu0 %v8860
  %8864 = vmatprep.subr.bf16.mxu0 0
  %8865 = vmatpush1.bf16.msra.mxu0 0
  %8866 = vmatprep.subr.bf16.mxu0 0
  %8867 = vmatpush1.bf16.msra.mxu0 0
  %8868 = vmatprep.subr.bf16.mxu0 0
  %8869 = vmatpush1.bf16.msra.mxu0 0
  %8870 = vmatprep.subr.bf16.mxu0 0
  %8871 = vmatpush1.bf16.msra.mxu0 0
  %8872 = vmatprep.subr.bf16.mxu0 0
  %8873 = vmatpush1.bf16.msra.mxu0 0
  %8874 = vmatprep.subr.bf16.mxu0 0
  %8875 = vmatpush1.bf16.msra.mxu0 0
  %8876 = vmatprep.subr.bf16.mxu0 0
  %8877 = vmatpush1.bf16.msra.mxu0 0
  %8878 = vmatprep.subr.bf16.mxu0 0
  %8879 = vmatpush1.bf16.msra.mxu0 0
  %8880 = vmatprep.subr.bf16.mxu0 0
  %8881 = vmatpush1.bf16.msra.mxu0 0
  %8882 = vmatprep.subr.bf16.mxu0 0
  %8883 = vmatpush1.bf16.msra.mxu0 0
  %8884 = vmatprep.subr.bf16.mxu0 0
  %8885 = vmatpush1.bf16.msra.mxu0 0
  %8886 = vmatprep.subr.bf16.mxu0 0
  %8887 = vmatpush1.bf16.msra.mxu0 0
  %8888 = vmatprep.subr.bf16.mxu0 0
  %8889 = vmatpush1.bf16.msra.mxu0 0
  %8890 = vmatprep.subr.bf16.mxu0 0
  %8891 = vmatpush1.bf16.msra.mxu0 0
  %8892 = vmatprep.subr.bf16.mxu0 0
  %8893 = vmatpush1.bf16.msra.mxu0 0
  %8894 = vmatprep.mubr.bf16.mxu0 0
  %8895 = vmatmul.mubr.bf16.gmra.mrb[0].mxu0 %v8857
  %v8896 = vpop.f32.mrb[0].mxu0
  %v8897 = vadd.f32 0.0, %v8896
  %v8898 = vpop.f32.mrb[0].mxu0
  %v8899 = vpop.f32.mrb[0].mxu0
  %v8900 = vpop.f32.mrb[0].mxu0
  %8901 = vdwg.mxu0
  %v8903 = vsel %vm6464, %v8375, 0
  %v8906 = vsel %vm6468, %v6443, 0
  %8908 = vmatprep.subr.bf16.mxu0 0
  %8909 = vmatpush1.bf16.msra.mxu0 %v8906
  %8910 = vmatprep.subr.bf16.mxu0 0
  %8911 = vmatpush1.bf16.msra.mxu0 0
  %8912 = vmatprep.subr.bf16.mxu0 0
  %8913 = vmatpush1.bf16.msra.mxu0 0
  %8914 = vmatprep.subr.bf16.mxu0 0
  %8915 = vmatpush1.bf16.msra.mxu0 0
  %8916 = vmatprep.subr.bf16.mxu0 0
  %8917 = vmatpush1.bf16.msra.mxu0 0
  %8918 = vmatprep.subr.bf16.mxu0 0
  %8919 = vmatpush1.bf16.msra.mxu0 0
  %8920 = vmatprep.subr.bf16.mxu0 0
  %8921 = vmatpush1.bf16.msra.mxu0 0
  %8922 = vmatprep.subr.bf16.mxu0 0
  %8923 = vmatpush1.bf16.msra.mxu0 0
  %8924 = vmatprep.subr.bf16.mxu0 0
  %8925 = vmatpush1.bf16.msra.mxu0 0
  %8926 = vmatprep.subr.bf16.mxu0 0
  %8927 = vmatpush1.bf16.msra.mxu0 0
  %8928 = vmatprep.subr.bf16.mxu0 0
  %8929 = vmatpush1.bf16.msra.mxu0 0
  %8930 = vmatprep.subr.bf16.mxu0 0
  %8931 = vmatpush1.bf16.msra.mxu0 0
  %8932 = vmatprep.subr.bf16.mxu0 0
  %8933 = vmatpush1.bf16.msra.mxu0 0
  %8934 = vmatprep.subr.bf16.mxu0 0
  %8935 = vmatpush1.bf16.msra.mxu0 0
  %8936 = vmatprep.subr.bf16.mxu0 0
  %8937 = vmatpush1.bf16.msra.mxu0 0
  %8938 = vmatprep.subr.bf16.mxu0 0
  %8939 = vmatpush1.bf16.msra.mxu0 0
  %8940 = vmatprep.mubr.bf16.mxu0 0
  %8941 = vmatmul.mubr.bf16.gmra.mrb[0].mxu0 %v8903
  %v8942 = vpop.f32.mrb[0].mxu0
  %v8943 = vadd.f32 0.0, %v8942
  %v8944 = vpop.f32.mrb[0].mxu0
  %v8945 = vpop.f32.mrb[0].mxu0
  %v8946 = vpop.f32.mrb[0].mxu0
  %8947 = vdwg.mxu0
  %v8949 = vsel %vm6464, %v8376, 0
  %v8952 = vsel %vm6468, %v6444, 0
  %8954 = vmatprep.subr.bf16.mxu0 0
  %8955 = vmatpush1.bf16.msra.mxu0 %v8952
  %8956 = vmatprep.subr.bf16.mxu0 0
  %8957 = vmatpush1.bf16.msra.mxu0 0
  %8958 = vmatprep.subr.bf16.mxu0 0
  %8959 = vmatpush1.bf16.msra.mxu0 0
  %8960 = vmatprep.subr.bf16.mxu0 0
  %8961 = vmatpush1.bf16.msra.mxu0 0
  %8962 = vmatprep.subr.bf16.mxu0 0
  %8963 = vmatpush1.bf16.msra.mxu0 0
  %8964 = vmatprep.subr.bf16.mxu0 0
  %8965 = vmatpush1.bf16.msra.mxu0 0
  %8966 = vmatprep.subr.bf16.mxu0 0
  %8967 = vmatpush1.bf16.msra.mxu0 0
  %8968 = vmatprep.subr.bf16.mxu0 0
  %8969 = vmatpush1.bf16.msra.mxu0 0
  %8970 = vmatprep.subr.bf16.mxu0 0
  %8971 = vmatpush1.bf16.msra.mxu0 0
  %8972 = vmatprep.subr.bf16.mxu0 0
  %8973 = vmatpush1.bf16.msra.mxu0 0
  %8974 = vmatprep.subr.bf16.mxu0 0
  %8975 = vmatpush1.bf16.msra.mxu0 0
  %8976 = vmatprep.subr.bf16.mxu0 0
  %8977 = vmatpush1.bf16.msra.mxu0 0
  %8978 = vmatprep.subr.bf16.mxu0 0
  %8979 = vmatpush1.bf16.msra.mxu0 0
  %8980 = vmatprep.subr.bf16.mxu0 0
  %8981 = vmatpush1.bf16.msra.mxu0 0
  %8982 = vmatprep.subr.bf16.mxu0 0
  %8983 = vmatpush1.bf16.msra.mxu0 0
  %8984 = vmatprep.subr.bf16.mxu0 0
  %8985 = vmatpush1.bf16.msra.mxu0 0
  %8986 = vmatprep.mubr.bf16.mxu0 0
  %8987 = vmatmul.mubr.bf16.gmra.mrb[0].mxu0 %v8949
  %v8988 = vpop.f32.mrb[0].mxu0
  %v8989 = vadd.f32 0.0, %v8988
  %v8990 = vpop.f32.mrb[0].mxu0
  %v8991 = vpop.f32.mrb[0].mxu0
  %v8992 = vpop.f32.mrb[0].mxu0
  %8993 = vdwg.mxu0
  %v8995 = vsel %vm6464, %v8377, 0
  %v8998 = vsel %vm6468, %v6445, 0
  %9000 = vmatprep.subr.bf16.mxu0 0
  %9001 = vmatpush1.bf16.msra.mxu0 %v8998
  %9002 = vmatprep.subr.bf16.mxu0 0
  %9003 = vmatpush1.bf16.msra.mxu0 0
  %9004 = vmatprep.subr.bf16.mxu0 0
  %9005 = vmatpush1.bf16.msra.mxu0 0
  %9006 = vmatprep.subr.bf16.mxu0 0
  %9007 = vmatpush1.bf16.msra.mxu0 0
  %9008 = vmatprep.subr.bf16.mxu0 0
  %9009 = vmatpush1.bf16.msra.mxu0 0
  %9010 = vmatprep.subr.bf16.mxu0 0
  %9011 = vmatpush1.bf16.msra.mxu0 0
  %9012 = vmatprep.subr.bf16.mxu0 0
  %9013 = vmatpush1.bf16.msra.mxu0 0
  %9014 = vmatprep.subr.bf16.mxu0 0
  %9015 = vmatpush1.bf16.msra.mxu0 0
  %9016 = vmatprep.subr.bf16.mxu0 0
  %9017 = vmatpush1.bf16.msra.mxu0 0
  %9018 = vmatprep.subr.bf16.mxu0 0
  %9019 = vmatpush1.bf16.msra.mxu0 0
  %9020 = vmatprep.subr.bf16.mxu0 0
  %9021 = vmatpush1.bf16.msra.mxu0 0
  %9022 = vmatprep.subr.bf16.mxu0 0
  %9023 = vmatpush1.bf16.msra.mxu0 0
  %9024 = vmatprep.subr.bf16.mxu0 0
  %9025 = vmatpush1.bf16.msra.mxu0 0
  %9026 = vmatprep.subr.bf16.mxu0 0
  %9027 = vmatpush1.bf16.msra.mxu0 0
  %9028 = vmatprep.subr.bf16.mxu0 0
  %9029 = vmatpush1.bf16.msra.mxu0 0
  %9030 = vmatprep.subr.bf16.mxu0 0
  %9031 = vmatpush1.bf16.msra.mxu0 0
  %9032 = vmatprep.mubr.bf16.mxu0 0
  %9033 = vmatmul.mubr.bf16.gmra.mrb[0].mxu0 %v8995
  %v9034 = vpop.f32.mrb[0].mxu0
  %v9035 = vadd.f32 0.0, %v9034
  %v9036 = vpop.f32.mrb[0].mxu0
  %v9037 = vpop.f32.mrb[0].mxu0
  %v9038 = vpop.f32.mrb[0].mxu0
  %9039 = vdwg.mxu0
  %v9041 = vsel %vm6464, %v8378, 0
  %v9044 = vsel %vm6468, %v6446, 0
  %9046 = vmatprep.subr.bf16.mxu0 0
  %9047 = vmatpush1.bf16.msra.mxu0 %v9044
  %9048 = vmatprep.subr.bf16.mxu0 0
  %9049 = vmatpush1.bf16.msra.mxu0 0
  %9050 = vmatprep.subr.bf16.mxu0 0
  %9051 = vmatpush1.bf16.msra.mxu0 0
  %9052 = vmatprep.subr.bf16.mxu0 0
  %9053 = vmatpush1.bf16.msra.mxu0 0
  %9054 = vmatprep.subr.bf16.mxu0 0
  %9055 = vmatpush1.bf16.msra.mxu0 0
  %9056 = vmatprep.subr.bf16.mxu0 0
  %9057 = vmatpush1.bf16.msra.mxu0 0
  %9058 = vmatprep.subr.bf16.mxu0 0
  %9059 = vmatpush1.bf16.msra.mxu0 0
  %9060 = vmatprep.subr.bf16.mxu0 0
  %9061 = vmatpush1.bf16.msra.mxu0 0
  %9062 = vmatprep.subr.bf16.mxu0 0
  %9063 = vmatpush1.bf16.msra.mxu0 0
  %9064 = vmatprep.subr.bf16.mxu0 0
  %9065 = vmatpush1.bf16.msra.mxu0 0
  %9066 = vmatprep.subr.bf16.mxu0 0
  %9067 = vmatpush1.bf16.msra.mxu0 0
  %9068 = vmatprep.subr.bf16.mxu0 0
  %9069 = vmatpush1.bf16.msra.mxu0 0
  %9070 = vmatprep.subr.bf16.mxu0 0
  %9071 = vmatpush1.bf16.msra.mxu0 0
  %9072 = vmatprep.subr.bf16.mxu0 0
  %9073 = vmatpush1.bf16.msra.mxu0 0
  %9074 = vmatprep.subr.bf16.mxu0 0
  %9075 = vmatpush1.bf16.msra.mxu0 0
  %9076 = vmatprep.subr.bf16.mxu0 0
  %9077 = vmatpush1.bf16.msra.mxu0 0
  %9078 = vmatprep.mubr.bf16.mxu0 0
  %9079 = vmatmul.mubr.bf16.gmra.mrb[0].mxu0 %v9041
  %v9080 = vpop.f32.mrb[0].mxu0
  %v9081 = vadd.f32 0.0, %v9080
  %v9082 = vpop.f32.mrb[0].mxu0
  %v9083 = vpop.f32.mrb[0].mxu0
  %v9084 = vpop.f32.mrb[0].mxu0
  %9085 = vdwg.mxu0
  %v9087 = vsel %vm6464, %v8379, 0
  %v9090 = vsel %vm6468, %v6447, 0
  %9092 = vmatprep.subr.bf16.mxu0 0
  %9093 = vmatpush1.bf16.msra.mxu0 %v9090
  %9094 = vmatprep.subr.bf16.mxu0 0
  %9095 = vmatpush1.bf16.msra.mxu0 0
  %9096 = vmatprep.subr.bf16.mxu0 0
  %9097 = vmatpush1.bf16.msra.mxu0 0
  %9098 = vmatprep.subr.bf16.mxu0 0
  %9099 = vmatpush1.bf16.msra.mxu0 0
  %9100 = vmatprep.subr.bf16.mxu0 0
  %9101 = vmatpush1.bf16.msra.mxu0 0
  %9102 = vmatprep.subr.bf16.mxu0 0
  %9103 = vmatpush1.bf16.msra.mxu0 0
  %9104 = vmatprep.subr.bf16.mxu0 0
  %9105 = vmatpush1.bf16.msra.mxu0 0
  %9106 = vmatprep.subr.bf16.mxu0 0
  %9107 = vmatpush1.bf16.msra.mxu0 0
  %9108 = vmatprep.subr.bf16.mxu0 0
  %9109 = vmatpush1.bf16.msra.mxu0 0
  %9110 = vmatprep.subr.bf16.mxu0 0
  %9111 = vmatpush1.bf16.msra.mxu0 0
  %9112 = vmatprep.subr.bf16.mxu0 0
  %9113 = vmatpush1.bf16.msra.mxu0 0
  %9114 = vmatprep.subr.bf16.mxu0 0
  %9115 = vmatpush1.bf16.msra.mxu0 0
  %9116 = vmatprep.subr.bf16.mxu0 0
  %9117 = vmatpush1.bf16.msra.mxu0 0
  %9118 = vmatprep.subr.bf16.mxu0 0
  %9119 = vmatpush1.bf16.msra.mxu0 0
  %9120 = vmatprep.subr.bf16.mxu0 0
  %9121 = vmatpush1.bf16.msra.mxu0 0
  %9122 = vmatprep.subr.bf16.mxu0 0
  %9123 = vmatpush1.bf16.msra.mxu0 0
  %9124 = vmatprep.mubr.bf16.mxu0 0
  %9125 = vmatmul.mubr.bf16.gmra.mrb[0].mxu0 %v9087
  %v9126 = vpop.f32.mrb[0].mxu0
  %v9127 = vadd.f32 0.0, %v9126
  %v9128 = vpop.f32.mrb[0].mxu0
  %v9129 = vpop.f32.mrb[0].mxu0
  %v9130 = vpop.f32.mrb[0].mxu0
  %9131 = vdwg.mxu0
  %v9133 = vsel %vm6464, %v8380, 0
  %v9136 = vsel %vm6468, %v6448, 0
  %9138 = vmatprep.subr.bf16.mxu0 0
  %9139 = vmatpush1.bf16.msra.mxu0 %v9136
  %9140 = vmatprep.subr.bf16.mxu0 0
  %9141 = vmatpush1.bf16.msra.mxu0 0
  %9142 = vmatprep.subr.bf16.mxu0 0
  %9143 = vmatpush1.bf16.msra.mxu0 0
  %9144 = vmatprep.subr.bf16.mxu0 0
  %9145 = vmatpush1.bf16.msra.mxu0 0
  %9146 = vmatprep.subr.bf16.mxu0 0
  %9147 = vmatpush1.bf16.msra.mxu0 0
  %9148 = vmatprep.subr.bf16.mxu0 0
  %9149 = vmatpush1.bf16.msra.mxu0 0
  %9150 = vmatprep.subr.bf16.mxu0 0
  %9151 = vmatpush1.bf16.msra.mxu0 0
  %9152 = vmatprep.subr.bf16.mxu0 0
  %9153 = vmatpush1.bf16.msra.mxu0 0
  %9154 = vmatprep.subr.bf16.mxu0 0
  %9155 = vmatpush1.bf16.msra.mxu0 0
  %9156 = vmatprep.subr.bf16.mxu0 0
  %9157 = vmatpush1.bf16.msra.mxu0 0
  %9158 = vmatprep.subr.bf16.mxu0 0
  %9159 = vmatpush1.bf16.msra.mxu0 0
  %9160 = vmatprep.subr.bf16.mxu0 0
  %9161 = vmatpush1.bf16.msra.mxu0 0
  %9162 = vmatprep.subr.bf16.mxu0 0
  %9163 = vmatpush1.bf16.msra.mxu0 0
  %9164 = vmatprep.subr.bf16.mxu0 0
  %9165 = vmatpush1.bf16.msra.mxu0 0
  %9166 = vmatprep.subr.bf16.mxu0 0
  %9167 = vmatpush1.bf16.msra.mxu0 0
  %9168 = vmatprep.subr.bf16.mxu0 0
  %9169 = vmatpush1.bf16.msra.mxu0 0
  %9170 = vmatprep.mubr.bf16.mxu0 0
  %9171 = vmatmul.mubr.bf16.gmra.mrb[0].mxu0 %v9133
  %v9172 = vpop.f32.mrb[0].mxu0
  %v9173 = vadd.f32 0.0, %v9172
  %v9174 = vpop.f32.mrb[0].mxu0
  %v9175 = vpop.f32.mrb[0].mxu0
  %v9176 = vpop.f32.mrb[0].mxu0
  %9177 = vdwg.mxu0
  %v9179 = vsel %vm6464, %v8381, 0
  %v9182 = vsel %vm6468, %v6449, 0
  %9184 = vmatprep.subr.bf16.mxu0 0
  %9185 = vmatpush1.bf16.msra.mxu0 %v9182
  %9186 = vmatprep.subr.bf16.mxu0 0
  %9187 = vmatpush1.bf16.msra.mxu0 0
  %9188 = vmatprep.subr.bf16.mxu0 0
  %9189 = vmatpush1.bf16.msra.mxu0 0
  %9190 = vmatprep.subr.bf16.mxu0 0
  %9191 = vmatpush1.bf16.msra.mxu0 0
  %9192 = vmatprep.subr.bf16.mxu0 0
  %9193 = vmatpush1.bf16.msra.mxu0 0
  %9194 = vmatprep.subr.bf16.mxu0 0
  %9195 = vmatpush1.bf16.msra.mxu0 0
  %9196 = vmatprep.subr.bf16.mxu0 0
  %9197 = vmatpush1.bf16.msra.mxu0 0
  %9198 = vmatprep.subr.bf16.mxu0 0
  %9199 = vmatpush1.bf16.msra.mxu0 0
  %9200 = vmatprep.subr.bf16.mxu0 0
  %9201 = vmatpush1.bf16.msra.mxu0 0
  %9202 = vmatprep.subr.bf16.mxu0 0
  %9203 = vmatpush1.bf16.msra.mxu0 0
  %9204 = vmatprep.subr.bf16.mxu0 0
  %9205 = vmatpush1.bf16.msra.mxu0 0
  %9206 = vmatprep.subr.bf16.mxu0 0
  %9207 = vmatpush1.bf16.msra.mxu0 0
  %9208 = vmatprep.subr.bf16.mxu0 0
  %9209 = vmatpush1.bf16.msra.mxu0 0
  %9210 = vmatprep.subr.bf16.mxu0 0
  %9211 = vmatpush1.bf16.msra.mxu0 0
  %9212 = vmatprep.subr.bf16.mxu0 0
  %9213 = vmatpush1.bf16.msra.mxu0 0
  %9214 = vmatprep.subr.bf16.mxu0 0
  %9215 = vmatpush1.bf16.msra.mxu0 0
  %9216 = vmatprep.mubr.bf16.mxu0 0
  %9217 = vmatmul.mubr.bf16.gmra.mrb[0].mxu0 %v9179
  %v9218 = vpop.f32.mrb[0].mxu0
  %v9219 = vadd.f32 0.0, %v9218
  %v9220 = vpop.f32.mrb[0].mxu0
  %v9221 = vpop.f32.mrb[0].mxu0
  %v9222 = vpop.f32.mrb[0].mxu0
  %9223 = vdwg.mxu0
  %v9225 = vsel %vm6464, %v8382, 0
  %v9228 = vsel %vm6468, %v6450, 0
  %9230 = vmatprep.subr.bf16.mxu0 0
  %9231 = vmatpush1.bf16.msra.mxu0 %v9228
  %9232 = vmatprep.subr.bf16.mxu0 0
  %9233 = vmatpush1.bf16.msra.mxu0 0
  %9234 = vmatprep.subr.bf16.mxu0 0
  %9235 = vmatpush1.bf16.msra.mxu0 0
  %9236 = vmatprep.subr.bf16.mxu0 0
  %9237 = vmatpush1.bf16.msra.mxu0 0
  %9238 = vmatprep.subr.bf16.mxu0 0
  %9239 = vmatpush1.bf16.msra.mxu0 0
  %9240 = vmatprep.subr.bf16.mxu0 0
  %9241 = vmatpush1.bf16.msra.mxu0 0
  %9242 = vmatprep.subr.bf16.mxu0 0
  %9243 = vmatpush1.bf16.msra.mxu0 0
  %9244 = vmatprep.subr.bf16.mxu0 0
  %9245 = vmatpush1.bf16.msra.mxu0 0
  %9246 = vmatprep.subr.bf16.mxu0 0
  %9247 = vmatpush1.bf16.msra.mxu0 0
  %9248 = vmatprep.subr.bf16.mxu0 0
  %9249 = vmatpush1.bf16.msra.mxu0 0
  %9250 = vmatprep.subr.bf16.mxu0 0
  %9251 = vmatpush1.bf16.msra.mxu0 0
  %9252 = vmatprep.subr.bf16.mxu0 0
  %9253 = vmatpush1.bf16.msra.mxu0 0
  %9254 = vmatprep.subr.bf16.mxu0 0
  %9255 = vmatpush1.bf16.msra.mxu0 0
  %9256 = vmatprep.subr.bf16.mxu0 0
  %9257 = vmatpush1.bf16.msra.mxu0 0
  %9258 = vmatprep.subr.bf16.mxu0 0
  %9259 = vmatpush1.bf16.msra.mxu0 0
  %9260 = vmatprep.subr.bf16.mxu0 0
  %9261 = vmatpush1.bf16.msra.mxu0 0
  %9262 = vmatprep.mubr.bf16.mxu0 0
  %9263 = vmatmul.mubr.bf16.gmra.mrb[0].mxu0 %v9225
  %v9264 = vpop.f32.mrb[0].mxu0
  %v9265 = vadd.f32 0.0, %v9264
  %v9266 = vpop.f32.mrb[0].mxu0
  %v9267 = vpop.f32.mrb[0].mxu0
  %v9268 = vpop.f32.mrb[0].mxu0
  %9269 = vdwg.mxu0
  %v9271 = vsel %vm6464, %v8383, 0
  %v9274 = vsel %vm6468, %v6451, 0
  %9276 = vmatprep.subr.bf16.mxu0 0
  %9277 = vmatpush1.bf16.msra.mxu0 %v9274
  %9278 = vmatprep.subr.bf16.mxu0 0
  %9279 = vmatpush1.bf16.msra.mxu0 0
  %9280 = vmatprep.subr.bf16.mxu0 0
  %9281 = vmatpush1.bf16.msra.mxu0 0
  %9282 = vmatprep.subr.bf16.mxu0 0
  %9283 = vmatpush1.bf16.msra.mxu0 0
  %9284 = vmatprep.subr.bf16.mxu0 0
  %9285 = vmatpush1.bf16.msra.mxu0 0
  %9286 = vmatprep.subr.bf16.mxu0 0
  %9287 = vmatpush1.bf16.msra.mxu0 0
  %9288 = vmatprep.subr.bf16.mxu0 0
  %9289 = vmatpush1.bf16.msra.mxu0 0
  %9290 = vmatprep.subr.bf16.mxu0 0
  %9291 = vmatpush1.bf16.msra.mxu0 0
  %9292 = vmatprep.subr.bf16.mxu0 0
  %9293 = vmatpush1.bf16.msra.mxu0 0
  %9294 = vmatprep.subr.bf16.mxu0 0
  %9295 = vmatpush1.bf16.msra.mxu0 0
  %9296 = vmatprep.subr.bf16.mxu0 0
  %9297 = vmatpush1.bf16.msra.mxu0 0
  %9298 = vmatprep.subr.bf16.mxu0 0
  %9299 = vmatpush1.bf16.msra.mxu0 0
  %9300 = vmatprep.subr.bf16.mxu0 0
  %9301 = vmatpush1.bf16.msra.mxu0 0
  %9302 = vmatprep.subr.bf16.mxu0 0
  %9303 = vmatpush1.bf16.msra.mxu0 0
  %9304 = vmatprep.subr.bf16.mxu0 0
  %9305 = vmatpush1.bf16.msra.mxu0 0
  %9306 = vmatprep.subr.bf16.mxu0 0
  %9307 = vmatpush1.bf16.msra.mxu0 0
  %9308 = vmatprep.mubr.bf16.mxu0 0
  %9309 = vmatmul.mubr.bf16.gmra.mrb[0].mxu0 %v9271
  %v9310 = vpop.f32.mrb[0].mxu0
  %v9311 = vadd.f32 0.0, %v9310
  %v9312 = vpop.f32.mrb[0].mxu0
  %v9313 = vpop.f32.mrb[0].mxu0
  %v9314 = vpop.f32.mrb[0].mxu0
  %9315 = vdwg.mxu0
  %v9317 = vsel %vm6464, %v8384, 0
  %v9320 = vsel %vm6468, %v6452, 0
  %9322 = vmatprep.subr.bf16.mxu0 0
  %9323 = vmatpush1.bf16.msra.mxu0 %v9320
  %9324 = vmatprep.subr.bf16.mxu0 0
  %9325 = vmatpush1.bf16.msra.mxu0 0
  %9326 = vmatprep.subr.bf16.mxu0 0
  %9327 = vmatpush1.bf16.msra.mxu0 0
  %9328 = vmatprep.subr.bf16.mxu0 0
  %9329 = vmatpush1.bf16.msra.mxu0 0
  %9330 = vmatprep.subr.bf16.mxu0 0
  %9331 = vmatpush1.bf16.msra.mxu0 0
  %9332 = vmatprep.subr.bf16.mxu0 0
  %9333 = vmatpush1.bf16.msra.mxu0 0
  %9334 = vmatprep.subr.bf16.mxu0 0
  %9335 = vmatpush1.bf16.msra.mxu0 0
  %9336 = vmatprep.subr.bf16.mxu0 0
  %9337 = vmatpush1.bf16.msra.mxu0 0
  %9338 = vmatprep.subr.bf16.mxu0 0
  %9339 = vmatpush1.bf16.msra.mxu0 0
  %9340 = vmatprep.subr.bf16.mxu0 0
  %9341 = vmatpush1.bf16.msra.mxu0 0
  %9342 = vmatprep.subr.bf16.mxu0 0
  %9343 = vmatpush1.bf16.msra.mxu0 0
  %9344 = vmatprep.subr.bf16.mxu0 0
  %9345 = vmatpush1.bf16.msra.mxu0 0
  %9346 = vmatprep.subr.bf16.mxu0 0
  %9347 = vmatpush1.bf16.msra.mxu0 0
  %9348 = vmatprep.subr.bf16.mxu0 0
  %9349 = vmatpush1.bf16.msra.mxu0 0
  %9350 = vmatprep.subr.bf16.mxu0 0
  %9351 = vmatpush1.bf16.msra.mxu0 0
  %9352 = vmatprep.subr.bf16.mxu0 0
  %9353 = vmatpush1.bf16.msra.mxu0 0
  %9354 = vmatprep.mubr.bf16.mxu0 0
  %9355 = vmatmul.mubr.bf16.gmra.mrb[0].mxu0 %v9317
  %v9356 = vpop.f32.mrb[0].mxu0
  %v9357 = vadd.f32 0.0, %v9356
  %v9358 = vpop.f32.mrb[0].mxu0
  %v9359 = vpop.f32.mrb[0].mxu0
  %v9360 = vpop.f32.mrb[0].mxu0
  %9361 = vdwg.mxu0
  %v9363 = vsel %vm6464, %v8385, 0
  %v9366 = vsel %vm6468, %v6453, 0
  %9368 = vmatprep.subr.bf16.mxu0 0
  %9369 = vmatpush1.bf16.msra.mxu0 %v9366
  %9370 = vmatprep.subr.bf16.mxu0 0
  %9371 = vmatpush1.bf16.msra.mxu0 0
  %9372 = vmatprep.subr.bf16.mxu0 0
  %9373 = vmatpush1.bf16.msra.mxu0 0
  %9374 = vmatprep.subr.bf16.mxu0 0
  %9375 = vmatpush1.bf16.msra.mxu0 0
  %9376 = vmatprep.subr.bf16.mxu0 0
  %9377 = vmatpush1.bf16.msra.mxu0 0
  %9378 = vmatprep.subr.bf16.mxu0 0
  %9379 = vmatpush1.bf16.msra.mxu0 0
  %9380 = vmatprep.subr.bf16.mxu0 0
  %9381 = vmatpush1.bf16.msra.mxu0 0
  %9382 = vmatprep.subr.bf16.mxu0 0
  %9383 = vmatpush1.bf16.msra.mxu0 0
  %9384 = vmatprep.subr.bf16.mxu0 0
  %9385 = vmatpush1.bf16.msra.mxu0 0
  %9386 = vmatprep.subr.bf16.mxu0 0
  %9387 = vmatpush1.bf16.msra.mxu0 0
  %9388 = vmatprep.subr.bf16.mxu0 0
  %9389 = vmatpush1.bf16.msra.mxu0 0
  %9390 = vmatprep.subr.bf16.mxu0 0
  %9391 = vmatpush1.bf16.msra.mxu0 0
  %9392 = vmatprep.subr.bf16.mxu0 0
  %9393 = vmatpush1.bf16.msra.mxu0 0
  %9394 = vmatprep.subr.bf16.mxu0 0
  %9395 = vmatpush1.bf16.msra.mxu0 0
  %9396 = vmatprep.subr.bf16.mxu0 0
  %9397 = vmatpush1.bf16.msra.mxu0 0
  %9398 = vmatprep.subr.bf16.mxu0 0
  %9399 = vmatpush1.bf16.msra.mxu0 0
  %9400 = vmatprep.mubr.bf16.mxu0 0
  %9401 = vmatmul.mubr.bf16.gmra.mrb[0].mxu0 %v9363
  %v9402 = vpop.f32.mrb[0].mxu0
  %v9403 = vadd.f32 0.0, %v9402
  %v9404 = vpop.f32.mrb[0].mxu0
  %v9405 = vpop.f32.mrb[0].mxu0
  %v9406 = vpop.f32.mrb[0].mxu0
  %9407 = vdwg.mxu0
  %v9409 = vsel %vm6464, %v8386, 0
  %v9412 = vsel %vm6468, %v6454, 0
  %9414 = vmatprep.subr.bf16.mxu0 0
  %9415 = vmatpush1.bf16.msra.mxu0 %v9412
  %9416 = vmatprep.subr.bf16.mxu0 0
  %9417 = vmatpush1.bf16.msra.mxu0 0
  %9418 = vmatprep.subr.bf16.mxu0 0
  %9419 = vmatpush1.bf16.msra.mxu0 0
  %9420 = vmatprep.subr.bf16.mxu0 0
  %9421 = vmatpush1.bf16.msra.mxu0 0
  %9422 = vmatprep.subr.bf16.mxu0 0
  %9423 = vmatpush1.bf16.msra.mxu0 0
  %9424 = vmatprep.subr.bf16.mxu0 0
  %9425 = vmatpush1.bf16.msra.mxu0 0
  %9426 = vmatprep.subr.bf16.mxu0 0
  %9427 = vmatpush1.bf16.msra.mxu0 0
  %9428 = vmatprep.subr.bf16.mxu0 0
  %9429 = vmatpush1.bf16.msra.mxu0 0
  %9430 = vmatprep.subr.bf16.mxu0 0
  %9431 = vmatpush1.bf16.msra.mxu0 0
  %9432 = vmatprep.subr.bf16.mxu0 0
  %9433 = vmatpush1.bf16.msra.mxu0 0
  %9434 = vmatprep.subr.bf16.mxu0 0
  %9435 = vmatpush1.bf16.msra.mxu0 0
  %9436 = vmatprep.subr.bf16.mxu0 0
  %9437 = vmatpush1.bf16.msra.mxu0 0
  %9438 = vmatprep.subr.bf16.mxu0 0
  %9439 = vmatpush1.bf16.msra.mxu0 0
  %9440 = vmatprep.subr.bf16.mxu0 0
  %9441 = vmatpush1.bf16.msra.mxu0 0
  %9442 = vmatprep.subr.bf16.mxu0 0
  %9443 = vmatpush1.bf16.msra.mxu0 0
  %9444 = vmatprep.subr.bf16.mxu0 0
  %9445 = vmatpush1.bf16.msra.mxu0 0
  %9446 = vmatprep.mubr.bf16.mxu0 0
  %9447 = vmatmul.mubr.bf16.gmra.mrb[0].mxu0 %v9409
  %v9448 = vpop.f32.mrb[0].mxu0
  %v9449 = vadd.f32 0.0, %v9448
  %v9450 = vpop.f32.mrb[0].mxu0
  %v9451 = vpop.f32.mrb[0].mxu0
  %v9452 = vpop.f32.mrb[0].mxu0
  %9453 = vdwg.mxu0
  %v9455 = vsel %vm6464, %v8387, 0
  %v9458 = vsel %vm6468, %v6455, 0
  %9460 = vmatprep.subr.bf16.mxu0 0
  %9461 = vmatpush1.bf16.msra.mxu0 %v9458
  %9462 = vmatprep.subr.bf16.mxu0 0
  %9463 = vmatpush1.bf16.msra.mxu0 0
  %9464 = vmatprep.subr.bf16.mxu0 0
  %9465 = vmatpush1.bf16.msra.mxu0 0
  %9466 = vmatprep.subr.bf16.mxu0 0
  %9467 = vmatpush1.bf16.msra.mxu0 0
  %9468 = vmatprep.subr.bf16.mxu0 0
  %9469 = vmatpush1.bf16.msra.mxu0 0
  %9470 = vmatprep.subr.bf16.mxu0 0
  %9471 = vmatpush1.bf16.msra.mxu0 0
  %9472 = vmatprep.subr.bf16.mxu0 0
  %9473 = vmatpush1.bf16.msra.mxu0 0
  %9474 = vmatprep.subr.bf16.mxu0 0
  %9475 = vmatpush1.bf16.msra.mxu0 0
  %9476 = vmatprep.subr.bf16.mxu0 0
  %9477 = vmatpush1.bf16.msra.mxu0 0
  %9478 = vmatprep.subr.bf16.mxu0 0
  %9479 = vmatpush1.bf16.msra.mxu0 0
  %9480 = vmatprep.subr.bf16.mxu0 0
  %9481 = vmatpush1.bf16.msra.mxu0 0
  %9482 = vmatprep.subr.bf16.mxu0 0
  %9483 = vmatpush1.bf16.msra.mxu0 0
  %9484 = vmatprep.subr.bf16.mxu0 0
  %9485 = vmatpush1.bf16.msra.mxu0 0
  %9486 = vmatprep.subr.bf16.mxu0 0
  %9487 = vmatpush1.bf16.msra.mxu0 0
  %9488 = vmatprep.subr.bf16.mxu0 0
  %9489 = vmatpush1.bf16.msra.mxu0 0
  %9490 = vmatprep.subr.bf16.mxu0 0
  %9491 = vmatpush1.bf16.msra.mxu0 0
  %9492 = vmatprep.mubr.bf16.mxu0 0
  %9493 = vmatmul.mubr.bf16.gmra.mrb[0].mxu0 %v9455
  %v9494 = vpop.f32.mrb[0].mxu0
  %v9495 = vadd.f32 0.0, %v9494
  %v9496 = vpop.f32.mrb[0].mxu0
  %v9497 = vpop.f32.mrb[0].mxu0
  %v9498 = vpop.f32.mrb[0].mxu0
  %9499 = vdwg.mxu0
  %v9501 = vsel %vm6464, %v8388, 0
  %v9504 = vsel %vm6468, %v6456, 0
  %9506 = vmatprep.subr.bf16.mxu0 0
  %9507 = vmatpush1.bf16.msra.mxu0 %v9504
  %9508 = vmatprep.subr.bf16.mxu0 0
  %9509 = vmatpush1.bf16.msra.mxu0 0
  %9510 = vmatprep.subr.bf16.mxu0 0
  %9511 = vmatpush1.bf16.msra.mxu0 0
  %9512 = vmatprep.subr.bf16.mxu0 0
  %9513 = vmatpush1.bf16.msra.mxu0 0
  %9514 = vmatprep.subr.bf16.mxu0 0
  %9515 = vmatpush1.bf16.msra.mxu0 0
  %9516 = vmatprep.subr.bf16.mxu0 0
  %9517 = vmatpush1.bf16.msra.mxu0 0
  %9518 = vmatprep.subr.bf16.mxu0 0
  %9519 = vmatpush1.bf16.msra.mxu0 0
  %9520 = vmatprep.subr.bf16.mxu0 0
  %9521 = vmatpush1.bf16.msra.mxu0 0
  %9522 = vmatprep.subr.bf16.mxu0 0
  %9523 = vmatpush1.bf16.msra.mxu0 0
  %9524 = vmatprep.subr.bf16.mxu0 0
  %9525 = vmatpush1.bf16.msra.mxu0 0
  %9526 = vmatprep.subr.bf16.mxu0 0
  %9527 = vmatpush1.bf16.msra.mxu0 0
  %9528 = vmatprep.subr.bf16.mxu0 0
  %9529 = vmatpush1.bf16.msra.mxu0 0
  %9530 = vmatprep.subr.bf16.mxu0 0
  %9531 = vmatpush1.bf16.msra.mxu0 0
  %9532 = vmatprep.subr.bf16.mxu0 0
  %9533 = vmatpush1.bf16.msra.mxu0 0
  %9534 = vmatprep.subr.bf16.mxu0 0
  %9535 = vmatpush1.bf16.msra.mxu0 0
  %9536 = vmatprep.subr.bf16.mxu0 0
  %9537 = vmatpush1.bf16.msra.mxu0 0
  %9538 = vmatprep.mubr.bf16.mxu0 0
  %9539 = vmatmul.mubr.bf16.gmra.mrb[0].mxu0 %v9501
  %v9540 = vpop.f32.mrb[0].mxu0
  %v9541 = vadd.f32 0.0, %v9540
  %v9542 = vpop.f32.mrb[0].mxu0
  %v9543 = vpop.f32.mrb[0].mxu0
  %v9544 = vpop.f32.mrb[0].mxu0
  %9545 = vdwg.mxu0
  %v9547 = vsel %vm6464, %v8389, 0
  %v9550 = vsel %vm6468, %v6457, 0
  %9552 = vmatprep.subr.bf16.mxu0 0
  %9553 = vmatpush1.bf16.msra.mxu0 %v9550
  %9554 = vmatprep.subr.bf16.mxu0 0
  %9555 = vmatpush1.bf16.msra.mxu0 0
  %9556 = vmatprep.subr.bf16.mxu0 0
  %9557 = vmatpush1.bf16.msra.mxu0 0
  %9558 = vmatprep.subr.bf16.mxu0 0
  %9559 = vmatpush1.bf16.msra.mxu0 0
  %9560 = vmatprep.subr.bf16.mxu0 0
  %9561 = vmatpush1.bf16.msra.mxu0 0
  %9562 = vmatprep.subr.bf16.mxu0 0
  %9563 = vmatpush1.bf16.msra.mxu0 0
  %9564 = vmatprep.subr.bf16.mxu0 0
  %9565 = vmatpush1.bf16.msra.mxu0 0
  %9566 = vmatprep.subr.bf16.mxu0 0
  %9567 = vmatpush1.bf16.msra.mxu0 0
  %9568 = vmatprep.subr.bf16.mxu0 0
  %9569 = vmatpush1.bf16.msra.mxu0 0
  %9570 = vmatprep.subr.bf16.mxu0 0
  %9571 = vmatpush1.bf16.msra.mxu0 0
  %9572 = vmatprep.subr.bf16.mxu0 0
  %9573 = vmatpush1.bf16.msra.mxu0 0
  %9574 = vmatprep.subr.bf16.mxu0 0
  %9575 = vmatpush1.bf16.msra.mxu0 0
  %9576 = vmatprep.subr.bf16.mxu0 0
  %9577 = vmatpush1.bf16.msra.mxu0 0
  %9578 = vmatprep.subr.bf16.mxu0 0
  %9579 = vmatpush1.bf16.msra.mxu0 0
  %9580 = vmatprep.subr.bf16.mxu0 0
  %9581 = vmatpush1.bf16.msra.mxu0 0
  %9582 = vmatprep.subr.bf16.mxu0 0
  %9583 = vmatpush1.bf16.msra.mxu0 0
  %9584 = vmatprep.mubr.bf16.mxu0 0
  %9585 = vmatmul.mubr.bf16.gmra.mrb[0].mxu0 %v9547
  %v9586 = vpop.f32.mrb[0].mxu0
  %v9587 = vadd.f32 0.0, %v9586
  %v9588 = vpop.f32.mrb[0].mxu0
  %v9589 = vpop.f32.mrb[0].mxu0
  %v9590 = vpop.f32.mrb[0].mxu0
  %9591 = vdwg.mxu0
  %v9593 = vsel %vm6464, %v8390, 0
  %v9596 = vsel %vm6468, %v6458, 0
  %9598 = vmatprep.subr.bf16.mxu0 0
  %9599 = vmatpush1.bf16.msra.mxu0 %v9596
  %9600 = vmatprep.subr.bf16.mxu0 0
  %9601 = vmatpush1.bf16.msra.mxu0 0
  %9602 = vmatprep.subr.bf16.mxu0 0
  %9603 = vmatpush1.bf16.msra.mxu0 0
  %9604 = vmatprep.subr.bf16.mxu0 0
  %9605 = vmatpush1.bf16.msra.mxu0 0
  %9606 = vmatprep.subr.bf16.mxu0 0
  %9607 = vmatpush1.bf16.msra.mxu0 0
  %9608 = vmatprep.subr.bf16.mxu0 0
  %9609 = vmatpush1.bf16.msra.mxu0 0
  %9610 = vmatprep.subr.bf16.mxu0 0
  %9611 = vmatpush1.bf16.msra.mxu0 0
  %9612 = vmatprep.subr.bf16.mxu0 0
  %9613 = vmatpush1.bf16.msra.mxu0 0
  %9614 = vmatprep.subr.bf16.mxu0 0
  %9615 = vmatpush1.bf16.msra.mxu0 0
  %9616 = vmatprep.subr.bf16.mxu0 0
  %9617 = vmatpush1.bf16.msra.mxu0 0
  %9618 = vmatprep.subr.bf16.mxu0 0
  %9619 = vmatpush1.bf16.msra.mxu0 0
  %9620 = vmatprep.subr.bf16.mxu0 0
  %9621 = vmatpush1.bf16.msra.mxu0 0
  %9622 = vmatprep.subr.bf16.mxu0 0
  %9623 = vmatpush1.bf16.msra.mxu0 0
  %9624 = vmatprep.subr.bf16.mxu0 0
  %9625 = vmatpush1.bf16.msra.mxu0 0
  %9626 = vmatprep.subr.bf16.mxu0 0
  %9627 = vmatpush1.bf16.msra.mxu0 0
  %9628 = vmatprep.subr.bf16.mxu0 0
  %9629 = vmatpush1.bf16.msra.mxu0 0
  %9630 = vmatprep.mubr.bf16.mxu0 0
  %9631 = vmatmul.mubr.bf16.gmra.mrb[0].mxu0 %v9593
  %v9632 = vpop.f32.mrb[0].mxu0
  %v9633 = vadd.f32 0.0, %v9632
  %v9634 = vpop.f32.mrb[0].mxu0
  %v9635 = vpop.f32.mrb[0].mxu0
  %v9636 = vpop.f32.mrb[0].mxu0
  %9637 = vdwg.mxu0
  %v9639 = vsel %vm6464, %v8391, 0
  %v9642 = vsel %vm6468, %v6459, 0
  %9644 = vmatprep.subr.bf16.mxu0 0
  %9645 = vmatpush1.bf16.msra.mxu0 %v9642
  %9646 = vmatprep.subr.bf16.mxu0 0
  %9647 = vmatpush1.bf16.msra.mxu0 0
  %9648 = vmatprep.subr.bf16.mxu0 0
  %9649 = vmatpush1.bf16.msra.mxu0 0
  %9650 = vmatprep.subr.bf16.mxu0 0
  %9651 = vmatpush1.bf16.msra.mxu0 0
  %9652 = vmatprep.subr.bf16.mxu0 0
  %9653 = vmatpush1.bf16.msra.mxu0 0
  %9654 = vmatprep.subr.bf16.mxu0 0
  %9655 = vmatpush1.bf16.msra.mxu0 0
  %9656 = vmatprep.subr.bf16.mxu0 0
  %9657 = vmatpush1.bf16.msra.mxu0 0
  %9658 = vmatprep.subr.bf16.mxu0 0
  %9659 = vmatpush1.bf16.msra.mxu0 0
  %9660 = vmatprep.subr.bf16.mxu0 0
  %9661 = vmatpush1.bf16.msra.mxu0 0
  %9662 = vmatprep.subr.bf16.mxu0 0
  %9663 = vmatpush1.bf16.msra.mxu0 0
  %9664 = vmatprep.subr.bf16.mxu0 0
  %9665 = vmatpush1.bf16.msra.mxu0 0
  %9666 = vmatprep.subr.bf16.mxu0 0
  %9667 = vmatpush1.bf16.msra.mxu0 0
  %9668 = vmatprep.subr.bf16.mxu0 0
  %9669 = vmatpush1.bf16.msra.mxu0 0
  %9670 = vmatprep.subr.bf16.mxu0 0
  %9671 = vmatpush1.bf16.msra.mxu0 0
  %9672 = vmatprep.subr.bf16.mxu0 0
  %9673 = vmatpush1.bf16.msra.mxu0 0
  %9674 = vmatprep.subr.bf16.mxu0 0
  %9675 = vmatpush1.bf16.msra.mxu0 0
  %9676 = vmatprep.mubr.bf16.mxu0 0
  %9677 = vmatmul.mubr.bf16.gmra.mrb[0].mxu0 %v9639
  %v9678 = vpop.f32.mrb[0].mxu0
  %v9679 = vadd.f32 0.0, %v9678
  %v9680 = vpop.f32.mrb[0].mxu0
  %v9681 = vpop.f32.mrb[0].mxu0
  %v9682 = vpop.f32.mrb[0].mxu0
  %9683 = vdwg.mxu0
  %v9685 = vsel %vm6464, %v8392, 0
  %v9688 = vsel %vm6468, %v6460, 0
  %9690 = vmatprep.subr.bf16.mxu0 0
  %9691 = vmatpush1.bf16.msra.mxu0 %v9688
  %9692 = vmatprep.subr.bf16.mxu0 0
  %9693 = vmatpush1.bf16.msra.mxu0 0
  %9694 = vmatprep.subr.bf16.mxu0 0
  %9695 = vmatpush1.bf16.msra.mxu0 0
  %9696 = vmatprep.subr.bf16.mxu0 0
  %9697 = vmatpush1.bf16.msra.mxu0 0
  %9698 = vmatprep.subr.bf16.mxu0 0
  %9699 = vmatpush1.bf16.msra.mxu0 0
  %9700 = vmatprep.subr.bf16.mxu0 0
  %9701 = vmatpush1.bf16.msra.mxu0 0
  %9702 = vmatprep.subr.bf16.mxu0 0
  %9703 = vmatpush1.bf16.msra.mxu0 0
  %9704 = vmatprep.subr.bf16.mxu0 0
  %9705 = vmatpush1.bf16.msra.mxu0 0
  %9706 = vmatprep.subr.bf16.mxu0 0
  %9707 = vmatpush1.bf16.msra.mxu0 0
  %9708 = vmatprep.subr.bf16.mxu0 0
  %9709 = vmatpush1.bf16.msra.mxu0 0
  %9710 = vmatprep.subr.bf16.mxu0 0
  %9711 = vmatpush1.bf16.msra.mxu0 0
  %9712 = vmatprep.subr.bf16.mxu0 0
  %9713 = vmatpush1.bf16.msra.mxu0 0
  %9714 = vmatprep.subr.bf16.mxu0 0
  %9715 = vmatpush1.bf16.msra.mxu0 0
  %9716 = vmatprep.subr.bf16.mxu0 0
  %9717 = vmatpush1.bf16.msra.mxu0 0
  %9718 = vmatprep.subr.bf16.mxu0 0
  %9719 = vmatpush1.bf16.msra.mxu0 0
  %9720 = vmatprep.subr.bf16.mxu0 0
  %9721 = vmatpush1.bf16.msra.mxu0 0
  %9722 = vmatprep.mubr.bf16.mxu0 0
  %9723 = vmatmul.mubr.bf16.gmra.mrb[0].mxu0 %v9685
  %v9724 = vpop.f32.mrb[0].mxu0
  %v9725 = vadd.f32 0.0, %v9724
  %v9726 = vpop.f32.mrb[0].mxu0
  %v9727 = vpop.f32.mrb[0].mxu0
  %v9728 = vpop.f32.mrb[0].mxu0
  %9729 = vdwg.mxu0
  %v9731 = vsel %vm6464, %v8393, 0
  %v9734 = vsel %vm6468, %v6461, 0
  %9736 = vmatprep.subr.bf16.mxu0 0
  %9737 = vmatpush1.bf16.msra.mxu0 %v9734
  %9738 = vmatprep.subr.bf16.mxu0 0
  %9739 = vmatpush1.bf16.msra.mxu0 0
  %9740 = vmatprep.subr.bf16.mxu0 0
  %9741 = vmatpush1.bf16.msra.mxu0 0
  %9742 = vmatprep.subr.bf16.mxu0 0
  %9743 = vmatpush1.bf16.msra.mxu0 0
  %9744 = vmatprep.subr.bf16.mxu0 0
  %9745 = vmatpush1.bf16.msra.mxu0 0
  %9746 = vmatprep.subr.bf16.mxu0 0
  %9747 = vmatpush1.bf16.msra.mxu0 0
  %9748 = vmatprep.subr.bf16.mxu0 0
  %9749 = vmatpush1.bf16.msra.mxu0 0
  %9750 = vmatprep.subr.bf16.mxu0 0
  %9751 = vmatpush1.bf16.msra.mxu0 0
  %9752 = vmatprep.subr.bf16.mxu0 0
  %9753 = vmatpush1.bf16.msra.mxu0 0
  %9754 = vmatprep.subr.bf16.mxu0 0
  %9755 = vmatpush1.bf16.msra.mxu0 0
  %9756 = vmatprep.subr.bf16.mxu0 0
  %9757 = vmatpush1.bf16.msra.mxu0 0
  %9758 = vmatprep.subr.bf16.mxu0 0
  %9759 = vmatpush1.bf16.msra.mxu0 0
  %9760 = vmatprep.subr.bf16.mxu0 0
  %9761 = vmatpush1.bf16.msra.mxu0 0
  %9762 = vmatprep.subr.bf16.mxu0 0
  %9763 = vmatpush1.bf16.msra.mxu0 0
  %9764 = vmatprep.subr.bf16.mxu0 0
  %9765 = vmatpush1.bf16.msra.mxu0 0
  %9766 = vmatprep.subr.bf16.mxu0 0
  %9767 = vmatpush1.bf16.msra.mxu0 0
  %9768 = vmatprep.mubr.bf16.mxu0 0
  %9769 = vmatmul.mubr.bf16.gmra.mrb[0].mxu0 %v9731
  %v9770 = vpop.f32.mrb[0].mxu0
  %v9771 = vadd.f32 0.0, %v9770
  %v9772 = vpop.f32.mrb[0].mxu0
  %v9773 = vpop.f32.mrb[0].mxu0
  %v9774 = vpop.f32.mrb[0].mxu0
  %9775 = vdwg.mxu0
  %v9777 = vsel %vm6464, %v8394, 0
  %v9780 = vsel %vm6468, %v6462, 0
  %9782 = vmatprep.subr.bf16.mxu0 0
  %9783 = vmatpush1.bf16.msra.mxu0 %v9780
  %9784 = vmatprep.subr.bf16.mxu0 0
  %9785 = vmatpush1.bf16.msra.mxu0 0
  %9786 = vmatprep.subr.bf16.mxu0 0
  %9787 = vmatpush1.bf16.msra.mxu0 0
  %9788 = vmatprep.subr.bf16.mxu0 0
  %9789 = vmatpush1.bf16.msra.mxu0 0
  %9790 = vmatprep.subr.bf16.mxu0 0
  %9791 = vmatpush1.bf16.msra.mxu0 0
  %9792 = vmatprep.subr.bf16.mxu0 0
  %9793 = vmatpush1.bf16.msra.mxu0 0
  %9794 = vmatprep.subr.bf16.mxu0 0
  %9795 = vmatpush1.bf16.msra.mxu0 0
  %9796 = vmatprep.subr.bf16.mxu0 0
  %9797 = vmatpush1.bf16.msra.mxu0 0
  %9798 = vmatprep.subr.bf16.mxu0 0
  %9799 = vmatpush1.bf16.msra.mxu0 0
  %9800 = vmatprep.subr.bf16.mxu0 0
  %9801 = vmatpush1.bf16.msra.mxu0 0
  %9802 = vmatprep.subr.bf16.mxu0 0
  %9803 = vmatpush1.bf16.msra.mxu0 0
  %9804 = vmatprep.subr.bf16.mxu0 0
  %9805 = vmatpush1.bf16.msra.mxu0 0
  %9806 = vmatprep.subr.bf16.mxu0 0
  %9807 = vmatpush1.bf16.msra.mxu0 0
  %9808 = vmatprep.subr.bf16.mxu0 0
  %9809 = vmatpush1.bf16.msra.mxu0 0
  %9810 = vmatprep.subr.bf16.mxu0 0
  %9811 = vmatpush1.bf16.msra.mxu0 0
  %9812 = vmatprep.subr.bf16.mxu0 0
  %9813 = vmatpush1.bf16.msra.mxu0 0
  %9814 = vmatprep.mubr.bf16.mxu0 0
  %9815 = vmatmul.mubr.bf16.gmra.mrb[0].mxu0 %v9777
  %v9816 = vpop.f32.mrb[0].mxu0
  %v9817 = vadd.f32 0.0, %v9816
  %v9818 = vpop.f32.mrb[0].mxu0
  %v9819 = vpop.f32.mrb[0].mxu0
  %v9820 = vpop.f32.mrb[0].mxu0
  %9821 = vdwg.mxu0
  %v9823 = vsel %vm6464, %v8395, 0
  %v9826 = vsel %vm6468, %v6463, 0
  %9828 = vmatprep.subr.bf16.mxu0 0
  %9829 = vmatpush1.bf16.msra.mxu0 %v9826
  %9830 = vmatprep.subr.bf16.mxu0 0
  %9831 = vmatpush1.bf16.msra.mxu0 0
  %9832 = vmatprep.subr.bf16.mxu0 0
  %9833 = vmatpush1.bf16.msra.mxu0 0
  %9834 = vmatprep.subr.bf16.mxu0 0
  %9835 = vmatpush1.bf16.msra.mxu0 0
  %9836 = vmatprep.subr.bf16.mxu0 0
  %9837 = vmatpush1.bf16.msra.mxu0 0
  %9838 = vmatprep.subr.bf16.mxu0 0
  %9839 = vmatpush1.bf16.msra.mxu0 0
  %9840 = vmatprep.subr.bf16.mxu0 0
  %9841 = vmatpush1.bf16.msra.mxu0 0
  %9842 = vmatprep.subr.bf16.mxu0 0
  %9843 = vmatpush1.bf16.msra.mxu0 0
  %9844 = vmatprep.subr.bf16.mxu0 0
  %9845 = vmatpush1.bf16.msra.mxu0 0
  %9846 = vmatprep.subr.bf16.mxu0 0
  %9847 = vmatpush1.bf16.msra.mxu0 0
  %9848 = vmatprep.subr.bf16.mxu0 0
  %9849 = vmatpush1.bf16.msra.mxu0 0
  %9850 = vmatprep.subr.bf16.mxu0 0
  %9851 = vmatpush1.bf16.msra.mxu0 0
  %9852 = vmatprep.subr.bf16.mxu0 0
  %9853 = vmatpush1.bf16.msra.mxu0 0
  %9854 = vmatprep.subr.bf16.mxu0 0
  %9855 = vmatpush1.bf16.msra.mxu0 0
  %9856 = vmatprep.subr.bf16.mxu0 0
  %9857 = vmatpush1.bf16.msra.mxu0 0
  %9858 = vmatprep.subr.bf16.mxu0 0
  %9859 = vmatpush1.bf16.msra.mxu0 0
  %9860 = vmatprep.mubr.bf16.mxu0 0
  %9861 = vmatmul.mubr.bf16.gmra.mrb[0].mxu0 %v9823
  %v9862 = vpop.f32.mrb[0].mxu0
  %v9863 = vadd.f32 0.0, %v9862
  %v9864 = vpop.f32.mrb[0].mxu0
  %v9865 = vpop.f32.mrb[0].mxu0
  %v9866 = vpop.f32.mrb[0].mxu0
  %9867 = vdwg.mxu0
  %v9868 = vcombine.low %v8437, %v8529
  %v9869 = vcombine.high %v8437, %v8529
  %v9871 = vunpack.c.l.s4 1983009808
  %v9872 = vunpack.c.0.s8 %v9871
  %v9873 = vlaneseq
  %v9874 = vshrl.u32 %v9873, 7
  %v9875 = vsub.s32 %v9872, %v9874
  %v9876 = vrot.slane %v9868, %v9875
  %v9878 = vunpack.c.l.s4 1983009808
  %v9879 = vunpack.c.0.s8 %v9878
  %v9880 = vlaneseq
  %v9881 = vshrl.u32 %v9880, 7
  %v9882 = vsub.s32 %v9879, %v9881
  %v9883 = vrot.slane %v9869, %v9882
  %v9884 = vcombine.low %v8483, %v8575
  %v9885 = vcombine.high %v8483, %v8575
  %v9887 = vunpack.c.l.s4 1983009808
  %v9888 = vunpack.c.0.s8 %v9887
  %v9889 = vlaneseq
  %v9890 = vshrl.u32 %v9889, 7
  %v9891 = vsub.s32 %v9888, %v9890
  %v9892 = vrot.slane %v9884, %v9891
  %v9894 = vunpack.c.l.s4 1983009808
  %v9895 = vunpack.c.0.s8 %v9894
  %v9896 = vlaneseq
  %v9897 = vshrl.u32 %v9896, 7
  %v9898 = vsub.s32 %v9895, %v9897
  %v9899 = vrot.slane %v9885, %v9898
  %v9900 = vcombine.low %v8621, %v8713
  %v9901 = vcombine.high %v8621, %v8713
  %v9903 = vunpack.c.l.s4 1983009808
  %v9904 = vunpack.c.0.s8 %v9903
  %v9905 = vlaneseq
  %v9906 = vshrl.u32 %v9905, 7
  %v9907 = vsub.s32 %v9904, %v9906
  %v9908 = vrot.slane %v9900, %v9907
  %v9910 = vunpack.c.l.s4 1983009808
  %v9911 = vunpack.c.0.s8 %v9910
  %v9912 = vlaneseq
  %v9913 = vshrl.u32 %v9912, 7
  %v9914 = vsub.s32 %v9911, %v9913
  %v9915 = vrot.slane %v9901, %v9914
  %v9916 = vcombine.low %v8667, %v8759
  %v9917 = vcombine.high %v8667, %v8759
  %v9919 = vunpack.c.l.s4 1983009808
  %v9920 = vunpack.c.0.s8 %v9919
  %v9921 = vlaneseq
  %v9922 = vshrl.u32 %v9921, 7
  %v9923 = vsub.s32 %v9920, %v9922
  %v9924 = vrot.slane %v9916, %v9923
  %v9926 = vunpack.c.l.s4 1983009808
  %v9927 = vunpack.c.0.s8 %v9926
  %v9928 = vlaneseq
  %v9929 = vshrl.u32 %v9928, 7
  %v9930 = vsub.s32 %v9927, %v9929
  %v9931 = vrot.slane %v9917, %v9930
  %v9932 = vcombine.low %v9876, %v9892
  %v9933 = vcombine.high %v9876, %v9892
  %v9935 = vunpack.c.l.s4 1934713408
  %v9936 = vunpack.c.0.s8 %v9935
  %v9937 = vlaneseq
  %v9938 = vshrl.u32 %v9937, 7
  %v9939 = vsub.s32 %v9936, %v9938
  %v9940 = vrot.slane %v9932, %v9939
  %v9942 = vunpack.c.l.s4 1934713408
  %v9943 = vunpack.c.0.s8 %v9942
  %v9944 = vlaneseq
  %v9945 = vshrl.u32 %v9944, 7
  %v9946 = vsub.s32 %v9943, %v9945
  %v9947 = vrot.slane %v9933, %v9946
  %v9948 = vcombine.low %v9883, %v9899
  %v9949 = vcombine.high %v9883, %v9899
  %v9951 = vunpack.c.l.s4 1934713408
  %v9952 = vunpack.c.0.s8 %v9951
  %v9953 = vlaneseq
  %v9954 = vshrl.u32 %v9953, 7
  %v9955 = vsub.s32 %v9952, %v9954
  %v9956 = vrot.slane %v9948, %v9955
  %v9958 = vunpack.c.l.s4 1934713408
  %v9959 = vunpack.c.0.s8 %v9958
  %v9960 = vlaneseq
  %v9961 = vshrl.u32 %v9960, 7
  %v9962 = vsub.s32 %v9959, %v9961
  %v9963 = vrot.slane %v9949, %v9962
  %v9964 = vcombine.low %v9908, %v9924
  %v9965 = vcombine.high %v9908, %v9924
  %v9967 = vunpack.c.l.s4 1934713408
  %v9968 = vunpack.c.0.s8 %v9967
  %v9969 = vlaneseq
  %v9970 = vshrl.u32 %v9969, 7
  %v9971 = vsub.s32 %v9968, %v9970
  %v9972 = vrot.slane %v9964, %v9971
  %v9974 = vunpack.c.l.s4 1934713408
  %v9975 = vunpack.c.0.s8 %v9974
  %v9976 = vlaneseq
  %v9977 = vshrl.u32 %v9976, 7
  %v9978 = vsub.s32 %v9975, %v9977
  %v9979 = vrot.slane %v9965, %v9978
  %v9980 = vcombine.low %v9915, %v9931
  %v9981 = vcombine.high %v9915, %v9931
  %v9983 = vunpack.c.l.s4 1934713408
  %v9984 = vunpack.c.0.s8 %v9983
  %v9985 = vlaneseq
  %v9986 = vshrl.u32 %v9985, 7
  %v9987 = vsub.s32 %v9984, %v9986
  %v9988 = vrot.slane %v9980, %v9987
  %v9990 = vunpack.c.l.s4 1934713408
  %v9991 = vunpack.c.0.s8 %v9990
  %v9992 = vlaneseq
  %v9993 = vshrl.u32 %v9992, 7
  %v9994 = vsub.s32 %v9991, %v9993
  %v9995 = vrot.slane %v9981, %v9994
  %v9996 = vcombine.low %v9940, %v9972
  %v9997 = vcombine.high %v9940, %v9972
  %v9998 = vcombine.low %v9947, %v9979
  %v9999 = vcombine.high %v9947, %v9979
  %v10000 = vcombine.low %v9956, %v9988
  %v10001 = vcombine.high %v9956, %v9988
  %v10002 = vcombine.low %v9963, %v9995
  %v10003 = vcombine.high %v9963, %v9995
  %v10004 = vcombine.low %v8805, %v8897
  %v10005 = vcombine.high %v8805, %v8897
  %v10007 = vunpack.c.l.s4 1983009808
  %v10008 = vunpack.c.0.s8 %v10007
  %v10009 = vlaneseq
  %v10010 = vshrl.u32 %v10009, 7
  %v10011 = vsub.s32 %v10008, %v10010
  %v10012 = vrot.slane %v10004, %v10011
  %v10014 = vunpack.c.l.s4 1983009808
  %v10015 = vunpack.c.0.s8 %v10014
  %v10016 = vlaneseq
  %v10017 = vshrl.u32 %v10016, 7
  %v10018 = vsub.s32 %v10015, %v10017
  %v10019 = vrot.slane %v10005, %v10018
  %v10020 = vcombine.low %v8851, %v8943
  %v10021 = vcombine.high %v8851, %v8943
  %v10023 = vunpack.c.l.s4 1983009808
  %v10024 = vunpack.c.0.s8 %v10023
  %v10025 = vlaneseq
  %v10026 = vshrl.u32 %v10025, 7
  %v10027 = vsub.s32 %v10024, %v10026
  %v10028 = vrot.slane %v10020, %v10027
  %v10030 = vunpack.c.l.s4 1983009808
  %v10031 = vunpack.c.0.s8 %v10030
  %v10032 = vlaneseq
  %v10033 = vshrl.u32 %v10032, 7
  %v10034 = vsub.s32 %v10031, %v10033
  %v10035 = vrot.slane %v10021, %v10034
  %v10036 = vcombine.low %v8989, %v9081
  %v10037 = vcombine.high %v8989, %v9081
  %v10039 = vunpack.c.l.s4 1983009808
  %v10040 = vunpack.c.0.s8 %v10039
  %v10041 = vlaneseq
  %v10042 = vshrl.u32 %v10041, 7
  %v10043 = vsub.s32 %v10040, %v10042
  %v10044 = vrot.slane %v10036, %v10043
  %v10046 = vunpack.c.l.s4 1983009808
  %v10047 = vunpack.c.0.s8 %v10046
  %v10048 = vlaneseq
  %v10049 = vshrl.u32 %v10048, 7
  %v10050 = vsub.s32 %v10047, %v10049
  %v10051 = vrot.slane %v10037, %v10050
  %v10052 = vcombine.low %v9035, %v9127
  %v10053 = vcombine.high %v9035, %v9127
  %v10055 = vunpack.c.l.s4 1983009808
  %v10056 = vunpack.c.0.s8 %v10055
  %v10057 = vlaneseq
  %v10058 = vshrl.u32 %v10057, 7
  %v10059 = vsub.s32 %v10056, %v10058
  %v10060 = vrot.slane %v10052, %v10059
  %v10062 = vunpack.c.l.s4 1983009808
  %v10063 = vunpack.c.0.s8 %v10062
  %v10064 = vlaneseq
  %v10065 = vshrl.u32 %v10064, 7
  %v10066 = vsub.s32 %v10063, %v10065
  %v10067 = vrot.slane %v10053, %v10066
  %v10068 = vcombine.low %v10012, %v10028
  %v10069 = vcombine.high %v10012, %v10028
  %v10071 = vunpack.c.l.s4 1934713408
  %v10072 = vunpack.c.0.s8 %v10071
  %v10073 = vlaneseq
  %v10074 = vshrl.u32 %v10073, 7
  %v10075 = vsub.s32 %v10072, %v10074
  %v10076 = vrot.slane %v10068, %v10075
  %v10078 = vunpack.c.l.s4 1934713408
  %v10079 = vunpack.c.0.s8 %v10078
  %v10080 = vlaneseq
  %v10081 = vshrl.u32 %v10080, 7
  %v10082 = vsub.s32 %v10079, %v10081
  %v10083 = vrot.slane %v10069, %v10082
  %v10084 = vcombine.low %v10019, %v10035
  %v10085 = vcombine.high %v10019, %v10035
  %v10087 = vunpack.c.l.s4 1934713408
  %v10088 = vunpack.c.0.s8 %v10087
  %v10089 = vlaneseq
  %v10090 = vshrl.u32 %v10089, 7
  %v10091 = vsub.s32 %v10088, %v10090
  %v10092 = vrot.slane %v10084, %v10091
  %v10094 = vunpack.c.l.s4 1934713408
  %v10095 = vunpack.c.0.s8 %v10094
  %v10096 = vlaneseq
  %v10097 = vshrl.u32 %v10096, 7
  %v10098 = vsub.s32 %v10095, %v10097
  %v10099 = vrot.slane %v10085, %v10098
  %v10100 = vcombine.low %v10044, %v10060
  %v10101 = vcombine.high %v10044, %v10060
  %v10103 = vunpack.c.l.s4 1934713408
  %v10104 = vunpack.c.0.s8 %v10103
  %v10105 = vlaneseq
  %v10106 = vshrl.u32 %v10105, 7
  %v10107 = vsub.s32 %v10104, %v10106
  %v10108 = vrot.slane %v10100, %v10107
  %v10110 = vunpack.c.l.s4 1934713408
  %v10111 = vunpack.c.0.s8 %v10110
  %v10112 = vlaneseq
  %v10113 = vshrl.u32 %v10112, 7
  %v10114 = vsub.s32 %v10111, %v10113
  %v10115 = vrot.slane %v10101, %v10114
  %v10116 = vcombine.low %v10051, %v10067
  %v10117 = vcombine.high %v10051, %v10067
  %v10119 = vunpack.c.l.s4 1934713408
  %v10120 = vunpack.c.0.s8 %v10119
  %v10121 = vlaneseq
  %v10122 = vshrl.u32 %v10121, 7
  %v10123 = vsub.s32 %v10120, %v10122
  %v10124 = vrot.slane %v10116, %v10123
  %v10126 = vunpack.c.l.s4 1934713408
  %v10127 = vunpack.c.0.s8 %v10126
  %v10128 = vlaneseq
  %v10129 = vshrl.u32 %v10128, 7
  %v10130 = vsub.s32 %v10127, %v10129
  %v10131 = vrot.slane %v10117, %v10130
  %v10132 = vcombine.low %v10076, %v10108
  %v10133 = vcombine.high %v10076, %v10108
  %v10134 = vcombine.low %v10083, %v10115
  %v10135 = vcombine.high %v10083, %v10115
  %v10136 = vcombine.low %v10092, %v10124
  %v10137 = vcombine.high %v10092, %v10124
  %v10138 = vcombine.low %v10099, %v10131
  %v10139 = vcombine.high %v10099, %v10131
  %v10140 = vcombine.low %v9173, %v9265
  %v10141 = vcombine.high %v9173, %v9265
  %v10143 = vunpack.c.l.s4 1983009808
  %v10144 = vunpack.c.0.s8 %v10143
  %v10145 = vlaneseq
  %v10146 = vshrl.u32 %v10145, 7
  %v10147 = vsub.s32 %v10144, %v10146
  %v10148 = vrot.slane %v10140, %v10147
  %v10150 = vunpack.c.l.s4 1983009808
  %v10151 = vunpack.c.0.s8 %v10150
  %v10152 = vlaneseq
  %v10153 = vshrl.u32 %v10152, 7
  %v10154 = vsub.s32 %v10151, %v10153
  %v10155 = vrot.slane %v10141, %v10154
  %v10156 = vcombine.low %v9219, %v9311
  %v10157 = vcombine.high %v9219, %v9311
  %v10159 = vunpack.c.l.s4 1983009808
  %v10160 = vunpack.c.0.s8 %v10159
  %v10161 = vlaneseq
  %v10162 = vshrl.u32 %v10161, 7
  %v10163 = vsub.s32 %v10160, %v10162
  %v10164 = vrot.slane %v10156, %v10163
  %v10166 = vunpack.c.l.s4 1983009808
  %v10167 = vunpack.c.0.s8 %v10166
  %v10168 = vlaneseq
  %v10169 = vshrl.u32 %v10168, 7
  %v10170 = vsub.s32 %v10167, %v10169
  %v10171 = vrot.slane %v10157, %v10170
  %v10172 = vcombine.low %v9357, %v9449
  %v10173 = vcombine.high %v9357, %v9449
  %v10175 = vunpack.c.l.s4 1983009808
  %v10176 = vunpack.c.0.s8 %v10175
  %v10177 = vlaneseq
  %v10178 = vshrl.u32 %v10177, 7
  %v10179 = vsub.s32 %v10176, %v10178
  %v10180 = vrot.slane %v10172, %v10179
  %v10182 = vunpack.c.l.s4 1983009808
  %v10183 = vunpack.c.0.s8 %v10182
  %v10184 = vlaneseq
  %v10185 = vshrl.u32 %v10184, 7
  %v10186 = vsub.s32 %v10183, %v10185
  %v10187 = vrot.slane %v10173, %v10186
  %v10188 = vcombine.low %v9403, %v9495
  %v10189 = vcombine.high %v9403, %v9495
  %v10191 = vunpack.c.l.s4 1983009808
  %v10192 = vunpack.c.0.s8 %v10191
  %v10193 = vlaneseq
  %v10194 = vshrl.u32 %v10193, 7
  %v10195 = vsub.s32 %v10192, %v10194
  %v10196 = vrot.slane %v10188, %v10195
  %v10198 = vunpack.c.l.s4 1983009808
  %v10199 = vunpack.c.0.s8 %v10198
  %v10200 = vlaneseq
  %v10201 = vshrl.u32 %v10200, 7
  %v10202 = vsub.s32 %v10199, %v10201
  %v10203 = vrot.slane %v10189, %v10202
  %v10204 = vcombine.low %v10148, %v10164
  %v10205 = vcombine.high %v10148, %v10164
  %v10207 = vunpack.c.l.s4 1934713408
  %v10208 = vunpack.c.0.s8 %v10207
  %v10209 = vlaneseq
  %v10210 = vshrl.u32 %v10209, 7
  %v10211 = vsub.s32 %v10208, %v10210
  %v10212 = vrot.slane %v10204, %v10211
  %v10214 = vunpack.c.l.s4 1934713408
  %v10215 = vunpack.c.0.s8 %v10214
  %v10216 = vlaneseq
  %v10217 = vshrl.u32 %v10216, 7
  %v10218 = vsub.s32 %v10215, %v10217
  %v10219 = vrot.slane %v10205, %v10218
  %v10220 = vcombine.low %v10155, %v10171
  %v10221 = vcombine.high %v10155, %v10171
  %v10223 = vunpack.c.l.s4 1934713408
  %v10224 = vunpack.c.0.s8 %v10223
  %v10225 = vlaneseq
  %v10226 = vshrl.u32 %v10225, 7
  %v10227 = vsub.s32 %v10224, %v10226
  %v10228 = vrot.slane %v10220, %v10227
  %v10230 = vunpack.c.l.s4 1934713408
  %v10231 = vunpack.c.0.s8 %v10230
  %v10232 = vlaneseq
  %v10233 = vshrl.u32 %v10232, 7
  %v10234 = vsub.s32 %v10231, %v10233
  %v10235 = vrot.slane %v10221, %v10234
  %v10236 = vcombine.low %v10180, %v10196
  %v10237 = vcombine.high %v10180, %v10196
  %v10239 = vunpack.c.l.s4 1934713408
  %v10240 = vunpack.c.0.s8 %v10239
  %v10241 = vlaneseq
  %v10242 = vshrl.u32 %v10241, 7
  %v10243 = vsub.s32 %v10240, %v10242
  %v10244 = vrot.slane %v10236, %v10243
  %v10246 = vunpack.c.l.s4 1934713408
  %v10247 = vunpack.c.0.s8 %v10246
  %v10248 = vlaneseq
  %v10249 = vshrl.u32 %v10248, 7
  %v10250 = vsub.s32 %v10247, %v10249
  %v10251 = vrot.slane %v10237, %v10250
  %v10252 = vcombine.low %v10187, %v10203
  %v10253 = vcombine.high %v10187, %v10203
  %v10255 = vunpack.c.l.s4 1934713408
  %v10256 = vunpack.c.0.s8 %v10255
  %v10257 = vlaneseq
  %v10258 = vshrl.u32 %v10257, 7
  %v10259 = vsub.s32 %v10256, %v10258
  %v10260 = vrot.slane %v10252, %v10259
  %v10262 = vunpack.c.l.s4 1934713408
  %v10263 = vunpack.c.0.s8 %v10262
  %v10264 = vlaneseq
  %v10265 = vshrl.u32 %v10264, 7
  %v10266 = vsub.s32 %v10263, %v10265
  %v10267 = vrot.slane %v10253, %v10266
  %v10268 = vcombine.low %v10212, %v10244
  %v10269 = vcombine.high %v10212, %v10244
  %v10270 = vcombine.low %v10219, %v10251
  %v10271 = vcombine.high %v10219, %v10251
  %v10272 = vcombine.low %v10228, %v10260
  %v10273 = vcombine.high %v10228, %v10260
  %v10274 = vcombine.low %v10235, %v10267
  %v10275 = vcombine.high %v10235, %v10267
  %v10276 = vcombine.low %v9541, %v9633
  %v10277 = vcombine.high %v9541, %v9633
  %v10279 = vunpack.c.l.s4 1983009808
  %v10280 = vunpack.c.0.s8 %v10279
  %v10281 = vlaneseq
  %v10282 = vshrl.u32 %v10281, 7
  %v10283 = vsub.s32 %v10280, %v10282
  %v10284 = vrot.slane %v10276, %v10283
  %v10286 = vunpack.c.l.s4 1983009808
  %v10287 = vunpack.c.0.s8 %v10286
  %v10288 = vlaneseq
  %v10289 = vshrl.u32 %v10288, 7
  %v10290 = vsub.s32 %v10287, %v10289
  %v10291 = vrot.slane %v10277, %v10290
  %v10292 = vcombine.low %v9587, %v9679
  %v10293 = vcombine.high %v9587, %v9679
  %v10295 = vunpack.c.l.s4 1983009808
  %v10296 = vunpack.c.0.s8 %v10295
  %v10297 = vlaneseq
  %v10298 = vshrl.u32 %v10297, 7
  %v10299 = vsub.s32 %v10296, %v10298
  %v10300 = vrot.slane %v10292, %v10299
  %v10302 = vunpack.c.l.s4 1983009808
  %v10303 = vunpack.c.0.s8 %v10302
  %v10304 = vlaneseq
  %v10305 = vshrl.u32 %v10304, 7
  %v10306 = vsub.s32 %v10303, %v10305
  %v10307 = vrot.slane %v10293, %v10306
  %v10308 = vcombine.low %v9725, %v9817
  %v10309 = vcombine.high %v9725, %v9817
  %v10311 = vunpack.c.l.s4 1983009808
  %v10312 = vunpack.c.0.s8 %v10311
  %v10313 = vlaneseq
  %v10314 = vshrl.u32 %v10313, 7
  %v10315 = vsub.s32 %v10312, %v10314
  %v10316 = vrot.slane %v10308, %v10315
  %v10318 = vunpack.c.l.s4 1983009808
  %v10319 = vunpack.c.0.s8 %v10318
  %v10320 = vlaneseq
  %v10321 = vshrl.u32 %v10320, 7
  %v10322 = vsub.s32 %v10319, %v10321
  %v10323 = vrot.slane %v10309, %v10322
  %v10324 = vcombine.low %v9771, %v9863
  %v10325 = vcombine.high %v9771, %v9863
  %v10327 = vunpack.c.l.s4 1983009808
  %v10328 = vunpack.c.0.s8 %v10327
  %v10329 = vlaneseq
  %v10330 = vshrl.u32 %v10329, 7
  %v10331 = vsub.s32 %v10328, %v10330
  %v10332 = vrot.slane %v10324, %v10331
  %v10334 = vunpack.c.l.s4 1983009808
  %v10335 = vunpack.c.0.s8 %v10334
  %v10336 = vlaneseq
  %v10337 = vshrl.u32 %v10336, 7
  %v10338 = vsub.s32 %v10335, %v10337
  %v10339 = vrot.slane %v10325, %v10338
  %v10340 = vcombine.low %v10284, %v10300
  %v10341 = vcombine.high %v10284, %v10300
  %v10343 = vunpack.c.l.s4 1934713408
  %v10344 = vunpack.c.0.s8 %v10343
  %v10345 = vlaneseq
  %v10346 = vshrl.u32 %v10345, 7
  %v10347 = vsub.s32 %v10344, %v10346
  %v10348 = vrot.slane %v10340, %v10347
  %v10350 = vunpack.c.l.s4 1934713408
  %v10351 = vunpack.c.0.s8 %v10350
  %v10352 = vlaneseq
  %v10353 = vshrl.u32 %v10352, 7
  %v10354 = vsub.s32 %v10351, %v10353
  %v10355 = vrot.slane %v10341, %v10354
  %v10356 = vcombine.low %v10291, %v10307
  %v10357 = vcombine.high %v10291, %v10307
  %v10359 = vunpack.c.l.s4 1934713408
  %v10360 = vunpack.c.0.s8 %v10359
  %v10361 = vlaneseq
  %v10362 = vshrl.u32 %v10361, 7
  %v10363 = vsub.s32 %v10360, %v10362
  %v10364 = vrot.slane %v10356, %v10363
  %v10366 = vunpack.c.l.s4 1934713408
  %v10367 = vunpack.c.0.s8 %v10366
  %v10368 = vlaneseq
  %v10369 = vshrl.u32 %v10368, 7
  %v10370 = vsub.s32 %v10367, %v10369
  %v10371 = vrot.slane %v10357, %v10370
  %v10372 = vcombine.low %v10316, %v10332
  %v10373 = vcombine.high %v10316, %v10332
  %v10375 = vunpack.c.l.s4 1934713408
  %v10376 = vunpack.c.0.s8 %v10375
  %v10377 = vlaneseq
  %v10378 = vshrl.u32 %v10377, 7
  %v10379 = vsub.s32 %v10376, %v10378
  %v10380 = vrot.slane %v10372, %v10379
  %v10382 = vunpack.c.l.s4 1934713408
  %v10383 = vunpack.c.0.s8 %v10382
  %v10384 = vlaneseq
  %v10385 = vshrl.u32 %v10384, 7
  %v10386 = vsub.s32 %v10383, %v10385
  %v10387 = vrot.slane %v10373, %v10386
  %v10388 = vcombine.low %v10323, %v10339
  %v10389 = vcombine.high %v10323, %v10339
  %v10391 = vunpack.c.l.s4 1934713408
  %v10392 = vunpack.c.0.s8 %v10391
  %v10393 = vlaneseq
  %v10394 = vshrl.u32 %v10393, 7
  %v10395 = vsub.s32 %v10392, %v10394
  %v10396 = vrot.slane %v10388, %v10395
  %v10398 = vunpack.c.l.s4 1934713408
  %v10399 = vunpack.c.0.s8 %v10398
  %v10400 = vlaneseq
  %v10401 = vshrl.u32 %v10400, 7
  %v10402 = vsub.s32 %v10399, %v10401
  %v10403 = vrot.slane %v10389, %v10402
  %v10404 = vcombine.low %v10348, %v10380
  %v10405 = vcombine.high %v10348, %v10380
  %v10406 = vcombine.low %v10355, %v10387
  %v10407 = vcombine.high %v10355, %v10387
  %v10408 = vcombine.low %v10364, %v10396
  %v10409 = vcombine.high %v10364, %v10396
  %v10410 = vcombine.low %v10371, %v10403
  %v10411 = vcombine.high %v10371, %v10403
  %v10412 = vcombine.low %v9996, %v9998
  %v10413 = vcombine.high %v9996, %v9998
  %v10415 = vunpack.c.l.s4 1983009808
  %v10416 = vunpack.c.0.s8 %v10415
  %v10417 = vlaneseq
  %v10418 = vshrl.u32 %v10417, 7
  %v10419 = vsub.s32 %v10416, %v10418
  %v10420 = vrot.slane %v10412, %v10419
  %v10422 = vunpack.c.l.s4 1983009808
  %v10423 = vunpack.c.0.s8 %v10422
  %v10424 = vlaneseq
  %v10425 = vshrl.u32 %v10424, 7
  %v10426 = vsub.s32 %v10423, %v10425
  %v10427 = vrot.slane %v10413, %v10426
  %v10428 = vcombine.low %v9997, %v9999
  %v10429 = vcombine.high %v9997, %v9999
  %v10431 = vunpack.c.l.s4 1983009808
  %v10432 = vunpack.c.0.s8 %v10431
  %v10433 = vlaneseq
  %v10434 = vshrl.u32 %v10433, 7
  %v10435 = vsub.s32 %v10432, %v10434
  %v10436 = vrot.slane %v10428, %v10435
  %v10438 = vunpack.c.l.s4 1983009808
  %v10439 = vunpack.c.0.s8 %v10438
  %v10440 = vlaneseq
  %v10441 = vshrl.u32 %v10440, 7
  %v10442 = vsub.s32 %v10439, %v10441
  %v10443 = vrot.slane %v10429, %v10442
  %v10444 = vcombine.low %v10000, %v10002
  %v10445 = vcombine.high %v10000, %v10002
  %v10447 = vunpack.c.l.s4 1983009808
  %v10448 = vunpack.c.0.s8 %v10447
  %v10449 = vlaneseq
  %v10450 = vshrl.u32 %v10449, 7
  %v10451 = vsub.s32 %v10448, %v10450
  %v10452 = vrot.slane %v10444, %v10451
  %v10454 = vunpack.c.l.s4 1983009808
  %v10455 = vunpack.c.0.s8 %v10454
  %v10456 = vlaneseq
  %v10457 = vshrl.u32 %v10456, 7
  %v10458 = vsub.s32 %v10455, %v10457
  %v10459 = vrot.slane %v10445, %v10458
  %v10460 = vcombine.low %v10001, %v10003
  %v10461 = vcombine.high %v10001, %v10003
  %v10463 = vunpack.c.l.s4 1983009808
  %v10464 = vunpack.c.0.s8 %v10463
  %v10465 = vlaneseq
  %v10466 = vshrl.u32 %v10465, 7
  %v10467 = vsub.s32 %v10464, %v10466
  %v10468 = vrot.slane %v10460, %v10467
  %v10470 = vunpack.c.l.s4 1983009808
  %v10471 = vunpack.c.0.s8 %v10470
  %v10472 = vlaneseq
  %v10473 = vshrl.u32 %v10472, 7
  %v10474 = vsub.s32 %v10471, %v10473
  %v10475 = vrot.slane %v10461, %v10474
  %v10476 = vcombine.low %v10420, %v10436
  %v10477 = vcombine.high %v10420, %v10436
  %v10479 = vunpack.c.l.s4 1934713408
  %v10480 = vunpack.c.0.s8 %v10479
  %v10481 = vlaneseq
  %v10482 = vshrl.u32 %v10481, 7
  %v10483 = vsub.s32 %v10480, %v10482
  %v10484 = vrot.slane %v10476, %v10483
  %v10486 = vunpack.c.l.s4 1934713408
  %v10487 = vunpack.c.0.s8 %v10486
  %v10488 = vlaneseq
  %v10489 = vshrl.u32 %v10488, 7
  %v10490 = vsub.s32 %v10487, %v10489
  %v10491 = vrot.slane %v10477, %v10490
  %v10492 = vcombine.low %v10427, %v10443
  %v10493 = vcombine.high %v10427, %v10443
  %v10495 = vunpack.c.l.s4 1934713408
  %v10496 = vunpack.c.0.s8 %v10495
  %v10497 = vlaneseq
  %v10498 = vshrl.u32 %v10497, 7
  %v10499 = vsub.s32 %v10496, %v10498
  %v10500 = vrot.slane %v10492, %v10499
  %v10502 = vunpack.c.l.s4 1934713408
  %v10503 = vunpack.c.0.s8 %v10502
  %v10504 = vlaneseq
  %v10505 = vshrl.u32 %v10504, 7
  %v10506 = vsub.s32 %v10503, %v10505
  %v10507 = vrot.slane %v10493, %v10506
  %v10508 = vcombine.low %v10452, %v10468
  %v10509 = vcombine.high %v10452, %v10468
  %v10511 = vunpack.c.l.s4 1934713408
  %v10512 = vunpack.c.0.s8 %v10511
  %v10513 = vlaneseq
  %v10514 = vshrl.u32 %v10513, 7
  %v10515 = vsub.s32 %v10512, %v10514
  %v10516 = vrot.slane %v10508, %v10515
  %v10518 = vunpack.c.l.s4 1934713408
  %v10519 = vunpack.c.0.s8 %v10518
  %v10520 = vlaneseq
  %v10521 = vshrl.u32 %v10520, 7
  %v10522 = vsub.s32 %v10519, %v10521
  %v10523 = vrot.slane %v10509, %v10522
  %v10524 = vcombine.low %v10459, %v10475
  %v10525 = vcombine.high %v10459, %v10475
  %v10527 = vunpack.c.l.s4 1934713408
  %v10528 = vunpack.c.0.s8 %v10527
  %v10529 = vlaneseq
  %v10530 = vshrl.u32 %v10529, 7
  %v10531 = vsub.s32 %v10528, %v10530
  %v10532 = vrot.slane %v10524, %v10531
  %v10534 = vunpack.c.l.s4 1934713408
  %v10535 = vunpack.c.0.s8 %v10534
  %v10536 = vlaneseq
  %v10537 = vshrl.u32 %v10536, 7
  %v10538 = vsub.s32 %v10535, %v10537
  %v10539 = vrot.slane %v10525, %v10538
  %v10540 = vcombine.low %v10484, %v10516
  %v10541 = vcombine.high %v10484, %v10516
  %v10542 = vcombine.low %v10491, %v10523
  %v10543 = vcombine.high %v10491, %v10523
  %v10544 = vcombine.low %v10500, %v10532
  %v10545 = vcombine.high %v10500, %v10532
  %v10546 = vcombine.low %v10507, %v10539
  %v10547 = vcombine.high %v10507, %v10539
  %v10548 = vcombine.low %v10132, %v10134
  %v10549 = vcombine.high %v10132, %v10134
  %v10551 = vunpack.c.l.s4 1983009808
  %v10552 = vunpack.c.0.s8 %v10551
  %v10553 = vlaneseq
  %v10554 = vshrl.u32 %v10553, 7
  %v10555 = vsub.s32 %v10552, %v10554
  %v10556 = vrot.slane %v10548, %v10555
  %v10558 = vunpack.c.l.s4 1983009808
  %v10559 = vunpack.c.0.s8 %v10558
  %v10560 = vlaneseq
  %v10561 = vshrl.u32 %v10560, 7
  %v10562 = vsub.s32 %v10559, %v10561
  %v10563 = vrot.slane %v10549, %v10562
  %v10564 = vcombine.low %v10133, %v10135
  %v10565 = vcombine.high %v10133, %v10135
  %v10567 = vunpack.c.l.s4 1983009808
  %v10568 = vunpack.c.0.s8 %v10567
  %v10569 = vlaneseq
  %v10570 = vshrl.u32 %v10569, 7
  %v10571 = vsub.s32 %v10568, %v10570
  %v10572 = vrot.slane %v10564, %v10571
  %v10574 = vunpack.c.l.s4 1983009808
  %v10575 = vunpack.c.0.s8 %v10574
  %v10576 = vlaneseq
  %v10577 = vshrl.u32 %v10576, 7
  %v10578 = vsub.s32 %v10575, %v10577
  %v10579 = vrot.slane %v10565, %v10578
  %v10580 = vcombine.low %v10136, %v10138
  %v10581 = vcombine.high %v10136, %v10138
  %v10583 = vunpack.c.l.s4 1983009808
  %v10584 = vunpack.c.0.s8 %v10583
  %v10585 = vlaneseq
  %v10586 = vshrl.u32 %v10585, 7
  %v10587 = vsub.s32 %v10584, %v10586
  %v10588 = vrot.slane %v10580, %v10587
  %v10590 = vunpack.c.l.s4 1983009808
  %v10591 = vunpack.c.0.s8 %v10590
  %v10592 = vlaneseq
  %v10593 = vshrl.u32 %v10592, 7
  %v10594 = vsub.s32 %v10591, %v10593
  %v10595 = vrot.slane %v10581, %v10594
  %v10596 = vcombine.low %v10137, %v10139
  %v10597 = vcombine.high %v10137, %v10139
  %v10599 = vunpack.c.l.s4 1983009808
  %v10600 = vunpack.c.0.s8 %v10599
  %v10601 = vlaneseq
  %v10602 = vshrl.u32 %v10601, 7
  %v10603 = vsub.s32 %v10600, %v10602
  %v10604 = vrot.slane %v10596, %v10603
  %v10606 = vunpack.c.l.s4 1983009808
  %v10607 = vunpack.c.0.s8 %v10606
  %v10608 = vlaneseq
  %v10609 = vshrl.u32 %v10608, 7
  %v10610 = vsub.s32 %v10607, %v10609
  %v10611 = vrot.slane %v10597, %v10610
  %v10612 = vcombine.low %v10556, %v10572
  %v10613 = vcombine.high %v10556, %v10572
  %v10615 = vunpack.c.l.s4 1934713408
  %v10616 = vunpack.c.0.s8 %v10615
  %v10617 = vlaneseq
  %v10618 = vshrl.u32 %v10617, 7
  %v10619 = vsub.s32 %v10616, %v10618
  %v10620 = vrot.slane %v10612, %v10619
  %v10622 = vunpack.c.l.s4 1934713408
  %v10623 = vunpack.c.0.s8 %v10622
  %v10624 = vlaneseq
  %v10625 = vshrl.u32 %v10624, 7
  %v10626 = vsub.s32 %v10623, %v10625
  %v10627 = vrot.slane %v10613, %v10626
  %v10628 = vcombine.low %v10563, %v10579
  %v10629 = vcombine.high %v10563, %v10579
  %v10631 = vunpack.c.l.s4 1934713408
  %v10632 = vunpack.c.0.s8 %v10631
  %v10633 = vlaneseq
  %v10634 = vshrl.u32 %v10633, 7
  %v10635 = vsub.s32 %v10632, %v10634
  %v10636 = vrot.slane %v10628, %v10635
  %v10638 = vunpack.c.l.s4 1934713408
  %v10639 = vunpack.c.0.s8 %v10638
  %v10640 = vlaneseq
  %v10641 = vshrl.u32 %v10640, 7
  %v10642 = vsub.s32 %v10639, %v10641
  %v10643 = vrot.slane %v10629, %v10642
  %v10644 = vcombine.low %v10588, %v10604
  %v10645 = vcombine.high %v10588, %v10604
  %v10647 = vunpack.c.l.s4 1934713408
  %v10648 = vunpack.c.0.s8 %v10647
  %v10649 = vlaneseq
  %v10650 = vshrl.u32 %v10649, 7
  %v10651 = vsub.s32 %v10648, %v10650
  %v10652 = vrot.slane %v10644, %v10651
  %v10654 = vunpack.c.l.s4 1934713408
  %v10655 = vunpack.c.0.s8 %v10654
  %v10656 = vlaneseq
  %v10657 = vshrl.u32 %v10656, 7
  %v10658 = vsub.s32 %v10655, %v10657
  %v10659 = vrot.slane %v10645, %v10658
  %v10660 = vcombine.low %v10595, %v10611
  %v10661 = vcombine.high %v10595, %v10611
  %v10663 = vunpack.c.l.s4 1934713408
  %v10664 = vunpack.c.0.s8 %v10663
  %v10665 = vlaneseq
  %v10666 = vshrl.u32 %v10665, 7
  %v10667 = vsub.s32 %v10664, %v10666
  %v10668 = vrot.slane %v10660, %v10667
  %v10670 = vunpack.c.l.s4 1934713408
  %v10671 = vunpack.c.0.s8 %v10670
  %v10672 = vlaneseq
  %v10673 = vshrl.u32 %v10672, 7
  %v10674 = vsub.s32 %v10671, %v10673
  %v10675 = vrot.slane %v10661, %v10674
  %v10676 = vcombine.low %v10620, %v10652
  %v10677 = vcombine.high %v10620, %v10652
  %v10678 = vcombine.low %v10627, %v10659
  %v10679 = vcombine.high %v10627, %v10659
  %v10680 = vcombine.low %v10636, %v10668
  %v10681 = vcombine.high %v10636, %v10668
  %v10682 = vcombine.low %v10643, %v10675
  %v10683 = vcombine.high %v10643, %v10675
  %v10684 = vcombine.low %v10268, %v10270
  %v10685 = vcombine.high %v10268, %v10270
  %v10687 = vunpack.c.l.s4 1983009808
  %v10688 = vunpack.c.0.s8 %v10687
  %v10689 = vlaneseq
  %v10690 = vshrl.u32 %v10689, 7
  %v10691 = vsub.s32 %v10688, %v10690
  %v10692 = vrot.slane %v10684, %v10691
  %v10694 = vunpack.c.l.s4 1983009808
  %v10695 = vunpack.c.0.s8 %v10694
  %v10696 = vlaneseq
  %v10697 = vshrl.u32 %v10696, 7
  %v10698 = vsub.s32 %v10695, %v10697
  %v10699 = vrot.slane %v10685, %v10698
  %v10700 = vcombine.low %v10269, %v10271
  %v10701 = vcombine.high %v10269, %v10271
  %v10703 = vunpack.c.l.s4 1983009808
  %v10704 = vunpack.c.0.s8 %v10703
  %v10705 = vlaneseq
  %v10706 = vshrl.u32 %v10705, 7
  %v10707 = vsub.s32 %v10704, %v10706
  %v10708 = vrot.slane %v10700, %v10707
  %v10710 = vunpack.c.l.s4 1983009808
  %v10711 = vunpack.c.0.s8 %v10710
  %v10712 = vlaneseq
  %v10713 = vshrl.u32 %v10712, 7
  %v10714 = vsub.s32 %v10711, %v10713
  %v10715 = vrot.slane %v10701, %v10714
  %v10716 = vcombine.low %v10272, %v10274
  %v10717 = vcombine.high %v10272, %v10274
  %v10719 = vunpack.c.l.s4 1983009808
  %v10720 = vunpack.c.0.s8 %v10719
  %v10721 = vlaneseq
  %v10722 = vshrl.u32 %v10721, 7
  %v10723 = vsub.s32 %v10720, %v10722
  %v10724 = vrot.slane %v10716, %v10723
  %v10726 = vunpack.c.l.s4 1983009808
  %v10727 = vunpack.c.0.s8 %v10726
  %v10728 = vlaneseq
  %v10729 = vshrl.u32 %v10728, 7
  %v10730 = vsub.s32 %v10727, %v10729
  %v10731 = vrot.slane %v10717, %v10730
  %v10732 = vcombine.low %v10273, %v10275
  %v10733 = vcombine.high %v10273, %v10275
  %v10735 = vunpack.c.l.s4 1983009808
  %v10736 = vunpack.c.0.s8 %v10735
  %v10737 = vlaneseq
  %v10738 = vshrl.u32 %v10737, 7
  %v10739 = vsub.s32 %v10736, %v10738
  %v10740 = vrot.slane %v10732, %v10739
  %v10742 = vunpack.c.l.s4 1983009808
  %v10743 = vunpack.c.0.s8 %v10742
  %v10744 = vlaneseq
  %v10745 = vshrl.u32 %v10744, 7
  %v10746 = vsub.s32 %v10743, %v10745
  %v10747 = vrot.slane %v10733, %v10746
  %v10748 = vcombine.low %v10692, %v10708
  %v10749 = vcombine.high %v10692, %v10708
  %v10751 = vunpack.c.l.s4 1934713408
  %v10752 = vunpack.c.0.s8 %v10751
  %v10753 = vlaneseq
  %v10754 = vshrl.u32 %v10753, 7
  %v10755 = vsub.s32 %v10752, %v10754
  %v10756 = vrot.slane %v10748, %v10755
  %v10758 = vunpack.c.l.s4 1934713408
  %v10759 = vunpack.c.0.s8 %v10758
  %v10760 = vlaneseq
  %v10761 = vshrl.u32 %v10760, 7
  %v10762 = vsub.s32 %v10759, %v10761
  %v10763 = vrot.slane %v10749, %v10762
  %v10764 = vcombine.low %v10699, %v10715
  %v10765 = vcombine.high %v10699, %v10715
  %v10767 = vunpack.c.l.s4 1934713408
  %v10768 = vunpack.c.0.s8 %v10767
  %v10769 = vlaneseq
  %v10770 = vshrl.u32 %v10769, 7
  %v10771 = vsub.s32 %v10768, %v10770
  %v10772 = vrot.slane %v10764, %v10771
  %v10774 = vunpack.c.l.s4 1934713408
  %v10775 = vunpack.c.0.s8 %v10774
  %v10776 = vlaneseq
  %v10777 = vshrl.u32 %v10776, 7
  %v10778 = vsub.s32 %v10775, %v10777
  %v10779 = vrot.slane %v10765, %v10778
  %v10780 = vcombine.low %v10724, %v10740
  %v10781 = vcombine.high %v10724, %v10740
  %v10783 = vunpack.c.l.s4 1934713408
  %v10784 = vunpack.c.0.s8 %v10783
  %v10785 = vlaneseq
  %v10786 = vshrl.u32 %v10785, 7
  %v10787 = vsub.s32 %v10784, %v10786
  %v10788 = vrot.slane %v10780, %v10787
  %v10790 = vunpack.c.l.s4 1934713408
  %v10791 = vunpack.c.0.s8 %v10790
  %v10792 = vlaneseq
  %v10793 = vshrl.u32 %v10792, 7
  %v10794 = vsub.s32 %v10791, %v10793
  %v10795 = vrot.slane %v10781, %v10794
  %v10796 = vcombine.low %v10731, %v10747
  %v10797 = vcombine.high %v10731, %v10747
  %v10799 = vunpack.c.l.s4 1934713408
  %v10800 = vunpack.c.0.s8 %v10799
  %v10801 = vlaneseq
  %v10802 = vshrl.u32 %v10801, 7
  %v10803 = vsub.s32 %v10800, %v10802
  %v10804 = vrot.slane %v10796, %v10803
  %v10806 = vunpack.c.l.s4 1934713408
  %v10807 = vunpack.c.0.s8 %v10806
  %v10808 = vlaneseq
  %v10809 = vshrl.u32 %v10808, 7
  %v10810 = vsub.s32 %v10807, %v10809
  %v10811 = vrot.slane %v10797, %v10810
  %v10812 = vcombine.low %v10756, %v10788
  %v10813 = vcombine.high %v10756, %v10788
  %v10814 = vcombine.low %v10763, %v10795
  %v10815 = vcombine.high %v10763, %v10795
  %v10816 = vcombine.low %v10772, %v10804
  %v10817 = vcombine.high %v10772, %v10804
  %v10818 = vcombine.low %v10779, %v10811
  %v10819 = vcombine.high %v10779, %v10811
  %v10820 = vcombine.low %v10404, %v10406
  %v10821 = vcombine.high %v10404, %v10406
  %v10823 = vunpack.c.l.s4 1983009808
  %v10824 = vunpack.c.0.s8 %v10823
  %v10825 = vlaneseq
  %v10826 = vshrl.u32 %v10825, 7
  %v10827 = vsub.s32 %v10824, %v10826
  %v10828 = vrot.slane %v10820, %v10827
  %v10830 = vunpack.c.l.s4 1983009808
  %v10831 = vunpack.c.0.s8 %v10830
  %v10832 = vlaneseq
  %v10833 = vshrl.u32 %v10832, 7
  %v10834 = vsub.s32 %v10831, %v10833
  %v10835 = vrot.slane %v10821, %v10834
  %v10836 = vcombine.low %v10405, %v10407
  %v10837 = vcombine.high %v10405, %v10407
  %v10839 = vunpack.c.l.s4 1983009808
  %v10840 = vunpack.c.0.s8 %v10839
  %v10841 = vlaneseq
  %v10842 = vshrl.u32 %v10841, 7
  %v10843 = vsub.s32 %v10840, %v10842
  %v10844 = vrot.slane %v10836, %v10843
  %v10846 = vunpack.c.l.s4 1983009808
  %v10847 = vunpack.c.0.s8 %v10846
  %v10848 = vlaneseq
  %v10849 = vshrl.u32 %v10848, 7
  %v10850 = vsub.s32 %v10847, %v10849
  %v10851 = vrot.slane %v10837, %v10850
  %v10852 = vcombine.low %v10408, %v10410
  %v10853 = vcombine.high %v10408, %v10410
  %v10855 = vunpack.c.l.s4 1983009808
  %v10856 = vunpack.c.0.s8 %v10855
  %v10857 = vlaneseq
  %v10858 = vshrl.u32 %v10857, 7
  %v10859 = vsub.s32 %v10856, %v10858
  %v10860 = vrot.slane %v10852, %v10859
  %v10862 = vunpack.c.l.s4 1983009808
  %v10863 = vunpack.c.0.s8 %v10862
  %v10864 = vlaneseq
  %v10865 = vshrl.u32 %v10864, 7
  %v10866 = vsub.s32 %v10863, %v10865
  %v10867 = vrot.slane %v10853, %v10866
  %v10868 = vcombine.low %v10409, %v10411
  %v10869 = vcombine.high %v10409, %v10411
  %v10871 = vunpack.c.l.s4 1983009808
  %v10872 = vunpack.c.0.s8 %v10871
  %v10873 = vlaneseq
  %v10874 = vshrl.u32 %v10873, 7
  %v10875 = vsub.s32 %v10872, %v10874
  %v10876 = vrot.slane %v10868, %v10875
  %v10878 = vunpack.c.l.s4 1983009808
  %v10879 = vunpack.c.0.s8 %v10878
  %v10880 = vlaneseq
  %v10881 = vshrl.u32 %v10880, 7
  %v10882 = vsub.s32 %v10879, %v10881
  %v10883 = vrot.slane %v10869, %v10882
  %v10884 = vcombine.low %v10828, %v10844
  %v10885 = vcombine.high %v10828, %v10844
  %v10887 = vunpack.c.l.s4 1934713408
  %v10888 = vunpack.c.0.s8 %v10887
  %v10889 = vlaneseq
  %v10890 = vshrl.u32 %v10889, 7
  %v10891 = vsub.s32 %v10888, %v10890
  %v10892 = vrot.slane %v10884, %v10891
  %v10894 = vunpack.c.l.s4 1934713408
  %v10895 = vunpack.c.0.s8 %v10894
  %v10896 = vlaneseq
  %v10897 = vshrl.u32 %v10896, 7
  %v10898 = vsub.s32 %v10895, %v10897
  %v10899 = vrot.slane %v10885, %v10898
  %v10900 = vcombine.low %v10835, %v10851
  %v10901 = vcombine.high %v10835, %v10851
  %v10903 = vunpack.c.l.s4 1934713408
  %v10904 = vunpack.c.0.s8 %v10903
  %v10905 = vlaneseq
  %v10906 = vshrl.u32 %v10905, 7
  %v10907 = vsub.s32 %v10904, %v10906
  %v10908 = vrot.slane %v10900, %v10907
  %v10910 = vunpack.c.l.s4 1934713408
  %v10911 = vunpack.c.0.s8 %v10910
  %v10912 = vlaneseq
  %v10913 = vshrl.u32 %v10912, 7
  %v10914 = vsub.s32 %v10911, %v10913
  %v10915 = vrot.slane %v10901, %v10914
  %v10916 = vcombine.low %v10860, %v10876
  %v10917 = vcombine.high %v10860, %v10876
  %v10919 = vunpack.c.l.s4 1934713408
  %v10920 = vunpack.c.0.s8 %v10919
  %v10921 = vlaneseq
  %v10922 = vshrl.u32 %v10921, 7
  %v10923 = vsub.s32 %v10920, %v10922
  %v10924 = vrot.slane %v10916, %v10923
  %v10926 = vunpack.c.l.s4 1934713408
  %v10927 = vunpack.c.0.s8 %v10926
  %v10928 = vlaneseq
  %v10929 = vshrl.u32 %v10928, 7
  %v10930 = vsub.s32 %v10927, %v10929
  %v10931 = vrot.slane %v10917, %v10930
  %v10932 = vcombine.low %v10867, %v10883
  %v10933 = vcombine.high %v10867, %v10883
  %v10935 = vunpack.c.l.s4 1934713408
  %v10936 = vunpack.c.0.s8 %v10935
  %v10937 = vlaneseq
  %v10938 = vshrl.u32 %v10937, 7
  %v10939 = vsub.s32 %v10936, %v10938
  %v10940 = vrot.slane %v10932, %v10939
  %v10942 = vunpack.c.l.s4 1934713408
  %v10943 = vunpack.c.0.s8 %v10942
  %v10944 = vlaneseq
  %v10945 = vshrl.u32 %v10944, 7
  %v10946 = vsub.s32 %v10943, %v10945
  %v10947 = vrot.slane %v10933, %v10946
  %v10948 = vcombine.low %v10892, %v10924
  %v10949 = vcombine.high %v10892, %v10924
  %v10950 = vcombine.low %v10899, %v10931
  %v10951 = vcombine.high %v10899, %v10931
  %v10952 = vcombine.low %v10908, %v10940
  %v10953 = vcombine.high %v10908, %v10940
  %v10954 = vcombine.low %v10915, %v10947
  %v10955 = vcombine.high %v10915, %v10947
  %10960 = vrot.lane.b32.xlu0 %v10541, 8
  %v10961 = vpop.permute.xlu0 %10960
  %10962 = vrot.lane.b32.xlu0 %v10677, 8
  %v10963 = vpop.permute.xlu0 %10962
  %10964 = vrot.lane.b32.xlu0 %v10813, 8
  %v10965 = vpop.permute.xlu0 %10964
  %10966 = vrot.lane.b32.xlu0 %v10949, 8
  %v10967 = vpop.permute.xlu0 %10966
  %10976 = vrot.lane.b32.xlu0 %v10542, 16
  %v10977 = vpop.permute.xlu0 %10976
  %10978 = vrot.lane.b32.xlu0 %v10678, 16
  %v10979 = vpop.permute.xlu0 %10978
  %10980 = vrot.lane.b32.xlu0 %v10814, 16
  %v10981 = vpop.permute.xlu0 %10980
  %10982 = vrot.lane.b32.xlu0 %v10950, 16
  %v10983 = vpop.permute.xlu0 %10982
  %10992 = vrot.lane.b32.xlu0 %v10543, 24
  %v10993 = vpop.permute.xlu0 %10992
  %10994 = vrot.lane.b32.xlu0 %v10679, 24
  %v10995 = vpop.permute.xlu0 %10994
  %10996 = vrot.lane.b32.xlu0 %v10815, 24
  %v10997 = vpop.permute.xlu0 %10996
  %10998 = vrot.lane.b32.xlu0 %v10951, 24
  %v10999 = vpop.permute.xlu0 %10998
  %11008 = vrot.lane.b32.xlu0 %v10544, 32
  %v11009 = vpop.permute.xlu0 %11008
  %11010 = vrot.lane.b32.xlu0 %v10680, 32
  %v11011 = vpop.permute.xlu0 %11010
  %11012 = vrot.lane.b32.xlu0 %v10816, 32
  %v11013 = vpop.permute.xlu0 %11012
  %11014 = vrot.lane.b32.xlu0 %v10952, 32
  %v11015 = vpop.permute.xlu0 %11014
  %11024 = vrot.lane.b32.xlu0 %v10545, 40
  %v11025 = vpop.permute.xlu0 %11024
  %11026 = vrot.lane.b32.xlu0 %v10681, 40
  %v11027 = vpop.permute.xlu0 %11026
  %11028 = vrot.lane.b32.xlu0 %v10817, 40
  %v11029 = vpop.permute.xlu0 %11028
  %11030 = vrot.lane.b32.xlu0 %v10953, 40
  %v11031 = vpop.permute.xlu0 %11030
  %11040 = vrot.lane.b32.xlu0 %v10546, 48
  %v11041 = vpop.permute.xlu0 %11040
  %11042 = vrot.lane.b32.xlu0 %v10682, 48
  %v11043 = vpop.permute.xlu0 %11042
  %11044 = vrot.lane.b32.xlu0 %v10818, 48
  %v11045 = vpop.permute.xlu0 %11044
  %11046 = vrot.lane.b32.xlu0 %v10954, 48
  %v11047 = vpop.permute.xlu0 %11046
  %11056 = vrot.lane.b32.xlu0 %v10547, 56
  %v11057 = vpop.permute.xlu0 %11056
  %11058 = vrot.lane.b32.xlu0 %v10683, 56
  %v11059 = vpop.permute.xlu0 %11058
  %11060 = vrot.lane.b32.xlu0 %v10819, 56
  %v11061 = vpop.permute.xlu0 %11060
  %11062 = vrot.lane.b32.xlu0 %v10955, 56
  %v11063 = vpop.permute.xlu0 %11062
  %v11068 = vsel %vm6464, %v10540, %v10961
  %v11069 = vsel %vm6464, %v10676, %v10963
  %v11070 = vsel %vm6464, %v10812, %v10965
  %v11071 = vsel %vm6464, %v10948, %v10967
  %vm11072 = vcmask 130048
  %v11073 = vsel %vm11072, %v11068, %v10977
  %v11074 = vsel %vm11072, %v11069, %v10979
  %v11075 = vsel %vm11072, %v11070, %v10981
  %v11076 = vsel %vm11072, %v11071, %v10983
  %vm11077 = vcmask 195584
  %v11078 = vsel %vm11077, %v11073, %v10993
  %v11079 = vsel %vm11077, %v11074, %v10995
  %v11080 = vsel %vm11077, %v11075, %v10997
  %v11081 = vsel %vm11077, %v11076, %v10999
  %vm11082 = vcmask 261120
  %v11083 = vsel %vm11082, %v11078, %v11009
  %v11084 = vsel %vm11082, %v11079, %v11011
  %v11085 = vsel %vm11082, %v11080, %v11013
  %v11086 = vsel %vm11082, %v11081, %v11015
  %vm11087 = vcmask 326656
  %v11088 = vsel %vm11087, %v11083, %v11025
  %v11089 = vsel %vm11087, %v11084, %v11027
  %v11090 = vsel %vm11087, %v11085, %v11029
  %v11091 = vsel %vm11087, %v11086, %v11031
  %vm11092 = vcmask 392192
  %v11093 = vsel %vm11092, %v11088, %v11041
  %v11094 = vsel %vm11092, %v11089, %v11043
  %v11095 = vsel %vm11092, %v11090, %v11045
  %v11096 = vsel %vm11092, %v11091, %v11047
  %vm11097 = vcmask 457728
  %v11098 = vsel %vm11097, %v11093, %v11057
  %v11099 = vsel %vm11097, %v11094, %v11059
  %v11100 = vsel %vm11097, %v11095, %v11061
  %v11101 = vsel %vm11097, %v11096, %v11063
  %v11102 = vpack.c.bf16 %v11099, %v11098
  %v11103 = vpack.c.bf16 %v11101, %v11100
  %v11104 = vld [vmem:[%s4] sm:$0xf]
  %v11105 = vld [vmem:[%s4 + $0x4] sm:$0xf]
  %v11106 = vld [vmem:[%s4 + $0x8] sm:$0xf]
  %v11107 = vld [vmem:[%s4 + $0xc] sm:$0xf]
  %v11108 = vld [vmem:[%s4 + $0x10] sm:$0xf]
  %v11109 = vld [vmem:[%s4 + $0x14] sm:$0xf]
  %v11110 = vld [vmem:[%s4 + $0x18] sm:$0xf]
  %v11111 = vld [vmem:[%s4 + $0x1c] sm:$0xf]
  %v11112 = vld [vmem:[%s5] sm:$0x1]
  %v11114 = vlaneseq
  %v11115 = vshrl.u32 %v11114, 7
  %v11116 = vsub.s32 0, %v11115
  %v11117 = vrot.slane %v11112, %v11116
  %v11127 = vunpack.c.l.b16 %v11104
  %v11128 = vunpack.c.l.b16 %v11105
  %v11129 = vunpack.c.l.b16 %v11106
  %v11130 = vunpack.c.l.b16 %v11107
  %v11131 = vunpack.c.l.b16 %v11108
  %v11132 = vunpack.c.l.b16 %v11109
  %v11133 = vunpack.c.l.b16 %v11110
  %v11134 = vunpack.c.l.b16 %v11111
  %v11135 = vpack.c.b16 %v11128, %v11127
  %v11136 = vpack.c.b16 %v11130, %v11129
  %v11137 = vpack.c.b16 %v11132, %v11131
  %v11138 = vpack.c.b16 %v11134, %v11133
  %v11144 = vsel %vm116, %v11102, 0
  %v11147 = vsel %vm116, %v11103, 0
  %11149 = vmatprep.subr.bf16.mxu0 0
  %11150 = vmatpush1.bf16.msra.mxu0 %v11135
  %11151 = vmatprep.subr.bf16.mxu0 0
  %11152 = vmatpush1.bf16.msra.mxu0 %v11136
  %11153 = vmatprep.subr.bf16.mxu0 0
  %11154 = vmatpush1.bf16.msra.mxu0 %v11137
  %11155 = vmatprep.subr.bf16.mxu0 0
  %11156 = vmatpush1.bf16.msra.mxu0 %v11138
  %11157 = vmatprep.subr.bf16.mxu0 0
  %11158 = vmatpush1.bf16.msra.mxu0 0
  %11159 = vmatprep.subr.bf16.mxu0 0
  %11160 = vmatpush1.bf16.msra.mxu0 0
  %11161 = vmatprep.subr.bf16.mxu0 0
  %11162 = vmatpush1.bf16.msra.mxu0 0
  %11163 = vmatprep.subr.bf16.mxu0 0
  %11164 = vmatpush1.bf16.msra.mxu0 0
  %11165 = vmatprep.subr.bf16.mxu0 0
  %11166 = vmatpush1.bf16.msra.mxu0 0
  %11167 = vmatprep.subr.bf16.mxu0 0
  %11168 = vmatpush1.bf16.msra.mxu0 0
  %11169 = vmatprep.subr.bf16.mxu0 0
  %11170 = vmatpush1.bf16.msra.mxu0 0
  %11171 = vmatprep.subr.bf16.mxu0 0
  %11172 = vmatpush1.bf16.msra.mxu0 0
  %11173 = vmatprep.subr.bf16.mxu0 0
  %11174 = vmatpush1.bf16.msra.mxu0 0
  %11175 = vmatprep.subr.bf16.mxu0 0
  %11176 = vmatpush1.bf16.msra.mxu0 0
  %11177 = vmatprep.subr.bf16.mxu0 0
  %11178 = vmatpush1.bf16.msra.mxu0 0
  %11179 = vmatprep.subr.bf16.mxu0 0
  %11180 = vmatpush1.bf16.msra.mxu0 0
  %11181 = vmatprep.mubr.bf16.mxu0 0
  %11182 = vmatmul.mubr.bf16.gmra.mrb[0].mxu0 %v11144
  %v11183 = vpop.f32.mrb[0].mxu0
  %v11184 = vadd.f32 %v11117, %v11183
  %v11185 = vpop.f32.mrb[0].mxu0
  %v11186 = vpop.f32.mrb[0].mxu0
  %v11187 = vadd.f32 %v11117, %v11186
  %v11188 = vpop.f32.mrb[0].mxu0
  %11189 = vmatprep.mubr.bf16.mxu0 0
  %11190 = vmatmul.mubr.bf16.gmra.mrb[0].mxu0 %v11147
  %v11191 = vpop.f32.mrb[0].mxu0
  %v11192 = vadd.f32 %v11117, %v11191
  %v11193 = vpop.f32.mrb[0].mxu0
  %v11194 = vpop.f32.mrb[0].mxu0
  %v11195 = vadd.f32 %v11117, %v11194
  %v11196 = vpop.f32.mrb[0].mxu0
  %11197 = vdwg.mxu0
  %v11198 = vadd.f32 %v48, %v11184
  %v11199 = vadd.f32 %v49, %v11187
  %v11200 = vadd.f32 %v50, %v11192
  %v11201 = vadd.f32 %v51, %v11195
  %v11202 = vld [vmem:[%s10] sm:$0x1]
  %v11203 = vld [vmem:[%s11] sm:$0x1]
  %v11204 = vsel %vm116, %v11198, 0.0
  %11205 = vadd.xlane.f32.xlu0 %v11204
  %v11206 = vpop.xlane.xlu0 %11205
  %v11207 = vsel %vm116, %v11199, 0.0
  %11208 = vadd.xlane.f32.xlu0 %v11207
  %v11209 = vpop.xlane.xlu0 %11208
  %v11210 = vsel %vm116, %v11200, 0.0
  %11211 = vadd.xlane.f32.xlu0 %v11210
  %v11212 = vpop.xlane.xlu0 %11211
  %v11213 = vsel %vm116, %v11201, 0.0
  %11214 = vadd.xlane.f32.xlu0 %v11213
  %v11215 = vpop.xlane.xlu0 %11214
  %v11216 = vrcp.pop 64.0
  %v11217 = vmul.f32 %v11206, %v11216
  %v11218 = vmul.f32 %v11209, %v11216
  %v11219 = vmul.f32 %v11212, %v11216
  %v11220 = vmul.f32 %v11215, %v11216
  %v11221 = vsub.f32 %v11198, %v11217
  %v11222 = vsub.f32 %v11199, %v11218
  %v11223 = vsub.f32 %v11200, %v11219
  %v11224 = vsub.f32 %v11201, %v11220
  %v11225 = vmul.f32 %v11221, %v11221
  %v11226 = vmul.f32 %v11222, %v11222
  %v11227 = vmul.f32 %v11223, %v11223
  %v11228 = vmul.f32 %v11224, %v11224
  %v11229 = vsel %vm116, %v11225, 0.0
  %11230 = vadd.xlane.f32.xlu0 %v11229
  %v11231 = vpop.xlane.xlu0 %11230
  %v11232 = vsel %vm116, %v11226, 0.0
  %11233 = vadd.xlane.f32.xlu0 %v11232
  %v11234 = vpop.xlane.xlu0 %11233
  %v11235 = vsel %vm116, %v11227, 0.0
  %11236 = vadd.xlane.f32.xlu0 %v11235
  %v11237 = vpop.xlane.xlu0 %11236
  %v11238 = vsel %vm116, %v11228, 0.0
  %11239 = vadd.xlane.f32.xlu0 %v11238
  %v11240 = vpop.xlane.xlu0 %11239
  %v11241 = vmul.f32 %v11231, %v11216
  %v11242 = vmul.f32 %v11234, %v11216
  %v11243 = vmul.f32 %v11237, %v11216
  %v11244 = vmul.f32 %v11240, %v11216
  %v11245 = vadd.f32 %v11241, 1e-05
  %v11246 = vadd.f32 %v11242, 1e-05
  %v11247 = vadd.f32 %v11243, 1e-05
  %v11248 = vadd.f32 %v11244, 1e-05
  %v11249 = vrsqrt.pop %v11245
  %v11250 = vrsqrt.pop %v11246
  %v11251 = vrsqrt.pop %v11247
  %v11252 = vrsqrt.pop %v11248
  %v11253 = vmul.f32 %v11221, %v11249
  %v11254 = vmul.f32 %v11222, %v11250
  %v11255 = vmul.f32 %v11223, %v11251
  %v11256 = vmul.f32 %v11224, %v11252
  %v11258 = vlaneseq
  %v11259 = vshrl.u32 %v11258, 7
  %v11260 = vsub.s32 0, %v11259
  %v11261 = vrot.slane %v11202, %v11260
  %v11263 = vmul.f32 %v11253, %v11261
  %v11264 = vmul.f32 %v11254, %v11261
  %v11265 = vmul.f32 %v11255, %v11261
  %v11266 = vmul.f32 %v11256, %v11261
  %v11268 = vlaneseq
  %v11269 = vshrl.u32 %v11268, 7
  %v11270 = vsub.s32 0, %v11269
  %v11271 = vrot.slane %v11203, %v11270
  %v11273 = vadd.f32 %v11263, %v11271
  %v11274 = vadd.f32 %v11264, %v11271
  %v11275 = vadd.f32 %v11265, %v11271
  %v11276 = vadd.f32 %v11266, %v11271
  %v11277 = vpack.c.bf16 %v11274, %v11273
  %v11278 = vpack.c.bf16 %v11276, %v11275
  %v11279 = vld [vmem:[%s6] sm:$0xf]
  %v11280 = vld [vmem:[%s6 + $0x4] sm:$0xf]
  %v11281 = vld [vmem:[%s6 + $0x8] sm:$0xf]
  %v11282 = vld [vmem:[%s6 + $0xc] sm:$0xf]
  %v11283 = vld [vmem:[%s6 + $0x10] sm:$0xf]
  %v11284 = vld [vmem:[%s6 + $0x14] sm:$0xf]
  %v11285 = vld [vmem:[%s6 + $0x18] sm:$0xf]
  %v11286 = vld [vmem:[%s6 + $0x1c] sm:$0xf]
  %v11287 = vld [vmem:[%s7] sm:$0x1]
  %v11289 = vlaneseq
  %v11290 = vshrl.u32 %v11289, 7
  %v11291 = vsub.s32 0, %v11290
  %v11292 = vrot.slane %v11287, %v11291
  %v11302 = vunpack.c.l.b16 %v11279
  %v11303 = vunpack.c.l.b16 %v11280
  %v11304 = vunpack.c.l.b16 %v11281
  %v11305 = vunpack.c.l.b16 %v11282
  %v11306 = vunpack.c.l.b16 %v11283
  %v11307 = vunpack.c.l.b16 %v11284
  %v11308 = vunpack.c.l.b16 %v11285
  %v11309 = vunpack.c.l.b16 %v11286
  %v11310 = vpack.c.b16 %v11303, %v11302
  %v11311 = vpack.c.b16 %v11305, %v11304
  %v11312 = vpack.c.b16 %v11307, %v11306
  %v11313 = vpack.c.b16 %v11309, %v11308
  %v11319 = vsel %vm116, %v11277, 0
  %v11322 = vsel %vm116, %v11278, 0
  %11324 = vmatprep.subr.bf16.mxu0 0
  %11325 = vmatpush1.bf16.msra.mxu0 %v11310
  %11326 = vmatprep.subr.bf16.mxu0 0
  %11327 = vmatpush1.bf16.msra.mxu0 %v11311
  %11328 = vmatprep.subr.bf16.mxu0 0
  %11329 = vmatpush1.bf16.msra.mxu0 %v11312
  %11330 = vmatprep.subr.bf16.mxu0 0
  %11331 = vmatpush1.bf16.msra.mxu0 %v11313
  %11332 = vmatprep.subr.bf16.mxu0 0
  %11333 = vmatpush1.bf16.msra.mxu0 0
  %11334 = vmatprep.subr.bf16.mxu0 0
  %11335 = vmatpush1.bf16.msra.mxu0 0
  %11336 = vmatprep.subr.bf16.mxu0 0
  %11337 = vmatpush1.bf16.msra.mxu0 0
  %11338 = vmatprep.subr.bf16.mxu0 0
  %11339 = vmatpush1.bf16.msra.mxu0 0
  %11340 = vmatprep.subr.bf16.mxu0 0
  %11341 = vmatpush1.bf16.msra.mxu0 0
  %11342 = vmatprep.subr.bf16.mxu0 0
  %11343 = vmatpush1.bf16.msra.mxu0 0
  %11344 = vmatprep.subr.bf16.mxu0 0
  %11345 = vmatpush1.bf16.msra.mxu0 0
  %11346 = vmatprep.subr.bf16.mxu0 0
  %11347 = vmatpush1.bf16.msra.mxu0 0
  %11348 = vmatprep.subr.bf16.mxu0 0
  %11349 = vmatpush1.bf16.msra.mxu0 0
  %11350 = vmatprep.subr.bf16.mxu0 0
  %11351 = vmatpush1.bf16.msra.mxu0 0
  %11352 = vmatprep.subr.bf16.mxu0 0
  %11353 = vmatpush1.bf16.msra.mxu0 0
  %11354 = vmatprep.subr.bf16.mxu0 0
  %11355 = vmatpush1.bf16.msra.mxu0 0
  %11356 = vmatprep.mubr.bf16.mxu0 0
  %11357 = vmatmul.mubr.bf16.gmra.mrb[0].mxu0 %v11319
  %v11358 = vpop.f32.mrb[0].mxu0
  %v11359 = vadd.f32 %v11292, %v11358
  %v11360 = vpop.f32.mrb[0].mxu0
  %v11361 = vpop.f32.mrb[0].mxu0
  %v11362 = vadd.f32 %v11292, %v11361
  %v11363 = vpop.f32.mrb[0].mxu0
  %11364 = vmatprep.mubr.bf16.mxu0 0
  %11365 = vmatmul.mubr.bf16.gmra.mrb[0].mxu0 %v11322
  %v11366 = vpop.f32.mrb[0].mxu0
  %v11367 = vadd.f32 %v11292, %v11366
  %v11368 = vpop.f32.mrb[0].mxu0
  %v11369 = vpop.f32.mrb[0].mxu0
  %v11370 = vadd.f32 %v11292, %v11369
  %v11371 = vpop.f32.mrb[0].mxu0
  %11372 = vdwg.mxu0
  %v11373 = vmax.f32 %v11359, 0.0
  %v11374 = vmax.f32 %v11362, 0.0
  %v11375 = vmax.f32 %v11367, 0.0
  %v11376 = vmax.f32 %v11370, 0.0
  %v11377 = vpack.c.bf16 %v11374, %v11373
  %v11378 = vpack.c.bf16 %v11376, %v11375
  %v11379 = vld [vmem:[%s8] sm:$0xf]
  %v11380 = vld [vmem:[%s8 + $0x4] sm:$0xf]
  %v11381 = vld [vmem:[%s8 + $0x8] sm:$0xf]
  %v11382 = vld [vmem:[%s8 + $0xc] sm:$0xf]
  %v11383 = vld [vmem:[%s8 + $0x10] sm:$0xf]
  %v11384 = vld [vmem:[%s8 + $0x14] sm:$0xf]
  %v11385 = vld [vmem:[%s8 + $0x18] sm:$0xf]
  %v11386 = vld [vmem:[%s8 + $0x1c] sm:$0xf]
  %v11387 = vld [vmem:[%s8 + $0x20] sm:$0xf]
  %v11388 = vld [vmem:[%s8 + $0x24] sm:$0xf]
  %v11389 = vld [vmem:[%s8 + $0x28] sm:$0xf]
  %v11390 = vld [vmem:[%s8 + $0x2c] sm:$0xf]
  %v11391 = vld [vmem:[%s8 + $0x30] sm:$0xf]
  %v11392 = vld [vmem:[%s8 + $0x34] sm:$0xf]
  %v11393 = vld [vmem:[%s8 + $0x38] sm:$0xf]
  %v11394 = vld [vmem:[%s8 + $0x3c] sm:$0xf]
  %v11395 = vld [vmem:[%s9] sm:$0x1]
  %v11397 = vlaneseq
  %v11398 = vshrl.u32 %v11397, 7
  %v11399 = vsub.s32 0, %v11398
  %v11400 = vrot.slane %v11395, %v11399
  %v11418 = vunpack.c.l.b16 %v11379
  %v11419 = vunpack.c.l.b16 %v11380
  %v11420 = vunpack.c.l.b16 %v11381
  %v11421 = vunpack.c.l.b16 %v11382
  %v11422 = vunpack.c.l.b16 %v11383
  %v11423 = vunpack.c.l.b16 %v11384
  %v11424 = vunpack.c.l.b16 %v11385
  %v11425 = vunpack.c.l.b16 %v11386
  %v11426 = vunpack.c.l.b16 %v11387
  %v11427 = vunpack.c.l.b16 %v11388
  %v11428 = vunpack.c.l.b16 %v11389
  %v11429 = vunpack.c.l.b16 %v11390
  %v11430 = vunpack.c.l.b16 %v11391
  %v11431 = vunpack.c.l.b16 %v11392
  %v11432 = vunpack.c.l.b16 %v11393
  %v11433 = vunpack.c.l.b16 %v11394
  %v11434 = vpack.c.b16 %v11419, %v11418
  %v11435 = vpack.c.b16 %v11421, %v11420
  %v11436 = vpack.c.b16 %v11423, %v11422
  %v11437 = vpack.c.b16 %v11425, %v11424
  %v11438 = vpack.c.b16 %v11427, %v11426
  %v11439 = vpack.c.b16 %v11429, %v11428
  %v11440 = vpack.c.b16 %v11431, %v11430
  %v11441 = vpack.c.b16 %v11433, %v11432
  %11450 = vmatprep.subr.bf16.mxu0 0
  %11451 = vmatpush1.bf16.msra.mxu0 %v11434
  %11452 = vmatprep.subr.bf16.mxu0 0
  %11453 = vmatpush1.bf16.msra.mxu0 %v11435
  %11454 = vmatprep.subr.bf16.mxu0 0
  %11455 = vmatpush1.bf16.msra.mxu0 %v11436
  %11456 = vmatprep.subr.bf16.mxu0 0
  %11457 = vmatpush1.bf16.msra.mxu0 %v11437
  %11458 = vmatprep.subr.bf16.mxu0 0
  %11459 = vmatpush1.bf16.msra.mxu0 %v11438
  %11460 = vmatprep.subr.bf16.mxu0 0
  %11461 = vmatpush1.bf16.msra.mxu0 %v11439
  %11462 = vmatprep.subr.bf16.mxu0 0
  %11463 = vmatpush1.bf16.msra.mxu0 %v11440
  %11464 = vmatprep.subr.bf16.mxu0 0
  %11465 = vmatpush1.bf16.msra.mxu0 %v11441
  %11466 = vmatprep.subr.bf16.mxu0 0
  %11467 = vmatpush1.bf16.msra.mxu0 0
  %11468 = vmatprep.subr.bf16.mxu0 0
  %11469 = vmatpush1.bf16.msra.mxu0 0
  %11470 = vmatprep.subr.bf16.mxu0 0
  %11471 = vmatpush1.bf16.msra.mxu0 0
  %11472 = vmatprep.subr.bf16.mxu0 0
  %11473 = vmatpush1.bf16.msra.mxu0 0
  %11474 = vmatprep.subr.bf16.mxu0 0
  %11475 = vmatpush1.bf16.msra.mxu0 0
  %11476 = vmatprep.subr.bf16.mxu0 0
  %11477 = vmatpush1.bf16.msra.mxu0 0
  %11478 = vmatprep.subr.bf16.mxu0 0
  %11479 = vmatpush1.bf16.msra.mxu0 0
  %11480 = vmatprep.subr.bf16.mxu0 0
  %11481 = vmatpush1.bf16.msra.mxu0 0
  %11482 = vmatprep.mubr.bf16.mxu0 0
  %11483 = vmatmul.mubr.bf16.gmra.mrb[0].mxu0 %v11377
  %v11484 = vpop.f32.mrb[0].mxu0
  %v11485 = vadd.f32 %v11400, %v11484
  %v11486 = vpop.f32.mrb[0].mxu0
  %v11487 = vpop.f32.mrb[0].mxu0
  %v11488 = vadd.f32 %v11400, %v11487
  %v11489 = vpop.f32.mrb[0].mxu0
  %11490 = vmatprep.mubr.bf16.mxu0 0
  %11491 = vmatmul.mubr.bf16.gmra.mrb[0].mxu0 %v11378
  %v11492 = vpop.f32.mrb[0].mxu0
  %v11493 = vadd.f32 %v11400, %v11492
  %v11494 = vpop.f32.mrb[0].mxu0
  %v11495 = vpop.f32.mrb[0].mxu0
  %v11496 = vadd.f32 %v11400, %v11495
  %v11497 = vpop.f32.mrb[0].mxu0
  %11498 = vdwg.mxu0
  %v11499 = vadd.f32 %v11273, %v11485
  %v11500 = vadd.f32 %v11274, %v11488
  %v11501 = vadd.f32 %v11275, %v11493
  %v11502 = vadd.f32 %v11276, %v11496
  %v11503 = vld [vmem:[%s12] sm:$0x1]
  %v11504 = vld [vmem:[%s13] sm:$0x1]
  %v11505 = vsel %vm116, %v11499, 0.0
  %11506 = vadd.xlane.f32.xlu0 %v11505
  %v11507 = vpop.xlane.xlu0 %11506
  %v11508 = vsel %vm116, %v11500, 0.0
  %11509 = vadd.xlane.f32.xlu0 %v11508
  %v11510 = vpop.xlane.xlu0 %11509
  %v11511 = vsel %vm116, %v11501, 0.0
  %11512 = vadd.xlane.f32.xlu0 %v11511
  %v11513 = vpop.xlane.xlu0 %11512
  %v11514 = vsel %vm116, %v11502, 0.0
  %11515 = vadd.xlane.f32.xlu0 %v11514
  %v11516 = vpop.xlane.xlu0 %11515
  %v11517 = vmul.f32 %v11507, %v11216
  %v11518 = vmul.f32 %v11510, %v11216
  %v11519 = vmul.f32 %v11513, %v11216
  %v11520 = vmul.f32 %v11516, %v11216
  %v11521 = vsub.f32 %v11499, %v11517
  %v11522 = vsub.f32 %v11500, %v11518
  %v11523 = vsub.f32 %v11501, %v11519
  %v11524 = vsub.f32 %v11502, %v11520
  %v11525 = vmul.f32 %v11521, %v11521
  %v11526 = vmul.f32 %v11522, %v11522
  %v11527 = vmul.f32 %v11523, %v11523
  %v11528 = vmul.f32 %v11524, %v11524
  %v11529 = vsel %vm116, %v11525, 0.0
  %11530 = vadd.xlane.f32.xlu0 %v11529
  %v11531 = vpop.xlane.xlu0 %11530
  %v11532 = vsel %vm116, %v11526, 0.0
  %11533 = vadd.xlane.f32.xlu0 %v11532
  %v11534 = vpop.xlane.xlu0 %11533
  %v11535 = vsel %vm116, %v11527, 0.0
  %11536 = vadd.xlane.f32.xlu0 %v11535
  %v11537 = vpop.xlane.xlu0 %11536
  %v11538 = vsel %vm116, %v11528, 0.0
  %11539 = vadd.xlane.f32.xlu0 %v11538
  %v11540 = vpop.xlane.xlu0 %11539
  %v11541 = vmul.f32 %v11531, %v11216
  %v11542 = vmul.f32 %v11534, %v11216
  %v11543 = vmul.f32 %v11537, %v11216
  %v11544 = vmul.f32 %v11540, %v11216
  %v11545 = vadd.f32 %v11541, 1e-05
  %v11546 = vadd.f32 %v11542, 1e-05
  %v11547 = vadd.f32 %v11543, 1e-05
  %v11548 = vadd.f32 %v11544, 1e-05
  %v11549 = vrsqrt.pop %v11545
  %v11550 = vrsqrt.pop %v11546
  %v11551 = vrsqrt.pop %v11547
  %v11552 = vrsqrt.pop %v11548
  %v11553 = vmul.f32 %v11521, %v11549
  %v11554 = vmul.f32 %v11522, %v11550
  %v11555 = vmul.f32 %v11523, %v11551
  %v11556 = vmul.f32 %v11524, %v11552
  %v11558 = vlaneseq
  %v11559 = vshrl.u32 %v11558, 7
  %v11560 = vsub.s32 0, %v11559
  %v11561 = vrot.slane %v11503, %v11560
  %v11563 = vmul.f32 %v11553, %v11561
  %v11564 = vmul.f32 %v11554, %v11561
  %v11565 = vmul.f32 %v11555, %v11561
  %v11566 = vmul.f32 %v11556, %v11561
  %v11568 = vlaneseq
  %v11569 = vshrl.u32 %v11568, 7
  %v11570 = vsub.s32 0, %v11569
  %v11571 = vrot.slane %v11504, %v11570
  %v11573 = vadd.f32 %v11563, %v11571
  %v11574 = vadd.f32 %v11564, %v11571
  %v11575 = vadd.f32 %v11565, %v11571
  %v11576 = vadd.f32 %v11566, %v11571
  %v11579 = vcombine.low %v52, %v53
  %v11581 = vunpack.c.l.s4 1983009808
  %v11582 = vunpack.c.0.s8 %v11581
  %v11583 = vlaneseq
  %v11584 = vshrl.u32 %v11583, 7
  %v11585 = vsub.s32 %v11582, %v11584
  %v11586 = vrot.slane %v11579, %v11585
  %vm11588 = vcmask 60416
  %v11589 = vsel %vm11588, %v11586, 0.0
  %11590 = vadd.xlane.f32.xlu0 %v11589
  %v11591 = vpop.xlane.xlu0 %11590
  %v11592 = vmax.f32 %v11591, 1e-08
  %v11593 = vlaneseq
  %v11594 = vshrl.u32 %v11593, 7
  %v11595 = vsub.s32 0, %v11594
  %v11596 = vrot.slane %v52, %v11595
  %11598 = vbcast.lane.b32.xlu0 %v11596, 256
  %v11599 = vpop.permute.xlu0 %11598
  %v11600 = vlaneseq
  %v11601 = vshrl.u32 %v11600, 7
  %v11602 = vsub.s32 1, %v11601
  %v11603 = vrot.slane %v52, %v11602
  %11605 = vbcast.lane.b32.xlu0 %v11603, 256
  %v11606 = vpop.permute.xlu0 %11605
  %v11607 = vlaneseq
  %v11608 = vshrl.u32 %v11607, 7
  %v11609 = vsub.s32 0, %v11608
  %v11610 = vrot.slane %v53, %v11609
  %11612 = vbcast.lane.b32.xlu0 %v11610, 256
  %v11613 = vpop.permute.xlu0 %11612
  %v11614 = vlaneseq
  %v11615 = vshrl.u32 %v11614, 7
  %v11616 = vsub.s32 1, %v11615
  %v11617 = vrot.slane %v53, %v11616
  %11619 = vbcast.lane.b32.xlu0 %v11617, 256
  %v11620 = vpop.permute.xlu0 %11619
  %v11621 = vmul.f32 %v11573, %v11599
  %v11622 = vmul.f32 %v11574, %v11606
  %v11623 = vmul.f32 %v11575, %v11613
  %v11624 = vmul.f32 %v11576, %v11620
  %v11625 = vsel %vm116, %v11621, 0.0
  %v11626 = vrot.slane %v11625, 4
  %v11627 = vadd.f32 %v11625, %v11626
  %v11628 = vrot.slane %v11627, 2
  %v11629 = vadd.f32 %v11627, %v11628
  %v11630 = vrot.slane %v11629, 1
  %v11631 = vadd.f32 %v11629, %v11630
  %v11632 = vsel %vm116, %v11622, 0.0
  %v11633 = vrot.slane %v11632, 4
  %v11634 = vadd.f32 %v11632, %v11633
  %v11635 = vrot.slane %v11634, 2
  %v11636 = vadd.f32 %v11634, %v11635
  %v11637 = vrot.slane %v11636, 1
  %v11638 = vadd.f32 %v11636, %v11637
  %v11639 = vsel %vm116, %v11623, 0.0
  %v11640 = vrot.slane %v11639, 4
  %v11641 = vadd.f32 %v11639, %v11640
  %v11642 = vrot.slane %v11641, 2
  %v11643 = vadd.f32 %v11641, %v11642
  %v11644 = vrot.slane %v11643, 1
  %v11645 = vadd.f32 %v11643, %v11644
  %v11646 = vsel %vm116, %v11624, 0.0
  %v11647 = vrot.slane %v11646, 4
  %v11648 = vadd.f32 %v11646, %v11647
  %v11649 = vrot.slane %v11648, 2
  %v11650 = vadd.f32 %v11648, %v11649
  %v11651 = vrot.slane %v11650, 1
  %v11652 = vadd.f32 %v11650, %v11651
  %v11654 = vrot.slane %v11592, 1
  %v11655 = vrot.slane %v11592, 2
  %v11656 = vrot.slane %v11592, 3
  %v11661 = vrcp.pop %v11592
  %v11662 = vmul.f32 %v11631, %v11661
  %v11663 = vrcp.pop %v11654
  %v11664 = vmul.f32 %v11638, %v11663
  %v11665 = vrcp.pop %v11655
  %v11666 = vmul.f32 %v11645, %v11665
  %v11667 = vrcp.pop %v11656
  %v11668 = vmul.f32 %v11652, %v11667
  %v11669 = vmul.f32 %v11662, %v11662
  %v11670 = vmul.f32 %v11664, %v11664
  %v11671 = vmul.f32 %v11666, %v11666
  %v11672 = vmul.f32 %v11668, %v11668
  %v11677 = vrot.slane %v11670, 7
  %vm11678 = vcmask 1041409
  %v11679 = vsel %vm11678, %v11677, %v11669
  %v11680 = vrot.slane %v11671, 6
  %vm11681 = vcmask 1042434
  %v11682 = vsel %vm11681, %v11680, %v11679
  %v11683 = vrot.slane %v11672, 5
  %vm11684 = vcmask 1043459
  %v11685 = vsel %vm11684, %v11683, %v11682
  %vm11687 = vcmask 519168
  %v11688 = vsel %vm11687, %v11685, 0.0
  %11689 = vadd.xlane.f32.xlu0 %v11688
  %v11690 = vpop.xlane.xlu0 %11689
  %v11691 = vmax.f32 %v11690, 1e-24
  %v11692 = vrsqrt.pop %v11691
  %v11694 = vrot.slane %v11692, 1
  %v11695 = vrot.slane %v11692, 2
  %v11696 = vrot.slane %v11692, 3
  %v11701 = vmul.f32 %v11662, %v11692
  %v11702 = vmul.f32 %v11664, %v11694
  %v11703 = vmul.f32 %v11666, %v11695
  %v11704 = vmul.f32 %v11668, %v11696
  %v11705 = vmul.f32 %v11701, %v11703
  %v11706 = vmul.f32 %v11702, %v11704
  %v11709 = vrot.slane %v11706, 7
  %v11710 = vsel %vm11678, %v11709, %v11705
  %vm11712 = vcmask 517120
  %v11713 = vsel %vm11712, %v11710, 0.0
  %11714 = vadd.xlane.f32.xlu0 %v11713
  %v11715 = vpop.xlane.xlu0 %11714
  %v11716 = vmul.f32 %v11701, %v11701
  %v11717 = vmul.f32 %v11702, %v11702
  %v11720 = vrot.slane %v11717, 7
  %v11721 = vsel %vm11678, %v11720, %v11716
  %v11723 = vsel %vm11712, %v11721, 0.0
  %11724 = vadd.xlane.f32.xlu0 %v11723
  %v11725 = vpop.xlane.xlu0 %11724
  %v11726 = vrsqrt.pop %v11725
  %v11727 = vmul.f32 %v11725, %v11726
  %vm11728 = vcmp.eq.f32.partialorder %v11725, inf
  %v11729 = vsel %vm11728, %v11725, %v11727
  %vm11730 = vcmp.eq.f32.partialorder %v11725, 0.0
  %v11731 = vand.u32 %v11725, 2147483648
  %v11732 = vsel %vm11730, %v11731, %v11729
  %v11733 = vmul.f32 %v11703, %v11703
  %v11734 = vmul.f32 %v11704, %v11704
  %v11737 = vrot.slane %v11734, 7
  %v11738 = vsel %vm11678, %v11737, %v11733
  %v11740 = vsel %vm11712, %v11738, 0.0
  %11741 = vadd.xlane.f32.xlu0 %v11740
  %v11742 = vpop.xlane.xlu0 %11741
  %v11743 = vrsqrt.pop %v11742
  %v11744 = vmul.f32 %v11742, %v11743
  %vm11745 = vcmp.eq.f32.partialorder %v11742, inf
  %v11746 = vsel %vm11745, %v11742, %v11744
  %vm11747 = vcmp.eq.f32.partialorder %v11742, 0.0
  %v11748 = vand.u32 %v11742, 2147483648
  %v11749 = vsel %vm11747, %v11748, %v11746
  %v11750 = vmax.f32 %v11732, 1e-08
  %v11751 = vmax.f32 %v11749, 1e-08
  %v11752 = vmul.f32 %v11750, %v11751
  %v11753 = vrcp.pop %v11752
  %v11754 = vmul.f32 %v11715, %v11753
  %11755 = vxpose.xlu0.b32.start [1/16] %v11754, 128
  %11756 = vxpose.xlu0.b32.cont [2/16] 0.0, 128
  %11757 = vxpose.xlu0.b32.cont [3/16] 0.0, 128
  %11758 = vxpose.xlu0.b32.cont [4/16] 0.0, 128
  %11759 = vxpose.xlu0.b32.cont [5/16] 0.0, 128
  %11760 = vxpose.xlu0.b32.cont [6/16] 0.0, 128
  %11761 = vxpose.xlu0.b32.cont [7/16] 0.0, 128
  %11762 = vxpose.xlu0.b32.cont [8/16] 0.0, 128
  %11763 = vxpose.xlu0.b32.cont [9/16] 0.0, 128
  %11764 = vxpose.xlu0.b32.cont [10/16] 0.0, 128
  %11765 = vxpose.xlu0.b32.cont [11/16] 0.0, 128
  %11766 = vxpose.xlu0.b32.cont [12/16] 0.0, 128
  %11767 = vxpose.xlu0.b32.cont [13/16] 0.0, 128
  %11768 = vxpose.xlu0.b32.cont [14/16] 0.0, 128
  %11769 = vxpose.xlu0.b32.cont [15/16] 0.0, 128
  %11770 = vxpose.xlu0.b32.end [16/16] 0.0, 128
  %v11771 = vpop.trf.xlu0
  %v11772 = vpop.trf.xlu0
  %v11773 = vpop.trf.xlu0
  %v11774 = vpop.trf.xlu0
  %v11775 = vpop.trf.xlu0
  %v11776 = vpop.trf.xlu0
  %v11777 = vpop.trf.xlu0
  %v11778 = vpop.trf.xlu0
  %v11779 = vpop.trf.xlu0
  %v11780 = vpop.trf.xlu0
  %v11781 = vpop.trf.xlu0
  %v11782 = vpop.trf.xlu0
  %v11783 = vpop.trf.xlu0
  %v11784 = vpop.trf.xlu0
  %v11785 = vpop.trf.xlu0
  %v11786 = vpop.trf.xlu0
  %vm11787 = vcmask 15360
  %v11788 = vsel %vm11787, %v11771, 0.0
  %11789 = vst [vmem:[%s14] sm:$0x1] %v11788
  // Predicated region
  $region58: #{custom_model_avgpool_forward.1} parent=0 // pred_check
    _
  $region59: #{custom_model_avgpool_forward.1} parent=0 // pred_check_branch
    %11791 = sbr.rel (0) target = $region61
  $region60: #{custom_model_avgpool_forward.1} parent=0 // pred_region
    _
  $region61: #{custom_model_avgpool_forward.1} parent=0 // pred_fallthru
    _
  // Predicated region
  $region62: #{custom_model_avgpool_forward.1} parent=0 // pred_check
    _
  $region63: #{custom_model_avgpool_forward.1} parent=0 // pred_check_branch
    %11793 = sbr.rel (0) target = $region65
  $region64: #{custom_model_avgpool_forward.1} parent=0 // pred_region
    _
  $region65: #{custom_model_avgpool_forward.1} parent=0 // pred_fallthru
    _

</llo_original>
